<compile_context>
chip_gen: v6e
topology: v6e:2x2x1
jax: 0.10.0
libtpu: 0.0.40
codegen_flags: <defaults>
</compile_context>

<pallas_src>
import math

import jax
import jax.numpy as jnp
from jax.experimental import pallas as pl
from jax.experimental.pallas import tpu as pltpu

# --- CSRMNodes hyperparameters (constructor defaults) ---
DT = 1.0
TAU = 1.0
RES_WINDOW = 20       # res_window_size  -> len(resKernel)
REF_WINDOW = 10       # ref_window_size  -> len(refKernel) == last_spikes depth
RESET_CONST = 50.0
REST = -65.0
THRESH = -52.0
TC_DECAY = 100.0
THETA_PLUS = 0.05
TC_THETA_DECAY = 1e7

DECAY = math.exp(-DT / TC_DECAY)              # self.decay
THETA_DECAY = math.exp(-DT / TC_THETA_DECAY)  # self.theta_decay

# Taps baked as compile-time Python float immediates (closed-form in the defaults):
# RES_TAPS == flip((1/tau)*exp(-t/tau)),  REF_TAPS == flip(-reset_const*exp(-t/tau)).
RES_TAPS = tuple((1.0 / TAU) * math.exp(-(RES_WINDOW - 1 - i) * DT / TAU)
                 for i in range(RES_WINDOW))
REF_TAPS = tuple(-RESET_CONST * math.exp(-(REF_WINDOW - 1 - i) * DT / TAU)
                 for i in range(REF_WINDOW))


def _footprint_bytes(tc, B, Lres, Lref, tile_n, x_bytes, s_bytes):
    """Approximate VMEM footprint: double-buffered pipeline blocks + scratch."""
    per_buffer = (tc * Lres * B * tile_n * x_bytes    # x chunk (in)
                  + Lref * B * tile_n * 4             # last_spikes (in)
                  + B * tile_n * 4 + tile_n * 4       # v, theta (in)
                  + tc * B * tile_n * s_bytes         # s chunk (out)
                  + B * tile_n * 4 + tile_n * 4       # v, theta (out)
                  + Lref * B * tile_n * 4)            # last_spikes (out)
    scratch = (B + 1 + Lref * B) * tile_n * 4         # resident v, theta, spike ring
    return 2 * per_buffer + scratch                   # BlockSpec double-buffers


def _choose_tiling(T, B, Lres, Lref, N, x_bytes, s_bytes,
                   vmem_budget_bytes, max_unroll=64):
    """Pick (tile_n, Tc, footprint) from the VMEM budget.

    Prefers >= 2 neuron tiles (so v7x's two TensorCores both get work), then the
    largest time chunk (amortizes per-grid-step overhead), then the largest tile.
    The time chunk must divide T and be either all of T or a multiple of Lref so
    the circular spike-history phase stays static per unrolled step.
    """
    tiles = [c for c in (1024, 512, 256, 128) if N % c == 0 and N // c >= 2]
    if not tiles:
        tiles = [c for c in (1024, 512, 256, 128) if N % c == 0] or [N]
    chunks = [d for d in range(min(T, max_unroll), 0, -1)
              if T % d == 0 and (d == T or d % Lref == 0)]
    if not chunks:
        # TODO(synk): very large T with no divisor multiple of Lref -> one big
        #             unrolled chunk (compile-time heavy). Pad T upstream instead.
        chunks = [T]
    for tc in chunks:              # larger time chunk first
        for tile_n in tiles:       # then larger neuron tile
            fp = _footprint_bytes(tc, B, Lres, Lref, tile_n, x_bytes, s_bytes)
            if fp <= vmem_budget_bytes:
                return tile_n, tc, fp
    raise AssertionError("no (tile_n, time_chunk) fits the VMEM budget; reduce the "
                         "batch size or raise vmem_budget_bytes")


def csrm_forward_steps(x_seq, last_spikes, v, theta, *,
                       res_taps=RES_TAPS, ref_taps=REF_TAPS,
                       tile_n=None, time_chunk=None,
                       vmem_budget_bytes=40 << 20,  # safe inside v7x's 64 MiB/TC;
                                                    # raise toward ~100 MiB on v5e/v6e
                       spike_dtype=jnp.float32):
    """Run T CSRMNodes.forward steps in a single pallas_call.

    Tap-major layouts (so every tap is a contiguous (B, tile_n) tile; B should be a
    multiple of 8 — pad the batch otherwise):
      x_seq:       (T, Lres, B, N) float32 or bfloat16 — per-step input windows.
      last_spikes: (Lref, B, N)    float32 0/1 — spike history (row Lref-1 newest).
      v:           (B, N)          float32 — membrane voltage.
      theta:       (1, N)          float32 — adaptive threshold.
    Returns (v_new, s_seq (T, B, N), theta_new, last_spikes_new).
    """
    T, Lres, B, N = x_seq.shape
    Lref = last_spikes.shape[0]
    assert last_spikes.shape == (Lref, B, N)
    assert v.shape == (B, N) and theta.shape == (1, N)
    assert last_spikes.dtype == jnp.float32 and v.dtype == jnp.float32
    assert theta.dtype == jnp.float32
    assert len(res_taps) == Lres and len(ref_taps) == Lref
    res_taps = tuple(float(c) for c in res_taps)   # VALU immediates
    ref_taps = tuple(float(c) for c in ref_taps)

    x_bytes = jnp.dtype(x_seq.dtype).itemsize
    s_bytes = jnp.dtype(spike_dtype).itemsize
    if tile_n is None or time_chunk is None:
        auto_tile, auto_tc, _ = _choose_tiling(T, B, Lres, Lref, N,
                                               x_bytes, s_bytes, vmem_budget_bytes)
        tile_n = auto_tile if tile_n is None else tile_n
        time_chunk = auto_tc if time_chunk is None else time_chunk

    assert N % tile_n == 0 and (tile_n % 128 == 0 or tile_n == N), (
        "neuron axis must be tiled in lane multiples")
    assert T % time_chunk == 0, "time_chunk must divide T"
    Tc = time_chunk
    n_chunks = T // Tc
    n_tiles = N // tile_n
    assert n_chunks == 1 or Tc % Lref == 0, (
        "time_chunk must be a multiple of the refractory window (or all of T) so "
        "the circular spike-history phase is static in the unrolled body")

    fp = _footprint_bytes(Tc, B, Lres, Lref, tile_n, x_bytes, s_bytes)
    vmem_limit = int(max(fp + (8 << 20), 32 << 20))

    def kernel(x_ref, ls_in_ref, v_in_ref, th_in_ref,
               v_out, s_out, th_out, ls_out,
               v_scr, th_scr, ls_buf):
        tb = pl.program_id(1)   # time-chunk index (innermost grid axis, sequential)

        # --- load this neuron tile's state into resident VMEM scratch once.
        @pl.when(tb == 0)
        def _init():
            v_scr[...] = v_in_ref[...]
            th_scr[...] = th_in_ref[...]
            for m in range(Lref):           # per-row loads; circular slot m == row m
                ls_buf[m] = ls_in_ref[m]

        # --- Tc unrolled simulation steps; state never leaves VMEM scratch.
        for tl in range(Tc):
            # Global step index is tb*Tc + tl; since Tc % Lref == 0 (or a single
            # chunk), its phase mod Lref is the static value below.
            phase = tl % Lref

            # Two accumulation chains for ILP; per-tap ref loads keep live vregs
            # small; taps are immediates; bf16 x is cast to f32 on load.
            acc0 = v_scr[...] * DECAY
            acc1 = RES_TAPS[0] * x_ref[tl, 0].astype(jnp.float32)
            for i in range(1, Lres):
                term = res_taps[i] * x_ref[tl, i].astype(jnp.float32)
                if i % 2 == 0:
                    acc0 = acc0 + term
                else:
                    acc1 = acc1 + term
            # Refractory taps over the circular spike history: slot m holds the most
            # recent spike written at a step == m (mod Lref); its coefficient at the
            # current step is refKernel[(m - t) % Lref].
            for m in range(Lref):
                term = ref_taps[(m - phase) % Lref] * ls_buf[m]
                if m % 2 == 0:
                    acc0 = acc0 + term
                else:
                    acc1 = acc1 + term
            v_t = acc0 + acc1

            th_t = th_scr[...] * THETA_DECAY                        # learning=True
            s = (v_t >= (THRESH + th_t)).astype(jnp.float32)        # (B, tile_n)
            th_t = th_t + THETA_PLUS * jnp.sum(s, axis=0, keepdims=True)

            v_scr[...] = v_t
            th_scr[...] = th_t
            ls_buf[phase] = s                # overwrite only the oldest history slot
            s_out[tl] = s.astype(s_out.dtype)
            # TODO(synk): lbound clamp / traces / traces_additive / sum_input are
            #             default-off in CSRMNodes and not implemented here.

        # --- write state back to HBM once, after the last chunk of this tile.
        @pl.when(tb == pl.num_programs(1) - 1)
        def _finalize():
            v_out[...] = v_scr[...]
            th_out[...] = th_scr[...]
            # Unpermute the circular buffer to module order (row Lref-1 = newest);
            # each store is a full (B, tile_n) tile (no masked single-row stores).
            for j in range(Lref):
                ls_out[j] = ls_buf[(T - Lref + j) % Lref]

    grid = (n_tiles, n_chunks)   # time innermost: per-tile state stays VMEM-resident

    return pl.pallas_call(
        kernel,
        out_shape=(
            jax.ShapeDtypeStruct((B, N), jnp.float32),         # new v
            jax.ShapeDtypeStruct((T, B, N), spike_dtype),      # s for every step
            jax.ShapeDtypeStruct((1, N), jnp.float32),         # new theta
            jax.ShapeDtypeStruct((Lref, B, N), jnp.float32),   # new last_spikes
        ),
        grid=grid,
        in_specs=[
            pl.BlockSpec((Tc, Lres, B, tile_n), lambda j, t: (t, 0, 0, j)),  # x
            pl.BlockSpec((Lref, B, tile_n), lambda j, t: (0, 0, j)),  # last_spikes
            pl.BlockSpec((B, tile_n), lambda j, t: (0, j)),           # v
            pl.BlockSpec((1, tile_n), lambda j, t: (0, j)),           # theta
        ],
        out_specs=(
            pl.BlockSpec((B, tile_n), lambda j, t: (0, j)),
            pl.BlockSpec((Tc, B, tile_n), lambda j, t: (t, 0, j)),
            pl.BlockSpec((1, tile_n), lambda j, t: (0, j)),
            pl.BlockSpec((Lref, B, tile_n), lambda j, t: (0, 0, j)),
        ),
        scratch_shapes=[
            pltpu.VMEM((B, tile_n), jnp.float32),        # resident v
            pltpu.VMEM((1, tile_n), jnp.float32),        # resident theta
            pltpu.VMEM((Lref, B, tile_n), jnp.float32),  # circular spike history
        ],
        # in-place state update: last_spikes->out3, v->out0, theta->out2
        input_output_aliases={1: 3, 2: 0, 3: 2},
        compiler_params=pltpu.CompilerParams(
            dimension_semantics=("parallel", "arbitrary"),
            vmem_limit_bytes=vmem_limit,
        ),
    )(x_seq, last_spikes, v, theta)


def check_against_module_reference(x_seq, ls0, v0, theta0, resk, refk,
                                   v_k, s_seq_k, theta_k, ls_k):
    """Validate against the einsum recurrence of CSRMNodes.forward.

    The spike decision is a hard threshold on a float32 accumulation; kernel and
    reference sum the window taps in different orders, so values within ~1 ulp of
    (thresh + theta) could legally flip.  We therefore (a) allow spike disagreement
    only where the reference margin is tiny, and (b) teacher-force the kernel's
    spikes into the reference recurrence so such a tie cannot cascade.
    """
    tie_tol = 5e-3
    v, theta, ls = v0, theta0, ls0          # ls layout: (Lref, B, N)
    for t in range(x_seq.shape[0]):
        v = v * DECAY
        theta = theta * THETA_DECAY
        x_t = x_seq[t].astype(jnp.float32)  # same (possibly bf16-quantized) values
        v = v + jnp.einsum("i,ikj->kj", resk, x_t)
        v = v + jnp.einsum("i,ikj->kj", refk, ls)
        margin = v - (THRESH + theta)
        s_ref = (margin >= 0).astype(jnp.float32)
        s_k = s_seq_k[t].astype(jnp.float32)
        ok = jnp.where(s_ref != s_k, jnp.abs(margin) <= tie_tol, True)
        assert bool(jnp.all(ok)), f"spike mismatch at step {t}"
        s = s_k                              # teacher-force the kernel's decision
        theta = theta + THETA_PLUS * jnp.sum(s, axis=0, keepdims=True)
        ls = jnp.concatenate([ls[1:], s[None]], axis=0)
    assert jnp.allclose(v_k, v, atol=2e-3, rtol=1e-5), "v mismatch"
    assert jnp.allclose(theta_k, theta, atol=1e-4, rtol=1e-6), "theta mismatch"
    assert jnp.array_equal(ls_k, ls), "last_spikes mismatch"


if __name__ == "__main__":
    # Small demo shapes. B=8 keeps every tap load a full (8,128) tile; T=20 with
    # tile_n=128 / time_chunk=10 exercises 2 neuron tiles x 2 time chunks.
    T, B, N = 20, 8, 256
    key = jax.random.PRNGKey(0)
    kx, ks = jax.random.split(key)

    x_seq = jax.random.uniform(kx, (T, RES_WINDOW, B, N), dtype=jnp.float32,
                               minval=0.0, maxval=30.0)
    last_spikes = (jax.random.uniform(ks, (REF_WINDOW, B, N)) > 0.8).astype(jnp.float32)
    v0 = jnp.full((B, N), REST, dtype=jnp.float32)   # v initialized to rest
    theta0 = jnp.zeros((1, N), dtype=jnp.float32)
    resk = jnp.asarray(RES_TAPS, dtype=jnp.float32)
    refk = jnp.asarray(REF_TAPS, dtype=jnp.float32)

    # Run 1: explicit multi-chunk tiling (2 neuron tiles x 2 time chunks) + check.
    v1, s1, th1, ls1 = jax.block_until_ready(
        csrm_forward_steps(x_seq, last_spikes, v0, theta0,
                           tile_n=128, time_chunk=10))
    check_against_module_reference(x_seq, last_spikes, v0, theta0, resk, refk,
                                   v1, s1, th1, ls1)

    # Run 2: bf16 x storage (halves the dominant HBM stream) with auto tiling,
    # continuing the simulation from run 1's state; checked against the same
    # recurrence evaluated on the bf16-quantized inputs.
    x_bf16 = x_seq.astype(jnp.bfloat16)
    v2, s2, th2, ls2 = jax.block_until_ready(
        csrm_forward_steps(x_bf16, ls1, v1, th1))
    check_against_module_reference(x_bf16, ls1, v1, th1, resk, refk,
                                   v2, s2, th2, ls2)

    print("KERNEL_OK")
</pallas_src>

<mosaic_0001>
module attributes {stable_mosaic.version = 11 : i64} {
  func.func @kernel(%arg0: i32, %arg1: i32, %arg2: memref<10x20x8x128xf32, #tpu.memory_space<vmem>>, %arg3: memref<10x8x128xf32, #tpu.memory_space<vmem>>, %arg4: memref<8x128xf32, #tpu.memory_space<vmem>>, %arg5: memref<1x128xf32, #tpu.memory_space<vmem>>, %arg6: memref<8x128xf32, #tpu.memory_space<vmem>>, %arg7: memref<10x8x128xf32, #tpu.memory_space<vmem>>, %arg8: memref<1x128xf32, #tpu.memory_space<vmem>>, %arg9: memref<10x8x128xf32, #tpu.memory_space<vmem>>, %arg10: memref<8x128xf32, #tpu.memory_space<vmem>>, %arg11: memref<1x128xf32, #tpu.memory_space<vmem>>, %arg12: memref<10x8x128xf32, #tpu.memory_space<vmem>>) attributes {dimension_semantics = [#tpu.dimension_semantics<parallel>, #tpu.dimension_semantics<arbitrary>], iteration_bounds = array<i64: 2, 2>, scalar_prefetch = 0 : i64, scratch_operands = 3 : i64, tpu.core_type = #tpu.core_type<tc>, window_params = [{transform_indices = @transform_0, window_bounds = array<i64: 10, 20, 8, 128>}, {transform_indices = @transform_1, window_bounds = array<i64: 10, 8, 128>}, {transform_indices = @transform_2, window_bounds = array<i64: 8, 128>}, {transform_indices = @transform_3, window_bounds = array<i64: 1, 128>}, {transform_indices = @transform_4, window_bounds = array<i64: 8, 128>}, {transform_indices = @transform_5, window_bounds = array<i64: 10, 8, 128>}, {transform_indices = @transform_6, window_bounds = array<i64: 1, 128>}, {transform_indices = @transform_7, window_bounds = array<i64: 10, 8, 128>}]} {
    %c0_i32 = arith.constant 0 : i32
    %0 = arith.cmpi eq, %arg1, %c0_i32 : i32
    %1 = arith.extui %0 : i1 to i32
    %c0_i32_0 = arith.constant 0 : i32
    %2 = arith.cmpi ne, %1, %c0_i32_0 : i32
    scf.if %2 {
      %c0_1571 = arith.constant 0 : index
      %c0_1572 = arith.constant 0 : index
      %1756 = vector.load %arg4[%c0_1571, %c0_1572] : memref<8x128xf32, #tpu.memory_space<vmem>>, vector<8x128xf32>
      %c0_1573 = arith.constant 0 : index
      %c0_1574 = arith.constant 0 : index
      %1757 = vector.load %arg10[%c0_1573, %c0_1574] : memref<8x128xf32, #tpu.memory_space<vmem>>, vector<8x128xf32>
      tpu.vector_store %arg10[%c0_1573, %c0_1574], %1756 {strides = array<i32>} : memref<8x128xf32, #tpu.memory_space<vmem>>, vector<8x128xf32>,
      %c0_1575 = arith.constant 0 : index
      %c0_1576 = arith.constant 0 : index
      %1758 = vector.load %arg5[%c0_1575, %c0_1576] : memref<1x128xf32, #tpu.memory_space<vmem>>, vector<1x128xf32>
      %c0_1577 = arith.constant 0 : index
      %c0_1578 = arith.constant 0 : index
      %1759 = vector.load %arg11[%c0_1577, %c0_1578] : memref<1x128xf32, #tpu.memory_space<vmem>>, vector<1x128xf32>
      tpu.vector_store %arg11[%c0_1577, %c0_1578], %1758 {strides = array<i32>} : memref<1x128xf32, #tpu.memory_space<vmem>>, vector<1x128xf32>,
      %c0_1579 = arith.constant 0 : index
      %c0_1580 = arith.constant 0 : index
      %c0_1581 = arith.constant 0 : index
      %1760 = vector.load %arg3[%c0_1579, %c0_1580, %c0_1581] : memref<10x8x128xf32, #tpu.memory_space<vmem>>, vector<1x8x128xf32>
      %1761 = vector.shape_cast %1760 : vector<1x8x128xf32> to vector<8x128xf32>
      %c0_1582 = arith.constant 0 : index
      %c0_1583 = arith.constant 0 : index
      %c0_1584 = arith.constant 0 : index
      %1762 = vector.load %arg12[%c0_1582, %c0_1583, %c0_1584] : memref<10x8x128xf32, #tpu.memory_space<vmem>>, vector<1x8x128xf32>
      %1763 = vector.shape_cast %1762 : vector<1x8x128xf32> to vector<8x128xf32>
      %1764 = vector.shape_cast %1761 : vector<8x128xf32> to vector<1x8x128xf32>
      tpu.vector_store %arg12[%c0_1582, %c0_1583, %c0_1584], %1764 {strides = array<i32>} : memref<10x8x128xf32, #tpu.memory_space<vmem>>, vector<1x8x128xf32>,
      %c1_1585 = arith.constant 1 : index
      %c0_1586 = arith.constant 0 : index
      %c0_1587 = arith.constant 0 : index
      %1765 = vector.load %arg3[%c1_1585, %c0_1586, %c0_1587] : memref<10x8x128xf32, #tpu.memory_space<vmem>>, vector<1x8x128xf32>
      %1766 = vector.shape_cast %1765 : vector<1x8x128xf32> to vector<8x128xf32>
      %c1_1588 = arith.constant 1 : index
      %c0_1589 = arith.constant 0 : index
      %c0_1590 = arith.constant 0 : index
      %1767 = vector.load %arg12[%c1_1588, %c0_1589, %c0_1590] : memref<10x8x128xf32, #tpu.memory_space<vmem>>, vector<1x8x128xf32>
      %1768 = vector.shape_cast %1767 : vector<1x8x128xf32> to vector<8x128xf32>
      %1769 = vector.shape_cast %1766 : vector<8x128xf32> to vector<1x8x128xf32>
      tpu.vector_store %arg12[%c1_1588, %c0_1589, %c0_1590], %1769 {strides = array<i32>} : memref<10x8x128xf32, #tpu.memory_space<vmem>>, vector<1x8x128xf32>,
      %c2_1591 = arith.constant 2 : index
      %c0_1592 = arith.constant 0 : index
      %c0_1593 = arith.constant 0 : index
      %1770 = vector.load %arg3[%c2_1591, %c0_1592, %c0_1593] : memref<10x8x128xf32, #tpu.memory_space<vmem>>, vector<1x8x128xf32>
      %1771 = vector.shape_cast %1770 : vector<1x8x128xf32> to vector<8x128xf32>
      %c2_1594 = arith.constant 2 : index
      %c0_1595 = arith.constant 0 : index
      %c0_1596 = arith.constant 0 : index
      %1772 = vector.load %arg12[%c2_1594, %c0_1595, %c0_1596] : memref<10x8x128xf32, #tpu.memory_space<vmem>>, vector<1x8x128xf32>
      %1773 = vector.shape_cast %1772 : vector<1x8x128xf32> to vector<8x128xf32>
      %1774 = vector.shape_cast %1771 : vector<8x128xf32> to vector<1x8x128xf32>
      tpu.vector_store %arg12[%c2_1594, %c0_1595, %c0_1596], %1774 {strides = array<i32>} : memref<10x8x128xf32, #tpu.memory_space<vmem>>, vector<1x8x128xf32>,
      %c3_1597 = arith.constant 3 : index
      %c0_1598 = arith.constant 0 : index
      %c0_1599 = arith.constant 0 : index
      %1775 = vector.load %arg3[%c3_1597, %c0_1598, %c0_1599] : memref<10x8x128xf32, #tpu.memory_space<vmem>>, vector<1x8x128xf32>
      %1776 = vector.shape_cast %1775 : vector<1x8x128xf32> to vector<8x128xf32>
      %c3_1600 = arith.constant 3 : index
      %c0_1601 = arith.constant 0 : index
      %c0_1602 = arith.constant 0 : index
      %1777 = vector.load %arg12[%c3_1600, %c0_1601, %c0_1602] : memref<10x8x128xf32, #tpu.memory_space<vmem>>, vector<1x8x128xf32>
      %1778 = vector.shape_cast %1777 : vector<1x8x128xf32> to vector<8x128xf32>
      %1779 = vector.shape_cast %1776 : vector<8x128xf32> to vector<1x8x128xf32>
      tpu.vector_store %arg12[%c3_1600, %c0_1601, %c0_1602], %1779 {strides = array<i32>} : memref<10x8x128xf32, #tpu.memory_space<vmem>>, vector<1x8x128xf32>,
      %c4_1603 = arith.constant 4 : index
      %c0_1604 = arith.constant 0 : index
      %c0_1605 = arith.constant 0 : index
      %1780 = vector.load %arg3[%c4_1603, %c0_1604, %c0_1605] : memref<10x8x128xf32, #tpu.memory_space<vmem>>, vector<1x8x128xf32>
      %1781 = vector.shape_cast %1780 : vector<1x8x128xf32> to vector<8x128xf32>
      %c4_1606 = arith.constant 4 : index
      %c0_1607 = arith.constant 0 : index
      %c0_1608 = arith.constant 0 : index
      %1782 = vector.load %arg12[%c4_1606, %c0_1607, %c0_1608] : memref<10x8x128xf32, #tpu.memory_space<vmem>>, vector<1x8x128xf32>
      %1783 = vector.shape_cast %1782 : vector<1x8x128xf32> to vector<8x128xf32>
      %1784 = vector.shape_cast %1781 : vector<8x128xf32> to vector<1x8x128xf32>
      tpu.vector_store %arg12[%c4_1606, %c0_1607, %c0_1608], %1784 {strides = array<i32>} : memref<10x8x128xf32, #tpu.memory_space<vmem>>, vector<1x8x128xf32>,
      %c5_1609 = arith.constant 5 : index
      %c0_1610 = arith.constant 0 : index
      %c0_1611 = arith.constant 0 : index
      %1785 = vector.load %arg3[%c5_1609, %c0_1610, %c0_1611] : memref<10x8x128xf32, #tpu.memory_space<vmem>>, vector<1x8x128xf32>
      %1786 = vector.shape_cast %1785 : vector<1x8x128xf32> to vector<8x128xf32>
      %c5_1612 = arith.constant 5 : index
      %c0_1613 = arith.constant 0 : index
      %c0_1614 = arith.constant 0 : index
      %1787 = vector.load %arg12[%c5_1612, %c0_1613, %c0_1614] : memref<10x8x128xf32, #tpu.memory_space<vmem>>, vector<1x8x128xf32>
      %1788 = vector.shape_cast %1787 : vector<1x8x128xf32> to vector<8x128xf32>
      %1789 = vector.shape_cast %1786 : vector<8x128xf32> to vector<1x8x128xf32>
      tpu.vector_store %arg12[%c5_1612, %c0_1613, %c0_1614], %1789 {strides = array<i32>} : memref<10x8x128xf32, #tpu.memory_space<vmem>>, vector<1x8x128xf32>,
      %c6_1615 = arith.constant 6 : index
      %c0_1616 = arith.constant 0 : index
      %c0_1617 = arith.constant 0 : index
      %1790 = vector.load %arg3[%c6_1615, %c0_1616, %c0_1617] : memref<10x8x128xf32, #tpu.memory_space<vmem>>, vector<1x8x128xf32>
      %1791 = vector.shape_cast %1790 : vector<1x8x128xf32> to vector<8x128xf32>
      %c6_1618 = arith.constant 6 : index
      %c0_1619 = arith.constant 0 : index
      %c0_1620 = arith.constant 0 : index
      %1792 = vector.load %arg12[%c6_1618, %c0_1619, %c0_1620] : memref<10x8x128xf32, #tpu.memory_space<vmem>>, vector<1x8x128xf32>
      %1793 = vector.shape_cast %1792 : vector<1x8x128xf32> to vector<8x128xf32>
      %1794 = vector.shape_cast %1791 : vector<8x128xf32> to vector<1x8x128xf32>
      tpu.vector_store %arg12[%c6_1618, %c0_1619, %c0_1620], %1794 {strides = array<i32>} : memref<10x8x128xf32, #tpu.memory_space<vmem>>, vector<1x8x128xf32>,
      %c7_1621 = arith.constant 7 : index
      %c0_1622 = arith.constant 0 : index
      %c0_1623 = arith.constant 0 : index
      %1795 = vector.load %arg3[%c7_1621, %c0_1622, %c0_1623] : memref<10x8x128xf32, #tpu.memory_space<vmem>>, vector<1x8x128xf32>
      %1796 = vector.shape_cast %1795 : vector<1x8x128xf32> to vector<8x128xf32>
      %c7_1624 = arith.constant 7 : index
      %c0_1625 = arith.constant 0 : index
      %c0_1626 = arith.constant 0 : index
      %1797 = vector.load %arg12[%c7_1624, %c0_1625, %c0_1626] : memref<10x8x128xf32, #tpu.memory_space<vmem>>, vector<1x8x128xf32>
      %1798 = vector.shape_cast %1797 : vector<1x8x128xf32> to vector<8x128xf32>
      %1799 = vector.shape_cast %1796 : vector<8x128xf32> to vector<1x8x128xf32>
      tpu.vector_store %arg12[%c7_1624, %c0_1625, %c0_1626], %1799 {strides = array<i32>} : memref<10x8x128xf32, #tpu.memory_space<vmem>>, vector<1x8x128xf32>,
      %c8_1627 = arith.constant 8 : index
      %c0_1628 = arith.constant 0 : index
      %c0_1629 = arith.constant 0 : index
      %1800 = vector.load %arg3[%c8_1627, %c0_1628, %c0_1629] : memref<10x8x128xf32, #tpu.memory_space<vmem>>, vector<1x8x128xf32>
      %1801 = vector.shape_cast %1800 : vector<1x8x128xf32> to vector<8x128xf32>
      %c8_1630 = arith.constant 8 : index
      %c0_1631 = arith.constant 0 : index
      %c0_1632 = arith.constant 0 : index
      %1802 = vector.load %arg12[%c8_1630, %c0_1631, %c0_1632] : memref<10x8x128xf32, #tpu.memory_space<vmem>>, vector<1x8x128xf32>
      %1803 = vector.shape_cast %1802 : vector<1x8x128xf32> to vector<8x128xf32>
      %1804 = vector.shape_cast %1801 : vector<8x128xf32> to vector<1x8x128xf32>
      tpu.vector_store %arg12[%c8_1630, %c0_1631, %c0_1632], %1804 {strides = array<i32>} : memref<10x8x128xf32, #tpu.memory_space<vmem>>, vector<1x8x128xf32>,
      %c9_1633 = arith.constant 9 : index
      %c0_1634 = arith.constant 0 : index
      %c0_1635 = arith.constant 0 : index
      %1805 = vector.load %arg3[%c9_1633, %c0_1634, %c0_1635] : memref<10x8x128xf32, #tpu.memory_space<vmem>>, vector<1x8x128xf32>
      %1806 = vector.shape_cast %1805 : vector<1x8x128xf32> to vector<8x128xf32>
      %c9_1636 = arith.constant 9 : index
      %c0_1637 = arith.constant 0 : index
      %c0_1638 = arith.constant 0 : index
      %1807 = vector.load %arg12[%c9_1636, %c0_1637, %c0_1638] : memref<10x8x128xf32, #tpu.memory_space<vmem>>, vector<1x8x128xf32>
      %1808 = vector.shape_cast %1807 : vector<1x8x128xf32> to vector<8x128xf32>
      %1809 = vector.shape_cast %1806 : vector<8x128xf32> to vector<1x8x128xf32>
      tpu.vector_store %arg12[%c9_1636, %c0_1637, %c0_1638], %1809 {strides = array<i32>} : memref<10x8x128xf32, #tpu.memory_space<vmem>>, vector<1x8x128xf32>,
    } else {
    }
    %c0 = arith.constant 0 : index
    %c0_1 = arith.constant 0 : index
    %3 = vector.load %arg10[%c0, %c0_1] : memref<8x128xf32, #tpu.memory_space<vmem>>, vector<8x128xf32>
    %cst = arith.constant 0.990049839 : f32
    %4 = vector.broadcast %cst : f32 to vector<8x128xf32>
    %5 = arith.mulf %3, %4 : vector<8x128xf32>
    %c0_2 = arith.constant 0 : index
    %c0_3 = arith.constant 0 : index
    %c0_4 = arith.constant 0 : index
    %c0_5 = arith.constant 0 : index
    %6 = vector.load %arg2[%c0_2, %c0_3, %c0_4, %c0_5] : memref<10x20x8x128xf32, #tpu.memory_space<vmem>>, vector<1x1x8x128xf32>
    %7 = vector.shape_cast %6 : vector<1x1x8x128xf32> to vector<8x128xf32>
    %cst_6 = arith.constant 5.60279644E-9 : f32
    %8 = vector.broadcast %cst_6 : f32 to vector<8x128xf32>
    %9 = arith.mulf %8, %7 : vector<8x128xf32>
    %c0_7 = arith.constant 0 : index
    %c1 = arith.constant 1 : index
    %c0_8 = arith.constant 0 : index
    %c0_9 = arith.constant 0 : index
    %10 = vector.load %arg2[%c0_7, %c1, %c0_8, %c0_9] : memref<10x20x8x128xf32, #tpu.memory_space<vmem>>, vector<1x1x8x128xf32>
    %11 = vector.shape_cast %10 : vector<1x1x8x128xf32> to vector<8x128xf32>
    %cst_10 = arith.constant 1.52299791E-8 : f32
    %12 = vector.broadcast %cst_10 : f32 to vector<8x128xf32>
    %13 = arith.mulf %12, %11 : vector<8x128xf32>
    %14 = arith.addf %9, %13 : vector<8x128xf32>
    %c0_11 = arith.constant 0 : index
    %c2 = arith.constant 2 : index
    %c0_12 = arith.constant 0 : index
    %c0_13 = arith.constant 0 : index
    %15 = vector.load %arg2[%c0_11, %c2, %c0_12, %c0_13] : memref<10x20x8x128xf32, #tpu.memory_space<vmem>>, vector<1x1x8x128xf32>
    %16 = vector.shape_cast %15 : vector<1x1x8x128xf32> to vector<8x128xf32>
    %cst_14 = arith.constant 4.13993781E-8 : f32
    %17 = vector.broadcast %cst_14 : f32 to vector<8x128xf32>
    %18 = arith.mulf %17, %16 : vector<8x128xf32>
    %19 = arith.addf %5, %18 : vector<8x128xf32>
    %c0_15 = arith.constant 0 : index
    %c3 = arith.constant 3 : index
    %c0_16 = arith.constant 0 : index
    %c0_17 = arith.constant 0 : index
    %20 = vector.load %arg2[%c0_15, %c3, %c0_16, %c0_17] : memref<10x20x8x128xf32, #tpu.memory_space<vmem>>, vector<1x1x8x128xf32>
    %21 = vector.shape_cast %20 : vector<1x1x8x128xf32> to vector<8x128xf32>
    %cst_18 = arith.constant 1.12535176E-7 : f32
    %22 = vector.broadcast %cst_18 : f32 to vector<8x128xf32>
    %23 = arith.mulf %22, %21 : vector<8x128xf32>
    %24 = arith.addf %14, %23 : vector<8x128xf32>
    %c0_19 = arith.constant 0 : index
    %c4 = arith.constant 4 : index
    %c0_20 = arith.constant 0 : index
    %c0_21 = arith.constant 0 : index
    %25 = vector.load %arg2[%c0_19, %c4, %c0_20, %c0_21] : memref<10x20x8x128xf32, #tpu.memory_space<vmem>>, vector<1x1x8x128xf32>
    %26 = vector.shape_cast %25 : vector<1x1x8x128xf32> to vector<8x128xf32>
    %cst_22 = arith.constant 3.05902319E-7 : f32
    %27 = vector.broadcast %cst_22 : f32 to vector<8x128xf32>
    %28 = arith.mulf %27, %26 : vector<8x128xf32>
    %29 = arith.addf %19, %28 : vector<8x128xf32>
    %c0_23 = arith.constant 0 : index
    %c5 = arith.constant 5 : index
    %c0_24 = arith.constant 0 : index
    %c0_25 = arith.constant 0 : index
    %30 = vector.load %arg2[%c0_23, %c5, %c0_24, %c0_25] : memref<10x20x8x128xf32, #tpu.memory_space<vmem>>, vector<1x1x8x128xf32>
    %31 = vector.shape_cast %30 : vector<1x1x8x128xf32> to vector<8x128xf32>
    %cst_26 = arith.constant 8.31528723E-7 : f32
    %32 = vector.broadcast %cst_26 : f32 to vector<8x128xf32>
    %33 = arith.mulf %32, %31 : vector<8x128xf32>
    %34 = arith.addf %24, %33 : vector<8x128xf32>
    %c0_27 = arith.constant 0 : index
    %c6 = arith.constant 6 : index
    %c0_28 = arith.constant 0 : index
    %c0_29 = arith.constant 0 : index
    %35 = vector.load %arg2[%c0_27, %c6, %c0_28, %c0_29] : memref<10x20x8x128xf32, #tpu.memory_space<vmem>>, vector<1x1x8x128xf32>
    %36 = vector.shape_cast %35 : vector<1x1x8x128xf32> to vector<8x128xf32>
    %cst_30 = arith.constant 2.26032944E-6 : f32
    %37 = vector.broadcast %cst_30 : f32 to vector<8x128xf32>
    %38 = arith.mulf %37, %36 : vector<8x128xf32>
    %39 = arith.addf %29, %38 : vector<8x128xf32>
    %c0_31 = arith.constant 0 : index
    %c7 = arith.constant 7 : index
    %c0_32 = arith.constant 0 : index
    %c0_33 = arith.constant 0 : index
    %40 = vector.load %arg2[%c0_31, %c7, %c0_32, %c0_33] : memref<10x20x8x128xf32, #tpu.memory_space<vmem>>, vector<1x1x8x128xf32>
    %41 = vector.shape_cast %40 : vector<1x1x8x128xf32> to vector<8x128xf32>
    %cst_34 = arith.constant 6.14421242E-6 : f32
    %42 = vector.broadcast %cst_34 : f32 to vector<8x128xf32>
    %43 = arith.mulf %42, %41 : vector<8x128xf32>
    %44 = arith.addf %34, %43 : vector<8x128xf32>
    %c0_35 = arith.constant 0 : index
    %c8 = arith.constant 8 : index
    %c0_36 = arith.constant 0 : index
    %c0_37 = arith.constant 0 : index
    %45 = vector.load %arg2[%c0_35, %c8, %c0_36, %c0_37] : memref<10x20x8x128xf32, #tpu.memory_space<vmem>>, vector<1x1x8x128xf32>
    %46 = vector.shape_cast %45 : vector<1x1x8x128xf32> to vector<8x128xf32>
    %cst_38 = arith.constant 1.670170e-05 : f32
    %47 = vector.broadcast %cst_38 : f32 to vector<8x128xf32>
    %48 = arith.mulf %47, %46 : vector<8x128xf32>
    %49 = arith.addf %39, %48 : vector<8x128xf32>
    %c0_39 = arith.constant 0 : index
    %c9 = arith.constant 9 : index
    %c0_40 = arith.constant 0 : index
    %c0_41 = arith.constant 0 : index
    %50 = vector.load %arg2[%c0_39, %c9, %c0_40, %c0_41] : memref<10x20x8x128xf32, #tpu.memory_space<vmem>>, vector<1x1x8x128xf32>
    %51 = vector.shape_cast %50 : vector<1x1x8x128xf32> to vector<8x128xf32>
    %cst_42 = arith.constant 4.5399931E-5 : f32
    %52 = vector.broadcast %cst_42 : f32 to vector<8x128xf32>
    %53 = arith.mulf %52, %51 : vector<8x128xf32>
    %54 = arith.addf %44, %53 : vector<8x128xf32>
    %c0_43 = arith.constant 0 : index
    %c10 = arith.constant 10 : index
    %c0_44 = arith.constant 0 : index
    %c0_45 = arith.constant 0 : index
    %55 = vector.load %arg2[%c0_43, %c10, %c0_44, %c0_45] : memref<10x20x8x128xf32, #tpu.memory_space<vmem>>, vector<1x1x8x128xf32>
    %56 = vector.shape_cast %55 : vector<1x1x8x128xf32> to vector<8x128xf32>
    %cst_46 = arith.constant 1.23409802E-4 : f32
    %57 = vector.broadcast %cst_46 : f32 to vector<8x128xf32>
    %58 = arith.mulf %57, %56 : vector<8x128xf32>
    %59 = arith.addf %49, %58 : vector<8x128xf32>
    %c0_47 = arith.constant 0 : index
    %c11 = arith.constant 11 : index
    %c0_48 = arith.constant 0 : index
    %c0_49 = arith.constant 0 : index
    %60 = vector.load %arg2[%c0_47, %c11, %c0_48, %c0_49] : memref<10x20x8x128xf32, #tpu.memory_space<vmem>>, vector<1x1x8x128xf32>
    %61 = vector.shape_cast %60 : vector<1x1x8x128xf32> to vector<8x128xf32>
    %cst_50 = arith.constant 3.35462624E-4 : f32
    %62 = vector.broadcast %cst_50 : f32 to vector<8x128xf32>
    %63 = arith.mulf %62, %61 : vector<8x128xf32>
    %64 = arith.addf %54, %63 : vector<8x128xf32>
    %c0_51 = arith.constant 0 : index
    %c12 = arith.constant 12 : index
    %c0_52 = arith.constant 0 : index
    %c0_53 = arith.constant 0 : index
    %65 = vector.load %arg2[%c0_51, %c12, %c0_52, %c0_53] : memref<10x20x8x128xf32, #tpu.memory_space<vmem>>, vector<1x1x8x128xf32>
    %66 = vector.shape_cast %65 : vector<1x1x8x128xf32> to vector<8x128xf32>
    %cst_54 = arith.constant 9.118820e-04 : f32
    %67 = vector.broadcast %cst_54 : f32 to vector<8x128xf32>
    %68 = arith.mulf %67, %66 : vector<8x128xf32>
    %69 = arith.addf %59, %68 : vector<8x128xf32>
    %c0_55 = arith.constant 0 : index
    %c13 = arith.constant 13 : index
    %c0_56 = arith.constant 0 : index
    %c0_57 = arith.constant 0 : index
    %70 = vector.load %arg2[%c0_55, %c13, %c0_56, %c0_57] : memref<10x20x8x128xf32, #tpu.memory_space<vmem>>, vector<1x1x8x128xf32>
    %71 = vector.shape_cast %70 : vector<1x1x8x128xf32> to vector<8x128xf32>
    %cst_58 = arith.constant 0.00247875229 : f32
    %72 = vector.broadcast %cst_58 : f32 to vector<8x128xf32>
    %73 = arith.mulf %72, %71 : vector<8x128xf32>
    %74 = arith.addf %64, %73 : vector<8x128xf32>
    %c0_59 = arith.constant 0 : index
    %c14 = arith.constant 14 : index
    %c0_60 = arith.constant 0 : index
    %c0_61 = arith.constant 0 : index
    %75 = vector.load %arg2[%c0_59, %c14, %c0_60, %c0_61] : memref<10x20x8x128xf32, #tpu.memory_space<vmem>>, vector<1x1x8x128xf32>
    %76 = vector.shape_cast %75 : vector<1x1x8x128xf32> to vector<8x128xf32>
    %cst_62 = arith.constant 0.006737947 : f32
    %77 = vector.broadcast %cst_62 : f32 to vector<8x128xf32>
    %78 = arith.mulf %77, %76 : vector<8x128xf32>
    %79 = arith.addf %69, %78 : vector<8x128xf32>
    %c0_63 = arith.constant 0 : index
    %c15 = arith.constant 15 : index
    %c0_64 = arith.constant 0 : index
    %c0_65 = arith.constant 0 : index
    %80 = vector.load %arg2[%c0_63, %c15, %c0_64, %c0_65] : memref<10x20x8x128xf32, #tpu.memory_space<vmem>>, vector<1x1x8x128xf32>
    %81 = vector.shape_cast %80 : vector<1x1x8x128xf32> to vector<8x128xf32>
    %cst_66 = arith.constant 0.0183156393 : f32
    %82 = vector.broadcast %cst_66 : f32 to vector<8x128xf32>
    %83 = arith.mulf %82, %81 : vector<8x128xf32>
    %84 = arith.addf %74, %83 : vector<8x128xf32>
    %c0_67 = arith.constant 0 : index
    %c16 = arith.constant 16 : index
    %c0_68 = arith.constant 0 : index
    %c0_69 = arith.constant 0 : index
    %85 = vector.load %arg2[%c0_67, %c16, %c0_68, %c0_69] : memref<10x20x8x128xf32, #tpu.memory_space<vmem>>, vector<1x1x8x128xf32>
    %86 = vector.shape_cast %85 : vector<1x1x8x128xf32> to vector<8x128xf32>
    %cst_70 = arith.constant 0.0497870669 : f32
    %87 = vector.broadcast %cst_70 : f32 to vector<8x128xf32>
    %88 = arith.mulf %87, %86 : vector<8x128xf32>
    %89 = arith.addf %79, %88 : vector<8x128xf32>
    %c0_71 = arith.constant 0 : index
    %c17 = arith.constant 17 : index
    %c0_72 = arith.constant 0 : index
    %c0_73 = arith.constant 0 : index
    %90 = vector.load %arg2[%c0_71, %c17, %c0_72, %c0_73] : memref<10x20x8x128xf32, #tpu.memory_space<vmem>>, vector<1x1x8x128xf32>
    %91 = vector.shape_cast %90 : vector<1x1x8x128xf32> to vector<8x128xf32>
    %cst_74 = arith.constant 0.135335281 : f32
    %92 = vector.broadcast %cst_74 : f32 to vector<8x128xf32>
    %93 = arith.mulf %92, %91 : vector<8x128xf32>
    %94 = arith.addf %84, %93 : vector<8x128xf32>
    %c0_75 = arith.constant 0 : index
    %c18 = arith.constant 18 : index
    %c0_76 = arith.constant 0 : index
    %c0_77 = arith.constant 0 : index
    %95 = vector.load %arg2[%c0_75, %c18, %c0_76, %c0_77] : memref<10x20x8x128xf32, #tpu.memory_space<vmem>>, vector<1x1x8x128xf32>
    %96 = vector.shape_cast %95 : vector<1x1x8x128xf32> to vector<8x128xf32>
    %cst_78 = arith.constant 0.36787945 : f32
    %97 = vector.broadcast %cst_78 : f32 to vector<8x128xf32>
    %98 = arith.mulf %97, %96 : vector<8x128xf32>
    %99 = arith.addf %89, %98 : vector<8x128xf32>
    %c0_79 = arith.constant 0 : index
    %c19 = arith.constant 19 : index
    %c0_80 = arith.constant 0 : index
    %c0_81 = arith.constant 0 : index
    %100 = vector.load %arg2[%c0_79, %c19, %c0_80, %c0_81] : memref<10x20x8x128xf32, #tpu.memory_space<vmem>>, vector<1x1x8x128xf32>
    %101 = vector.shape_cast %100 : vector<1x1x8x128xf32> to vector<8x128xf32>
    %cst_82 = arith.constant 1.000000e+00 : f32
    %102 = vector.broadcast %cst_82 : f32 to vector<8x128xf32>
    %103 = arith.mulf %102, %101 : vector<8x128xf32>
    %104 = arith.addf %94, %103 : vector<8x128xf32>
    %c0_83 = arith.constant 0 : index
    %c0_84 = arith.constant 0 : index
    %c0_85 = arith.constant 0 : index
    %105 = vector.load %arg12[%c0_83, %c0_84, %c0_85] : memref<10x8x128xf32, #tpu.memory_space<vmem>>, vector<1x8x128xf32>
    %106 = vector.shape_cast %105 : vector<1x8x128xf32> to vector<8x128xf32>
    %cst_86 = arith.constant -0.00617049029 : f32
    %107 = vector.broadcast %cst_86 : f32 to vector<8x128xf32>
    %108 = arith.mulf %107, %106 : vector<8x128xf32>
    %109 = arith.addf %99, %108 : vector<8x128xf32>
    %c1_87 = arith.constant 1 : index
    %c0_88 = arith.constant 0 : index
    %c0_89 = arith.constant 0 : index
    %110 = vector.load %arg12[%c1_87, %c0_88, %c0_89] : memref<10x8x128xf32, #tpu.memory_space<vmem>>, vector<1x8x128xf32>
    %111 = vector.shape_cast %110 : vector<1x8x128xf32> to vector<8x128xf32>
    %cst_90 = arith.constant -0.0167731307 : f32
    %112 = vector.broadcast %cst_90 : f32 to vector<8x128xf32>
    %113 = arith.mulf %112, %111 : vector<8x128xf32>
    %114 = arith.addf %104, %113 : vector<8x128xf32>
    %c2_91 = arith.constant 2 : index
    %c0_92 = arith.constant 0 : index
    %c0_93 = arith.constant 0 : index
    %115 = vector.load %arg12[%c2_91, %c0_92, %c0_93] : memref<10x8x128xf32, #tpu.memory_space<vmem>>, vector<1x8x128xf32>
    %116 = vector.shape_cast %115 : vector<1x8x128xf32> to vector<8x128xf32>
    %cst_94 = arith.constant -4.559410e-02 : f32
    %117 = vector.broadcast %cst_94 : f32 to vector<8x128xf32>
    %118 = arith.mulf %117, %116 : vector<8x128xf32>
    %119 = arith.addf %109, %118 : vector<8x128xf32>
    %c3_95 = arith.constant 3 : index
    %c0_96 = arith.constant 0 : index
    %c0_97 = arith.constant 0 : index
    %120 = vector.load %arg12[%c3_95, %c0_96, %c0_97] : memref<10x8x128xf32, #tpu.memory_space<vmem>>, vector<1x8x128xf32>
    %121 = vector.shape_cast %120 : vector<1x8x128xf32> to vector<8x128xf32>
    %cst_98 = arith.constant -0.123937607 : f32
    %122 = vector.broadcast %cst_98 : f32 to vector<8x128xf32>
    %123 = arith.mulf %122, %121 : vector<8x128xf32>
    %124 = arith.addf %114, %123 : vector<8x128xf32>
    %c4_99 = arith.constant 4 : index
    %c0_100 = arith.constant 0 : index
    %c0_101 = arith.constant 0 : index
    %125 = vector.load %arg12[%c4_99, %c0_100, %c0_101] : memref<10x8x128xf32, #tpu.memory_space<vmem>>, vector<1x8x128xf32>
    %126 = vector.shape_cast %125 : vector<1x8x128xf32> to vector<8x128xf32>
    %cst_102 = arith.constant -0.336897343 : f32
    %127 = vector.broadcast %cst_102 : f32 to vector<8x128xf32>
    %128 = arith.mulf %127, %126 : vector<8x128xf32>
    %129 = arith.addf %119, %128 : vector<8x128xf32>
    %c5_103 = arith.constant 5 : index
    %c0_104 = arith.constant 0 : index
    %c0_105 = arith.constant 0 : index
    %130 = vector.load %arg12[%c5_103, %c0_104, %c0_105] : memref<10x8x128xf32, #tpu.memory_space<vmem>>, vector<1x8x128xf32>
    %131 = vector.shape_cast %130 : vector<1x8x128xf32> to vector<8x128xf32>
    %cst_106 = arith.constant -0.915781915 : f32
    %132 = vector.broadcast %cst_106 : f32 to vector<8x128xf32>
    %133 = arith.mulf %132, %131 : vector<8x128xf32>
    %134 = arith.addf %124, %133 : vector<8x128xf32>
    %c6_107 = arith.constant 6 : index
    %c0_108 = arith.constant 0 : index
    %c0_109 = arith.constant 0 : index
    %135 = vector.load %arg12[%c6_107, %c0_108, %c0_109] : memref<10x8x128xf32, #tpu.memory_space<vmem>>, vector<1x8x128xf32>
    %136 = vector.shape_cast %135 : vector<1x8x128xf32> to vector<8x128xf32>
    %cst_110 = arith.constant -2.48935342 : f32
    %137 = vector.broadcast %cst_110 : f32 to vector<8x128xf32>
    %138 = arith.mulf %137, %136 : vector<8x128xf32>
    %139 = arith.addf %129, %138 : vector<8x128xf32>
    %c7_111 = arith.constant 7 : index
    %c0_112 = arith.constant 0 : index
    %c0_113 = arith.constant 0 : index
    %140 = vector.load %arg12[%c7_111, %c0_112, %c0_113] : memref<10x8x128xf32, #tpu.memory_space<vmem>>, vector<1x8x128xf32>
    %141 = vector.shape_cast %140 : vector<1x8x128xf32> to vector<8x128xf32>
    %cst_114 = arith.constant -6.76676416 : f32
    %142 = vector.broadcast %cst_114 : f32 to vector<8x128xf32>
    %143 = arith.mulf %142, %141 : vector<8x128xf32>
    %144 = arith.addf %134, %143 : vector<8x128xf32>
    %c8_115 = arith.constant 8 : index
    %c0_116 = arith.constant 0 : index
    %c0_117 = arith.constant 0 : index
    %145 = vector.load %arg12[%c8_115, %c0_116, %c0_117] : memref<10x8x128xf32, #tpu.memory_space<vmem>>, vector<1x8x128xf32>
    %146 = vector.shape_cast %145 : vector<1x8x128xf32> to vector<8x128xf32>
    %cst_118 = arith.constant -18.3939724 : f32
    %147 = vector.broadcast %cst_118 : f32 to vector<8x128xf32>
    %148 = arith.mulf %147, %146 : vector<8x128xf32>
    %149 = arith.addf %139, %148 : vector<8x128xf32>
    %c9_119 = arith.constant 9 : index
    %c0_120 = arith.constant 0 : index
    %c0_121 = arith.constant 0 : index
    %150 = vector.load %arg12[%c9_119, %c0_120, %c0_121] : memref<10x8x128xf32, #tpu.memory_space<vmem>>, vector<1x8x128xf32>
    %151 = vector.shape_cast %150 : vector<1x8x128xf32> to vector<8x128xf32>
    %cst_122 = arith.constant -5.000000e+01 : f32
    %152 = vector.broadcast %cst_122 : f32 to vector<8x128xf32>
    %153 = arith.mulf %152, %151 : vector<8x128xf32>
    %154 = arith.addf %144, %153 : vector<8x128xf32>
    %155 = arith.addf %149, %154 : vector<8x128xf32>
    %c0_123 = arith.constant 0 : index
    %c0_124 = arith.constant 0 : index
    %156 = vector.load %arg11[%c0_123, %c0_124] : memref<1x128xf32, #tpu.memory_space<vmem>>, vector<1x128xf32>
    %cst_125 = arith.constant 0.99999988 : f32
    %157 = vector.broadcast %cst_125 : f32 to vector<1x128xf32>
    %158 = arith.mulf %156, %157 : vector<1x128xf32>
    %cst_126 = arith.constant -5.200000e+01 : f32
    %159 = vector.broadcast %cst_126 : f32 to vector<1x128xf32>
    %160 = arith.addf %159, %158 : vector<1x128xf32>
    %161 = vector.broadcast %160 : vector<1x128xf32> to vector<8x128xf32>
    %162 = arith.cmpf oge, %155, %161 : vector<8x128xf32>
    %163 = arith.extui %162 : vector<8x128xi1> to vector<8x128xi32>
    %164 = arith.sitofp %163 : vector<8x128xi32> to vector<8x128xf32>
    %cst_127 = arith.constant dense<0.000000e+00> : vector<128xf32>
    %165 = vector.multi_reduction <add>, %164, %cst_127 [0] : vector<8x128xf32> to vector<128xf32>
    %166 = vector.shape_cast %165 : vector<128xf32> to vector<1x128xf32>
    %cst_128 = arith.constant 5.000000e-02 : f32
    %167 = vector.broadcast %cst_128 : f32 to vector<1x128xf32>
    %168 = arith.mulf %167, %166 : vector<1x128xf32>
    %169 = arith.addf %158, %168 : vector<1x128xf32>
    %c0_129 = arith.constant 0 : index
    %c0_130 = arith.constant 0 : index
    %170 = vector.load %arg10[%c0_129, %c0_130] : memref<8x128xf32, #tpu.memory_space<vmem>>, vector<8x128xf32>
    tpu.vector_store %arg10[%c0_129, %c0_130], %155 {strides = array<i32>} : memref<8x128xf32, #tpu.memory_space<vmem>>, vector<8x128xf32>,
    %c0_131 = arith.constant 0 : index
    %c0_132 = arith.constant 0 : index
    %171 = vector.load %arg11[%c0_131, %c0_132] : memref<1x128xf32, #tpu.memory_space<vmem>>, vector<1x128xf32>
    tpu.vector_store %arg11[%c0_131, %c0_132], %169 {strides = array<i32>} : memref<1x128xf32, #tpu.memory_space<vmem>>, vector<1x128xf32>,
    %c0_133 = arith.constant 0 : index
    %c0_134 = arith.constant 0 : index
    %c0_135 = arith.constant 0 : index
    %172 = vector.load %arg12[%c0_133, %c0_134, %c0_135] : memref<10x8x128xf32, #tpu.memory_space<vmem>>, vector<1x8x128xf32>
    %173 = vector.shape_cast %172 : vector<1x8x128xf32> to vector<8x128xf32>
    %174 = vector.shape_cast %164 : vector<8x128xf32> to vector<1x8x128xf32>
    tpu.vector_store %arg12[%c0_133, %c0_134, %c0_135], %174 {strides = array<i32>} : memref<10x8x128xf32, #tpu.memory_space<vmem>>, vector<1x8x128xf32>,
    %c0_136 = arith.constant 0 : index
    %c0_137 = arith.constant 0 : index
    %c0_138 = arith.constant 0 : index
    %175 = vector.load %arg7[%c0_136, %c0_137, %c0_138] : memref<10x8x128xf32, #tpu.memory_space<vmem>>, vector<1x8x128xf32>
    %176 = vector.shape_cast %175 : vector<1x8x128xf32> to vector<8x128xf32>
    %177 = vector.shape_cast %164 : vector<8x128xf32> to vector<1x8x128xf32>
    tpu.vector_store %arg7[%c0_136, %c0_137, %c0_138], %177 {strides = array<i32>} : memref<10x8x128xf32, #tpu.memory_space<vmem>>, vector<1x8x128xf32>,
    %c0_139 = arith.constant 0 : index
    %c0_140 = arith.constant 0 : index
    %178 = vector.load %arg10[%c0_139, %c0_140] : memref<8x128xf32, #tpu.memory_space<vmem>>, vector<8x128xf32>
    %cst_141 = arith.constant 0.990049839 : f32
    %179 = vector.broadcast %cst_141 : f32 to vector<8x128xf32>
    %180 = arith.mulf %178, %179 : vector<8x128xf32>
    %c1_142 = arith.constant 1 : index
    %c0_143 = arith.constant 0 : index
    %c0_144 = arith.constant 0 : index
    %c0_145 = arith.constant 0 : index
    %181 = vector.load %arg2[%c1_142, %c0_143, %c0_144, %c0_145] : memref<10x20x8x128xf32, #tpu.memory_space<vmem>>, vector<1x1x8x128xf32>
    %182 = vector.shape_cast %181 : vector<1x1x8x128xf32> to vector<8x128xf32>
    %cst_146 = arith.constant 5.60279644E-9 : f32
    %183 = vector.broadcast %cst_146 : f32 to vector<8x128xf32>
    %184 = arith.mulf %183, %182 : vector<8x128xf32>
    %c1_147 = arith.constant 1 : index
    %c1_148 = arith.constant 1 : index
    %c0_149 = arith.constant 0 : index
    %c0_150 = arith.constant 0 : index
    %185 = vector.load %arg2[%c1_147, %c1_148, %c0_149, %c0_150] : memref<10x20x8x128xf32, #tpu.memory_space<vmem>>, vector<1x1x8x128xf32>
    %186 = vector.shape_cast %185 : vector<1x1x8x128xf32> to vector<8x128xf32>
    %cst_151 = arith.constant 1.52299791E-8 : f32
    %187 = vector.broadcast %cst_151 : f32 to vector<8x128xf32>
    %188 = arith.mulf %187, %186 : vector<8x128xf32>
    %189 = arith.addf %184, %188 : vector<8x128xf32>
    %c1_152 = arith.constant 1 : index
    %c2_153 = arith.constant 2 : index
    %c0_154 = arith.constant 0 : index
    %c0_155 = arith.constant 0 : index
    %190 = vector.load %arg2[%c1_152, %c2_153, %c0_154, %c0_155] : memref<10x20x8x128xf32, #tpu.memory_space<vmem>>, vector<1x1x8x128xf32>
    %191 = vector.shape_cast %190 : vector<1x1x8x128xf32> to vector<8x128xf32>
    %cst_156 = arith.constant 4.13993781E-8 : f32
    %192 = vector.broadcast %cst_156 : f32 to vector<8x128xf32>
    %193 = arith.mulf %192, %191 : vector<8x128xf32>
    %194 = arith.addf %180, %193 : vector<8x128xf32>
    %c1_157 = arith.constant 1 : index
    %c3_158 = arith.constant 3 : index
    %c0_159 = arith.constant 0 : index
    %c0_160 = arith.constant 0 : index
    %195 = vector.load %arg2[%c1_157, %c3_158, %c0_159, %c0_160] : memref<10x20x8x128xf32, #tpu.memory_space<vmem>>, vector<1x1x8x128xf32>
    %196 = vector.shape_cast %195 : vector<1x1x8x128xf32> to vector<8x128xf32>
    %cst_161 = arith.constant 1.12535176E-7 : f32
    %197 = vector.broadcast %cst_161 : f32 to vector<8x128xf32>
    %198 = arith.mulf %197, %196 : vector<8x128xf32>
    %199 = arith.addf %189, %198 : vector<8x128xf32>
    %c1_162 = arith.constant 1 : index
    %c4_163 = arith.constant 4 : index
    %c0_164 = arith.constant 0 : index
    %c0_165 = arith.constant 0 : index
    %200 = vector.load %arg2[%c1_162, %c4_163, %c0_164, %c0_165] : memref<10x20x8x128xf32, #tpu.memory_space<vmem>>, vector<1x1x8x128xf32>
    %201 = vector.shape_cast %200 : vector<1x1x8x128xf32> to vector<8x128xf32>
    %cst_166 = arith.constant 3.05902319E-7 : f32
    %202 = vector.broadcast %cst_166 : f32 to vector<8x128xf32>
    %203 = arith.mulf %202, %201 : vector<8x128xf32>
    %204 = arith.addf %194, %203 : vector<8x128xf32>
    %c1_167 = arith.constant 1 : index
    %c5_168 = arith.constant 5 : index
    %c0_169 = arith.constant 0 : index
    %c0_170 = arith.constant 0 : index
    %205 = vector.load %arg2[%c1_167, %c5_168, %c0_169, %c0_170] : memref<10x20x8x128xf32, #tpu.memory_space<vmem>>, vector<1x1x8x128xf32>
    %206 = vector.shape_cast %205 : vector<1x1x8x128xf32> to vector<8x128xf32>
    %cst_171 = arith.constant 8.31528723E-7 : f32
    %207 = vector.broadcast %cst_171 : f32 to vector<8x128xf32>
    %208 = arith.mulf %207, %206 : vector<8x128xf32>
    %209 = arith.addf %199, %208 : vector<8x128xf32>
    %c1_172 = arith.constant 1 : index
    %c6_173 = arith.constant 6 : index
    %c0_174 = arith.constant 0 : index
    %c0_175 = arith.constant 0 : index
    %210 = vector.load %arg2[%c1_172, %c6_173, %c0_174, %c0_175] : memref<10x20x8x128xf32, #tpu.memory_space<vmem>>, vector<1x1x8x128xf32>
    %211 = vector.shape_cast %210 : vector<1x1x8x128xf32> to vector<8x128xf32>
    %cst_176 = arith.constant 2.26032944E-6 : f32
    %212 = vector.broadcast %cst_176 : f32 to vector<8x128xf32>
    %213 = arith.mulf %212, %211 : vector<8x128xf32>
    %214 = arith.addf %204, %213 : vector<8x128xf32>
    %c1_177 = arith.constant 1 : index
    %c7_178 = arith.constant 7 : index
    %c0_179 = arith.constant 0 : index
    %c0_180 = arith.constant 0 : index
    %215 = vector.load %arg2[%c1_177, %c7_178, %c0_179, %c0_180] : memref<10x20x8x128xf32, #tpu.memory_space<vmem>>, vector<1x1x8x128xf32>
    %216 = vector.shape_cast %215 : vector<1x1x8x128xf32> to vector<8x128xf32>
    %cst_181 = arith.constant 6.14421242E-6 : f32
    %217 = vector.broadcast %cst_181 : f32 to vector<8x128xf32>
    %218 = arith.mulf %217, %216 : vector<8x128xf32>
    %219 = arith.addf %209, %218 : vector<8x128xf32>
    %c1_182 = arith.constant 1 : index
    %c8_183 = arith.constant 8 : index
    %c0_184 = arith.constant 0 : index
    %c0_185 = arith.constant 0 : index
    %220 = vector.load %arg2[%c1_182, %c8_183, %c0_184, %c0_185] : memref<10x20x8x128xf32, #tpu.memory_space<vmem>>, vector<1x1x8x128xf32>
    %221 = vector.shape_cast %220 : vector<1x1x8x128xf32> to vector<8x128xf32>
    %cst_186 = arith.constant 1.670170e-05 : f32
    %222 = vector.broadcast %cst_186 : f32 to vector<8x128xf32>
    %223 = arith.mulf %222, %221 : vector<8x128xf32>
    %224 = arith.addf %214, %223 : vector<8x128xf32>
    %c1_187 = arith.constant 1 : index
    %c9_188 = arith.constant 9 : index
    %c0_189 = arith.constant 0 : index
    %c0_190 = arith.constant 0 : index
    %225 = vector.load %arg2[%c1_187, %c9_188, %c0_189, %c0_190] : memref<10x20x8x128xf32, #tpu.memory_space<vmem>>, vector<1x1x8x128xf32>
    %226 = vector.shape_cast %225 : vector<1x1x8x128xf32> to vector<8x128xf32>
    %cst_191 = arith.constant 4.5399931E-5 : f32
    %227 = vector.broadcast %cst_191 : f32 to vector<8x128xf32>
    %228 = arith.mulf %227, %226 : vector<8x128xf32>
    %229 = arith.addf %219, %228 : vector<8x128xf32>
    %c1_192 = arith.constant 1 : index
    %c10_193 = arith.constant 10 : index
    %c0_194 = arith.constant 0 : index
    %c0_195 = arith.constant 0 : index
    %230 = vector.load %arg2[%c1_192, %c10_193, %c0_194, %c0_195] : memref<10x20x8x128xf32, #tpu.memory_space<vmem>>, vector<1x1x8x128xf32>
    %231 = vector.shape_cast %230 : vector<1x1x8x128xf32> to vector<8x128xf32>
    %cst_196 = arith.constant 1.23409802E-4 : f32
    %232 = vector.broadcast %cst_196 : f32 to vector<8x128xf32>
    %233 = arith.mulf %232, %231 : vector<8x128xf32>
    %234 = arith.addf %224, %233 : vector<8x128xf32>
    %c1_197 = arith.constant 1 : index
    %c11_198 = arith.constant 11 : index
    %c0_199 = arith.constant 0 : index
    %c0_200 = arith.constant 0 : index
    %235 = vector.load %arg2[%c1_197, %c11_198, %c0_199, %c0_200] : memref<10x20x8x128xf32, #tpu.memory_space<vmem>>, vector<1x1x8x128xf32>
    %236 = vector.shape_cast %235 : vector<1x1x8x128xf32> to vector<8x128xf32>
    %cst_201 = arith.constant 3.35462624E-4 : f32
    %237 = vector.broadcast %cst_201 : f32 to vector<8x128xf32>
    %238 = arith.mulf %237, %236 : vector<8x128xf32>
    %239 = arith.addf %229, %238 : vector<8x128xf32>
    %c1_202 = arith.constant 1 : index
    %c12_203 = arith.constant 12 : index
    %c0_204 = arith.constant 0 : index
    %c0_205 = arith.constant 0 : index
    %240 = vector.load %arg2[%c1_202, %c12_203, %c0_204, %c0_205] : memref<10x20x8x128xf32, #tpu.memory_space<vmem>>, vector<1x1x8x128xf32>
    %241 = vector.shape_cast %240 : vector<1x1x8x128xf32> to vector<8x128xf32>
    %cst_206 = arith.constant 9.118820e-04 : f32
    %242 = vector.broadcast %cst_206 : f32 to vector<8x128xf32>
    %243 = arith.mulf %242, %241 : vector<8x128xf32>
    %244 = arith.addf %234, %243 : vector<8x128xf32>
    %c1_207 = arith.constant 1 : index
    %c13_208 = arith.constant 13 : index
    %c0_209 = arith.constant 0 : index
    %c0_210 = arith.constant 0 : index
    %245 = vector.load %arg2[%c1_207, %c13_208, %c0_209, %c0_210] : memref<10x20x8x128xf32, #tpu.memory_space<vmem>>, vector<1x1x8x128xf32>
    %246 = vector.shape_cast %245 : vector<1x1x8x128xf32> to vector<8x128xf32>
    %cst_211 = arith.constant 0.00247875229 : f32
    %247 = vector.broadcast %cst_211 : f32 to vector<8x128xf32>
    %248 = arith.mulf %247, %246 : vector<8x128xf32>
    %249 = arith.addf %239, %248 : vector<8x128xf32>
    %c1_212 = arith.constant 1 : index
    %c14_213 = arith.constant 14 : index
    %c0_214 = arith.constant 0 : index
    %c0_215 = arith.constant 0 : index
    %250 = vector.load %arg2[%c1_212, %c14_213, %c0_214, %c0_215] : memref<10x20x8x128xf32, #tpu.memory_space<vmem>>, vector<1x1x8x128xf32>
    %251 = vector.shape_cast %250 : vector<1x1x8x128xf32> to vector<8x128xf32>
    %cst_216 = arith.constant 0.006737947 : f32
    %252 = vector.broadcast %cst_216 : f32 to vector<8x128xf32>
    %253 = arith.mulf %252, %251 : vector<8x128xf32>
    %254 = arith.addf %244, %253 : vector<8x128xf32>
    %c1_217 = arith.constant 1 : index
    %c15_218 = arith.constant 15 : index
    %c0_219 = arith.constant 0 : index
    %c0_220 = arith.constant 0 : index
    %255 = vector.load %arg2[%c1_217, %c15_218, %c0_219, %c0_220] : memref<10x20x8x128xf32, #tpu.memory_space<vmem>>, vector<1x1x8x128xf32>
    %256 = vector.shape_cast %255 : vector<1x1x8x128xf32> to vector<8x128xf32>
    %cst_221 = arith.constant 0.0183156393 : f32
    %257 = vector.broadcast %cst_221 : f32 to vector<8x128xf32>
    %258 = arith.mulf %257, %256 : vector<8x128xf32>
    %259 = arith.addf %249, %258 : vector<8x128xf32>
    %c1_222 = arith.constant 1 : index
    %c16_223 = arith.constant 16 : index
    %c0_224 = arith.constant 0 : index
    %c0_225 = arith.constant 0 : index
    %260 = vector.load %arg2[%c1_222, %c16_223, %c0_224, %c0_225] : memref<10x20x8x128xf32, #tpu.memory_space<vmem>>, vector<1x1x8x128xf32>
    %261 = vector.shape_cast %260 : vector<1x1x8x128xf32> to vector<8x128xf32>
    %cst_226 = arith.constant 0.0497870669 : f32
    %262 = vector.broadcast %cst_226 : f32 to vector<8x128xf32>
    %263 = arith.mulf %262, %261 : vector<8x128xf32>
    %264 = arith.addf %254, %263 : vector<8x128xf32>
    %c1_227 = arith.constant 1 : index
    %c17_228 = arith.constant 17 : index
    %c0_229 = arith.constant 0 : index
    %c0_230 = arith.constant 0 : index
    %265 = vector.load %arg2[%c1_227, %c17_228, %c0_229, %c0_230] : memref<10x20x8x128xf32, #tpu.memory_space<vmem>>, vector<1x1x8x128xf32>
    %266 = vector.shape_cast %265 : vector<1x1x8x128xf32> to vector<8x128xf32>
    %cst_231 = arith.constant 0.135335281 : f32
    %267 = vector.broadcast %cst_231 : f32 to vector<8x128xf32>
    %268 = arith.mulf %267, %266 : vector<8x128xf32>
    %269 = arith.addf %259, %268 : vector<8x128xf32>
    %c1_232 = arith.constant 1 : index
    %c18_233 = arith.constant 18 : index
    %c0_234 = arith.constant 0 : index
    %c0_235 = arith.constant 0 : index
    %270 = vector.load %arg2[%c1_232, %c18_233, %c0_234, %c0_235] : memref<10x20x8x128xf32, #tpu.memory_space<vmem>>, vector<1x1x8x128xf32>
    %271 = vector.shape_cast %270 : vector<1x1x8x128xf32> to vector<8x128xf32>
    %cst_236 = arith.constant 0.36787945 : f32
    %272 = vector.broadcast %cst_236 : f32 to vector<8x128xf32>
    %273 = arith.mulf %272, %271 : vector<8x128xf32>
    %274 = arith.addf %264, %273 : vector<8x128xf32>
    %c1_237 = arith.constant 1 : index
    %c19_238 = arith.constant 19 : index
    %c0_239 = arith.constant 0 : index
    %c0_240 = arith.constant 0 : index
    %275 = vector.load %arg2[%c1_237, %c19_238, %c0_239, %c0_240] : memref<10x20x8x128xf32, #tpu.memory_space<vmem>>, vector<1x1x8x128xf32>
    %276 = vector.shape_cast %275 : vector<1x1x8x128xf32> to vector<8x128xf32>
    %cst_241 = arith.constant 1.000000e+00 : f32
    %277 = vector.broadcast %cst_241 : f32 to vector<8x128xf32>
    %278 = arith.mulf %277, %276 : vector<8x128xf32>
    %279 = arith.addf %269, %278 : vector<8x128xf32>
    %c0_242 = arith.constant 0 : index
    %c0_243 = arith.constant 0 : index
    %c0_244 = arith.constant 0 : index
    %280 = vector.load %arg12[%c0_242, %c0_243, %c0_244] : memref<10x8x128xf32, #tpu.memory_space<vmem>>, vector<1x8x128xf32>
    %281 = vector.shape_cast %280 : vector<1x8x128xf32> to vector<8x128xf32>
    %cst_245 = arith.constant -5.000000e+01 : f32
    %282 = vector.broadcast %cst_245 : f32 to vector<8x128xf32>
    %283 = arith.mulf %282, %281 : vector<8x128xf32>
    %284 = arith.addf %274, %283 : vector<8x128xf32>
    %c1_246 = arith.constant 1 : index
    %c0_247 = arith.constant 0 : index
    %c0_248 = arith.constant 0 : index
    %285 = vector.load %arg12[%c1_246, %c0_247, %c0_248] : memref<10x8x128xf32, #tpu.memory_space<vmem>>, vector<1x8x128xf32>
    %286 = vector.shape_cast %285 : vector<1x8x128xf32> to vector<8x128xf32>
    %cst_249 = arith.constant -0.00617049029 : f32
    %287 = vector.broadcast %cst_249 : f32 to vector<8x128xf32>
    %288 = arith.mulf %287, %286 : vector<8x128xf32>
    %289 = arith.addf %279, %288 : vector<8x128xf32>
    %c2_250 = arith.constant 2 : index
    %c0_251 = arith.constant 0 : index
    %c0_252 = arith.constant 0 : index
    %290 = vector.load %arg12[%c2_250, %c0_251, %c0_252] : memref<10x8x128xf32, #tpu.memory_space<vmem>>, vector<1x8x128xf32>
    %291 = vector.shape_cast %290 : vector<1x8x128xf32> to vector<8x128xf32>
    %cst_253 = arith.constant -0.0167731307 : f32
    %292 = vector.broadcast %cst_253 : f32 to vector<8x128xf32>
    %293 = arith.mulf %292, %291 : vector<8x128xf32>
    %294 = arith.addf %284, %293 : vector<8x128xf32>
    %c3_254 = arith.constant 3 : index
    %c0_255 = arith.constant 0 : index
    %c0_256 = arith.constant 0 : index
    %295 = vector.load %arg12[%c3_254, %c0_255, %c0_256] : memref<10x8x128xf32, #tpu.memory_space<vmem>>, vector<1x8x128xf32>
    %296 = vector.shape_cast %295 : vector<1x8x128xf32> to vector<8x128xf32>
    %cst_257 = arith.constant -4.559410e-02 : f32
    %297 = vector.broadcast %cst_257 : f32 to vector<8x128xf32>
    %298 = arith.mulf %297, %296 : vector<8x128xf32>
    %299 = arith.addf %289, %298 : vector<8x128xf32>
    %c4_258 = arith.constant 4 : index
    %c0_259 = arith.constant 0 : index
    %c0_260 = arith.constant 0 : index
    %300 = vector.load %arg12[%c4_258, %c0_259, %c0_260] : memref<10x8x128xf32, #tpu.memory_space<vmem>>, vector<1x8x128xf32>
    %301 = vector.shape_cast %300 : vector<1x8x128xf32> to vector<8x128xf32>
    %cst_261 = arith.constant -0.123937607 : f32
    %302 = vector.broadcast %cst_261 : f32 to vector<8x128xf32>
    %303 = arith.mulf %302, %301 : vector<8x128xf32>
    %304 = arith.addf %294, %303 : vector<8x128xf32>
    %c5_262 = arith.constant 5 : index
    %c0_263 = arith.constant 0 : index
    %c0_264 = arith.constant 0 : index
    %305 = vector.load %arg12[%c5_262, %c0_263, %c0_264] : memref<10x8x128xf32, #tpu.memory_space<vmem>>, vector<1x8x128xf32>
    %306 = vector.shape_cast %305 : vector<1x8x128xf32> to vector<8x128xf32>
    %cst_265 = arith.constant -0.336897343 : f32
    %307 = vector.broadcast %cst_265 : f32 to vector<8x128xf32>
    %308 = arith.mulf %307, %306 : vector<8x128xf32>
    %309 = arith.addf %299, %308 : vector<8x128xf32>
    %c6_266 = arith.constant 6 : index
    %c0_267 = arith.constant 0 : index
    %c0_268 = arith.constant 0 : index
    %310 = vector.load %arg12[%c6_266, %c0_267, %c0_268] : memref<10x8x128xf32, #tpu.memory_space<vmem>>, vector<1x8x128xf32>
    %311 = vector.shape_cast %310 : vector<1x8x128xf32> to vector<8x128xf32>
    %cst_269 = arith.constant -0.915781915 : f32
    %312 = vector.broadcast %cst_269 : f32 to vector<8x128xf32>
    %313 = arith.mulf %312, %311 : vector<8x128xf32>
    %314 = arith.addf %304, %313 : vector<8x128xf32>
    %c7_270 = arith.constant 7 : index
    %c0_271 = arith.constant 0 : index
    %c0_272 = arith.constant 0 : index
    %315 = vector.load %arg12[%c7_270, %c0_271, %c0_272] : memref<10x8x128xf32, #tpu.memory_space<vmem>>, vector<1x8x128xf32>
    %316 = vector.shape_cast %315 : vector<1x8x128xf32> to vector<8x128xf32>
    %cst_273 = arith.constant -2.48935342 : f32
    %317 = vector.broadcast %cst_273 : f32 to vector<8x128xf32>
    %318 = arith.mulf %317, %316 : vector<8x128xf32>
    %319 = arith.addf %309, %318 : vector<8x128xf32>
    %c8_274 = arith.constant 8 : index
    %c0_275 = arith.constant 0 : index
    %c0_276 = arith.constant 0 : index
    %320 = vector.load %arg12[%c8_274, %c0_275, %c0_276] : memref<10x8x128xf32, #tpu.memory_space<vmem>>, vector<1x8x128xf32>
    %321 = vector.shape_cast %320 : vector<1x8x128xf32> to vector<8x128xf32>
    %cst_277 = arith.constant -6.76676416 : f32
    %322 = vector.broadcast %cst_277 : f32 to vector<8x128xf32>
    %323 = arith.mulf %322, %321 : vector<8x128xf32>
    %324 = arith.addf %314, %323 : vector<8x128xf32>
    %c9_278 = arith.constant 9 : index
    %c0_279 = arith.constant 0 : index
    %c0_280 = arith.constant 0 : index
    %325 = vector.load %arg12[%c9_278, %c0_279, %c0_280] : memref<10x8x128xf32, #tpu.memory_space<vmem>>, vector<1x8x128xf32>
    %326 = vector.shape_cast %325 : vector<1x8x128xf32> to vector<8x128xf32>
    %cst_281 = arith.constant -18.3939724 : f32
    %327 = vector.broadcast %cst_281 : f32 to vector<8x128xf32>
    %328 = arith.mulf %327, %326 : vector<8x128xf32>
    %329 = arith.addf %319, %328 : vector<8x128xf32>
    %330 = arith.addf %324, %329 : vector<8x128xf32>
    %c0_282 = arith.constant 0 : index
    %c0_283 = arith.constant 0 : index
    %331 = vector.load %arg11[%c0_282, %c0_283] : memref<1x128xf32, #tpu.memory_space<vmem>>, vector<1x128xf32>
    %cst_284 = arith.constant 0.99999988 : f32
    %332 = vector.broadcast %cst_284 : f32 to vector<1x128xf32>
    %333 = arith.mulf %331, %332 : vector<1x128xf32>
    %cst_285 = arith.constant -5.200000e+01 : f32
    %334 = vector.broadcast %cst_285 : f32 to vector<1x128xf32>
    %335 = arith.addf %334, %333 : vector<1x128xf32>
    %336 = vector.broadcast %335 : vector<1x128xf32> to vector<8x128xf32>
    %337 = arith.cmpf oge, %330, %336 : vector<8x128xf32>
    %338 = arith.extui %337 : vector<8x128xi1> to vector<8x128xi32>
    %339 = arith.sitofp %338 : vector<8x128xi32> to vector<8x128xf32>
    %cst_286 = arith.constant dense<0.000000e+00> : vector<128xf32>
    %340 = vector.multi_reduction <add>, %339, %cst_286 [0] : vector<8x128xf32> to vector<128xf32>
    %341 = vector.shape_cast %340 : vector<128xf32> to vector<1x128xf32>
    %cst_287 = arith.constant 5.000000e-02 : f32
    %342 = vector.broadcast %cst_287 : f32 to vector<1x128xf32>
    %343 = arith.mulf %342, %341 : vector<1x128xf32>
    %344 = arith.addf %333, %343 : vector<1x128xf32>
    %c0_288 = arith.constant 0 : index
    %c0_289 = arith.constant 0 : index
    %345 = vector.load %arg10[%c0_288, %c0_289] : memref<8x128xf32, #tpu.memory_space<vmem>>, vector<8x128xf32>
    tpu.vector_store %arg10[%c0_288, %c0_289], %330 {strides = array<i32>} : memref<8x128xf32, #tpu.memory_space<vmem>>, vector<8x128xf32>,
    %c0_290 = arith.constant 0 : index
    %c0_291 = arith.constant 0 : index
    %346 = vector.load %arg11[%c0_290, %c0_291] : memref<1x128xf32, #tpu.memory_space<vmem>>, vector<1x128xf32>
    tpu.vector_store %arg11[%c0_290, %c0_291], %344 {strides = array<i32>} : memref<1x128xf32, #tpu.memory_space<vmem>>, vector<1x128xf32>,
    %c1_292 = arith.constant 1 : index
    %c0_293 = arith.constant 0 : index
    %c0_294 = arith.constant 0 : index
    %347 = vector.load %arg12[%c1_292, %c0_293, %c0_294] : memref<10x8x128xf32, #tpu.memory_space<vmem>>, vector<1x8x128xf32>
    %348 = vector.shape_cast %347 : vector<1x8x128xf32> to vector<8x128xf32>
    %349 = vector.shape_cast %339 : vector<8x128xf32> to vector<1x8x128xf32>
    tpu.vector_store %arg12[%c1_292, %c0_293, %c0_294], %349 {strides = array<i32>} : memref<10x8x128xf32, #tpu.memory_space<vmem>>, vector<1x8x128xf32>,
    %c1_295 = arith.constant 1 : index
    %c0_296 = arith.constant 0 : index
    %c0_297 = arith.constant 0 : index
    %350 = vector.load %arg7[%c1_295, %c0_296, %c0_297] : memref<10x8x128xf32, #tpu.memory_space<vmem>>, vector<1x8x128xf32>
    %351 = vector.shape_cast %350 : vector<1x8x128xf32> to vector<8x128xf32>
    %352 = vector.shape_cast %339 : vector<8x128xf32> to vector<1x8x128xf32>
    tpu.vector_store %arg7[%c1_295, %c0_296, %c0_297], %352 {strides = array<i32>} : memref<10x8x128xf32, #tpu.memory_space<vmem>>, vector<1x8x128xf32>,
    %c0_298 = arith.constant 0 : index
    %c0_299 = arith.constant 0 : index
    %353 = vector.load %arg10[%c0_298, %c0_299] : memref<8x128xf32, #tpu.memory_space<vmem>>, vector<8x128xf32>
    %cst_300 = arith.constant 0.990049839 : f32
    %354 = vector.broadcast %cst_300 : f32 to vector<8x128xf32>
    %355 = arith.mulf %353, %354 : vector<8x128xf32>
    %c2_301 = arith.constant 2 : index
    %c0_302 = arith.constant 0 : index
    %c0_303 = arith.constant 0 : index
    %c0_304 = arith.constant 0 : index
    %356 = vector.load %arg2[%c2_301, %c0_302, %c0_303, %c0_304] : memref<10x20x8x128xf32, #tpu.memory_space<vmem>>, vector<1x1x8x128xf32>
    %357 = vector.shape_cast %356 : vector<1x1x8x128xf32> to vector<8x128xf32>
    %cst_305 = arith.constant 5.60279644E-9 : f32
    %358 = vector.broadcast %cst_305 : f32 to vector<8x128xf32>
    %359 = arith.mulf %358, %357 : vector<8x128xf32>
    %c2_306 = arith.constant 2 : index
    %c1_307 = arith.constant 1 : index
    %c0_308 = arith.constant 0 : index
    %c0_309 = arith.constant 0 : index
    %360 = vector.load %arg2[%c2_306, %c1_307, %c0_308, %c0_309] : memref<10x20x8x128xf32, #tpu.memory_space<vmem>>, vector<1x1x8x128xf32>
    %361 = vector.shape_cast %360 : vector<1x1x8x128xf32> to vector<8x128xf32>
    %cst_310 = arith.constant 1.52299791E-8 : f32
    %362 = vector.broadcast %cst_310 : f32 to vector<8x128xf32>
    %363 = arith.mulf %362, %361 : vector<8x128xf32>
    %364 = arith.addf %359, %363 : vector<8x128xf32>
    %c2_311 = arith.constant 2 : index
    %c2_312 = arith.constant 2 : index
    %c0_313 = arith.constant 0 : index
    %c0_314 = arith.constant 0 : index
    %365 = vector.load %arg2[%c2_311, %c2_312, %c0_313, %c0_314] : memref<10x20x8x128xf32, #tpu.memory_space<vmem>>, vector<1x1x8x128xf32>
    %366 = vector.shape_cast %365 : vector<1x1x8x128xf32> to vector<8x128xf32>
    %cst_315 = arith.constant 4.13993781E-8 : f32
    %367 = vector.broadcast %cst_315 : f32 to vector<8x128xf32>
    %368 = arith.mulf %367, %366 : vector<8x128xf32>
    %369 = arith.addf %355, %368 : vector<8x128xf32>
    %c2_316 = arith.constant 2 : index
    %c3_317 = arith.constant 3 : index
    %c0_318 = arith.constant 0 : index
    %c0_319 = arith.constant 0 : index
    %370 = vector.load %arg2[%c2_316, %c3_317, %c0_318, %c0_319] : memref<10x20x8x128xf32, #tpu.memory_space<vmem>>, vector<1x1x8x128xf32>
    %371 = vector.shape_cast %370 : vector<1x1x8x128xf32> to vector<8x128xf32>
    %cst_320 = arith.constant 1.12535176E-7 : f32
    %372 = vector.broadcast %cst_320 : f32 to vector<8x128xf32>
    %373 = arith.mulf %372, %371 : vector<8x128xf32>
    %374 = arith.addf %364, %373 : vector<8x128xf32>
    %c2_321 = arith.constant 2 : index
    %c4_322 = arith.constant 4 : index
    %c0_323 = arith.constant 0 : index
    %c0_324 = arith.constant 0 : index
    %375 = vector.load %arg2[%c2_321, %c4_322, %c0_323, %c0_324] : memref<10x20x8x128xf32, #tpu.memory_space<vmem>>, vector<1x1x8x128xf32>
    %376 = vector.shape_cast %375 : vector<1x1x8x128xf32> to vector<8x128xf32>
    %cst_325 = arith.constant 3.05902319E-7 : f32
    %377 = vector.broadcast %cst_325 : f32 to vector<8x128xf32>
    %378 = arith.mulf %377, %376 : vector<8x128xf32>
    %379 = arith.addf %369, %378 : vector<8x128xf32>
    %c2_326 = arith.constant 2 : index
    %c5_327 = arith.constant 5 : index
    %c0_328 = arith.constant 0 : index
    %c0_329 = arith.constant 0 : index
    %380 = vector.load %arg2[%c2_326, %c5_327, %c0_328, %c0_329] : memref<10x20x8x128xf32, #tpu.memory_space<vmem>>, vector<1x1x8x128xf32>
    %381 = vector.shape_cast %380 : vector<1x1x8x128xf32> to vector<8x128xf32>
    %cst_330 = arith.constant 8.31528723E-7 : f32
    %382 = vector.broadcast %cst_330 : f32 to vector<8x128xf32>
    %383 = arith.mulf %382, %381 : vector<8x128xf32>
    %384 = arith.addf %374, %383 : vector<8x128xf32>
    %c2_331 = arith.constant 2 : index
    %c6_332 = arith.constant 6 : index
    %c0_333 = arith.constant 0 : index
    %c0_334 = arith.constant 0 : index
    %385 = vector.load %arg2[%c2_331, %c6_332, %c0_333, %c0_334] : memref<10x20x8x128xf32, #tpu.memory_space<vmem>>, vector<1x1x8x128xf32>
    %386 = vector.shape_cast %385 : vector<1x1x8x128xf32> to vector<8x128xf32>
    %cst_335 = arith.constant 2.26032944E-6 : f32
    %387 = vector.broadcast %cst_335 : f32 to vector<8x128xf32>
    %388 = arith.mulf %387, %386 : vector<8x128xf32>
    %389 = arith.addf %379, %388 : vector<8x128xf32>
    %c2_336 = arith.constant 2 : index
    %c7_337 = arith.constant 7 : index
    %c0_338 = arith.constant 0 : index
    %c0_339 = arith.constant 0 : index
    %390 = vector.load %arg2[%c2_336, %c7_337, %c0_338, %c0_339] : memref<10x20x8x128xf32, #tpu.memory_space<vmem>>, vector<1x1x8x128xf32>
    %391 = vector.shape_cast %390 : vector<1x1x8x128xf32> to vector<8x128xf32>
    %cst_340 = arith.constant 6.14421242E-6 : f32
    %392 = vector.broadcast %cst_340 : f32 to vector<8x128xf32>
    %393 = arith.mulf %392, %391 : vector<8x128xf32>
    %394 = arith.addf %384, %393 : vector<8x128xf32>
    %c2_341 = arith.constant 2 : index
    %c8_342 = arith.constant 8 : index
    %c0_343 = arith.constant 0 : index
    %c0_344 = arith.constant 0 : index
    %395 = vector.load %arg2[%c2_341, %c8_342, %c0_343, %c0_344] : memref<10x20x8x128xf32, #tpu.memory_space<vmem>>, vector<1x1x8x128xf32>
    %396 = vector.shape_cast %395 : vector<1x1x8x128xf32> to vector<8x128xf32>
    %cst_345 = arith.constant 1.670170e-05 : f32
    %397 = vector.broadcast %cst_345 : f32 to vector<8x128xf32>
    %398 = arith.mulf %397, %396 : vector<8x128xf32>
    %399 = arith.addf %389, %398 : vector<8x128xf32>
    %c2_346 = arith.constant 2 : index
    %c9_347 = arith.constant 9 : index
    %c0_348 = arith.constant 0 : index
    %c0_349 = arith.constant 0 : index
    %400 = vector.load %arg2[%c2_346, %c9_347, %c0_348, %c0_349] : memref<10x20x8x128xf32, #tpu.memory_space<vmem>>, vector<1x1x8x128xf32>
    %401 = vector.shape_cast %400 : vector<1x1x8x128xf32> to vector<8x128xf32>
    %cst_350 = arith.constant 4.5399931E-5 : f32
    %402 = vector.broadcast %cst_350 : f32 to vector<8x128xf32>
    %403 = arith.mulf %402, %401 : vector<8x128xf32>
    %404 = arith.addf %394, %403 : vector<8x128xf32>
    %c2_351 = arith.constant 2 : index
    %c10_352 = arith.constant 10 : index
    %c0_353 = arith.constant 0 : index
    %c0_354 = arith.constant 0 : index
    %405 = vector.load %arg2[%c2_351, %c10_352, %c0_353, %c0_354] : memref<10x20x8x128xf32, #tpu.memory_space<vmem>>, vector<1x1x8x128xf32>
    %406 = vector.shape_cast %405 : vector<1x1x8x128xf32> to vector<8x128xf32>
    %cst_355 = arith.constant 1.23409802E-4 : f32
    %407 = vector.broadcast %cst_355 : f32 to vector<8x128xf32>
    %408 = arith.mulf %407, %406 : vector<8x128xf32>
    %409 = arith.addf %399, %408 : vector<8x128xf32>
    %c2_356 = arith.constant 2 : index
    %c11_357 = arith.constant 11 : index
    %c0_358 = arith.constant 0 : index
    %c0_359 = arith.constant 0 : index
    %410 = vector.load %arg2[%c2_356, %c11_357, %c0_358, %c0_359] : memref<10x20x8x128xf32, #tpu.memory_space<vmem>>, vector<1x1x8x128xf32>
    %411 = vector.shape_cast %410 : vector<1x1x8x128xf32> to vector<8x128xf32>
    %cst_360 = arith.constant 3.35462624E-4 : f32
    %412 = vector.broadcast %cst_360 : f32 to vector<8x128xf32>
    %413 = arith.mulf %412, %411 : vector<8x128xf32>
    %414 = arith.addf %404, %413 : vector<8x128xf32>
    %c2_361 = arith.constant 2 : index
    %c12_362 = arith.constant 12 : index
    %c0_363 = arith.constant 0 : index
    %c0_364 = arith.constant 0 : index
    %415 = vector.load %arg2[%c2_361, %c12_362, %c0_363, %c0_364] : memref<10x20x8x128xf32, #tpu.memory_space<vmem>>, vector<1x1x8x128xf32>
    %416 = vector.shape_cast %415 : vector<1x1x8x128xf32> to vector<8x128xf32>
    %cst_365 = arith.constant 9.118820e-04 : f32
    %417 = vector.broadcast %cst_365 : f32 to vector<8x128xf32>
    %418 = arith.mulf %417, %416 : vector<8x128xf32>
    %419 = arith.addf %409, %418 : vector<8x128xf32>
    %c2_366 = arith.constant 2 : index
    %c13_367 = arith.constant 13 : index
    %c0_368 = arith.constant 0 : index
    %c0_369 = arith.constant 0 : index
    %420 = vector.load %arg2[%c2_366, %c13_367, %c0_368, %c0_369] : memref<10x20x8x128xf32, #tpu.memory_space<vmem>>, vector<1x1x8x128xf32>
    %421 = vector.shape_cast %420 : vector<1x1x8x128xf32> to vector<8x128xf32>
    %cst_370 = arith.constant 0.00247875229 : f32
    %422 = vector.broadcast %cst_370 : f32 to vector<8x128xf32>
    %423 = arith.mulf %422, %421 : vector<8x128xf32>
    %424 = arith.addf %414, %423 : vector<8x128xf32>
    %c2_371 = arith.constant 2 : index
    %c14_372 = arith.constant 14 : index
    %c0_373 = arith.constant 0 : index
    %c0_374 = arith.constant 0 : index
    %425 = vector.load %arg2[%c2_371, %c14_372, %c0_373, %c0_374] : memref<10x20x8x128xf32, #tpu.memory_space<vmem>>, vector<1x1x8x128xf32>
    %426 = vector.shape_cast %425 : vector<1x1x8x128xf32> to vector<8x128xf32>
    %cst_375 = arith.constant 0.006737947 : f32
    %427 = vector.broadcast %cst_375 : f32 to vector<8x128xf32>
    %428 = arith.mulf %427, %426 : vector<8x128xf32>
    %429 = arith.addf %419, %428 : vector<8x128xf32>
    %c2_376 = arith.constant 2 : index
    %c15_377 = arith.constant 15 : index
    %c0_378 = arith.constant 0 : index
    %c0_379 = arith.constant 0 : index
    %430 = vector.load %arg2[%c2_376, %c15_377, %c0_378, %c0_379] : memref<10x20x8x128xf32, #tpu.memory_space<vmem>>, vector<1x1x8x128xf32>
    %431 = vector.shape_cast %430 : vector<1x1x8x128xf32> to vector<8x128xf32>
    %cst_380 = arith.constant 0.0183156393 : f32
    %432 = vector.broadcast %cst_380 : f32 to vector<8x128xf32>
    %433 = arith.mulf %432, %431 : vector<8x128xf32>
    %434 = arith.addf %424, %433 : vector<8x128xf32>
    %c2_381 = arith.constant 2 : index
    %c16_382 = arith.constant 16 : index
    %c0_383 = arith.constant 0 : index
    %c0_384 = arith.constant 0 : index
    %435 = vector.load %arg2[%c2_381, %c16_382, %c0_383, %c0_384] : memref<10x20x8x128xf32, #tpu.memory_space<vmem>>, vector<1x1x8x128xf32>
    %436 = vector.shape_cast %435 : vector<1x1x8x128xf32> to vector<8x128xf32>
    %cst_385 = arith.constant 0.0497870669 : f32
    %437 = vector.broadcast %cst_385 : f32 to vector<8x128xf32>
    %438 = arith.mulf %437, %436 : vector<8x128xf32>
    %439 = arith.addf %429, %438 : vector<8x128xf32>
    %c2_386 = arith.constant 2 : index
    %c17_387 = arith.constant 17 : index
    %c0_388 = arith.constant 0 : index
    %c0_389 = arith.constant 0 : index
    %440 = vector.load %arg2[%c2_386, %c17_387, %c0_388, %c0_389] : memref<10x20x8x128xf32, #tpu.memory_space<vmem>>, vector<1x1x8x128xf32>
    %441 = vector.shape_cast %440 : vector<1x1x8x128xf32> to vector<8x128xf32>
    %cst_390 = arith.constant 0.135335281 : f32
    %442 = vector.broadcast %cst_390 : f32 to vector<8x128xf32>
    %443 = arith.mulf %442, %441 : vector<8x128xf32>
    %444 = arith.addf %434, %443 : vector<8x128xf32>
    %c2_391 = arith.constant 2 : index
    %c18_392 = arith.constant 18 : index
    %c0_393 = arith.constant 0 : index
    %c0_394 = arith.constant 0 : index
    %445 = vector.load %arg2[%c2_391, %c18_392, %c0_393, %c0_394] : memref<10x20x8x128xf32, #tpu.memory_space<vmem>>, vector<1x1x8x128xf32>
    %446 = vector.shape_cast %445 : vector<1x1x8x128xf32> to vector<8x128xf32>
    %cst_395 = arith.constant 0.36787945 : f32
    %447 = vector.broadcast %cst_395 : f32 to vector<8x128xf32>
    %448 = arith.mulf %447, %446 : vector<8x128xf32>
    %449 = arith.addf %439, %448 : vector<8x128xf32>
    %c2_396 = arith.constant 2 : index
    %c19_397 = arith.constant 19 : index
    %c0_398 = arith.constant 0 : index
    %c0_399 = arith.constant 0 : index
    %450 = vector.load %arg2[%c2_396, %c19_397, %c0_398, %c0_399] : memref<10x20x8x128xf32, #tpu.memory_space<vmem>>, vector<1x1x8x128xf32>
    %451 = vector.shape_cast %450 : vector<1x1x8x128xf32> to vector<8x128xf32>
    %cst_400 = arith.constant 1.000000e+00 : f32
    %452 = vector.broadcast %cst_400 : f32 to vector<8x128xf32>
    %453 = arith.mulf %452, %451 : vector<8x128xf32>
    %454 = arith.addf %444, %453 : vector<8x128xf32>
    %c0_401 = arith.constant 0 : index
    %c0_402 = arith.constant 0 : index
    %c0_403 = arith.constant 0 : index
    %455 = vector.load %arg12[%c0_401, %c0_402, %c0_403] : memref<10x8x128xf32, #tpu.memory_space<vmem>>, vector<1x8x128xf32>
    %456 = vector.shape_cast %455 : vector<1x8x128xf32> to vector<8x128xf32>
    %cst_404 = arith.constant -18.3939724 : f32
    %457 = vector.broadcast %cst_404 : f32 to vector<8x128xf32>
    %458 = arith.mulf %457, %456 : vector<8x128xf32>
    %459 = arith.addf %449, %458 : vector<8x128xf32>
    %c1_405 = arith.constant 1 : index
    %c0_406 = arith.constant 0 : index
    %c0_407 = arith.constant 0 : index
    %460 = vector.load %arg12[%c1_405, %c0_406, %c0_407] : memref<10x8x128xf32, #tpu.memory_space<vmem>>, vector<1x8x128xf32>
    %461 = vector.shape_cast %460 : vector<1x8x128xf32> to vector<8x128xf32>
    %cst_408 = arith.constant -5.000000e+01 : f32
    %462 = vector.broadcast %cst_408 : f32 to vector<8x128xf32>
    %463 = arith.mulf %462, %461 : vector<8x128xf32>
    %464 = arith.addf %454, %463 : vector<8x128xf32>
    %c2_409 = arith.constant 2 : index
    %c0_410 = arith.constant 0 : index
    %c0_411 = arith.constant 0 : index
    %465 = vector.load %arg12[%c2_409, %c0_410, %c0_411] : memref<10x8x128xf32, #tpu.memory_space<vmem>>, vector<1x8x128xf32>
    %466 = vector.shape_cast %465 : vector<1x8x128xf32> to vector<8x128xf32>
    %cst_412 = arith.constant -0.00617049029 : f32
    %467 = vector.broadcast %cst_412 : f32 to vector<8x128xf32>
    %468 = arith.mulf %467, %466 : vector<8x128xf32>
    %469 = arith.addf %459, %468 : vector<8x128xf32>
    %c3_413 = arith.constant 3 : index
    %c0_414 = arith.constant 0 : index
    %c0_415 = arith.constant 0 : index
    %470 = vector.load %arg12[%c3_413, %c0_414, %c0_415] : memref<10x8x128xf32, #tpu.memory_space<vmem>>, vector<1x8x128xf32>
    %471 = vector.shape_cast %470 : vector<1x8x128xf32> to vector<8x128xf32>
    %cst_416 = arith.constant -0.0167731307 : f32
    %472 = vector.broadcast %cst_416 : f32 to vector<8x128xf32>
    %473 = arith.mulf %472, %471 : vector<8x128xf32>
    %474 = arith.addf %464, %473 : vector<8x128xf32>
    %c4_417 = arith.constant 4 : index
    %c0_418 = arith.constant 0 : index
    %c0_419 = arith.constant 0 : index
    %475 = vector.load %arg12[%c4_417, %c0_418, %c0_419] : memref<10x8x128xf32, #tpu.memory_space<vmem>>, vector<1x8x128xf32>
    %476 = vector.shape_cast %475 : vector<1x8x128xf32> to vector<8x128xf32>
    %cst_420 = arith.constant -4.559410e-02 : f32
    %477 = vector.broadcast %cst_420 : f32 to vector<8x128xf32>
    %478 = arith.mulf %477, %476 : vector<8x128xf32>
    %479 = arith.addf %469, %478 : vector<8x128xf32>
    %c5_421 = arith.constant 5 : index
    %c0_422 = arith.constant 0 : index
    %c0_423 = arith.constant 0 : index
    %480 = vector.load %arg12[%c5_421, %c0_422, %c0_423] : memref<10x8x128xf32, #tpu.memory_space<vmem>>, vector<1x8x128xf32>
    %481 = vector.shape_cast %480 : vector<1x8x128xf32> to vector<8x128xf32>
    %cst_424 = arith.constant -0.123937607 : f32
    %482 = vector.broadcast %cst_424 : f32 to vector<8x128xf32>
    %483 = arith.mulf %482, %481 : vector<8x128xf32>
    %484 = arith.addf %474, %483 : vector<8x128xf32>
    %c6_425 = arith.constant 6 : index
    %c0_426 = arith.constant 0 : index
    %c0_427 = arith.constant 0 : index
    %485 = vector.load %arg12[%c6_425, %c0_426, %c0_427] : memref<10x8x128xf32, #tpu.memory_space<vmem>>, vector<1x8x128xf32>
    %486 = vector.shape_cast %485 : vector<1x8x128xf32> to vector<8x128xf32>
    %cst_428 = arith.constant -0.336897343 : f32
    %487 = vector.broadcast %cst_428 : f32 to vector<8x128xf32>
    %488 = arith.mulf %487, %486 : vector<8x128xf32>
    %489 = arith.addf %479, %488 : vector<8x128xf32>
    %c7_429 = arith.constant 7 : index
    %c0_430 = arith.constant 0 : index
    %c0_431 = arith.constant 0 : index
    %490 = vector.load %arg12[%c7_429, %c0_430, %c0_431] : memref<10x8x128xf32, #tpu.memory_space<vmem>>, vector<1x8x128xf32>
    %491 = vector.shape_cast %490 : vector<1x8x128xf32> to vector<8x128xf32>
    %cst_432 = arith.constant -0.915781915 : f32
    %492 = vector.broadcast %cst_432 : f32 to vector<8x128xf32>
    %493 = arith.mulf %492, %491 : vector<8x128xf32>
    %494 = arith.addf %484, %493 : vector<8x128xf32>
    %c8_433 = arith.constant 8 : index
    %c0_434 = arith.constant 0 : index
    %c0_435 = arith.constant 0 : index
    %495 = vector.load %arg12[%c8_433, %c0_434, %c0_435] : memref<10x8x128xf32, #tpu.memory_space<vmem>>, vector<1x8x128xf32>
    %496 = vector.shape_cast %495 : vector<1x8x128xf32> to vector<8x128xf32>
    %cst_436 = arith.constant -2.48935342 : f32
    %497 = vector.broadcast %cst_436 : f32 to vector<8x128xf32>
    %498 = arith.mulf %497, %496 : vector<8x128xf32>
    %499 = arith.addf %489, %498 : vector<8x128xf32>
    %c9_437 = arith.constant 9 : index
    %c0_438 = arith.constant 0 : index
    %c0_439 = arith.constant 0 : index
    %500 = vector.load %arg12[%c9_437, %c0_438, %c0_439] : memref<10x8x128xf32, #tpu.memory_space<vmem>>, vector<1x8x128xf32>
    %501 = vector.shape_cast %500 : vector<1x8x128xf32> to vector<8x128xf32>
    %cst_440 = arith.constant -6.76676416 : f32
    %502 = vector.broadcast %cst_440 : f32 to vector<8x128xf32>
    %503 = arith.mulf %502, %501 : vector<8x128xf32>
    %504 = arith.addf %494, %503 : vector<8x128xf32>
    %505 = arith.addf %499, %504 : vector<8x128xf32>
    %c0_441 = arith.constant 0 : index
    %c0_442 = arith.constant 0 : index
    %506 = vector.load %arg11[%c0_441, %c0_442] : memref<1x128xf32, #tpu.memory_space<vmem>>, vector<1x128xf32>
    %cst_443 = arith.constant 0.99999988 : f32
    %507 = vector.broadcast %cst_443 : f32 to vector<1x128xf32>
    %508 = arith.mulf %506, %507 : vector<1x128xf32>
    %cst_444 = arith.constant -5.200000e+01 : f32
    %509 = vector.broadcast %cst_444 : f32 to vector<1x128xf32>
    %510 = arith.addf %509, %508 : vector<1x128xf32>
    %511 = vector.broadcast %510 : vector<1x128xf32> to vector<8x128xf32>
    %512 = arith.cmpf oge, %505, %511 : vector<8x128xf32>
    %513 = arith.extui %512 : vector<8x128xi1> to vector<8x128xi32>
    %514 = arith.sitofp %513 : vector<8x128xi32> to vector<8x128xf32>
    %cst_445 = arith.constant dense<0.000000e+00> : vector<128xf32>
    %515 = vector.multi_reduction <add>, %514, %cst_445 [0] : vector<8x128xf32> to vector<128xf32>
    %516 = vector.shape_cast %515 : vector<128xf32> to vector<1x128xf32>
    %cst_446 = arith.constant 5.000000e-02 : f32
    %517 = vector.broadcast %cst_446 : f32 to vector<1x128xf32>
    %518 = arith.mulf %517, %516 : vector<1x128xf32>
    %519 = arith.addf %508, %518 : vector<1x128xf32>
    %c0_447 = arith.constant 0 : index
    %c0_448 = arith.constant 0 : index
    %520 = vector.load %arg10[%c0_447, %c0_448] : memref<8x128xf32, #tpu.memory_space<vmem>>, vector<8x128xf32>
    tpu.vector_store %arg10[%c0_447, %c0_448], %505 {strides = array<i32>} : memref<8x128xf32, #tpu.memory_space<vmem>>, vector<8x128xf32>,
    %c0_449 = arith.constant 0 : index
    %c0_450 = arith.constant 0 : index
    %521 = vector.load %arg11[%c0_449, %c0_450] : memref<1x128xf32, #tpu.memory_space<vmem>>, vector<1x128xf32>
    tpu.vector_store %arg11[%c0_449, %c0_450], %519 {strides = array<i32>} : memref<1x128xf32, #tpu.memory_space<vmem>>, vector<1x128xf32>,
    %c2_451 = arith.constant 2 : index
    %c0_452 = arith.constant 0 : index
    %c0_453 = arith.constant 0 : index
    %522 = vector.load %arg12[%c2_451, %c0_452, %c0_453] : memref<10x8x128xf32, #tpu.memory_space<vmem>>, vector<1x8x128xf32>
    %523 = vector.shape_cast %522 : vector<1x8x128xf32> to vector<8x128xf32>
    %524 = vector.shape_cast %514 : vector<8x128xf32> to vector<1x8x128xf32>
    tpu.vector_store %arg12[%c2_451, %c0_452, %c0_453], %524 {strides = array<i32>} : memref<10x8x128xf32, #tpu.memory_space<vmem>>, vector<1x8x128xf32>,
    %c2_454 = arith.constant 2 : index
    %c0_455 = arith.constant 0 : index
    %c0_456 = arith.constant 0 : index
    %525 = vector.load %arg7[%c2_454, %c0_455, %c0_456] : memref<10x8x128xf32, #tpu.memory_space<vmem>>, vector<1x8x128xf32>
    %526 = vector.shape_cast %525 : vector<1x8x128xf32> to vector<8x128xf32>
    %527 = vector.shape_cast %514 : vector<8x128xf32> to vector<1x8x128xf32>
    tpu.vector_store %arg7[%c2_454, %c0_455, %c0_456], %527 {strides = array<i32>} : memref<10x8x128xf32, #tpu.memory_space<vmem>>, vector<1x8x128xf32>,
    %c0_457 = arith.constant 0 : index
    %c0_458 = arith.constant 0 : index
    %528 = vector.load %arg10[%c0_457, %c0_458] : memref<8x128xf32, #tpu.memory_space<vmem>>, vector<8x128xf32>
    %cst_459 = arith.constant 0.990049839 : f32
    %529 = vector.broadcast %cst_459 : f32 to vector<8x128xf32>
    %530 = arith.mulf %528, %529 : vector<8x128xf32>
    %c3_460 = arith.constant 3 : index
    %c0_461 = arith.constant 0 : index
    %c0_462 = arith.constant 0 : index
    %c0_463 = arith.constant 0 : index
    %531 = vector.load %arg2[%c3_460, %c0_461, %c0_462, %c0_463] : memref<10x20x8x128xf32, #tpu.memory_space<vmem>>, vector<1x1x8x128xf32>
    %532 = vector.shape_cast %531 : vector<1x1x8x128xf32> to vector<8x128xf32>
    %cst_464 = arith.constant 5.60279644E-9 : f32
    %533 = vector.broadcast %cst_464 : f32 to vector<8x128xf32>
    %534 = arith.mulf %533, %532 : vector<8x128xf32>
    %c3_465 = arith.constant 3 : index
    %c1_466 = arith.constant 1 : index
    %c0_467 = arith.constant 0 : index
    %c0_468 = arith.constant 0 : index
    %535 = vector.load %arg2[%c3_465, %c1_466, %c0_467, %c0_468] : memref<10x20x8x128xf32, #tpu.memory_space<vmem>>, vector<1x1x8x128xf32>
    %536 = vector.shape_cast %535 : vector<1x1x8x128xf32> to vector<8x128xf32>
    %cst_469 = arith.constant 1.52299791E-8 : f32
    %537 = vector.broadcast %cst_469 : f32 to vector<8x128xf32>
    %538 = arith.mulf %537, %536 : vector<8x128xf32>
    %539 = arith.addf %534, %538 : vector<8x128xf32>
    %c3_470 = arith.constant 3 : index
    %c2_471 = arith.constant 2 : index
    %c0_472 = arith.constant 0 : index
    %c0_473 = arith.constant 0 : index
    %540 = vector.load %arg2[%c3_470, %c2_471, %c0_472, %c0_473] : memref<10x20x8x128xf32, #tpu.memory_space<vmem>>, vector<1x1x8x128xf32>
    %541 = vector.shape_cast %540 : vector<1x1x8x128xf32> to vector<8x128xf32>
    %cst_474 = arith.constant 4.13993781E-8 : f32
    %542 = vector.broadcast %cst_474 : f32 to vector<8x128xf32>
    %543 = arith.mulf %542, %541 : vector<8x128xf32>
    %544 = arith.addf %530, %543 : vector<8x128xf32>
    %c3_475 = arith.constant 3 : index
    %c3_476 = arith.constant 3 : index
    %c0_477 = arith.constant 0 : index
    %c0_478 = arith.constant 0 : index
    %545 = vector.load %arg2[%c3_475, %c3_476, %c0_477, %c0_478] : memref<10x20x8x128xf32, #tpu.memory_space<vmem>>, vector<1x1x8x128xf32>
    %546 = vector.shape_cast %545 : vector<1x1x8x128xf32> to vector<8x128xf32>
    %cst_479 = arith.constant 1.12535176E-7 : f32
    %547 = vector.broadcast %cst_479 : f32 to vector<8x128xf32>
    %548 = arith.mulf %547, %546 : vector<8x128xf32>
    %549 = arith.addf %539, %548 : vector<8x128xf32>
    %c3_480 = arith.constant 3 : index
    %c4_481 = arith.constant 4 : index
    %c0_482 = arith.constant 0 : index
    %c0_483 = arith.constant 0 : index
    %550 = vector.load %arg2[%c3_480, %c4_481, %c0_482, %c0_483] : memref<10x20x8x128xf32, #tpu.memory_space<vmem>>, vector<1x1x8x128xf32>
    %551 = vector.shape_cast %550 : vector<1x1x8x128xf32> to vector<8x128xf32>
    %cst_484 = arith.constant 3.05902319E-7 : f32
    %552 = vector.broadcast %cst_484 : f32 to vector<8x128xf32>
    %553 = arith.mulf %552, %551 : vector<8x128xf32>
    %554 = arith.addf %544, %553 : vector<8x128xf32>
    %c3_485 = arith.constant 3 : index
    %c5_486 = arith.constant 5 : index
    %c0_487 = arith.constant 0 : index
    %c0_488 = arith.constant 0 : index
    %555 = vector.load %arg2[%c3_485, %c5_486, %c0_487, %c0_488] : memref<10x20x8x128xf32, #tpu.memory_space<vmem>>, vector<1x1x8x128xf32>
    %556 = vector.shape_cast %555 : vector<1x1x8x128xf32> to vector<8x128xf32>
    %cst_489 = arith.constant 8.31528723E-7 : f32
    %557 = vector.broadcast %cst_489 : f32 to vector<8x128xf32>
    %558 = arith.mulf %557, %556 : vector<8x128xf32>
    %559 = arith.addf %549, %558 : vector<8x128xf32>
    %c3_490 = arith.constant 3 : index
    %c6_491 = arith.constant 6 : index
    %c0_492 = arith.constant 0 : index
    %c0_493 = arith.constant 0 : index
    %560 = vector.load %arg2[%c3_490, %c6_491, %c0_492, %c0_493] : memref<10x20x8x128xf32, #tpu.memory_space<vmem>>, vector<1x1x8x128xf32>
    %561 = vector.shape_cast %560 : vector<1x1x8x128xf32> to vector<8x128xf32>
    %cst_494 = arith.constant 2.26032944E-6 : f32
    %562 = vector.broadcast %cst_494 : f32 to vector<8x128xf32>
    %563 = arith.mulf %562, %561 : vector<8x128xf32>
    %564 = arith.addf %554, %563 : vector<8x128xf32>
    %c3_495 = arith.constant 3 : index
    %c7_496 = arith.constant 7 : index
    %c0_497 = arith.constant 0 : index
    %c0_498 = arith.constant 0 : index
    %565 = vector.load %arg2[%c3_495, %c7_496, %c0_497, %c0_498] : memref<10x20x8x128xf32, #tpu.memory_space<vmem>>, vector<1x1x8x128xf32>
    %566 = vector.shape_cast %565 : vector<1x1x8x128xf32> to vector<8x128xf32>
    %cst_499 = arith.constant 6.14421242E-6 : f32
    %567 = vector.broadcast %cst_499 : f32 to vector<8x128xf32>
    %568 = arith.mulf %567, %566 : vector<8x128xf32>
    %569 = arith.addf %559, %568 : vector<8x128xf32>
    %c3_500 = arith.constant 3 : index
    %c8_501 = arith.constant 8 : index
    %c0_502 = arith.constant 0 : index
    %c0_503 = arith.constant 0 : index
    %570 = vector.load %arg2[%c3_500, %c8_501, %c0_502, %c0_503] : memref<10x20x8x128xf32, #tpu.memory_space<vmem>>, vector<1x1x8x128xf32>
    %571 = vector.shape_cast %570 : vector<1x1x8x128xf32> to vector<8x128xf32>
    %cst_504 = arith.constant 1.670170e-05 : f32
    %572 = vector.broadcast %cst_504 : f32 to vector<8x128xf32>
    %573 = arith.mulf %572, %571 : vector<8x128xf32>
    %574 = arith.addf %564, %573 : vector<8x128xf32>
    %c3_505 = arith.constant 3 : index
    %c9_506 = arith.constant 9 : index
    %c0_507 = arith.constant 0 : index
    %c0_508 = arith.constant 0 : index
    %575 = vector.load %arg2[%c3_505, %c9_506, %c0_507, %c0_508] : memref<10x20x8x128xf32, #tpu.memory_space<vmem>>, vector<1x1x8x128xf32>
    %576 = vector.shape_cast %575 : vector<1x1x8x128xf32> to vector<8x128xf32>
    %cst_509 = arith.constant 4.5399931E-5 : f32
    %577 = vector.broadcast %cst_509 : f32 to vector<8x128xf32>
    %578 = arith.mulf %577, %576 : vector<8x128xf32>
    %579 = arith.addf %569, %578 : vector<8x128xf32>
    %c3_510 = arith.constant 3 : index
    %c10_511 = arith.constant 10 : index
    %c0_512 = arith.constant 0 : index
    %c0_513 = arith.constant 0 : index
    %580 = vector.load %arg2[%c3_510, %c10_511, %c0_512, %c0_513] : memref<10x20x8x128xf32, #tpu.memory_space<vmem>>, vector<1x1x8x128xf32>
    %581 = vector.shape_cast %580 : vector<1x1x8x128xf32> to vector<8x128xf32>
    %cst_514 = arith.constant 1.23409802E-4 : f32
    %582 = vector.broadcast %cst_514 : f32 to vector<8x128xf32>
    %583 = arith.mulf %582, %581 : vector<8x128xf32>
    %584 = arith.addf %574, %583 : vector<8x128xf32>
    %c3_515 = arith.constant 3 : index
    %c11_516 = arith.constant 11 : index
    %c0_517 = arith.constant 0 : index
    %c0_518 = arith.constant 0 : index
    %585 = vector.load %arg2[%c3_515, %c11_516, %c0_517, %c0_518] : memref<10x20x8x128xf32, #tpu.memory_space<vmem>>, vector<1x1x8x128xf32>
    %586 = vector.shape_cast %585 : vector<1x1x8x128xf32> to vector<8x128xf32>
    %cst_519 = arith.constant 3.35462624E-4 : f32
    %587 = vector.broadcast %cst_519 : f32 to vector<8x128xf32>
    %588 = arith.mulf %587, %586 : vector<8x128xf32>
    %589 = arith.addf %579, %588 : vector<8x128xf32>
    %c3_520 = arith.constant 3 : index
    %c12_521 = arith.constant 12 : index
    %c0_522 = arith.constant 0 : index
    %c0_523 = arith.constant 0 : index
    %590 = vector.load %arg2[%c3_520, %c12_521, %c0_522, %c0_523] : memref<10x20x8x128xf32, #tpu.memory_space<vmem>>, vector<1x1x8x128xf32>
    %591 = vector.shape_cast %590 : vector<1x1x8x128xf32> to vector<8x128xf32>
    %cst_524 = arith.constant 9.118820e-04 : f32
    %592 = vector.broadcast %cst_524 : f32 to vector<8x128xf32>
    %593 = arith.mulf %592, %591 : vector<8x128xf32>
    %594 = arith.addf %584, %593 : vector<8x128xf32>
    %c3_525 = arith.constant 3 : index
    %c13_526 = arith.constant 13 : index
    %c0_527 = arith.constant 0 : index
    %c0_528 = arith.constant 0 : index
    %595 = vector.load %arg2[%c3_525, %c13_526, %c0_527, %c0_528] : memref<10x20x8x128xf32, #tpu.memory_space<vmem>>, vector<1x1x8x128xf32>
    %596 = vector.shape_cast %595 : vector<1x1x8x128xf32> to vector<8x128xf32>
    %cst_529 = arith.constant 0.00247875229 : f32
    %597 = vector.broadcast %cst_529 : f32 to vector<8x128xf32>
    %598 = arith.mulf %597, %596 : vector<8x128xf32>
    %599 = arith.addf %589, %598 : vector<8x128xf32>
    %c3_530 = arith.constant 3 : index
    %c14_531 = arith.constant 14 : index
    %c0_532 = arith.constant 0 : index
    %c0_533 = arith.constant 0 : index
    %600 = vector.load %arg2[%c3_530, %c14_531, %c0_532, %c0_533] : memref<10x20x8x128xf32, #tpu.memory_space<vmem>>, vector<1x1x8x128xf32>
    %601 = vector.shape_cast %600 : vector<1x1x8x128xf32> to vector<8x128xf32>
    %cst_534 = arith.constant 0.006737947 : f32
    %602 = vector.broadcast %cst_534 : f32 to vector<8x128xf32>
    %603 = arith.mulf %602, %601 : vector<8x128xf32>
    %604 = arith.addf %594, %603 : vector<8x128xf32>
    %c3_535 = arith.constant 3 : index
    %c15_536 = arith.constant 15 : index
    %c0_537 = arith.constant 0 : index
    %c0_538 = arith.constant 0 : index
    %605 = vector.load %arg2[%c3_535, %c15_536, %c0_537, %c0_538] : memref<10x20x8x128xf32, #tpu.memory_space<vmem>>, vector<1x1x8x128xf32>
    %606 = vector.shape_cast %605 : vector<1x1x8x128xf32> to vector<8x128xf32>
    %cst_539 = arith.constant 0.0183156393 : f32
    %607 = vector.broadcast %cst_539 : f32 to vector<8x128xf32>
    %608 = arith.mulf %607, %606 : vector<8x128xf32>
    %609 = arith.addf %599, %608 : vector<8x128xf32>
    %c3_540 = arith.constant 3 : index
    %c16_541 = arith.constant 16 : index
    %c0_542 = arith.constant 0 : index
    %c0_543 = arith.constant 0 : index
    %610 = vector.load %arg2[%c3_540, %c16_541, %c0_542, %c0_543] : memref<10x20x8x128xf32, #tpu.memory_space<vmem>>, vector<1x1x8x128xf32>
    %611 = vector.shape_cast %610 : vector<1x1x8x128xf32> to vector<8x128xf32>
    %cst_544 = arith.constant 0.0497870669 : f32
    %612 = vector.broadcast %cst_544 : f32 to vector<8x128xf32>
    %613 = arith.mulf %612, %611 : vector<8x128xf32>
    %614 = arith.addf %604, %613 : vector<8x128xf32>
    %c3_545 = arith.constant 3 : index
    %c17_546 = arith.constant 17 : index
    %c0_547 = arith.constant 0 : index
    %c0_548 = arith.constant 0 : index
    %615 = vector.load %arg2[%c3_545, %c17_546, %c0_547, %c0_548] : memref<10x20x8x128xf32, #tpu.memory_space<vmem>>, vector<1x1x8x128xf32>
    %616 = vector.shape_cast %615 : vector<1x1x8x128xf32> to vector<8x128xf32>
    %cst_549 = arith.constant 0.135335281 : f32
    %617 = vector.broadcast %cst_549 : f32 to vector<8x128xf32>
    %618 = arith.mulf %617, %616 : vector<8x128xf32>
    %619 = arith.addf %609, %618 : vector<8x128xf32>
    %c3_550 = arith.constant 3 : index
    %c18_551 = arith.constant 18 : index
    %c0_552 = arith.constant 0 : index
    %c0_553 = arith.constant 0 : index
    %620 = vector.load %arg2[%c3_550, %c18_551, %c0_552, %c0_553] : memref<10x20x8x128xf32, #tpu.memory_space<vmem>>, vector<1x1x8x128xf32>
    %621 = vector.shape_cast %620 : vector<1x1x8x128xf32> to vector<8x128xf32>
    %cst_554 = arith.constant 0.36787945 : f32
    %622 = vector.broadcast %cst_554 : f32 to vector<8x128xf32>
    %623 = arith.mulf %622, %621 : vector<8x128xf32>
    %624 = arith.addf %614, %623 : vector<8x128xf32>
    %c3_555 = arith.constant 3 : index
    %c19_556 = arith.constant 19 : index
    %c0_557 = arith.constant 0 : index
    %c0_558 = arith.constant 0 : index
    %625 = vector.load %arg2[%c3_555, %c19_556, %c0_557, %c0_558] : memref<10x20x8x128xf32, #tpu.memory_space<vmem>>, vector<1x1x8x128xf32>
    %626 = vector.shape_cast %625 : vector<1x1x8x128xf32> to vector<8x128xf32>
    %cst_559 = arith.constant 1.000000e+00 : f32
    %627 = vector.broadcast %cst_559 : f32 to vector<8x128xf32>
    %628 = arith.mulf %627, %626 : vector<8x128xf32>
    %629 = arith.addf %619, %628 : vector<8x128xf32>
    %c0_560 = arith.constant 0 : index
    %c0_561 = arith.constant 0 : index
    %c0_562 = arith.constant 0 : index
    %630 = vector.load %arg12[%c0_560, %c0_561, %c0_562] : memref<10x8x128xf32, #tpu.memory_space<vmem>>, vector<1x8x128xf32>
    %631 = vector.shape_cast %630 : vector<1x8x128xf32> to vector<8x128xf32>
    %cst_563 = arith.constant -6.76676416 : f32
    %632 = vector.broadcast %cst_563 : f32 to vector<8x128xf32>
    %633 = arith.mulf %632, %631 : vector<8x128xf32>
    %634 = arith.addf %624, %633 : vector<8x128xf32>
    %c1_564 = arith.constant 1 : index
    %c0_565 = arith.constant 0 : index
    %c0_566 = arith.constant 0 : index
    %635 = vector.load %arg12[%c1_564, %c0_565, %c0_566] : memref<10x8x128xf32, #tpu.memory_space<vmem>>, vector<1x8x128xf32>
    %636 = vector.shape_cast %635 : vector<1x8x128xf32> to vector<8x128xf32>
    %cst_567 = arith.constant -18.3939724 : f32
    %637 = vector.broadcast %cst_567 : f32 to vector<8x128xf32>
    %638 = arith.mulf %637, %636 : vector<8x128xf32>
    %639 = arith.addf %629, %638 : vector<8x128xf32>
    %c2_568 = arith.constant 2 : index
    %c0_569 = arith.constant 0 : index
    %c0_570 = arith.constant 0 : index
    %640 = vector.load %arg12[%c2_568, %c0_569, %c0_570] : memref<10x8x128xf32, #tpu.memory_space<vmem>>, vector<1x8x128xf32>
    %641 = vector.shape_cast %640 : vector<1x8x128xf32> to vector<8x128xf32>
    %cst_571 = arith.constant -5.000000e+01 : f32
    %642 = vector.broadcast %cst_571 : f32 to vector<8x128xf32>
    %643 = arith.mulf %642, %641 : vector<8x128xf32>
    %644 = arith.addf %634, %643 : vector<8x128xf32>
    %c3_572 = arith.constant 3 : index
    %c0_573 = arith.constant 0 : index
    %c0_574 = arith.constant 0 : index
    %645 = vector.load %arg12[%c3_572, %c0_573, %c0_574] : memref<10x8x128xf32, #tpu.memory_space<vmem>>, vector<1x8x128xf32>
    %646 = vector.shape_cast %645 : vector<1x8x128xf32> to vector<8x128xf32>
    %cst_575 = arith.constant -0.00617049029 : f32
    %647 = vector.broadcast %cst_575 : f32 to vector<8x128xf32>
    %648 = arith.mulf %647, %646 : vector<8x128xf32>
    %649 = arith.addf %639, %648 : vector<8x128xf32>
    %c4_576 = arith.constant 4 : index
    %c0_577 = arith.constant 0 : index
    %c0_578 = arith.constant 0 : index
    %650 = vector.load %arg12[%c4_576, %c0_577, %c0_578] : memref<10x8x128xf32, #tpu.memory_space<vmem>>, vector<1x8x128xf32>
    %651 = vector.shape_cast %650 : vector<1x8x128xf32> to vector<8x128xf32>
    %cst_579 = arith.constant -0.0167731307 : f32
    %652 = vector.broadcast %cst_579 : f32 to vector<8x128xf32>
    %653 = arith.mulf %652, %651 : vector<8x128xf32>
    %654 = arith.addf %644, %653 : vector<8x128xf32>
    %c5_580 = arith.constant 5 : index
    %c0_581 = arith.constant 0 : index
    %c0_582 = arith.constant 0 : index
    %655 = vector.load %arg12[%c5_580, %c0_581, %c0_582] : memref<10x8x128xf32, #tpu.memory_space<vmem>>, vector<1x8x128xf32>
    %656 = vector.shape_cast %655 : vector<1x8x128xf32> to vector<8x128xf32>
    %cst_583 = arith.constant -4.559410e-02 : f32
    %657 = vector.broadcast %cst_583 : f32 to vector<8x128xf32>
    %658 = arith.mulf %657, %656 : vector<8x128xf32>
    %659 = arith.addf %649, %658 : vector<8x128xf32>
    %c6_584 = arith.constant 6 : index
    %c0_585 = arith.constant 0 : index
    %c0_586 = arith.constant 0 : index
    %660 = vector.load %arg12[%c6_584, %c0_585, %c0_586] : memref<10x8x128xf32, #tpu.memory_space<vmem>>, vector<1x8x128xf32>
    %661 = vector.shape_cast %660 : vector<1x8x128xf32> to vector<8x128xf32>
    %cst_587 = arith.constant -0.123937607 : f32
    %662 = vector.broadcast %cst_587 : f32 to vector<8x128xf32>
    %663 = arith.mulf %662, %661 : vector<8x128xf32>
    %664 = arith.addf %654, %663 : vector<8x128xf32>
    %c7_588 = arith.constant 7 : index
    %c0_589 = arith.constant 0 : index
    %c0_590 = arith.constant 0 : index
    %665 = vector.load %arg12[%c7_588, %c0_589, %c0_590] : memref<10x8x128xf32, #tpu.memory_space<vmem>>, vector<1x8x128xf32>
    %666 = vector.shape_cast %665 : vector<1x8x128xf32> to vector<8x128xf32>
    %cst_591 = arith.constant -0.336897343 : f32
    %667 = vector.broadcast %cst_591 : f32 to vector<8x128xf32>
    %668 = arith.mulf %667, %666 : vector<8x128xf32>
    %669 = arith.addf %659, %668 : vector<8x128xf32>
    %c8_592 = arith.constant 8 : index
    %c0_593 = arith.constant 0 : index
    %c0_594 = arith.constant 0 : index
    %670 = vector.load %arg12[%c8_592, %c0_593, %c0_594] : memref<10x8x128xf32, #tpu.memory_space<vmem>>, vector<1x8x128xf32>
    %671 = vector.shape_cast %670 : vector<1x8x128xf32> to vector<8x128xf32>
    %cst_595 = arith.constant -0.915781915 : f32
    %672 = vector.broadcast %cst_595 : f32 to vector<8x128xf32>
    %673 = arith.mulf %672, %671 : vector<8x128xf32>
    %674 = arith.addf %664, %673 : vector<8x128xf32>
    %c9_596 = arith.constant 9 : index
    %c0_597 = arith.constant 0 : index
    %c0_598 = arith.constant 0 : index
    %675 = vector.load %arg12[%c9_596, %c0_597, %c0_598] : memref<10x8x128xf32, #tpu.memory_space<vmem>>, vector<1x8x128xf32>
    %676 = vector.shape_cast %675 : vector<1x8x128xf32> to vector<8x128xf32>
    %cst_599 = arith.constant -2.48935342 : f32
    %677 = vector.broadcast %cst_599 : f32 to vector<8x128xf32>
    %678 = arith.mulf %677, %676 : vector<8x128xf32>
    %679 = arith.addf %669, %678 : vector<8x128xf32>
    %680 = arith.addf %674, %679 : vector<8x128xf32>
    %c0_600 = arith.constant 0 : index
    %c0_601 = arith.constant 0 : index
    %681 = vector.load %arg11[%c0_600, %c0_601] : memref<1x128xf32, #tpu.memory_space<vmem>>, vector<1x128xf32>
    %cst_602 = arith.constant 0.99999988 : f32
    %682 = vector.broadcast %cst_602 : f32 to vector<1x128xf32>
    %683 = arith.mulf %681, %682 : vector<1x128xf32>
    %cst_603 = arith.constant -5.200000e+01 : f32
    %684 = vector.broadcast %cst_603 : f32 to vector<1x128xf32>
    %685 = arith.addf %684, %683 : vector<1x128xf32>
    %686 = vector.broadcast %685 : vector<1x128xf32> to vector<8x128xf32>
    %687 = arith.cmpf oge, %680, %686 : vector<8x128xf32>
    %688 = arith.extui %687 : vector<8x128xi1> to vector<8x128xi32>
    %689 = arith.sitofp %688 : vector<8x128xi32> to vector<8x128xf32>
    %cst_604 = arith.constant dense<0.000000e+00> : vector<128xf32>
    %690 = vector.multi_reduction <add>, %689, %cst_604 [0] : vector<8x128xf32> to vector<128xf32>
    %691 = vector.shape_cast %690 : vector<128xf32> to vector<1x128xf32>
    %cst_605 = arith.constant 5.000000e-02 : f32
    %692 = vector.broadcast %cst_605 : f32 to vector<1x128xf32>
    %693 = arith.mulf %692, %691 : vector<1x128xf32>
    %694 = arith.addf %683, %693 : vector<1x128xf32>
    %c0_606 = arith.constant 0 : index
    %c0_607 = arith.constant 0 : index
    %695 = vector.load %arg10[%c0_606, %c0_607] : memref<8x128xf32, #tpu.memory_space<vmem>>, vector<8x128xf32>
    tpu.vector_store %arg10[%c0_606, %c0_607], %680 {strides = array<i32>} : memref<8x128xf32, #tpu.memory_space<vmem>>, vector<8x128xf32>,
    %c0_608 = arith.constant 0 : index
    %c0_609 = arith.constant 0 : index
    %696 = vector.load %arg11[%c0_608, %c0_609] : memref<1x128xf32, #tpu.memory_space<vmem>>, vector<1x128xf32>
    tpu.vector_store %arg11[%c0_608, %c0_609], %694 {strides = array<i32>} : memref<1x128xf32, #tpu.memory_space<vmem>>, vector<1x128xf32>,
    %c3_610 = arith.constant 3 : index
    %c0_611 = arith.constant 0 : index
    %c0_612 = arith.constant 0 : index
    %697 = vector.load %arg12[%c3_610, %c0_611, %c0_612] : memref<10x8x128xf32, #tpu.memory_space<vmem>>, vector<1x8x128xf32>
    %698 = vector.shape_cast %697 : vector<1x8x128xf32> to vector<8x128xf32>
    %699 = vector.shape_cast %689 : vector<8x128xf32> to vector<1x8x128xf32>
    tpu.vector_store %arg12[%c3_610, %c0_611, %c0_612], %699 {strides = array<i32>} : memref<10x8x128xf32, #tpu.memory_space<vmem>>, vector<1x8x128xf32>,
    %c3_613 = arith.constant 3 : index
    %c0_614 = arith.constant 0 : index
    %c0_615 = arith.constant 0 : index
    %700 = vector.load %arg7[%c3_613, %c0_614, %c0_615] : memref<10x8x128xf32, #tpu.memory_space<vmem>>, vector<1x8x128xf32>
    %701 = vector.shape_cast %700 : vector<1x8x128xf32> to vector<8x128xf32>
    %702 = vector.shape_cast %689 : vector<8x128xf32> to vector<1x8x128xf32>
    tpu.vector_store %arg7[%c3_613, %c0_614, %c0_615], %702 {strides = array<i32>} : memref<10x8x128xf32, #tpu.memory_space<vmem>>, vector<1x8x128xf32>,
    %c0_616 = arith.constant 0 : index
    %c0_617 = arith.constant 0 : index
    %703 = vector.load %arg10[%c0_616, %c0_617] : memref<8x128xf32, #tpu.memory_space<vmem>>, vector<8x128xf32>
    %cst_618 = arith.constant 0.990049839 : f32
    %704 = vector.broadcast %cst_618 : f32 to vector<8x128xf32>
    %705 = arith.mulf %703, %704 : vector<8x128xf32>
    %c4_619 = arith.constant 4 : index
    %c0_620 = arith.constant 0 : index
    %c0_621 = arith.constant 0 : index
    %c0_622 = arith.constant 0 : index
    %706 = vector.load %arg2[%c4_619, %c0_620, %c0_621, %c0_622] : memref<10x20x8x128xf32, #tpu.memory_space<vmem>>, vector<1x1x8x128xf32>
    %707 = vector.shape_cast %706 : vector<1x1x8x128xf32> to vector<8x128xf32>
    %cst_623 = arith.constant 5.60279644E-9 : f32
    %708 = vector.broadcast %cst_623 : f32 to vector<8x128xf32>
    %709 = arith.mulf %708, %707 : vector<8x128xf32>
    %c4_624 = arith.constant 4 : index
    %c1_625 = arith.constant 1 : index
    %c0_626 = arith.constant 0 : index
    %c0_627 = arith.constant 0 : index
    %710 = vector.load %arg2[%c4_624, %c1_625, %c0_626, %c0_627] : memref<10x20x8x128xf32, #tpu.memory_space<vmem>>, vector<1x1x8x128xf32>
    %711 = vector.shape_cast %710 : vector<1x1x8x128xf32> to vector<8x128xf32>
    %cst_628 = arith.constant 1.52299791E-8 : f32
    %712 = vector.broadcast %cst_628 : f32 to vector<8x128xf32>
    %713 = arith.mulf %712, %711 : vector<8x128xf32>
    %714 = arith.addf %709, %713 : vector<8x128xf32>
    %c4_629 = arith.constant 4 : index
    %c2_630 = arith.constant 2 : index
    %c0_631 = arith.constant 0 : index
    %c0_632 = arith.constant 0 : index
    %715 = vector.load %arg2[%c4_629, %c2_630, %c0_631, %c0_632] : memref<10x20x8x128xf32, #tpu.memory_space<vmem>>, vector<1x1x8x128xf32>
    %716 = vector.shape_cast %715 : vector<1x1x8x128xf32> to vector<8x128xf32>
    %cst_633 = arith.constant 4.13993781E-8 : f32
    %717 = vector.broadcast %cst_633 : f32 to vector<8x128xf32>
    %718 = arith.mulf %717, %716 : vector<8x128xf32>
    %719 = arith.addf %705, %718 : vector<8x128xf32>
    %c4_634 = arith.constant 4 : index
    %c3_635 = arith.constant 3 : index
    %c0_636 = arith.constant 0 : index
    %c0_637 = arith.constant 0 : index
    %720 = vector.load %arg2[%c4_634, %c3_635, %c0_636, %c0_637] : memref<10x20x8x128xf32, #tpu.memory_space<vmem>>, vector<1x1x8x128xf32>
    %721 = vector.shape_cast %720 : vector<1x1x8x128xf32> to vector<8x128xf32>
    %cst_638 = arith.constant 1.12535176E-7 : f32
    %722 = vector.broadcast %cst_638 : f32 to vector<8x128xf32>
    %723 = arith.mulf %722, %721 : vector<8x128xf32>
    %724 = arith.addf %714, %723 : vector<8x128xf32>
    %c4_639 = arith.constant 4 : index
    %c4_640 = arith.constant 4 : index
    %c0_641 = arith.constant 0 : index
    %c0_642 = arith.constant 0 : index
    %725 = vector.load %arg2[%c4_639, %c4_640, %c0_641, %c0_642] : memref<10x20x8x128xf32, #tpu.memory_space<vmem>>, vector<1x1x8x128xf32>
    %726 = vector.shape_cast %725 : vector<1x1x8x128xf32> to vector<8x128xf32>
    %cst_643 = arith.constant 3.05902319E-7 : f32
    %727 = vector.broadcast %cst_643 : f32 to vector<8x128xf32>
    %728 = arith.mulf %727, %726 : vector<8x128xf32>
    %729 = arith.addf %719, %728 : vector<8x128xf32>
    %c4_644 = arith.constant 4 : index
    %c5_645 = arith.constant 5 : index
    %c0_646 = arith.constant 0 : index
    %c0_647 = arith.constant 0 : index
    %730 = vector.load %arg2[%c4_644, %c5_645, %c0_646, %c0_647] : memref<10x20x8x128xf32, #tpu.memory_space<vmem>>, vector<1x1x8x128xf32>
    %731 = vector.shape_cast %730 : vector<1x1x8x128xf32> to vector<8x128xf32>
    %cst_648 = arith.constant 8.31528723E-7 : f32
    %732 = vector.broadcast %cst_648 : f32 to vector<8x128xf32>
    %733 = arith.mulf %732, %731 : vector<8x128xf32>
    %734 = arith.addf %724, %733 : vector<8x128xf32>
    %c4_649 = arith.constant 4 : index
    %c6_650 = arith.constant 6 : index
    %c0_651 = arith.constant 0 : index
    %c0_652 = arith.constant 0 : index
    %735 = vector.load %arg2[%c4_649, %c6_650, %c0_651, %c0_652] : memref<10x20x8x128xf32, #tpu.memory_space<vmem>>, vector<1x1x8x128xf32>
    %736 = vector.shape_cast %735 : vector<1x1x8x128xf32> to vector<8x128xf32>
    %cst_653 = arith.constant 2.26032944E-6 : f32
    %737 = vector.broadcast %cst_653 : f32 to vector<8x128xf32>
    %738 = arith.mulf %737, %736 : vector<8x128xf32>
    %739 = arith.addf %729, %738 : vector<8x128xf32>
    %c4_654 = arith.constant 4 : index
    %c7_655 = arith.constant 7 : index
    %c0_656 = arith.constant 0 : index
    %c0_657 = arith.constant 0 : index
    %740 = vector.load %arg2[%c4_654, %c7_655, %c0_656, %c0_657] : memref<10x20x8x128xf32, #tpu.memory_space<vmem>>, vector<1x1x8x128xf32>
    %741 = vector.shape_cast %740 : vector<1x1x8x128xf32> to vector<8x128xf32>
    %cst_658 = arith.constant 6.14421242E-6 : f32
    %742 = vector.broadcast %cst_658 : f32 to vector<8x128xf32>
    %743 = arith.mulf %742, %741 : vector<8x128xf32>
    %744 = arith.addf %734, %743 : vector<8x128xf32>
    %c4_659 = arith.constant 4 : index
    %c8_660 = arith.constant 8 : index
    %c0_661 = arith.constant 0 : index
    %c0_662 = arith.constant 0 : index
    %745 = vector.load %arg2[%c4_659, %c8_660, %c0_661, %c0_662] : memref<10x20x8x128xf32, #tpu.memory_space<vmem>>, vector<1x1x8x128xf32>
    %746 = vector.shape_cast %745 : vector<1x1x8x128xf32> to vector<8x128xf32>
    %cst_663 = arith.constant 1.670170e-05 : f32
    %747 = vector.broadcast %cst_663 : f32 to vector<8x128xf32>
    %748 = arith.mulf %747, %746 : vector<8x128xf32>
    %749 = arith.addf %739, %748 : vector<8x128xf32>
    %c4_664 = arith.constant 4 : index
    %c9_665 = arith.constant 9 : index
    %c0_666 = arith.constant 0 : index
    %c0_667 = arith.constant 0 : index
    %750 = vector.load %arg2[%c4_664, %c9_665, %c0_666, %c0_667] : memref<10x20x8x128xf32, #tpu.memory_space<vmem>>, vector<1x1x8x128xf32>
    %751 = vector.shape_cast %750 : vector<1x1x8x128xf32> to vector<8x128xf32>
    %cst_668 = arith.constant 4.5399931E-5 : f32
    %752 = vector.broadcast %cst_668 : f32 to vector<8x128xf32>
    %753 = arith.mulf %752, %751 : vector<8x128xf32>
    %754 = arith.addf %744, %753 : vector<8x128xf32>
    %c4_669 = arith.constant 4 : index
    %c10_670 = arith.constant 10 : index
    %c0_671 = arith.constant 0 : index
    %c0_672 = arith.constant 0 : index
    %755 = vector.load %arg2[%c4_669, %c10_670, %c0_671, %c0_672] : memref<10x20x8x128xf32, #tpu.memory_space<vmem>>, vector<1x1x8x128xf32>
    %756 = vector.shape_cast %755 : vector<1x1x8x128xf32> to vector<8x128xf32>
    %cst_673 = arith.constant 1.23409802E-4 : f32
    %757 = vector.broadcast %cst_673 : f32 to vector<8x128xf32>
    %758 = arith.mulf %757, %756 : vector<8x128xf32>
    %759 = arith.addf %749, %758 : vector<8x128xf32>
    %c4_674 = arith.constant 4 : index
    %c11_675 = arith.constant 11 : index
    %c0_676 = arith.constant 0 : index
    %c0_677 = arith.constant 0 : index
    %760 = vector.load %arg2[%c4_674, %c11_675, %c0_676, %c0_677] : memref<10x20x8x128xf32, #tpu.memory_space<vmem>>, vector<1x1x8x128xf32>
    %761 = vector.shape_cast %760 : vector<1x1x8x128xf32> to vector<8x128xf32>
    %cst_678 = arith.constant 3.35462624E-4 : f32
    %762 = vector.broadcast %cst_678 : f32 to vector<8x128xf32>
    %763 = arith.mulf %762, %761 : vector<8x128xf32>
    %764 = arith.addf %754, %763 : vector<8x128xf32>
    %c4_679 = arith.constant 4 : index
    %c12_680 = arith.constant 12 : index
    %c0_681 = arith.constant 0 : index
    %c0_682 = arith.constant 0 : index
    %765 = vector.load %arg2[%c4_679, %c12_680, %c0_681, %c0_682] : memref<10x20x8x128xf32, #tpu.memory_space<vmem>>, vector<1x1x8x128xf32>
    %766 = vector.shape_cast %765 : vector<1x1x8x128xf32> to vector<8x128xf32>
    %cst_683 = arith.constant 9.118820e-04 : f32
    %767 = vector.broadcast %cst_683 : f32 to vector<8x128xf32>
    %768 = arith.mulf %767, %766 : vector<8x128xf32>
    %769 = arith.addf %759, %768 : vector<8x128xf32>
    %c4_684 = arith.constant 4 : index
    %c13_685 = arith.constant 13 : index
    %c0_686 = arith.constant 0 : index
    %c0_687 = arith.constant 0 : index
    %770 = vector.load %arg2[%c4_684, %c13_685, %c0_686, %c0_687] : memref<10x20x8x128xf32, #tpu.memory_space<vmem>>, vector<1x1x8x128xf32>
    %771 = vector.shape_cast %770 : vector<1x1x8x128xf32> to vector<8x128xf32>
    %cst_688 = arith.constant 0.00247875229 : f32
    %772 = vector.broadcast %cst_688 : f32 to vector<8x128xf32>
    %773 = arith.mulf %772, %771 : vector<8x128xf32>
    %774 = arith.addf %764, %773 : vector<8x128xf32>
    %c4_689 = arith.constant 4 : index
    %c14_690 = arith.constant 14 : index
    %c0_691 = arith.constant 0 : index
    %c0_692 = arith.constant 0 : index
    %775 = vector.load %arg2[%c4_689, %c14_690, %c0_691, %c0_692] : memref<10x20x8x128xf32, #tpu.memory_space<vmem>>, vector<1x1x8x128xf32>
    %776 = vector.shape_cast %775 : vector<1x1x8x128xf32> to vector<8x128xf32>
    %cst_693 = arith.constant 0.006737947 : f32
    %777 = vector.broadcast %cst_693 : f32 to vector<8x128xf32>
    %778 = arith.mulf %777, %776 : vector<8x128xf32>
    %779 = arith.addf %769, %778 : vector<8x128xf32>
    %c4_694 = arith.constant 4 : index
    %c15_695 = arith.constant 15 : index
    %c0_696 = arith.constant 0 : index
    %c0_697 = arith.constant 0 : index
    %780 = vector.load %arg2[%c4_694, %c15_695, %c0_696, %c0_697] : memref<10x20x8x128xf32, #tpu.memory_space<vmem>>, vector<1x1x8x128xf32>
    %781 = vector.shape_cast %780 : vector<1x1x8x128xf32> to vector<8x128xf32>
    %cst_698 = arith.constant 0.0183156393 : f32
    %782 = vector.broadcast %cst_698 : f32 to vector<8x128xf32>
    %783 = arith.mulf %782, %781 : vector<8x128xf32>
    %784 = arith.addf %774, %783 : vector<8x128xf32>
    %c4_699 = arith.constant 4 : index
    %c16_700 = arith.constant 16 : index
    %c0_701 = arith.constant 0 : index
    %c0_702 = arith.constant 0 : index
    %785 = vector.load %arg2[%c4_699, %c16_700, %c0_701, %c0_702] : memref<10x20x8x128xf32, #tpu.memory_space<vmem>>, vector<1x1x8x128xf32>
    %786 = vector.shape_cast %785 : vector<1x1x8x128xf32> to vector<8x128xf32>
    %cst_703 = arith.constant 0.0497870669 : f32
    %787 = vector.broadcast %cst_703 : f32 to vector<8x128xf32>
    %788 = arith.mulf %787, %786 : vector<8x128xf32>
    %789 = arith.addf %779, %788 : vector<8x128xf32>
    %c4_704 = arith.constant 4 : index
    %c17_705 = arith.constant 17 : index
    %c0_706 = arith.constant 0 : index
    %c0_707 = arith.constant 0 : index
    %790 = vector.load %arg2[%c4_704, %c17_705, %c0_706, %c0_707] : memref<10x20x8x128xf32, #tpu.memory_space<vmem>>, vector<1x1x8x128xf32>
    %791 = vector.shape_cast %790 : vector<1x1x8x128xf32> to vector<8x128xf32>
    %cst_708 = arith.constant 0.135335281 : f32
    %792 = vector.broadcast %cst_708 : f32 to vector<8x128xf32>
    %793 = arith.mulf %792, %791 : vector<8x128xf32>
    %794 = arith.addf %784, %793 : vector<8x128xf32>
    %c4_709 = arith.constant 4 : index
    %c18_710 = arith.constant 18 : index
    %c0_711 = arith.constant 0 : index
    %c0_712 = arith.constant 0 : index
    %795 = vector.load %arg2[%c4_709, %c18_710, %c0_711, %c0_712] : memref<10x20x8x128xf32, #tpu.memory_space<vmem>>, vector<1x1x8x128xf32>
    %796 = vector.shape_cast %795 : vector<1x1x8x128xf32> to vector<8x128xf32>
    %cst_713 = arith.constant 0.36787945 : f32
    %797 = vector.broadcast %cst_713 : f32 to vector<8x128xf32>
    %798 = arith.mulf %797, %796 : vector<8x128xf32>
    %799 = arith.addf %789, %798 : vector<8x128xf32>
    %c4_714 = arith.constant 4 : index
    %c19_715 = arith.constant 19 : index
    %c0_716 = arith.constant 0 : index
    %c0_717 = arith.constant 0 : index
    %800 = vector.load %arg2[%c4_714, %c19_715, %c0_716, %c0_717] : memref<10x20x8x128xf32, #tpu.memory_space<vmem>>, vector<1x1x8x128xf32>
    %801 = vector.shape_cast %800 : vector<1x1x8x128xf32> to vector<8x128xf32>
    %cst_718 = arith.constant 1.000000e+00 : f32
    %802 = vector.broadcast %cst_718 : f32 to vector<8x128xf32>
    %803 = arith.mulf %802, %801 : vector<8x128xf32>
    %804 = arith.addf %794, %803 : vector<8x128xf32>
    %c0_719 = arith.constant 0 : index
    %c0_720 = arith.constant 0 : index
    %c0_721 = arith.constant 0 : index
    %805 = vector.load %arg12[%c0_719, %c0_720, %c0_721] : memref<10x8x128xf32, #tpu.memory_space<vmem>>, vector<1x8x128xf32>
    %806 = vector.shape_cast %805 : vector<1x8x128xf32> to vector<8x128xf32>
    %cst_722 = arith.constant -2.48935342 : f32
    %807 = vector.broadcast %cst_722 : f32 to vector<8x128xf32>
    %808 = arith.mulf %807, %806 : vector<8x128xf32>
    %809 = arith.addf %799, %808 : vector<8x128xf32>
    %c1_723 = arith.constant 1 : index
    %c0_724 = arith.constant 0 : index
    %c0_725 = arith.constant 0 : index
    %810 = vector.load %arg12[%c1_723, %c0_724, %c0_725] : memref<10x8x128xf32, #tpu.memory_space<vmem>>, vector<1x8x128xf32>
    %811 = vector.shape_cast %810 : vector<1x8x128xf32> to vector<8x128xf32>
    %cst_726 = arith.constant -6.76676416 : f32
    %812 = vector.broadcast %cst_726 : f32 to vector<8x128xf32>
    %813 = arith.mulf %812, %811 : vector<8x128xf32>
    %814 = arith.addf %804, %813 : vector<8x128xf32>
    %c2_727 = arith.constant 2 : index
    %c0_728 = arith.constant 0 : index
    %c0_729 = arith.constant 0 : index
    %815 = vector.load %arg12[%c2_727, %c0_728, %c0_729] : memref<10x8x128xf32, #tpu.memory_space<vmem>>, vector<1x8x128xf32>
    %816 = vector.shape_cast %815 : vector<1x8x128xf32> to vector<8x128xf32>
    %cst_730 = arith.constant -18.3939724 : f32
    %817 = vector.broadcast %cst_730 : f32 to vector<8x128xf32>
    %818 = arith.mulf %817, %816 : vector<8x128xf32>
    %819 = arith.addf %809, %818 : vector<8x128xf32>
    %c3_731 = arith.constant 3 : index
    %c0_732 = arith.constant 0 : index
    %c0_733 = arith.constant 0 : index
    %820 = vector.load %arg12[%c3_731, %c0_732, %c0_733] : memref<10x8x128xf32, #tpu.memory_space<vmem>>, vector<1x8x128xf32>
    %821 = vector.shape_cast %820 : vector<1x8x128xf32> to vector<8x128xf32>
    %cst_734 = arith.constant -5.000000e+01 : f32
    %822 = vector.broadcast %cst_734 : f32 to vector<8x128xf32>
    %823 = arith.mulf %822, %821 : vector<8x128xf32>
    %824 = arith.addf %814, %823 : vector<8x128xf32>
    %c4_735 = arith.constant 4 : index
    %c0_736 = arith.constant 0 : index
    %c0_737 = arith.constant 0 : index
    %825 = vector.load %arg12[%c4_735, %c0_736, %c0_737] : memref<10x8x128xf32, #tpu.memory_space<vmem>>, vector<1x8x128xf32>
    %826 = vector.shape_cast %825 : vector<1x8x128xf32> to vector<8x128xf32>
    %cst_738 = arith.constant -0.00617049029 : f32
    %827 = vector.broadcast %cst_738 : f32 to vector<8x128xf32>
    %828 = arith.mulf %827, %826 : vector<8x128xf32>
    %829 = arith.addf %819, %828 : vector<8x128xf32>
    %c5_739 = arith.constant 5 : index
    %c0_740 = arith.constant 0 : index
    %c0_741 = arith.constant 0 : index
    %830 = vector.load %arg12[%c5_739, %c0_740, %c0_741] : memref<10x8x128xf32, #tpu.memory_space<vmem>>, vector<1x8x128xf32>
    %831 = vector.shape_cast %830 : vector<1x8x128xf32> to vector<8x128xf32>
    %cst_742 = arith.constant -0.0167731307 : f32
    %832 = vector.broadcast %cst_742 : f32 to vector<8x128xf32>
    %833 = arith.mulf %832, %831 : vector<8x128xf32>
    %834 = arith.addf %824, %833 : vector<8x128xf32>
    %c6_743 = arith.constant 6 : index
    %c0_744 = arith.constant 0 : index
    %c0_745 = arith.constant 0 : index
    %835 = vector.load %arg12[%c6_743, %c0_744, %c0_745] : memref<10x8x128xf32, #tpu.memory_space<vmem>>, vector<1x8x128xf32>
    %836 = vector.shape_cast %835 : vector<1x8x128xf32> to vector<8x128xf32>
    %cst_746 = arith.constant -4.559410e-02 : f32
    %837 = vector.broadcast %cst_746 : f32 to vector<8x128xf32>
    %838 = arith.mulf %837, %836 : vector<8x128xf32>
    %839 = arith.addf %829, %838 : vector<8x128xf32>
    %c7_747 = arith.constant 7 : index
    %c0_748 = arith.constant 0 : index
    %c0_749 = arith.constant 0 : index
    %840 = vector.load %arg12[%c7_747, %c0_748, %c0_749] : memref<10x8x128xf32, #tpu.memory_space<vmem>>, vector<1x8x128xf32>
    %841 = vector.shape_cast %840 : vector<1x8x128xf32> to vector<8x128xf32>
    %cst_750 = arith.constant -0.123937607 : f32
    %842 = vector.broadcast %cst_750 : f32 to vector<8x128xf32>
    %843 = arith.mulf %842, %841 : vector<8x128xf32>
    %844 = arith.addf %834, %843 : vector<8x128xf32>
    %c8_751 = arith.constant 8 : index
    %c0_752 = arith.constant 0 : index
    %c0_753 = arith.constant 0 : index
    %845 = vector.load %arg12[%c8_751, %c0_752, %c0_753] : memref<10x8x128xf32, #tpu.memory_space<vmem>>, vector<1x8x128xf32>
    %846 = vector.shape_cast %845 : vector<1x8x128xf32> to vector<8x128xf32>
    %cst_754 = arith.constant -0.336897343 : f32
    %847 = vector.broadcast %cst_754 : f32 to vector<8x128xf32>
    %848 = arith.mulf %847, %846 : vector<8x128xf32>
    %849 = arith.addf %839, %848 : vector<8x128xf32>
    %c9_755 = arith.constant 9 : index
    %c0_756 = arith.constant 0 : index
    %c0_757 = arith.constant 0 : index
    %850 = vector.load %arg12[%c9_755, %c0_756, %c0_757] : memref<10x8x128xf32, #tpu.memory_space<vmem>>, vector<1x8x128xf32>
    %851 = vector.shape_cast %850 : vector<1x8x128xf32> to vector<8x128xf32>
    %cst_758 = arith.constant -0.915781915 : f32
    %852 = vector.broadcast %cst_758 : f32 to vector<8x128xf32>
    %853 = arith.mulf %852, %851 : vector<8x128xf32>
    %854 = arith.addf %844, %853 : vector<8x128xf32>
    %855 = arith.addf %849, %854 : vector<8x128xf32>
    %c0_759 = arith.constant 0 : index
    %c0_760 = arith.constant 0 : index
    %856 = vector.load %arg11[%c0_759, %c0_760] : memref<1x128xf32, #tpu.memory_space<vmem>>, vector<1x128xf32>
    %cst_761 = arith.constant 0.99999988 : f32
    %857 = vector.broadcast %cst_761 : f32 to vector<1x128xf32>
    %858 = arith.mulf %856, %857 : vector<1x128xf32>
    %cst_762 = arith.constant -5.200000e+01 : f32
    %859 = vector.broadcast %cst_762 : f32 to vector<1x128xf32>
    %860 = arith.addf %859, %858 : vector<1x128xf32>
    %861 = vector.broadcast %860 : vector<1x128xf32> to vector<8x128xf32>
    %862 = arith.cmpf oge, %855, %861 : vector<8x128xf32>
    %863 = arith.extui %862 : vector<8x128xi1> to vector<8x128xi32>
    %864 = arith.sitofp %863 : vector<8x128xi32> to vector<8x128xf32>
    %cst_763 = arith.constant dense<0.000000e+00> : vector<128xf32>
    %865 = vector.multi_reduction <add>, %864, %cst_763 [0] : vector<8x128xf32> to vector<128xf32>
    %866 = vector.shape_cast %865 : vector<128xf32> to vector<1x128xf32>
    %cst_764 = arith.constant 5.000000e-02 : f32
    %867 = vector.broadcast %cst_764 : f32 to vector<1x128xf32>
    %868 = arith.mulf %867, %866 : vector<1x128xf32>
    %869 = arith.addf %858, %868 : vector<1x128xf32>
    %c0_765 = arith.constant 0 : index
    %c0_766 = arith.constant 0 : index
    %870 = vector.load %arg10[%c0_765, %c0_766] : memref<8x128xf32, #tpu.memory_space<vmem>>, vector<8x128xf32>
    tpu.vector_store %arg10[%c0_765, %c0_766], %855 {strides = array<i32>} : memref<8x128xf32, #tpu.memory_space<vmem>>, vector<8x128xf32>,
    %c0_767 = arith.constant 0 : index
    %c0_768 = arith.constant 0 : index
    %871 = vector.load %arg11[%c0_767, %c0_768] : memref<1x128xf32, #tpu.memory_space<vmem>>, vector<1x128xf32>
    tpu.vector_store %arg11[%c0_767, %c0_768], %869 {strides = array<i32>} : memref<1x128xf32, #tpu.memory_space<vmem>>, vector<1x128xf32>,
    %c4_769 = arith.constant 4 : index
    %c0_770 = arith.constant 0 : index
    %c0_771 = arith.constant 0 : index
    %872 = vector.load %arg12[%c4_769, %c0_770, %c0_771] : memref<10x8x128xf32, #tpu.memory_space<vmem>>, vector<1x8x128xf32>
    %873 = vector.shape_cast %872 : vector<1x8x128xf32> to vector<8x128xf32>
    %874 = vector.shape_cast %864 : vector<8x128xf32> to vector<1x8x128xf32>
    tpu.vector_store %arg12[%c4_769, %c0_770, %c0_771], %874 {strides = array<i32>} : memref<10x8x128xf32, #tpu.memory_space<vmem>>, vector<1x8x128xf32>,
    %c4_772 = arith.constant 4 : index
    %c0_773 = arith.constant 0 : index
    %c0_774 = arith.constant 0 : index
    %875 = vector.load %arg7[%c4_772, %c0_773, %c0_774] : memref<10x8x128xf32, #tpu.memory_space<vmem>>, vector<1x8x128xf32>
    %876 = vector.shape_cast %875 : vector<1x8x128xf32> to vector<8x128xf32>
    %877 = vector.shape_cast %864 : vector<8x128xf32> to vector<1x8x128xf32>
    tpu.vector_store %arg7[%c4_772, %c0_773, %c0_774], %877 {strides = array<i32>} : memref<10x8x128xf32, #tpu.memory_space<vmem>>, vector<1x8x128xf32>,
    %c0_775 = arith.constant 0 : index
    %c0_776 = arith.constant 0 : index
    %878 = vector.load %arg10[%c0_775, %c0_776] : memref<8x128xf32, #tpu.memory_space<vmem>>, vector<8x128xf32>
    %cst_777 = arith.constant 0.990049839 : f32
    %879 = vector.broadcast %cst_777 : f32 to vector<8x128xf32>
    %880 = arith.mulf %878, %879 : vector<8x128xf32>
    %c5_778 = arith.constant 5 : index
    %c0_779 = arith.constant 0 : index
    %c0_780 = arith.constant 0 : index
    %c0_781 = arith.constant 0 : index
    %881 = vector.load %arg2[%c5_778, %c0_779, %c0_780, %c0_781] : memref<10x20x8x128xf32, #tpu.memory_space<vmem>>, vector<1x1x8x128xf32>
    %882 = vector.shape_cast %881 : vector<1x1x8x128xf32> to vector<8x128xf32>
    %cst_782 = arith.constant 5.60279644E-9 : f32
    %883 = vector.broadcast %cst_782 : f32 to vector<8x128xf32>
    %884 = arith.mulf %883, %882 : vector<8x128xf32>
    %c5_783 = arith.constant 5 : index
    %c1_784 = arith.constant 1 : index
    %c0_785 = arith.constant 0 : index
    %c0_786 = arith.constant 0 : index
    %885 = vector.load %arg2[%c5_783, %c1_784, %c0_785, %c0_786] : memref<10x20x8x128xf32, #tpu.memory_space<vmem>>, vector<1x1x8x128xf32>
    %886 = vector.shape_cast %885 : vector<1x1x8x128xf32> to vector<8x128xf32>
    %cst_787 = arith.constant 1.52299791E-8 : f32
    %887 = vector.broadcast %cst_787 : f32 to vector<8x128xf32>
    %888 = arith.mulf %887, %886 : vector<8x128xf32>
    %889 = arith.addf %884, %888 : vector<8x128xf32>
    %c5_788 = arith.constant 5 : index
    %c2_789 = arith.constant 2 : index
    %c0_790 = arith.constant 0 : index
    %c0_791 = arith.constant 0 : index
    %890 = vector.load %arg2[%c5_788, %c2_789, %c0_790, %c0_791] : memref<10x20x8x128xf32, #tpu.memory_space<vmem>>, vector<1x1x8x128xf32>
    %891 = vector.shape_cast %890 : vector<1x1x8x128xf32> to vector<8x128xf32>
    %cst_792 = arith.constant 4.13993781E-8 : f32
    %892 = vector.broadcast %cst_792 : f32 to vector<8x128xf32>
    %893 = arith.mulf %892, %891 : vector<8x128xf32>
    %894 = arith.addf %880, %893 : vector<8x128xf32>
    %c5_793 = arith.constant 5 : index
    %c3_794 = arith.constant 3 : index
    %c0_795 = arith.constant 0 : index
    %c0_796 = arith.constant 0 : index
    %895 = vector.load %arg2[%c5_793, %c3_794, %c0_795, %c0_796] : memref<10x20x8x128xf32, #tpu.memory_space<vmem>>, vector<1x1x8x128xf32>
    %896 = vector.shape_cast %895 : vector<1x1x8x128xf32> to vector<8x128xf32>
    %cst_797 = arith.constant 1.12535176E-7 : f32
    %897 = vector.broadcast %cst_797 : f32 to vector<8x128xf32>
    %898 = arith.mulf %897, %896 : vector<8x128xf32>
    %899 = arith.addf %889, %898 : vector<8x128xf32>
    %c5_798 = arith.constant 5 : index
    %c4_799 = arith.constant 4 : index
    %c0_800 = arith.constant 0 : index
    %c0_801 = arith.constant 0 : index
    %900 = vector.load %arg2[%c5_798, %c4_799, %c0_800, %c0_801] : memref<10x20x8x128xf32, #tpu.memory_space<vmem>>, vector<1x1x8x128xf32>
    %901 = vector.shape_cast %900 : vector<1x1x8x128xf32> to vector<8x128xf32>
    %cst_802 = arith.constant 3.05902319E-7 : f32
    %902 = vector.broadcast %cst_802 : f32 to vector<8x128xf32>
    %903 = arith.mulf %902, %901 : vector<8x128xf32>
    %904 = arith.addf %894, %903 : vector<8x128xf32>
    %c5_803 = arith.constant 5 : index
    %c5_804 = arith.constant 5 : index
    %c0_805 = arith.constant 0 : index
    %c0_806 = arith.constant 0 : index
    %905 = vector.load %arg2[%c5_803, %c5_804, %c0_805, %c0_806] : memref<10x20x8x128xf32, #tpu.memory_space<vmem>>, vector<1x1x8x128xf32>
    %906 = vector.shape_cast %905 : vector<1x1x8x128xf32> to vector<8x128xf32>
    %cst_807 = arith.constant 8.31528723E-7 : f32
    %907 = vector.broadcast %cst_807 : f32 to vector<8x128xf32>
    %908 = arith.mulf %907, %906 : vector<8x128xf32>
    %909 = arith.addf %899, %908 : vector<8x128xf32>
    %c5_808 = arith.constant 5 : index
    %c6_809 = arith.constant 6 : index
    %c0_810 = arith.constant 0 : index
    %c0_811 = arith.constant 0 : index
    %910 = vector.load %arg2[%c5_808, %c6_809, %c0_810, %c0_811] : memref<10x20x8x128xf32, #tpu.memory_space<vmem>>, vector<1x1x8x128xf32>
    %911 = vector.shape_cast %910 : vector<1x1x8x128xf32> to vector<8x128xf32>
    %cst_812 = arith.constant 2.26032944E-6 : f32
    %912 = vector.broadcast %cst_812 : f32 to vector<8x128xf32>
    %913 = arith.mulf %912, %911 : vector<8x128xf32>
    %914 = arith.addf %904, %913 : vector<8x128xf32>
    %c5_813 = arith.constant 5 : index
    %c7_814 = arith.constant 7 : index
    %c0_815 = arith.constant 0 : index
    %c0_816 = arith.constant 0 : index
    %915 = vector.load %arg2[%c5_813, %c7_814, %c0_815, %c0_816] : memref<10x20x8x128xf32, #tpu.memory_space<vmem>>, vector<1x1x8x128xf32>
    %916 = vector.shape_cast %915 : vector<1x1x8x128xf32> to vector<8x128xf32>
    %cst_817 = arith.constant 6.14421242E-6 : f32
    %917 = vector.broadcast %cst_817 : f32 to vector<8x128xf32>
    %918 = arith.mulf %917, %916 : vector<8x128xf32>
    %919 = arith.addf %909, %918 : vector<8x128xf32>
    %c5_818 = arith.constant 5 : index
    %c8_819 = arith.constant 8 : index
    %c0_820 = arith.constant 0 : index
    %c0_821 = arith.constant 0 : index
    %920 = vector.load %arg2[%c5_818, %c8_819, %c0_820, %c0_821] : memref<10x20x8x128xf32, #tpu.memory_space<vmem>>, vector<1x1x8x128xf32>
    %921 = vector.shape_cast %920 : vector<1x1x8x128xf32> to vector<8x128xf32>
    %cst_822 = arith.constant 1.670170e-05 : f32
    %922 = vector.broadcast %cst_822 : f32 to vector<8x128xf32>
    %923 = arith.mulf %922, %921 : vector<8x128xf32>
    %924 = arith.addf %914, %923 : vector<8x128xf32>
    %c5_823 = arith.constant 5 : index
    %c9_824 = arith.constant 9 : index
    %c0_825 = arith.constant 0 : index
    %c0_826 = arith.constant 0 : index
    %925 = vector.load %arg2[%c5_823, %c9_824, %c0_825, %c0_826] : memref<10x20x8x128xf32, #tpu.memory_space<vmem>>, vector<1x1x8x128xf32>
    %926 = vector.shape_cast %925 : vector<1x1x8x128xf32> to vector<8x128xf32>
    %cst_827 = arith.constant 4.5399931E-5 : f32
    %927 = vector.broadcast %cst_827 : f32 to vector<8x128xf32>
    %928 = arith.mulf %927, %926 : vector<8x128xf32>
    %929 = arith.addf %919, %928 : vector<8x128xf32>
    %c5_828 = arith.constant 5 : index
    %c10_829 = arith.constant 10 : index
    %c0_830 = arith.constant 0 : index
    %c0_831 = arith.constant 0 : index
    %930 = vector.load %arg2[%c5_828, %c10_829, %c0_830, %c0_831] : memref<10x20x8x128xf32, #tpu.memory_space<vmem>>, vector<1x1x8x128xf32>
    %931 = vector.shape_cast %930 : vector<1x1x8x128xf32> to vector<8x128xf32>
    %cst_832 = arith.constant 1.23409802E-4 : f32
    %932 = vector.broadcast %cst_832 : f32 to vector<8x128xf32>
    %933 = arith.mulf %932, %931 : vector<8x128xf32>
    %934 = arith.addf %924, %933 : vector<8x128xf32>
    %c5_833 = arith.constant 5 : index
    %c11_834 = arith.constant 11 : index
    %c0_835 = arith.constant 0 : index
    %c0_836 = arith.constant 0 : index
    %935 = vector.load %arg2[%c5_833, %c11_834, %c0_835, %c0_836] : memref<10x20x8x128xf32, #tpu.memory_space<vmem>>, vector<1x1x8x128xf32>
    %936 = vector.shape_cast %935 : vector<1x1x8x128xf32> to vector<8x128xf32>
    %cst_837 = arith.constant 3.35462624E-4 : f32
    %937 = vector.broadcast %cst_837 : f32 to vector<8x128xf32>
    %938 = arith.mulf %937, %936 : vector<8x128xf32>
    %939 = arith.addf %929, %938 : vector<8x128xf32>
    %c5_838 = arith.constant 5 : index
    %c12_839 = arith.constant 12 : index
    %c0_840 = arith.constant 0 : index
    %c0_841 = arith.constant 0 : index
    %940 = vector.load %arg2[%c5_838, %c12_839, %c0_840, %c0_841] : memref<10x20x8x128xf32, #tpu.memory_space<vmem>>, vector<1x1x8x128xf32>
    %941 = vector.shape_cast %940 : vector<1x1x8x128xf32> to vector<8x128xf32>
    %cst_842 = arith.constant 9.118820e-04 : f32
    %942 = vector.broadcast %cst_842 : f32 to vector<8x128xf32>
    %943 = arith.mulf %942, %941 : vector<8x128xf32>
    %944 = arith.addf %934, %943 : vector<8x128xf32>
    %c5_843 = arith.constant 5 : index
    %c13_844 = arith.constant 13 : index
    %c0_845 = arith.constant 0 : index
    %c0_846 = arith.constant 0 : index
    %945 = vector.load %arg2[%c5_843, %c13_844, %c0_845, %c0_846] : memref<10x20x8x128xf32, #tpu.memory_space<vmem>>, vector<1x1x8x128xf32>
    %946 = vector.shape_cast %945 : vector<1x1x8x128xf32> to vector<8x128xf32>
    %cst_847 = arith.constant 0.00247875229 : f32
    %947 = vector.broadcast %cst_847 : f32 to vector<8x128xf32>
    %948 = arith.mulf %947, %946 : vector<8x128xf32>
    %949 = arith.addf %939, %948 : vector<8x128xf32>
    %c5_848 = arith.constant 5 : index
    %c14_849 = arith.constant 14 : index
    %c0_850 = arith.constant 0 : index
    %c0_851 = arith.constant 0 : index
    %950 = vector.load %arg2[%c5_848, %c14_849, %c0_850, %c0_851] : memref<10x20x8x128xf32, #tpu.memory_space<vmem>>, vector<1x1x8x128xf32>
    %951 = vector.shape_cast %950 : vector<1x1x8x128xf32> to vector<8x128xf32>
    %cst_852 = arith.constant 0.006737947 : f32
    %952 = vector.broadcast %cst_852 : f32 to vector<8x128xf32>
    %953 = arith.mulf %952, %951 : vector<8x128xf32>
    %954 = arith.addf %944, %953 : vector<8x128xf32>
    %c5_853 = arith.constant 5 : index
    %c15_854 = arith.constant 15 : index
    %c0_855 = arith.constant 0 : index
    %c0_856 = arith.constant 0 : index
    %955 = vector.load %arg2[%c5_853, %c15_854, %c0_855, %c0_856] : memref<10x20x8x128xf32, #tpu.memory_space<vmem>>, vector<1x1x8x128xf32>
    %956 = vector.shape_cast %955 : vector<1x1x8x128xf32> to vector<8x128xf32>
    %cst_857 = arith.constant 0.0183156393 : f32
    %957 = vector.broadcast %cst_857 : f32 to vector<8x128xf32>
    %958 = arith.mulf %957, %956 : vector<8x128xf32>
    %959 = arith.addf %949, %958 : vector<8x128xf32>
    %c5_858 = arith.constant 5 : index
    %c16_859 = arith.constant 16 : index
    %c0_860 = arith.constant 0 : index
    %c0_861 = arith.constant 0 : index
    %960 = vector.load %arg2[%c5_858, %c16_859, %c0_860, %c0_861] : memref<10x20x8x128xf32, #tpu.memory_space<vmem>>, vector<1x1x8x128xf32>
    %961 = vector.shape_cast %960 : vector<1x1x8x128xf32> to vector<8x128xf32>
    %cst_862 = arith.constant 0.0497870669 : f32
    %962 = vector.broadcast %cst_862 : f32 to vector<8x128xf32>
    %963 = arith.mulf %962, %961 : vector<8x128xf32>
    %964 = arith.addf %954, %963 : vector<8x128xf32>
    %c5_863 = arith.constant 5 : index
    %c17_864 = arith.constant 17 : index
    %c0_865 = arith.constant 0 : index
    %c0_866 = arith.constant 0 : index
    %965 = vector.load %arg2[%c5_863, %c17_864, %c0_865, %c0_866] : memref<10x20x8x128xf32, #tpu.memory_space<vmem>>, vector<1x1x8x128xf32>
    %966 = vector.shape_cast %965 : vector<1x1x8x128xf32> to vector<8x128xf32>
    %cst_867 = arith.constant 0.135335281 : f32
    %967 = vector.broadcast %cst_867 : f32 to vector<8x128xf32>
    %968 = arith.mulf %967, %966 : vector<8x128xf32>
    %969 = arith.addf %959, %968 : vector<8x128xf32>
    %c5_868 = arith.constant 5 : index
    %c18_869 = arith.constant 18 : index
    %c0_870 = arith.constant 0 : index
    %c0_871 = arith.constant 0 : index
    %970 = vector.load %arg2[%c5_868, %c18_869, %c0_870, %c0_871] : memref<10x20x8x128xf32, #tpu.memory_space<vmem>>, vector<1x1x8x128xf32>
    %971 = vector.shape_cast %970 : vector<1x1x8x128xf32> to vector<8x128xf32>
    %cst_872 = arith.constant 0.36787945 : f32
    %972 = vector.broadcast %cst_872 : f32 to vector<8x128xf32>
    %973 = arith.mulf %972, %971 : vector<8x128xf32>
    %974 = arith.addf %964, %973 : vector<8x128xf32>
    %c5_873 = arith.constant 5 : index
    %c19_874 = arith.constant 19 : index
    %c0_875 = arith.constant 0 : index
    %c0_876 = arith.constant 0 : index
    %975 = vector.load %arg2[%c5_873, %c19_874, %c0_875, %c0_876] : memref<10x20x8x128xf32, #tpu.memory_space<vmem>>, vector<1x1x8x128xf32>
    %976 = vector.shape_cast %975 : vector<1x1x8x128xf32> to vector<8x128xf32>
    %cst_877 = arith.constant 1.000000e+00 : f32
    %977 = vector.broadcast %cst_877 : f32 to vector<8x128xf32>
    %978 = arith.mulf %977, %976 : vector<8x128xf32>
    %979 = arith.addf %969, %978 : vector<8x128xf32>
    %c0_878 = arith.constant 0 : index
    %c0_879 = arith.constant 0 : index
    %c0_880 = arith.constant 0 : index
    %980 = vector.load %arg12[%c0_878, %c0_879, %c0_880] : memref<10x8x128xf32, #tpu.memory_space<vmem>>, vector<1x8x128xf32>
    %981 = vector.shape_cast %980 : vector<1x8x128xf32> to vector<8x128xf32>
    %cst_881 = arith.constant -0.915781915 : f32
    %982 = vector.broadcast %cst_881 : f32 to vector<8x128xf32>
    %983 = arith.mulf %982, %981 : vector<8x128xf32>
    %984 = arith.addf %974, %983 : vector<8x128xf32>
    %c1_882 = arith.constant 1 : index
    %c0_883 = arith.constant 0 : index
    %c0_884 = arith.constant 0 : index
    %985 = vector.load %arg12[%c1_882, %c0_883, %c0_884] : memref<10x8x128xf32, #tpu.memory_space<vmem>>, vector<1x8x128xf32>
    %986 = vector.shape_cast %985 : vector<1x8x128xf32> to vector<8x128xf32>
    %cst_885 = arith.constant -2.48935342 : f32
    %987 = vector.broadcast %cst_885 : f32 to vector<8x128xf32>
    %988 = arith.mulf %987, %986 : vector<8x128xf32>
    %989 = arith.addf %979, %988 : vector<8x128xf32>
    %c2_886 = arith.constant 2 : index
    %c0_887 = arith.constant 0 : index
    %c0_888 = arith.constant 0 : index
    %990 = vector.load %arg12[%c2_886, %c0_887, %c0_888] : memref<10x8x128xf32, #tpu.memory_space<vmem>>, vector<1x8x128xf32>
    %991 = vector.shape_cast %990 : vector<1x8x128xf32> to vector<8x128xf32>
    %cst_889 = arith.constant -6.76676416 : f32
    %992 = vector.broadcast %cst_889 : f32 to vector<8x128xf32>
    %993 = arith.mulf %992, %991 : vector<8x128xf32>
    %994 = arith.addf %984, %993 : vector<8x128xf32>
    %c3_890 = arith.constant 3 : index
    %c0_891 = arith.constant 0 : index
    %c0_892 = arith.constant 0 : index
    %995 = vector.load %arg12[%c3_890, %c0_891, %c0_892] : memref<10x8x128xf32, #tpu.memory_space<vmem>>, vector<1x8x128xf32>
    %996 = vector.shape_cast %995 : vector<1x8x128xf32> to vector<8x128xf32>
    %cst_893 = arith.constant -18.3939724 : f32
    %997 = vector.broadcast %cst_893 : f32 to vector<8x128xf32>
    %998 = arith.mulf %997, %996 : vector<8x128xf32>
    %999 = arith.addf %989, %998 : vector<8x128xf32>
    %c4_894 = arith.constant 4 : index
    %c0_895 = arith.constant 0 : index
    %c0_896 = arith.constant 0 : index
    %1000 = vector.load %arg12[%c4_894, %c0_895, %c0_896] : memref<10x8x128xf32, #tpu.memory_space<vmem>>, vector<1x8x128xf32>
    %1001 = vector.shape_cast %1000 : vector<1x8x128xf32> to vector<8x128xf32>
    %cst_897 = arith.constant -5.000000e+01 : f32
    %1002 = vector.broadcast %cst_897 : f32 to vector<8x128xf32>
    %1003 = arith.mulf %1002, %1001 : vector<8x128xf32>
    %1004 = arith.addf %994, %1003 : vector<8x128xf32>
    %c5_898 = arith.constant 5 : index
    %c0_899 = arith.constant 0 : index
    %c0_900 = arith.constant 0 : index
    %1005 = vector.load %arg12[%c5_898, %c0_899, %c0_900] : memref<10x8x128xf32, #tpu.memory_space<vmem>>, vector<1x8x128xf32>
    %1006 = vector.shape_cast %1005 : vector<1x8x128xf32> to vector<8x128xf32>
    %cst_901 = arith.constant -0.00617049029 : f32
    %1007 = vector.broadcast %cst_901 : f32 to vector<8x128xf32>
    %1008 = arith.mulf %1007, %1006 : vector<8x128xf32>
    %1009 = arith.addf %999, %1008 : vector<8x128xf32>
    %c6_902 = arith.constant 6 : index
    %c0_903 = arith.constant 0 : index
    %c0_904 = arith.constant 0 : index
    %1010 = vector.load %arg12[%c6_902, %c0_903, %c0_904] : memref<10x8x128xf32, #tpu.memory_space<vmem>>, vector<1x8x128xf32>
    %1011 = vector.shape_cast %1010 : vector<1x8x128xf32> to vector<8x128xf32>
    %cst_905 = arith.constant -0.0167731307 : f32
    %1012 = vector.broadcast %cst_905 : f32 to vector<8x128xf32>
    %1013 = arith.mulf %1012, %1011 : vector<8x128xf32>
    %1014 = arith.addf %1004, %1013 : vector<8x128xf32>
    %c7_906 = arith.constant 7 : index
    %c0_907 = arith.constant 0 : index
    %c0_908 = arith.constant 0 : index
    %1015 = vector.load %arg12[%c7_906, %c0_907, %c0_908] : memref<10x8x128xf32, #tpu.memory_space<vmem>>, vector<1x8x128xf32>
    %1016 = vector.shape_cast %1015 : vector<1x8x128xf32> to vector<8x128xf32>
    %cst_909 = arith.constant -4.559410e-02 : f32
    %1017 = vector.broadcast %cst_909 : f32 to vector<8x128xf32>
    %1018 = arith.mulf %1017, %1016 : vector<8x128xf32>
    %1019 = arith.addf %1009, %1018 : vector<8x128xf32>
    %c8_910 = arith.constant 8 : index
    %c0_911 = arith.constant 0 : index
    %c0_912 = arith.constant 0 : index
    %1020 = vector.load %arg12[%c8_910, %c0_911, %c0_912] : memref<10x8x128xf32, #tpu.memory_space<vmem>>, vector<1x8x128xf32>
    %1021 = vector.shape_cast %1020 : vector<1x8x128xf32> to vector<8x128xf32>
    %cst_913 = arith.constant -0.123937607 : f32
    %1022 = vector.broadcast %cst_913 : f32 to vector<8x128xf32>
    %1023 = arith.mulf %1022, %1021 : vector<8x128xf32>
    %1024 = arith.addf %1014, %1023 : vector<8x128xf32>
    %c9_914 = arith.constant 9 : index
    %c0_915 = arith.constant 0 : index
    %c0_916 = arith.constant 0 : index
    %1025 = vector.load %arg12[%c9_914, %c0_915, %c0_916] : memref<10x8x128xf32, #tpu.memory_space<vmem>>, vector<1x8x128xf32>
    %1026 = vector.shape_cast %1025 : vector<1x8x128xf32> to vector<8x128xf32>
    %cst_917 = arith.constant -0.336897343 : f32
    %1027 = vector.broadcast %cst_917 : f32 to vector<8x128xf32>
    %1028 = arith.mulf %1027, %1026 : vector<8x128xf32>
    %1029 = arith.addf %1019, %1028 : vector<8x128xf32>
    %1030 = arith.addf %1024, %1029 : vector<8x128xf32>
    %c0_918 = arith.constant 0 : index
    %c0_919 = arith.constant 0 : index
    %1031 = vector.load %arg11[%c0_918, %c0_919] : memref<1x128xf32, #tpu.memory_space<vmem>>, vector<1x128xf32>
    %cst_920 = arith.constant 0.99999988 : f32
    %1032 = vector.broadcast %cst_920 : f32 to vector<1x128xf32>
    %1033 = arith.mulf %1031, %1032 : vector<1x128xf32>
    %cst_921 = arith.constant -5.200000e+01 : f32
    %1034 = vector.broadcast %cst_921 : f32 to vector<1x128xf32>
    %1035 = arith.addf %1034, %1033 : vector<1x128xf32>
    %1036 = vector.broadcast %1035 : vector<1x128xf32> to vector<8x128xf32>
    %1037 = arith.cmpf oge, %1030, %1036 : vector<8x128xf32>
    %1038 = arith.extui %1037 : vector<8x128xi1> to vector<8x128xi32>
    %1039 = arith.sitofp %1038 : vector<8x128xi32> to vector<8x128xf32>
    %cst_922 = arith.constant dense<0.000000e+00> : vector<128xf32>
    %1040 = vector.multi_reduction <add>, %1039, %cst_922 [0] : vector<8x128xf32> to vector<128xf32>
    %1041 = vector.shape_cast %1040 : vector<128xf32> to vector<1x128xf32>
    %cst_923 = arith.constant 5.000000e-02 : f32
    %1042 = vector.broadcast %cst_923 : f32 to vector<1x128xf32>
    %1043 = arith.mulf %1042, %1041 : vector<1x128xf32>
    %1044 = arith.addf %1033, %1043 : vector<1x128xf32>
    %c0_924 = arith.constant 0 : index
    %c0_925 = arith.constant 0 : index
    %1045 = vector.load %arg10[%c0_924, %c0_925] : memref<8x128xf32, #tpu.memory_space<vmem>>, vector<8x128xf32>
    tpu.vector_store %arg10[%c0_924, %c0_925], %1030 {strides = array<i32>} : memref<8x128xf32, #tpu.memory_space<vmem>>, vector<8x128xf32>,
    %c0_926 = arith.constant 0 : index
    %c0_927 = arith.constant 0 : index
    %1046 = vector.load %arg11[%c0_926, %c0_927] : memref<1x128xf32, #tpu.memory_space<vmem>>, vector<1x128xf32>
    tpu.vector_store %arg11[%c0_926, %c0_927], %1044 {strides = array<i32>} : memref<1x128xf32, #tpu.memory_space<vmem>>, vector<1x128xf32>,
    %c5_928 = arith.constant 5 : index
    %c0_929 = arith.constant 0 : index
    %c0_930 = arith.constant 0 : index
    %1047 = vector.load %arg12[%c5_928, %c0_929, %c0_930] : memref<10x8x128xf32, #tpu.memory_space<vmem>>, vector<1x8x128xf32>
    %1048 = vector.shape_cast %1047 : vector<1x8x128xf32> to vector<8x128xf32>
    %1049 = vector.shape_cast %1039 : vector<8x128xf32> to vector<1x8x128xf32>
    tpu.vector_store %arg12[%c5_928, %c0_929, %c0_930], %1049 {strides = array<i32>} : memref<10x8x128xf32, #tpu.memory_space<vmem>>, vector<1x8x128xf32>,
    %c5_931 = arith.constant 5 : index
    %c0_932 = arith.constant 0 : index
    %c0_933 = arith.constant 0 : index
    %1050 = vector.load %arg7[%c5_931, %c0_932, %c0_933] : memref<10x8x128xf32, #tpu.memory_space<vmem>>, vector<1x8x128xf32>
    %1051 = vector.shape_cast %1050 : vector<1x8x128xf32> to vector<8x128xf32>
    %1052 = vector.shape_cast %1039 : vector<8x128xf32> to vector<1x8x128xf32>
    tpu.vector_store %arg7[%c5_931, %c0_932, %c0_933], %1052 {strides = array<i32>} : memref<10x8x128xf32, #tpu.memory_space<vmem>>, vector<1x8x128xf32>,
    %c0_934 = arith.constant 0 : index
    %c0_935 = arith.constant 0 : index
    %1053 = vector.load %arg10[%c0_934, %c0_935] : memref<8x128xf32, #tpu.memory_space<vmem>>, vector<8x128xf32>
    %cst_936 = arith.constant 0.990049839 : f32
    %1054 = vector.broadcast %cst_936 : f32 to vector<8x128xf32>
    %1055 = arith.mulf %1053, %1054 : vector<8x128xf32>
    %c6_937 = arith.constant 6 : index
    %c0_938 = arith.constant 0 : index
    %c0_939 = arith.constant 0 : index
    %c0_940 = arith.constant 0 : index
    %1056 = vector.load %arg2[%c6_937, %c0_938, %c0_939, %c0_940] : memref<10x20x8x128xf32, #tpu.memory_space<vmem>>, vector<1x1x8x128xf32>
    %1057 = vector.shape_cast %1056 : vector<1x1x8x128xf32> to vector<8x128xf32>
    %cst_941 = arith.constant 5.60279644E-9 : f32
    %1058 = vector.broadcast %cst_941 : f32 to vector<8x128xf32>
    %1059 = arith.mulf %1058, %1057 : vector<8x128xf32>
    %c6_942 = arith.constant 6 : index
    %c1_943 = arith.constant 1 : index
    %c0_944 = arith.constant 0 : index
    %c0_945 = arith.constant 0 : index
    %1060 = vector.load %arg2[%c6_942, %c1_943, %c0_944, %c0_945] : memref<10x20x8x128xf32, #tpu.memory_space<vmem>>, vector<1x1x8x128xf32>
    %1061 = vector.shape_cast %1060 : vector<1x1x8x128xf32> to vector<8x128xf32>
    %cst_946 = arith.constant 1.52299791E-8 : f32
    %1062 = vector.broadcast %cst_946 : f32 to vector<8x128xf32>
    %1063 = arith.mulf %1062, %1061 : vector<8x128xf32>
    %1064 = arith.addf %1059, %1063 : vector<8x128xf32>
    %c6_947 = arith.constant 6 : index
    %c2_948 = arith.constant 2 : index
    %c0_949 = arith.constant 0 : index
    %c0_950 = arith.constant 0 : index
    %1065 = vector.load %arg2[%c6_947, %c2_948, %c0_949, %c0_950] : memref<10x20x8x128xf32, #tpu.memory_space<vmem>>, vector<1x1x8x128xf32>
    %1066 = vector.shape_cast %1065 : vector<1x1x8x128xf32> to vector<8x128xf32>
    %cst_951 = arith.constant 4.13993781E-8 : f32
    %1067 = vector.broadcast %cst_951 : f32 to vector<8x128xf32>
    %1068 = arith.mulf %1067, %1066 : vector<8x128xf32>
    %1069 = arith.addf %1055, %1068 : vector<8x128xf32>
    %c6_952 = arith.constant 6 : index
    %c3_953 = arith.constant 3 : index
    %c0_954 = arith.constant 0 : index
    %c0_955 = arith.constant 0 : index
    %1070 = vector.load %arg2[%c6_952, %c3_953, %c0_954, %c0_955] : memref<10x20x8x128xf32, #tpu.memory_space<vmem>>, vector<1x1x8x128xf32>
    %1071 = vector.shape_cast %1070 : vector<1x1x8x128xf32> to vector<8x128xf32>
    %cst_956 = arith.constant 1.12535176E-7 : f32
    %1072 = vector.broadcast %cst_956 : f32 to vector<8x128xf32>
    %1073 = arith.mulf %1072, %1071 : vector<8x128xf32>
    %1074 = arith.addf %1064, %1073 : vector<8x128xf32>
    %c6_957 = arith.constant 6 : index
    %c4_958 = arith.constant 4 : index
    %c0_959 = arith.constant 0 : index
    %c0_960 = arith.constant 0 : index
    %1075 = vector.load %arg2[%c6_957, %c4_958, %c0_959, %c0_960] : memref<10x20x8x128xf32, #tpu.memory_space<vmem>>, vector<1x1x8x128xf32>
    %1076 = vector.shape_cast %1075 : vector<1x1x8x128xf32> to vector<8x128xf32>
    %cst_961 = arith.constant 3.05902319E-7 : f32
    %1077 = vector.broadcast %cst_961 : f32 to vector<8x128xf32>
    %1078 = arith.mulf %1077, %1076 : vector<8x128xf32>
    %1079 = arith.addf %1069, %1078 : vector<8x128xf32>
    %c6_962 = arith.constant 6 : index
    %c5_963 = arith.constant 5 : index
    %c0_964 = arith.constant 0 : index
    %c0_965 = arith.constant 0 : index
    %1080 = vector.load %arg2[%c6_962, %c5_963, %c0_964, %c0_965] : memref<10x20x8x128xf32, #tpu.memory_space<vmem>>, vector<1x1x8x128xf32>
    %1081 = vector.shape_cast %1080 : vector<1x1x8x128xf32> to vector<8x128xf32>
    %cst_966 = arith.constant 8.31528723E-7 : f32
    %1082 = vector.broadcast %cst_966 : f32 to vector<8x128xf32>
    %1083 = arith.mulf %1082, %1081 : vector<8x128xf32>
    %1084 = arith.addf %1074, %1083 : vector<8x128xf32>
    %c6_967 = arith.constant 6 : index
    %c6_968 = arith.constant 6 : index
    %c0_969 = arith.constant 0 : index
    %c0_970 = arith.constant 0 : index
    %1085 = vector.load %arg2[%c6_967, %c6_968, %c0_969, %c0_970] : memref<10x20x8x128xf32, #tpu.memory_space<vmem>>, vector<1x1x8x128xf32>
    %1086 = vector.shape_cast %1085 : vector<1x1x8x128xf32> to vector<8x128xf32>
    %cst_971 = arith.constant 2.26032944E-6 : f32
    %1087 = vector.broadcast %cst_971 : f32 to vector<8x128xf32>
    %1088 = arith.mulf %1087, %1086 : vector<8x128xf32>
    %1089 = arith.addf %1079, %1088 : vector<8x128xf32>
    %c6_972 = arith.constant 6 : index
    %c7_973 = arith.constant 7 : index
    %c0_974 = arith.constant 0 : index
    %c0_975 = arith.constant 0 : index
    %1090 = vector.load %arg2[%c6_972, %c7_973, %c0_974, %c0_975] : memref<10x20x8x128xf32, #tpu.memory_space<vmem>>, vector<1x1x8x128xf32>
    %1091 = vector.shape_cast %1090 : vector<1x1x8x128xf32> to vector<8x128xf32>
    %cst_976 = arith.constant 6.14421242E-6 : f32
    %1092 = vector.broadcast %cst_976 : f32 to vector<8x128xf32>
    %1093 = arith.mulf %1092, %1091 : vector<8x128xf32>
    %1094 = arith.addf %1084, %1093 : vector<8x128xf32>
    %c6_977 = arith.constant 6 : index
    %c8_978 = arith.constant 8 : index
    %c0_979 = arith.constant 0 : index
    %c0_980 = arith.constant 0 : index
    %1095 = vector.load %arg2[%c6_977, %c8_978, %c0_979, %c0_980] : memref<10x20x8x128xf32, #tpu.memory_space<vmem>>, vector<1x1x8x128xf32>
    %1096 = vector.shape_cast %1095 : vector<1x1x8x128xf32> to vector<8x128xf32>
    %cst_981 = arith.constant 1.670170e-05 : f32
    %1097 = vector.broadcast %cst_981 : f32 to vector<8x128xf32>
    %1098 = arith.mulf %1097, %1096 : vector<8x128xf32>
    %1099 = arith.addf %1089, %1098 : vector<8x128xf32>
    %c6_982 = arith.constant 6 : index
    %c9_983 = arith.constant 9 : index
    %c0_984 = arith.constant 0 : index
    %c0_985 = arith.constant 0 : index
    %1100 = vector.load %arg2[%c6_982, %c9_983, %c0_984, %c0_985] : memref<10x20x8x128xf32, #tpu.memory_space<vmem>>, vector<1x1x8x128xf32>
    %1101 = vector.shape_cast %1100 : vector<1x1x8x128xf32> to vector<8x128xf32>
    %cst_986 = arith.constant 4.5399931E-5 : f32
    %1102 = vector.broadcast %cst_986 : f32 to vector<8x128xf32>
    %1103 = arith.mulf %1102, %1101 : vector<8x128xf32>
    %1104 = arith.addf %1094, %1103 : vector<8x128xf32>
    %c6_987 = arith.constant 6 : index
    %c10_988 = arith.constant 10 : index
    %c0_989 = arith.constant 0 : index
    %c0_990 = arith.constant 0 : index
    %1105 = vector.load %arg2[%c6_987, %c10_988, %c0_989, %c0_990] : memref<10x20x8x128xf32, #tpu.memory_space<vmem>>, vector<1x1x8x128xf32>
    %1106 = vector.shape_cast %1105 : vector<1x1x8x128xf32> to vector<8x128xf32>
    %cst_991 = arith.constant 1.23409802E-4 : f32
    %1107 = vector.broadcast %cst_991 : f32 to vector<8x128xf32>
    %1108 = arith.mulf %1107, %1106 : vector<8x128xf32>
    %1109 = arith.addf %1099, %1108 : vector<8x128xf32>
    %c6_992 = arith.constant 6 : index
    %c11_993 = arith.constant 11 : index
    %c0_994 = arith.constant 0 : index
    %c0_995 = arith.constant 0 : index
    %1110 = vector.load %arg2[%c6_992, %c11_993, %c0_994, %c0_995] : memref<10x20x8x128xf32, #tpu.memory_space<vmem>>, vector<1x1x8x128xf32>
    %1111 = vector.shape_cast %1110 : vector<1x1x8x128xf32> to vector<8x128xf32>
    %cst_996 = arith.constant 3.35462624E-4 : f32
    %1112 = vector.broadcast %cst_996 : f32 to vector<8x128xf32>
    %1113 = arith.mulf %1112, %1111 : vector<8x128xf32>
    %1114 = arith.addf %1104, %1113 : vector<8x128xf32>
    %c6_997 = arith.constant 6 : index
    %c12_998 = arith.constant 12 : index
    %c0_999 = arith.constant 0 : index
    %c0_1000 = arith.constant 0 : index
    %1115 = vector.load %arg2[%c6_997, %c12_998, %c0_999, %c0_1000] : memref<10x20x8x128xf32, #tpu.memory_space<vmem>>, vector<1x1x8x128xf32>
    %1116 = vector.shape_cast %1115 : vector<1x1x8x128xf32> to vector<8x128xf32>
    %cst_1001 = arith.constant 9.118820e-04 : f32
    %1117 = vector.broadcast %cst_1001 : f32 to vector<8x128xf32>
    %1118 = arith.mulf %1117, %1116 : vector<8x128xf32>
    %1119 = arith.addf %1109, %1118 : vector<8x128xf32>
    %c6_1002 = arith.constant 6 : index
    %c13_1003 = arith.constant 13 : index
    %c0_1004 = arith.constant 0 : index
    %c0_1005 = arith.constant 0 : index
    %1120 = vector.load %arg2[%c6_1002, %c13_1003, %c0_1004, %c0_1005] : memref<10x20x8x128xf32, #tpu.memory_space<vmem>>, vector<1x1x8x128xf32>
    %1121 = vector.shape_cast %1120 : vector<1x1x8x128xf32> to vector<8x128xf32>
    %cst_1006 = arith.constant 0.00247875229 : f32
    %1122 = vector.broadcast %cst_1006 : f32 to vector<8x128xf32>
    %1123 = arith.mulf %1122, %1121 : vector<8x128xf32>
    %1124 = arith.addf %1114, %1123 : vector<8x128xf32>
    %c6_1007 = arith.constant 6 : index
    %c14_1008 = arith.constant 14 : index
    %c0_1009 = arith.constant 0 : index
    %c0_1010 = arith.constant 0 : index
    %1125 = vector.load %arg2[%c6_1007, %c14_1008, %c0_1009, %c0_1010] : memref<10x20x8x128xf32, #tpu.memory_space<vmem>>, vector<1x1x8x128xf32>
    %1126 = vector.shape_cast %1125 : vector<1x1x8x128xf32> to vector<8x128xf32>
    %cst_1011 = arith.constant 0.006737947 : f32
    %1127 = vector.broadcast %cst_1011 : f32 to vector<8x128xf32>
    %1128 = arith.mulf %1127, %1126 : vector<8x128xf32>
    %1129 = arith.addf %1119, %1128 : vector<8x128xf32>
    %c6_1012 = arith.constant 6 : index
    %c15_1013 = arith.constant 15 : index
    %c0_1014 = arith.constant 0 : index
    %c0_1015 = arith.constant 0 : index
    %1130 = vector.load %arg2[%c6_1012, %c15_1013, %c0_1014, %c0_1015] : memref<10x20x8x128xf32, #tpu.memory_space<vmem>>, vector<1x1x8x128xf32>
    %1131 = vector.shape_cast %1130 : vector<1x1x8x128xf32> to vector<8x128xf32>
    %cst_1016 = arith.constant 0.0183156393 : f32
    %1132 = vector.broadcast %cst_1016 : f32 to vector<8x128xf32>
    %1133 = arith.mulf %1132, %1131 : vector<8x128xf32>
    %1134 = arith.addf %1124, %1133 : vector<8x128xf32>
    %c6_1017 = arith.constant 6 : index
    %c16_1018 = arith.constant 16 : index
    %c0_1019 = arith.constant 0 : index
    %c0_1020 = arith.constant 0 : index
    %1135 = vector.load %arg2[%c6_1017, %c16_1018, %c0_1019, %c0_1020] : memref<10x20x8x128xf32, #tpu.memory_space<vmem>>, vector<1x1x8x128xf32>
    %1136 = vector.shape_cast %1135 : vector<1x1x8x128xf32> to vector<8x128xf32>
    %cst_1021 = arith.constant 0.0497870669 : f32
    %1137 = vector.broadcast %cst_1021 : f32 to vector<8x128xf32>
    %1138 = arith.mulf %1137, %1136 : vector<8x128xf32>
    %1139 = arith.addf %1129, %1138 : vector<8x128xf32>
    %c6_1022 = arith.constant 6 : index
    %c17_1023 = arith.constant 17 : index
    %c0_1024 = arith.constant 0 : index
    %c0_1025 = arith.constant 0 : index
    %1140 = vector.load %arg2[%c6_1022, %c17_1023, %c0_1024, %c0_1025] : memref<10x20x8x128xf32, #tpu.memory_space<vmem>>, vector<1x1x8x128xf32>
    %1141 = vector.shape_cast %1140 : vector<1x1x8x128xf32> to vector<8x128xf32>
    %cst_1026 = arith.constant 0.135335281 : f32
    %1142 = vector.broadcast %cst_1026 : f32 to vector<8x128xf32>
    %1143 = arith.mulf %1142, %1141 : vector<8x128xf32>
    %1144 = arith.addf %1134, %1143 : vector<8x128xf32>
    %c6_1027 = arith.constant 6 : index
    %c18_1028 = arith.constant 18 : index
    %c0_1029 = arith.constant 0 : index
    %c0_1030 = arith.constant 0 : index
    %1145 = vector.load %arg2[%c6_1027, %c18_1028, %c0_1029, %c0_1030] : memref<10x20x8x128xf32, #tpu.memory_space<vmem>>, vector<1x1x8x128xf32>
    %1146 = vector.shape_cast %1145 : vector<1x1x8x128xf32> to vector<8x128xf32>
    %cst_1031 = arith.constant 0.36787945 : f32
    %1147 = vector.broadcast %cst_1031 : f32 to vector<8x128xf32>
    %1148 = arith.mulf %1147, %1146 : vector<8x128xf32>
    %1149 = arith.addf %1139, %1148 : vector<8x128xf32>
    %c6_1032 = arith.constant 6 : index
    %c19_1033 = arith.constant 19 : index
    %c0_1034 = arith.constant 0 : index
    %c0_1035 = arith.constant 0 : index
    %1150 = vector.load %arg2[%c6_1032, %c19_1033, %c0_1034, %c0_1035] : memref<10x20x8x128xf32, #tpu.memory_space<vmem>>, vector<1x1x8x128xf32>
    %1151 = vector.shape_cast %1150 : vector<1x1x8x128xf32> to vector<8x128xf32>
    %cst_1036 = arith.constant 1.000000e+00 : f32
    %1152 = vector.broadcast %cst_1036 : f32 to vector<8x128xf32>
    %1153 = arith.mulf %1152, %1151 : vector<8x128xf32>
    %1154 = arith.addf %1144, %1153 : vector<8x128xf32>
    %c0_1037 = arith.constant 0 : index
    %c0_1038 = arith.constant 0 : index
    %c0_1039 = arith.constant 0 : index
    %1155 = vector.load %arg12[%c0_1037, %c0_1038, %c0_1039] : memref<10x8x128xf32, #tpu.memory_space<vmem>>, vector<1x8x128xf32>
    %1156 = vector.shape_cast %1155 : vector<1x8x128xf32> to vector<8x128xf32>
    %cst_1040 = arith.constant -0.336897343 : f32
    %1157 = vector.broadcast %cst_1040 : f32 to vector<8x128xf32>
    %1158 = arith.mulf %1157, %1156 : vector<8x128xf32>
    %1159 = arith.addf %1149, %1158 : vector<8x128xf32>
    %c1_1041 = arith.constant 1 : index
    %c0_1042 = arith.constant 0 : index
    %c0_1043 = arith.constant 0 : index
    %1160 = vector.load %arg12[%c1_1041, %c0_1042, %c0_1043] : memref<10x8x128xf32, #tpu.memory_space<vmem>>, vector<1x8x128xf32>
    %1161 = vector.shape_cast %1160 : vector<1x8x128xf32> to vector<8x128xf32>
    %cst_1044 = arith.constant -0.915781915 : f32
    %1162 = vector.broadcast %cst_1044 : f32 to vector<8x128xf32>
    %1163 = arith.mulf %1162, %1161 : vector<8x128xf32>
    %1164 = arith.addf %1154, %1163 : vector<8x128xf32>
    %c2_1045 = arith.constant 2 : index
    %c0_1046 = arith.constant 0 : index
    %c0_1047 = arith.constant 0 : index
    %1165 = vector.load %arg12[%c2_1045, %c0_1046, %c0_1047] : memref<10x8x128xf32, #tpu.memory_space<vmem>>, vector<1x8x128xf32>
    %1166 = vector.shape_cast %1165 : vector<1x8x128xf32> to vector<8x128xf32>
    %cst_1048 = arith.constant -2.48935342 : f32
    %1167 = vector.broadcast %cst_1048 : f32 to vector<8x128xf32>
    %1168 = arith.mulf %1167, %1166 : vector<8x128xf32>
    %1169 = arith.addf %1159, %1168 : vector<8x128xf32>
    %c3_1049 = arith.constant 3 : index
    %c0_1050 = arith.constant 0 : index
    %c0_1051 = arith.constant 0 : index
    %1170 = vector.load %arg12[%c3_1049, %c0_1050, %c0_1051] : memref<10x8x128xf32, #tpu.memory_space<vmem>>, vector<1x8x128xf32>
    %1171 = vector.shape_cast %1170 : vector<1x8x128xf32> to vector<8x128xf32>
    %cst_1052 = arith.constant -6.76676416 : f32
    %1172 = vector.broadcast %cst_1052 : f32 to vector<8x128xf32>
    %1173 = arith.mulf %1172, %1171 : vector<8x128xf32>
    %1174 = arith.addf %1164, %1173 : vector<8x128xf32>
    %c4_1053 = arith.constant 4 : index
    %c0_1054 = arith.constant 0 : index
    %c0_1055 = arith.constant 0 : index
    %1175 = vector.load %arg12[%c4_1053, %c0_1054, %c0_1055] : memref<10x8x128xf32, #tpu.memory_space<vmem>>, vector<1x8x128xf32>
    %1176 = vector.shape_cast %1175 : vector<1x8x128xf32> to vector<8x128xf32>
    %cst_1056 = arith.constant -18.3939724 : f32
    %1177 = vector.broadcast %cst_1056 : f32 to vector<8x128xf32>
    %1178 = arith.mulf %1177, %1176 : vector<8x128xf32>
    %1179 = arith.addf %1169, %1178 : vector<8x128xf32>
    %c5_1057 = arith.constant 5 : index
    %c0_1058 = arith.constant 0 : index
    %c0_1059 = arith.constant 0 : index
    %1180 = vector.load %arg12[%c5_1057, %c0_1058, %c0_1059] : memref<10x8x128xf32, #tpu.memory_space<vmem>>, vector<1x8x128xf32>
    %1181 = vector.shape_cast %1180 : vector<1x8x128xf32> to vector<8x128xf32>
    %cst_1060 = arith.constant -5.000000e+01 : f32
    %1182 = vector.broadcast %cst_1060 : f32 to vector<8x128xf32>
    %1183 = arith.mulf %1182, %1181 : vector<8x128xf32>
    %1184 = arith.addf %1174, %1183 : vector<8x128xf32>
    %c6_1061 = arith.constant 6 : index
    %c0_1062 = arith.constant 0 : index
    %c0_1063 = arith.constant 0 : index
    %1185 = vector.load %arg12[%c6_1061, %c0_1062, %c0_1063] : memref<10x8x128xf32, #tpu.memory_space<vmem>>, vector<1x8x128xf32>
    %1186 = vector.shape_cast %1185 : vector<1x8x128xf32> to vector<8x128xf32>
    %cst_1064 = arith.constant -0.00617049029 : f32
    %1187 = vector.broadcast %cst_1064 : f32 to vector<8x128xf32>
    %1188 = arith.mulf %1187, %1186 : vector<8x128xf32>
    %1189 = arith.addf %1179, %1188 : vector<8x128xf32>
    %c7_1065 = arith.constant 7 : index
    %c0_1066 = arith.constant 0 : index
    %c0_1067 = arith.constant 0 : index
    %1190 = vector.load %arg12[%c7_1065, %c0_1066, %c0_1067] : memref<10x8x128xf32, #tpu.memory_space<vmem>>, vector<1x8x128xf32>
    %1191 = vector.shape_cast %1190 : vector<1x8x128xf32> to vector<8x128xf32>
    %cst_1068 = arith.constant -0.0167731307 : f32
    %1192 = vector.broadcast %cst_1068 : f32 to vector<8x128xf32>
    %1193 = arith.mulf %1192, %1191 : vector<8x128xf32>
    %1194 = arith.addf %1184, %1193 : vector<8x128xf32>
    %c8_1069 = arith.constant 8 : index
    %c0_1070 = arith.constant 0 : index
    %c0_1071 = arith.constant 0 : index
    %1195 = vector.load %arg12[%c8_1069, %c0_1070, %c0_1071] : memref<10x8x128xf32, #tpu.memory_space<vmem>>, vector<1x8x128xf32>
    %1196 = vector.shape_cast %1195 : vector<1x8x128xf32> to vector<8x128xf32>
    %cst_1072 = arith.constant -4.559410e-02 : f32
    %1197 = vector.broadcast %cst_1072 : f32 to vector<8x128xf32>
    %1198 = arith.mulf %1197, %1196 : vector<8x128xf32>
    %1199 = arith.addf %1189, %1198 : vector<8x128xf32>
    %c9_1073 = arith.constant 9 : index
    %c0_1074 = arith.constant 0 : index
    %c0_1075 = arith.constant 0 : index
    %1200 = vector.load %arg12[%c9_1073, %c0_1074, %c0_1075] : memref<10x8x128xf32, #tpu.memory_space<vmem>>, vector<1x8x128xf32>
    %1201 = vector.shape_cast %1200 : vector<1x8x128xf32> to vector<8x128xf32>
    %cst_1076 = arith.constant -0.123937607 : f32
    %1202 = vector.broadcast %cst_1076 : f32 to vector<8x128xf32>
    %1203 = arith.mulf %1202, %1201 : vector<8x128xf32>
    %1204 = arith.addf %1194, %1203 : vector<8x128xf32>
    %1205 = arith.addf %1199, %1204 : vector<8x128xf32>
    %c0_1077 = arith.constant 0 : index
    %c0_1078 = arith.constant 0 : index
    %1206 = vector.load %arg11[%c0_1077, %c0_1078] : memref<1x128xf32, #tpu.memory_space<vmem>>, vector<1x128xf32>
    %cst_1079 = arith.constant 0.99999988 : f32
    %1207 = vector.broadcast %cst_1079 : f32 to vector<1x128xf32>
    %1208 = arith.mulf %1206, %1207 : vector<1x128xf32>
    %cst_1080 = arith.constant -5.200000e+01 : f32
    %1209 = vector.broadcast %cst_1080 : f32 to vector<1x128xf32>
    %1210 = arith.addf %1209, %1208 : vector<1x128xf32>
    %1211 = vector.broadcast %1210 : vector<1x128xf32> to vector<8x128xf32>
    %1212 = arith.cmpf oge, %1205, %1211 : vector<8x128xf32>
    %1213 = arith.extui %1212 : vector<8x128xi1> to vector<8x128xi32>
    %1214 = arith.sitofp %1213 : vector<8x128xi32> to vector<8x128xf32>
    %cst_1081 = arith.constant dense<0.000000e+00> : vector<128xf32>
    %1215 = vector.multi_reduction <add>, %1214, %cst_1081 [0] : vector<8x128xf32> to vector<128xf32>
    %1216 = vector.shape_cast %1215 : vector<128xf32> to vector<1x128xf32>
    %cst_1082 = arith.constant 5.000000e-02 : f32
    %1217 = vector.broadcast %cst_1082 : f32 to vector<1x128xf32>
    %1218 = arith.mulf %1217, %1216 : vector<1x128xf32>
    %1219 = arith.addf %1208, %1218 : vector<1x128xf32>
    %c0_1083 = arith.constant 0 : index
    %c0_1084 = arith.constant 0 : index
    %1220 = vector.load %arg10[%c0_1083, %c0_1084] : memref<8x128xf32, #tpu.memory_space<vmem>>, vector<8x128xf32>
    tpu.vector_store %arg10[%c0_1083, %c0_1084], %1205 {strides = array<i32>} : memref<8x128xf32, #tpu.memory_space<vmem>>, vector<8x128xf32>,
    %c0_1085 = arith.constant 0 : index
    %c0_1086 = arith.constant 0 : index
    %1221 = vector.load %arg11[%c0_1085, %c0_1086] : memref<1x128xf32, #tpu.memory_space<vmem>>, vector<1x128xf32>
    tpu.vector_store %arg11[%c0_1085, %c0_1086], %1219 {strides = array<i32>} : memref<1x128xf32, #tpu.memory_space<vmem>>, vector<1x128xf32>,
    %c6_1087 = arith.constant 6 : index
    %c0_1088 = arith.constant 0 : index
    %c0_1089 = arith.constant 0 : index
    %1222 = vector.load %arg12[%c6_1087, %c0_1088, %c0_1089] : memref<10x8x128xf32, #tpu.memory_space<vmem>>, vector<1x8x128xf32>
    %1223 = vector.shape_cast %1222 : vector<1x8x128xf32> to vector<8x128xf32>
    %1224 = vector.shape_cast %1214 : vector<8x128xf32> to vector<1x8x128xf32>
    tpu.vector_store %arg12[%c6_1087, %c0_1088, %c0_1089], %1224 {strides = array<i32>} : memref<10x8x128xf32, #tpu.memory_space<vmem>>, vector<1x8x128xf32>,
    %c6_1090 = arith.constant 6 : index
    %c0_1091 = arith.constant 0 : index
    %c0_1092 = arith.constant 0 : index
    %1225 = vector.load %arg7[%c6_1090, %c0_1091, %c0_1092] : memref<10x8x128xf32, #tpu.memory_space<vmem>>, vector<1x8x128xf32>
    %1226 = vector.shape_cast %1225 : vector<1x8x128xf32> to vector<8x128xf32>
    %1227 = vector.shape_cast %1214 : vector<8x128xf32> to vector<1x8x128xf32>
    tpu.vector_store %arg7[%c6_1090, %c0_1091, %c0_1092], %1227 {strides = array<i32>} : memref<10x8x128xf32, #tpu.memory_space<vmem>>, vector<1x8x128xf32>,
    %c0_1093 = arith.constant 0 : index
    %c0_1094 = arith.constant 0 : index
    %1228 = vector.load %arg10[%c0_1093, %c0_1094] : memref<8x128xf32, #tpu.memory_space<vmem>>, vector<8x128xf32>
    %cst_1095 = arith.constant 0.990049839 : f32
    %1229 = vector.broadcast %cst_1095 : f32 to vector<8x128xf32>
    %1230 = arith.mulf %1228, %1229 : vector<8x128xf32>
    %c7_1096 = arith.constant 7 : index
    %c0_1097 = arith.constant 0 : index
    %c0_1098 = arith.constant 0 : index
    %c0_1099 = arith.constant 0 : index
    %1231 = vector.load %arg2[%c7_1096, %c0_1097, %c0_1098, %c0_1099] : memref<10x20x8x128xf32, #tpu.memory_space<vmem>>, vector<1x1x8x128xf32>
    %1232 = vector.shape_cast %1231 : vector<1x1x8x128xf32> to vector<8x128xf32>
    %cst_1100 = arith.constant 5.60279644E-9 : f32
    %1233 = vector.broadcast %cst_1100 : f32 to vector<8x128xf32>
    %1234 = arith.mulf %1233, %1232 : vector<8x128xf32>
    %c7_1101 = arith.constant 7 : index
    %c1_1102 = arith.constant 1 : index
    %c0_1103 = arith.constant 0 : index
    %c0_1104 = arith.constant 0 : index
    %1235 = vector.load %arg2[%c7_1101, %c1_1102, %c0_1103, %c0_1104] : memref<10x20x8x128xf32, #tpu.memory_space<vmem>>, vector<1x1x8x128xf32>
    %1236 = vector.shape_cast %1235 : vector<1x1x8x128xf32> to vector<8x128xf32>
    %cst_1105 = arith.constant 1.52299791E-8 : f32
    %1237 = vector.broadcast %cst_1105 : f32 to vector<8x128xf32>
    %1238 = arith.mulf %1237, %1236 : vector<8x128xf32>
    %1239 = arith.addf %1234, %1238 : vector<8x128xf32>
    %c7_1106 = arith.constant 7 : index
    %c2_1107 = arith.constant 2 : index
    %c0_1108 = arith.constant 0 : index
    %c0_1109 = arith.constant 0 : index
    %1240 = vector.load %arg2[%c7_1106, %c2_1107, %c0_1108, %c0_1109] : memref<10x20x8x128xf32, #tpu.memory_space<vmem>>, vector<1x1x8x128xf32>
    %1241 = vector.shape_cast %1240 : vector<1x1x8x128xf32> to vector<8x128xf32>
    %cst_1110 = arith.constant 4.13993781E-8 : f32
    %1242 = vector.broadcast %cst_1110 : f32 to vector<8x128xf32>
    %1243 = arith.mulf %1242, %1241 : vector<8x128xf32>
    %1244 = arith.addf %1230, %1243 : vector<8x128xf32>
    %c7_1111 = arith.constant 7 : index
    %c3_1112 = arith.constant 3 : index
    %c0_1113 = arith.constant 0 : index
    %c0_1114 = arith.constant 0 : index
    %1245 = vector.load %arg2[%c7_1111, %c3_1112, %c0_1113, %c0_1114] : memref<10x20x8x128xf32, #tpu.memory_space<vmem>>, vector<1x1x8x128xf32>
    %1246 = vector.shape_cast %1245 : vector<1x1x8x128xf32> to vector<8x128xf32>
    %cst_1115 = arith.constant 1.12535176E-7 : f32
    %1247 = vector.broadcast %cst_1115 : f32 to vector<8x128xf32>
    %1248 = arith.mulf %1247, %1246 : vector<8x128xf32>
    %1249 = arith.addf %1239, %1248 : vector<8x128xf32>
    %c7_1116 = arith.constant 7 : index
    %c4_1117 = arith.constant 4 : index
    %c0_1118 = arith.constant 0 : index
    %c0_1119 = arith.constant 0 : index
    %1250 = vector.load %arg2[%c7_1116, %c4_1117, %c0_1118, %c0_1119] : memref<10x20x8x128xf32, #tpu.memory_space<vmem>>, vector<1x1x8x128xf32>
    %1251 = vector.shape_cast %1250 : vector<1x1x8x128xf32> to vector<8x128xf32>
    %cst_1120 = arith.constant 3.05902319E-7 : f32
    %1252 = vector.broadcast %cst_1120 : f32 to vector<8x128xf32>
    %1253 = arith.mulf %1252, %1251 : vector<8x128xf32>
    %1254 = arith.addf %1244, %1253 : vector<8x128xf32>
    %c7_1121 = arith.constant 7 : index
    %c5_1122 = arith.constant 5 : index
    %c0_1123 = arith.constant 0 : index
    %c0_1124 = arith.constant 0 : index
    %1255 = vector.load %arg2[%c7_1121, %c5_1122, %c0_1123, %c0_1124] : memref<10x20x8x128xf32, #tpu.memory_space<vmem>>, vector<1x1x8x128xf32>
    %1256 = vector.shape_cast %1255 : vector<1x1x8x128xf32> to vector<8x128xf32>
    %cst_1125 = arith.constant 8.31528723E-7 : f32
    %1257 = vector.broadcast %cst_1125 : f32 to vector<8x128xf32>
    %1258 = arith.mulf %1257, %1256 : vector<8x128xf32>
    %1259 = arith.addf %1249, %1258 : vector<8x128xf32>
    %c7_1126 = arith.constant 7 : index
    %c6_1127 = arith.constant 6 : index
    %c0_1128 = arith.constant 0 : index
    %c0_1129 = arith.constant 0 : index
    %1260 = vector.load %arg2[%c7_1126, %c6_1127, %c0_1128, %c0_1129] : memref<10x20x8x128xf32, #tpu.memory_space<vmem>>, vector<1x1x8x128xf32>
    %1261 = vector.shape_cast %1260 : vector<1x1x8x128xf32> to vector<8x128xf32>
    %cst_1130 = arith.constant 2.26032944E-6 : f32
    %1262 = vector.broadcast %cst_1130 : f32 to vector<8x128xf32>
    %1263 = arith.mulf %1262, %1261 : vector<8x128xf32>
    %1264 = arith.addf %1254, %1263 : vector<8x128xf32>
    %c7_1131 = arith.constant 7 : index
    %c7_1132 = arith.constant 7 : index
    %c0_1133 = arith.constant 0 : index
    %c0_1134 = arith.constant 0 : index
    %1265 = vector.load %arg2[%c7_1131, %c7_1132, %c0_1133, %c0_1134] : memref<10x20x8x128xf32, #tpu.memory_space<vmem>>, vector<1x1x8x128xf32>
    %1266 = vector.shape_cast %1265 : vector<1x1x8x128xf32> to vector<8x128xf32>
    %cst_1135 = arith.constant 6.14421242E-6 : f32
    %1267 = vector.broadcast %cst_1135 : f32 to vector<8x128xf32>
    %1268 = arith.mulf %1267, %1266 : vector<8x128xf32>
    %1269 = arith.addf %1259, %1268 : vector<8x128xf32>
    %c7_1136 = arith.constant 7 : index
    %c8_1137 = arith.constant 8 : index
    %c0_1138 = arith.constant 0 : index
    %c0_1139 = arith.constant 0 : index
    %1270 = vector.load %arg2[%c7_1136, %c8_1137, %c0_1138, %c0_1139] : memref<10x20x8x128xf32, #tpu.memory_space<vmem>>, vector<1x1x8x128xf32>
    %1271 = vector.shape_cast %1270 : vector<1x1x8x128xf32> to vector<8x128xf32>
    %cst_1140 = arith.constant 1.670170e-05 : f32
    %1272 = vector.broadcast %cst_1140 : f32 to vector<8x128xf32>
    %1273 = arith.mulf %1272, %1271 : vector<8x128xf32>
    %1274 = arith.addf %1264, %1273 : vector<8x128xf32>
    %c7_1141 = arith.constant 7 : index
    %c9_1142 = arith.constant 9 : index
    %c0_1143 = arith.constant 0 : index
    %c0_1144 = arith.constant 0 : index
    %1275 = vector.load %arg2[%c7_1141, %c9_1142, %c0_1143, %c0_1144] : memref<10x20x8x128xf32, #tpu.memory_space<vmem>>, vector<1x1x8x128xf32>
    %1276 = vector.shape_cast %1275 : vector<1x1x8x128xf32> to vector<8x128xf32>
    %cst_1145 = arith.constant 4.5399931E-5 : f32
    %1277 = vector.broadcast %cst_1145 : f32 to vector<8x128xf32>
    %1278 = arith.mulf %1277, %1276 : vector<8x128xf32>
    %1279 = arith.addf %1269, %1278 : vector<8x128xf32>
    %c7_1146 = arith.constant 7 : index
    %c10_1147 = arith.constant 10 : index
    %c0_1148 = arith.constant 0 : index
    %c0_1149 = arith.constant 0 : index
    %1280 = vector.load %arg2[%c7_1146, %c10_1147, %c0_1148, %c0_1149] : memref<10x20x8x128xf32, #tpu.memory_space<vmem>>, vector<1x1x8x128xf32>
    %1281 = vector.shape_cast %1280 : vector<1x1x8x128xf32> to vector<8x128xf32>
    %cst_1150 = arith.constant 1.23409802E-4 : f32
    %1282 = vector.broadcast %cst_1150 : f32 to vector<8x128xf32>
    %1283 = arith.mulf %1282, %1281 : vector<8x128xf32>
    %1284 = arith.addf %1274, %1283 : vector<8x128xf32>
    %c7_1151 = arith.constant 7 : index
    %c11_1152 = arith.constant 11 : index
    %c0_1153 = arith.constant 0 : index
    %c0_1154 = arith.constant 0 : index
    %1285 = vector.load %arg2[%c7_1151, %c11_1152, %c0_1153, %c0_1154] : memref<10x20x8x128xf32, #tpu.memory_space<vmem>>, vector<1x1x8x128xf32>
    %1286 = vector.shape_cast %1285 : vector<1x1x8x128xf32> to vector<8x128xf32>
    %cst_1155 = arith.constant 3.35462624E-4 : f32
    %1287 = vector.broadcast %cst_1155 : f32 to vector<8x128xf32>
    %1288 = arith.mulf %1287, %1286 : vector<8x128xf32>
    %1289 = arith.addf %1279, %1288 : vector<8x128xf32>
    %c7_1156 = arith.constant 7 : index
    %c12_1157 = arith.constant 12 : index
    %c0_1158 = arith.constant 0 : index
    %c0_1159 = arith.constant 0 : index
    %1290 = vector.load %arg2[%c7_1156, %c12_1157, %c0_1158, %c0_1159] : memref<10x20x8x128xf32, #tpu.memory_space<vmem>>, vector<1x1x8x128xf32>
    %1291 = vector.shape_cast %1290 : vector<1x1x8x128xf32> to vector<8x128xf32>
    %cst_1160 = arith.constant 9.118820e-04 : f32
    %1292 = vector.broadcast %cst_1160 : f32 to vector<8x128xf32>
    %1293 = arith.mulf %1292, %1291 : vector<8x128xf32>
    %1294 = arith.addf %1284, %1293 : vector<8x128xf32>
    %c7_1161 = arith.constant 7 : index
    %c13_1162 = arith.constant 13 : index
    %c0_1163 = arith.constant 0 : index
    %c0_1164 = arith.constant 0 : index
    %1295 = vector.load %arg2[%c7_1161, %c13_1162, %c0_1163, %c0_1164] : memref<10x20x8x128xf32, #tpu.memory_space<vmem>>, vector<1x1x8x128xf32>
    %1296 = vector.shape_cast %1295 : vector<1x1x8x128xf32> to vector<8x128xf32>
    %cst_1165 = arith.constant 0.00247875229 : f32
    %1297 = vector.broadcast %cst_1165 : f32 to vector<8x128xf32>
    %1298 = arith.mulf %1297, %1296 : vector<8x128xf32>
    %1299 = arith.addf %1289, %1298 : vector<8x128xf32>
    %c7_1166 = arith.constant 7 : index
    %c14_1167 = arith.constant 14 : index
    %c0_1168 = arith.constant 0 : index
    %c0_1169 = arith.constant 0 : index
    %1300 = vector.load %arg2[%c7_1166, %c14_1167, %c0_1168, %c0_1169] : memref<10x20x8x128xf32, #tpu.memory_space<vmem>>, vector<1x1x8x128xf32>
    %1301 = vector.shape_cast %1300 : vector<1x1x8x128xf32> to vector<8x128xf32>
    %cst_1170 = arith.constant 0.006737947 : f32
    %1302 = vector.broadcast %cst_1170 : f32 to vector<8x128xf32>
    %1303 = arith.mulf %1302, %1301 : vector<8x128xf32>
    %1304 = arith.addf %1294, %1303 : vector<8x128xf32>
    %c7_1171 = arith.constant 7 : index
    %c15_1172 = arith.constant 15 : index
    %c0_1173 = arith.constant 0 : index
    %c0_1174 = arith.constant 0 : index
    %1305 = vector.load %arg2[%c7_1171, %c15_1172, %c0_1173, %c0_1174] : memref<10x20x8x128xf32, #tpu.memory_space<vmem>>, vector<1x1x8x128xf32>
    %1306 = vector.shape_cast %1305 : vector<1x1x8x128xf32> to vector<8x128xf32>
    %cst_1175 = arith.constant 0.0183156393 : f32
    %1307 = vector.broadcast %cst_1175 : f32 to vector<8x128xf32>
    %1308 = arith.mulf %1307, %1306 : vector<8x128xf32>
    %1309 = arith.addf %1299, %1308 : vector<8x128xf32>
    %c7_1176 = arith.constant 7 : index
    %c16_1177 = arith.constant 16 : index
    %c0_1178 = arith.constant 0 : index
    %c0_1179 = arith.constant 0 : index
    %1310 = vector.load %arg2[%c7_1176, %c16_1177, %c0_1178, %c0_1179] : memref<10x20x8x128xf32, #tpu.memory_space<vmem>>, vector<1x1x8x128xf32>
    %1311 = vector.shape_cast %1310 : vector<1x1x8x128xf32> to vector<8x128xf32>
    %cst_1180 = arith.constant 0.0497870669 : f32
    %1312 = vector.broadcast %cst_1180 : f32 to vector<8x128xf32>
    %1313 = arith.mulf %1312, %1311 : vector<8x128xf32>
    %1314 = arith.addf %1304, %1313 : vector<8x128xf32>
    %c7_1181 = arith.constant 7 : index
    %c17_1182 = arith.constant 17 : index
    %c0_1183 = arith.constant 0 : index
    %c0_1184 = arith.constant 0 : index
    %1315 = vector.load %arg2[%c7_1181, %c17_1182, %c0_1183, %c0_1184] : memref<10x20x8x128xf32, #tpu.memory_space<vmem>>, vector<1x1x8x128xf32>
    %1316 = vector.shape_cast %1315 : vector<1x1x8x128xf32> to vector<8x128xf32>
    %cst_1185 = arith.constant 0.135335281 : f32
    %1317 = vector.broadcast %cst_1185 : f32 to vector<8x128xf32>
    %1318 = arith.mulf %1317, %1316 : vector<8x128xf32>
    %1319 = arith.addf %1309, %1318 : vector<8x128xf32>
    %c7_1186 = arith.constant 7 : index
    %c18_1187 = arith.constant 18 : index
    %c0_1188 = arith.constant 0 : index
    %c0_1189 = arith.constant 0 : index
    %1320 = vector.load %arg2[%c7_1186, %c18_1187, %c0_1188, %c0_1189] : memref<10x20x8x128xf32, #tpu.memory_space<vmem>>, vector<1x1x8x128xf32>
    %1321 = vector.shape_cast %1320 : vector<1x1x8x128xf32> to vector<8x128xf32>
    %cst_1190 = arith.constant 0.36787945 : f32
    %1322 = vector.broadcast %cst_1190 : f32 to vector<8x128xf32>
    %1323 = arith.mulf %1322, %1321 : vector<8x128xf32>
    %1324 = arith.addf %1314, %1323 : vector<8x128xf32>
    %c7_1191 = arith.constant 7 : index
    %c19_1192 = arith.constant 19 : index
    %c0_1193 = arith.constant 0 : index
    %c0_1194 = arith.constant 0 : index
    %1325 = vector.load %arg2[%c7_1191, %c19_1192, %c0_1193, %c0_1194] : memref<10x20x8x128xf32, #tpu.memory_space<vmem>>, vector<1x1x8x128xf32>
    %1326 = vector.shape_cast %1325 : vector<1x1x8x128xf32> to vector<8x128xf32>
    %cst_1195 = arith.constant 1.000000e+00 : f32
    %1327 = vector.broadcast %cst_1195 : f32 to vector<8x128xf32>
    %1328 = arith.mulf %1327, %1326 : vector<8x128xf32>
    %1329 = arith.addf %1319, %1328 : vector<8x128xf32>
    %c0_1196 = arith.constant 0 : index
    %c0_1197 = arith.constant 0 : index
    %c0_1198 = arith.constant 0 : index
    %1330 = vector.load %arg12[%c0_1196, %c0_1197, %c0_1198] : memref<10x8x128xf32, #tpu.memory_space<vmem>>, vector<1x8x128xf32>
    %1331 = vector.shape_cast %1330 : vector<1x8x128xf32> to vector<8x128xf32>
    %cst_1199 = arith.constant -0.123937607 : f32
    %1332 = vector.broadcast %cst_1199 : f32 to vector<8x128xf32>
    %1333 = arith.mulf %1332, %1331 : vector<8x128xf32>
    %1334 = arith.addf %1324, %1333 : vector<8x128xf32>
    %c1_1200 = arith.constant 1 : index
    %c0_1201 = arith.constant 0 : index
    %c0_1202 = arith.constant 0 : index
    %1335 = vector.load %arg12[%c1_1200, %c0_1201, %c0_1202] : memref<10x8x128xf32, #tpu.memory_space<vmem>>, vector<1x8x128xf32>
    %1336 = vector.shape_cast %1335 : vector<1x8x128xf32> to vector<8x128xf32>
    %cst_1203 = arith.constant -0.336897343 : f32
    %1337 = vector.broadcast %cst_1203 : f32 to vector<8x128xf32>
    %1338 = arith.mulf %1337, %1336 : vector<8x128xf32>
    %1339 = arith.addf %1329, %1338 : vector<8x128xf32>
    %c2_1204 = arith.constant 2 : index
    %c0_1205 = arith.constant 0 : index
    %c0_1206 = arith.constant 0 : index
    %1340 = vector.load %arg12[%c2_1204, %c0_1205, %c0_1206] : memref<10x8x128xf32, #tpu.memory_space<vmem>>, vector<1x8x128xf32>
    %1341 = vector.shape_cast %1340 : vector<1x8x128xf32> to vector<8x128xf32>
    %cst_1207 = arith.constant -0.915781915 : f32
    %1342 = vector.broadcast %cst_1207 : f32 to vector<8x128xf32>
    %1343 = arith.mulf %1342, %1341 : vector<8x128xf32>
    %1344 = arith.addf %1334, %1343 : vector<8x128xf32>
    %c3_1208 = arith.constant 3 : index
    %c0_1209 = arith.constant 0 : index
    %c0_1210 = arith.constant 0 : index
    %1345 = vector.load %arg12[%c3_1208, %c0_1209, %c0_1210] : memref<10x8x128xf32, #tpu.memory_space<vmem>>, vector<1x8x128xf32>
    %1346 = vector.shape_cast %1345 : vector<1x8x128xf32> to vector<8x128xf32>
    %cst_1211 = arith.constant -2.48935342 : f32
    %1347 = vector.broadcast %cst_1211 : f32 to vector<8x128xf32>
    %1348 = arith.mulf %1347, %1346 : vector<8x128xf32>
    %1349 = arith.addf %1339, %1348 : vector<8x128xf32>
    %c4_1212 = arith.constant 4 : index
    %c0_1213 = arith.constant 0 : index
    %c0_1214 = arith.constant 0 : index
    %1350 = vector.load %arg12[%c4_1212, %c0_1213, %c0_1214] : memref<10x8x128xf32, #tpu.memory_space<vmem>>, vector<1x8x128xf32>
    %1351 = vector.shape_cast %1350 : vector<1x8x128xf32> to vector<8x128xf32>
    %cst_1215 = arith.constant -6.76676416 : f32
    %1352 = vector.broadcast %cst_1215 : f32 to vector<8x128xf32>
    %1353 = arith.mulf %1352, %1351 : vector<8x128xf32>
    %1354 = arith.addf %1344, %1353 : vector<8x128xf32>
    %c5_1216 = arith.constant 5 : index
    %c0_1217 = arith.constant 0 : index
    %c0_1218 = arith.constant 0 : index
    %1355 = vector.load %arg12[%c5_1216, %c0_1217, %c0_1218] : memref<10x8x128xf32, #tpu.memory_space<vmem>>, vector<1x8x128xf32>
    %1356 = vector.shape_cast %1355 : vector<1x8x128xf32> to vector<8x128xf32>
    %cst_1219 = arith.constant -18.3939724 : f32
    %1357 = vector.broadcast %cst_1219 : f32 to vector<8x128xf32>
    %1358 = arith.mulf %1357, %1356 : vector<8x128xf32>
    %1359 = arith.addf %1349, %1358 : vector<8x128xf32>
    %c6_1220 = arith.constant 6 : index
    %c0_1221 = arith.constant 0 : index
    %c0_1222 = arith.constant 0 : index
    %1360 = vector.load %arg12[%c6_1220, %c0_1221, %c0_1222] : memref<10x8x128xf32, #tpu.memory_space<vmem>>, vector<1x8x128xf32>
    %1361 = vector.shape_cast %1360 : vector<1x8x128xf32> to vector<8x128xf32>
    %cst_1223 = arith.constant -5.000000e+01 : f32
    %1362 = vector.broadcast %cst_1223 : f32 to vector<8x128xf32>
    %1363 = arith.mulf %1362, %1361 : vector<8x128xf32>
    %1364 = arith.addf %1354, %1363 : vector<8x128xf32>
    %c7_1224 = arith.constant 7 : index
    %c0_1225 = arith.constant 0 : index
    %c0_1226 = arith.constant 0 : index
    %1365 = vector.load %arg12[%c7_1224, %c0_1225, %c0_1226] : memref<10x8x128xf32, #tpu.memory_space<vmem>>, vector<1x8x128xf32>
    %1366 = vector.shape_cast %1365 : vector<1x8x128xf32> to vector<8x128xf32>
    %cst_1227 = arith.constant -0.00617049029 : f32
    %1367 = vector.broadcast %cst_1227 : f32 to vector<8x128xf32>
    %1368 = arith.mulf %1367, %1366 : vector<8x128xf32>
    %1369 = arith.addf %1359, %1368 : vector<8x128xf32>
    %c8_1228 = arith.constant 8 : index
    %c0_1229 = arith.constant 0 : index
    %c0_1230 = arith.constant 0 : index
    %1370 = vector.load %arg12[%c8_1228, %c0_1229, %c0_1230] : memref<10x8x128xf32, #tpu.memory_space<vmem>>, vector<1x8x128xf32>
    %1371 = vector.shape_cast %1370 : vector<1x8x128xf32> to vector<8x128xf32>
    %cst_1231 = arith.constant -0.0167731307 : f32
    %1372 = vector.broadcast %cst_1231 : f32 to vector<8x128xf32>
    %1373 = arith.mulf %1372, %1371 : vector<8x128xf32>
    %1374 = arith.addf %1364, %1373 : vector<8x128xf32>
    %c9_1232 = arith.constant 9 : index
    %c0_1233 = arith.constant 0 : index
    %c0_1234 = arith.constant 0 : index
    %1375 = vector.load %arg12[%c9_1232, %c0_1233, %c0_1234] : memref<10x8x128xf32, #tpu.memory_space<vmem>>, vector<1x8x128xf32>
    %1376 = vector.shape_cast %1375 : vector<1x8x128xf32> to vector<8x128xf32>
    %cst_1235 = arith.constant -4.559410e-02 : f32
    %1377 = vector.broadcast %cst_1235 : f32 to vector<8x128xf32>
    %1378 = arith.mulf %1377, %1376 : vector<8x128xf32>
    %1379 = arith.addf %1369, %1378 : vector<8x128xf32>
    %1380 = arith.addf %1374, %1379 : vector<8x128xf32>
    %c0_1236 = arith.constant 0 : index
    %c0_1237 = arith.constant 0 : index
    %1381 = vector.load %arg11[%c0_1236, %c0_1237] : memref<1x128xf32, #tpu.memory_space<vmem>>, vector<1x128xf32>
    %cst_1238 = arith.constant 0.99999988 : f32
    %1382 = vector.broadcast %cst_1238 : f32 to vector<1x128xf32>
    %1383 = arith.mulf %1381, %1382 : vector<1x128xf32>
    %cst_1239 = arith.constant -5.200000e+01 : f32
    %1384 = vector.broadcast %cst_1239 : f32 to vector<1x128xf32>
    %1385 = arith.addf %1384, %1383 : vector<1x128xf32>
    %1386 = vector.broadcast %1385 : vector<1x128xf32> to vector<8x128xf32>
    %1387 = arith.cmpf oge, %1380, %1386 : vector<8x128xf32>
    %1388 = arith.extui %1387 : vector<8x128xi1> to vector<8x128xi32>
    %1389 = arith.sitofp %1388 : vector<8x128xi32> to vector<8x128xf32>
    %cst_1240 = arith.constant dense<0.000000e+00> : vector<128xf32>
    %1390 = vector.multi_reduction <add>, %1389, %cst_1240 [0] : vector<8x128xf32> to vector<128xf32>
    %1391 = vector.shape_cast %1390 : vector<128xf32> to vector<1x128xf32>
    %cst_1241 = arith.constant 5.000000e-02 : f32
    %1392 = vector.broadcast %cst_1241 : f32 to vector<1x128xf32>
    %1393 = arith.mulf %1392, %1391 : vector<1x128xf32>
    %1394 = arith.addf %1383, %1393 : vector<1x128xf32>
    %c0_1242 = arith.constant 0 : index
    %c0_1243 = arith.constant 0 : index
    %1395 = vector.load %arg10[%c0_1242, %c0_1243] : memref<8x128xf32, #tpu.memory_space<vmem>>, vector<8x128xf32>
    tpu.vector_store %arg10[%c0_1242, %c0_1243], %1380 {strides = array<i32>} : memref<8x128xf32, #tpu.memory_space<vmem>>, vector<8x128xf32>,
    %c0_1244 = arith.constant 0 : index
    %c0_1245 = arith.constant 0 : index
    %1396 = vector.load %arg11[%c0_1244, %c0_1245] : memref<1x128xf32, #tpu.memory_space<vmem>>, vector<1x128xf32>
    tpu.vector_store %arg11[%c0_1244, %c0_1245], %1394 {strides = array<i32>} : memref<1x128xf32, #tpu.memory_space<vmem>>, vector<1x128xf32>,
    %c7_1246 = arith.constant 7 : index
    %c0_1247 = arith.constant 0 : index
    %c0_1248 = arith.constant 0 : index
    %1397 = vector.load %arg12[%c7_1246, %c0_1247, %c0_1248] : memref<10x8x128xf32, #tpu.memory_space<vmem>>, vector<1x8x128xf32>
    %1398 = vector.shape_cast %1397 : vector<1x8x128xf32> to vector<8x128xf32>
    %1399 = vector.shape_cast %1389 : vector<8x128xf32> to vector<1x8x128xf32>
    tpu.vector_store %arg12[%c7_1246, %c0_1247, %c0_1248], %1399 {strides = array<i32>} : memref<10x8x128xf32, #tpu.memory_space<vmem>>, vector<1x8x128xf32>,
    %c7_1249 = arith.constant 7 : index
    %c0_1250 = arith.constant 0 : index
    %c0_1251 = arith.constant 0 : index
    %1400 = vector.load %arg7[%c7_1249, %c0_1250, %c0_1251] : memref<10x8x128xf32, #tpu.memory_space<vmem>>, vector<1x8x128xf32>
    %1401 = vector.shape_cast %1400 : vector<1x8x128xf32> to vector<8x128xf32>
    %1402 = vector.shape_cast %1389 : vector<8x128xf32> to vector<1x8x128xf32>
    tpu.vector_store %arg7[%c7_1249, %c0_1250, %c0_1251], %1402 {strides = array<i32>} : memref<10x8x128xf32, #tpu.memory_space<vmem>>, vector<1x8x128xf32>,
    %c0_1252 = arith.constant 0 : index
    %c0_1253 = arith.constant 0 : index
    %1403 = vector.load %arg10[%c0_1252, %c0_1253] : memref<8x128xf32, #tpu.memory_space<vmem>>, vector<8x128xf32>
    %cst_1254 = arith.constant 0.990049839 : f32
    %1404 = vector.broadcast %cst_1254 : f32 to vector<8x128xf32>
    %1405 = arith.mulf %1403, %1404 : vector<8x128xf32>
    %c8_1255 = arith.constant 8 : index
    %c0_1256 = arith.constant 0 : index
    %c0_1257 = arith.constant 0 : index
    %c0_1258 = arith.constant 0 : index
    %1406 = vector.load %arg2[%c8_1255, %c0_1256, %c0_1257, %c0_1258] : memref<10x20x8x128xf32, #tpu.memory_space<vmem>>, vector<1x1x8x128xf32>
    %1407 = vector.shape_cast %1406 : vector<1x1x8x128xf32> to vector<8x128xf32>
    %cst_1259 = arith.constant 5.60279644E-9 : f32
    %1408 = vector.broadcast %cst_1259 : f32 to vector<8x128xf32>
    %1409 = arith.mulf %1408, %1407 : vector<8x128xf32>
    %c8_1260 = arith.constant 8 : index
    %c1_1261 = arith.constant 1 : index
    %c0_1262 = arith.constant 0 : index
    %c0_1263 = arith.constant 0 : index
    %1410 = vector.load %arg2[%c8_1260, %c1_1261, %c0_1262, %c0_1263] : memref<10x20x8x128xf32, #tpu.memory_space<vmem>>, vector<1x1x8x128xf32>
    %1411 = vector.shape_cast %1410 : vector<1x1x8x128xf32> to vector<8x128xf32>
    %cst_1264 = arith.constant 1.52299791E-8 : f32
    %1412 = vector.broadcast %cst_1264 : f32 to vector<8x128xf32>
    %1413 = arith.mulf %1412, %1411 : vector<8x128xf32>
    %1414 = arith.addf %1409, %1413 : vector<8x128xf32>
    %c8_1265 = arith.constant 8 : index
    %c2_1266 = arith.constant 2 : index
    %c0_1267 = arith.constant 0 : index
    %c0_1268 = arith.constant 0 : index
    %1415 = vector.load %arg2[%c8_1265, %c2_1266, %c0_1267, %c0_1268] : memref<10x20x8x128xf32, #tpu.memory_space<vmem>>, vector<1x1x8x128xf32>
    %1416 = vector.shape_cast %1415 : vector<1x1x8x128xf32> to vector<8x128xf32>
    %cst_1269 = arith.constant 4.13993781E-8 : f32
    %1417 = vector.broadcast %cst_1269 : f32 to vector<8x128xf32>
    %1418 = arith.mulf %1417, %1416 : vector<8x128xf32>
    %1419 = arith.addf %1405, %1418 : vector<8x128xf32>
    %c8_1270 = arith.constant 8 : index
    %c3_1271 = arith.constant 3 : index
    %c0_1272 = arith.constant 0 : index
    %c0_1273 = arith.constant 0 : index
    %1420 = vector.load %arg2[%c8_1270, %c3_1271, %c0_1272, %c0_1273] : memref<10x20x8x128xf32, #tpu.memory_space<vmem>>, vector<1x1x8x128xf32>
    %1421 = vector.shape_cast %1420 : vector<1x1x8x128xf32> to vector<8x128xf32>
    %cst_1274 = arith.constant 1.12535176E-7 : f32
    %1422 = vector.broadcast %cst_1274 : f32 to vector<8x128xf32>
    %1423 = arith.mulf %1422, %1421 : vector<8x128xf32>
    %1424 = arith.addf %1414, %1423 : vector<8x128xf32>
    %c8_1275 = arith.constant 8 : index
    %c4_1276 = arith.constant 4 : index
    %c0_1277 = arith.constant 0 : index
    %c0_1278 = arith.constant 0 : index
    %1425 = vector.load %arg2[%c8_1275, %c4_1276, %c0_1277, %c0_1278] : memref<10x20x8x128xf32, #tpu.memory_space<vmem>>, vector<1x1x8x128xf32>
    %1426 = vector.shape_cast %1425 : vector<1x1x8x128xf32> to vector<8x128xf32>
    %cst_1279 = arith.constant 3.05902319E-7 : f32
    %1427 = vector.broadcast %cst_1279 : f32 to vector<8x128xf32>
    %1428 = arith.mulf %1427, %1426 : vector<8x128xf32>
    %1429 = arith.addf %1419, %1428 : vector<8x128xf32>
    %c8_1280 = arith.constant 8 : index
    %c5_1281 = arith.constant 5 : index
    %c0_1282 = arith.constant 0 : index
    %c0_1283 = arith.constant 0 : index
    %1430 = vector.load %arg2[%c8_1280, %c5_1281, %c0_1282, %c0_1283] : memref<10x20x8x128xf32, #tpu.memory_space<vmem>>, vector<1x1x8x128xf32>
    %1431 = vector.shape_cast %1430 : vector<1x1x8x128xf32> to vector<8x128xf32>
    %cst_1284 = arith.constant 8.31528723E-7 : f32
    %1432 = vector.broadcast %cst_1284 : f32 to vector<8x128xf32>
    %1433 = arith.mulf %1432, %1431 : vector<8x128xf32>
    %1434 = arith.addf %1424, %1433 : vector<8x128xf32>
    %c8_1285 = arith.constant 8 : index
    %c6_1286 = arith.constant 6 : index
    %c0_1287 = arith.constant 0 : index
    %c0_1288 = arith.constant 0 : index
    %1435 = vector.load %arg2[%c8_1285, %c6_1286, %c0_1287, %c0_1288] : memref<10x20x8x128xf32, #tpu.memory_space<vmem>>, vector<1x1x8x128xf32>
    %1436 = vector.shape_cast %1435 : vector<1x1x8x128xf32> to vector<8x128xf32>
    %cst_1289 = arith.constant 2.26032944E-6 : f32
    %1437 = vector.broadcast %cst_1289 : f32 to vector<8x128xf32>
    %1438 = arith.mulf %1437, %1436 : vector<8x128xf32>
    %1439 = arith.addf %1429, %1438 : vector<8x128xf32>
    %c8_1290 = arith.constant 8 : index
    %c7_1291 = arith.constant 7 : index
    %c0_1292 = arith.constant 0 : index
    %c0_1293 = arith.constant 0 : index
    %1440 = vector.load %arg2[%c8_1290, %c7_1291, %c0_1292, %c0_1293] : memref<10x20x8x128xf32, #tpu.memory_space<vmem>>, vector<1x1x8x128xf32>
    %1441 = vector.shape_cast %1440 : vector<1x1x8x128xf32> to vector<8x128xf32>
    %cst_1294 = arith.constant 6.14421242E-6 : f32
    %1442 = vector.broadcast %cst_1294 : f32 to vector<8x128xf32>
    %1443 = arith.mulf %1442, %1441 : vector<8x128xf32>
    %1444 = arith.addf %1434, %1443 : vector<8x128xf32>
    %c8_1295 = arith.constant 8 : index
    %c8_1296 = arith.constant 8 : index
    %c0_1297 = arith.constant 0 : index
    %c0_1298 = arith.constant 0 : index
    %1445 = vector.load %arg2[%c8_1295, %c8_1296, %c0_1297, %c0_1298] : memref<10x20x8x128xf32, #tpu.memory_space<vmem>>, vector<1x1x8x128xf32>
    %1446 = vector.shape_cast %1445 : vector<1x1x8x128xf32> to vector<8x128xf32>
    %cst_1299 = arith.constant 1.670170e-05 : f32
    %1447 = vector.broadcast %cst_1299 : f32 to vector<8x128xf32>
    %1448 = arith.mulf %1447, %1446 : vector<8x128xf32>
    %1449 = arith.addf %1439, %1448 : vector<8x128xf32>
    %c8_1300 = arith.constant 8 : index
    %c9_1301 = arith.constant 9 : index
    %c0_1302 = arith.constant 0 : index
    %c0_1303 = arith.constant 0 : index
    %1450 = vector.load %arg2[%c8_1300, %c9_1301, %c0_1302, %c0_1303] : memref<10x20x8x128xf32, #tpu.memory_space<vmem>>, vector<1x1x8x128xf32>
    %1451 = vector.shape_cast %1450 : vector<1x1x8x128xf32> to vector<8x128xf32>
    %cst_1304 = arith.constant 4.5399931E-5 : f32
    %1452 = vector.broadcast %cst_1304 : f32 to vector<8x128xf32>
    %1453 = arith.mulf %1452, %1451 : vector<8x128xf32>
    %1454 = arith.addf %1444, %1453 : vector<8x128xf32>
    %c8_1305 = arith.constant 8 : index
    %c10_1306 = arith.constant 10 : index
    %c0_1307 = arith.constant 0 : index
    %c0_1308 = arith.constant 0 : index
    %1455 = vector.load %arg2[%c8_1305, %c10_1306, %c0_1307, %c0_1308] : memref<10x20x8x128xf32, #tpu.memory_space<vmem>>, vector<1x1x8x128xf32>
    %1456 = vector.shape_cast %1455 : vector<1x1x8x128xf32> to vector<8x128xf32>
    %cst_1309 = arith.constant 1.23409802E-4 : f32
    %1457 = vector.broadcast %cst_1309 : f32 to vector<8x128xf32>
    %1458 = arith.mulf %1457, %1456 : vector<8x128xf32>
    %1459 = arith.addf %1449, %1458 : vector<8x128xf32>
    %c8_1310 = arith.constant 8 : index
    %c11_1311 = arith.constant 11 : index
    %c0_1312 = arith.constant 0 : index
    %c0_1313 = arith.constant 0 : index
    %1460 = vector.load %arg2[%c8_1310, %c11_1311, %c0_1312, %c0_1313] : memref<10x20x8x128xf32, #tpu.memory_space<vmem>>, vector<1x1x8x128xf32>
    %1461 = vector.shape_cast %1460 : vector<1x1x8x128xf32> to vector<8x128xf32>
    %cst_1314 = arith.constant 3.35462624E-4 : f32
    %1462 = vector.broadcast %cst_1314 : f32 to vector<8x128xf32>
    %1463 = arith.mulf %1462, %1461 : vector<8x128xf32>
    %1464 = arith.addf %1454, %1463 : vector<8x128xf32>
    %c8_1315 = arith.constant 8 : index
    %c12_1316 = arith.constant 12 : index
    %c0_1317 = arith.constant 0 : index
    %c0_1318 = arith.constant 0 : index
    %1465 = vector.load %arg2[%c8_1315, %c12_1316, %c0_1317, %c0_1318] : memref<10x20x8x128xf32, #tpu.memory_space<vmem>>, vector<1x1x8x128xf32>
    %1466 = vector.shape_cast %1465 : vector<1x1x8x128xf32> to vector<8x128xf32>
    %cst_1319 = arith.constant 9.118820e-04 : f32
    %1467 = vector.broadcast %cst_1319 : f32 to vector<8x128xf32>
    %1468 = arith.mulf %1467, %1466 : vector<8x128xf32>
    %1469 = arith.addf %1459, %1468 : vector<8x128xf32>
    %c8_1320 = arith.constant 8 : index
    %c13_1321 = arith.constant 13 : index
    %c0_1322 = arith.constant 0 : index
    %c0_1323 = arith.constant 0 : index
    %1470 = vector.load %arg2[%c8_1320, %c13_1321, %c0_1322, %c0_1323] : memref<10x20x8x128xf32, #tpu.memory_space<vmem>>, vector<1x1x8x128xf32>
    %1471 = vector.shape_cast %1470 : vector<1x1x8x128xf32> to vector<8x128xf32>
    %cst_1324 = arith.constant 0.00247875229 : f32
    %1472 = vector.broadcast %cst_1324 : f32 to vector<8x128xf32>
    %1473 = arith.mulf %1472, %1471 : vector<8x128xf32>
    %1474 = arith.addf %1464, %1473 : vector<8x128xf32>
    %c8_1325 = arith.constant 8 : index
    %c14_1326 = arith.constant 14 : index
    %c0_1327 = arith.constant 0 : index
    %c0_1328 = arith.constant 0 : index
    %1475 = vector.load %arg2[%c8_1325, %c14_1326, %c0_1327, %c0_1328] : memref<10x20x8x128xf32, #tpu.memory_space<vmem>>, vector<1x1x8x128xf32>
    %1476 = vector.shape_cast %1475 : vector<1x1x8x128xf32> to vector<8x128xf32>
    %cst_1329 = arith.constant 0.006737947 : f32
    %1477 = vector.broadcast %cst_1329 : f32 to vector<8x128xf32>
    %1478 = arith.mulf %1477, %1476 : vector<8x128xf32>
    %1479 = arith.addf %1469, %1478 : vector<8x128xf32>
    %c8_1330 = arith.constant 8 : index
    %c15_1331 = arith.constant 15 : index
    %c0_1332 = arith.constant 0 : index
    %c0_1333 = arith.constant 0 : index
    %1480 = vector.load %arg2[%c8_1330, %c15_1331, %c0_1332, %c0_1333] : memref<10x20x8x128xf32, #tpu.memory_space<vmem>>, vector<1x1x8x128xf32>
    %1481 = vector.shape_cast %1480 : vector<1x1x8x128xf32> to vector<8x128xf32>
    %cst_1334 = arith.constant 0.0183156393 : f32
    %1482 = vector.broadcast %cst_1334 : f32 to vector<8x128xf32>
    %1483 = arith.mulf %1482, %1481 : vector<8x128xf32>
    %1484 = arith.addf %1474, %1483 : vector<8x128xf32>
    %c8_1335 = arith.constant 8 : index
    %c16_1336 = arith.constant 16 : index
    %c0_1337 = arith.constant 0 : index
    %c0_1338 = arith.constant 0 : index
    %1485 = vector.load %arg2[%c8_1335, %c16_1336, %c0_1337, %c0_1338] : memref<10x20x8x128xf32, #tpu.memory_space<vmem>>, vector<1x1x8x128xf32>
    %1486 = vector.shape_cast %1485 : vector<1x1x8x128xf32> to vector<8x128xf32>
    %cst_1339 = arith.constant 0.0497870669 : f32
    %1487 = vector.broadcast %cst_1339 : f32 to vector<8x128xf32>
    %1488 = arith.mulf %1487, %1486 : vector<8x128xf32>
    %1489 = arith.addf %1479, %1488 : vector<8x128xf32>
    %c8_1340 = arith.constant 8 : index
    %c17_1341 = arith.constant 17 : index
    %c0_1342 = arith.constant 0 : index
    %c0_1343 = arith.constant 0 : index
    %1490 = vector.load %arg2[%c8_1340, %c17_1341, %c0_1342, %c0_1343] : memref<10x20x8x128xf32, #tpu.memory_space<vmem>>, vector<1x1x8x128xf32>
    %1491 = vector.shape_cast %1490 : vector<1x1x8x128xf32> to vector<8x128xf32>
    %cst_1344 = arith.constant 0.135335281 : f32
    %1492 = vector.broadcast %cst_1344 : f32 to vector<8x128xf32>
    %1493 = arith.mulf %1492, %1491 : vector<8x128xf32>
    %1494 = arith.addf %1484, %1493 : vector<8x128xf32>
    %c8_1345 = arith.constant 8 : index
    %c18_1346 = arith.constant 18 : index
    %c0_1347 = arith.constant 0 : index
    %c0_1348 = arith.constant 0 : index
    %1495 = vector.load %arg2[%c8_1345, %c18_1346, %c0_1347, %c0_1348] : memref<10x20x8x128xf32, #tpu.memory_space<vmem>>, vector<1x1x8x128xf32>
    %1496 = vector.shape_cast %1495 : vector<1x1x8x128xf32> to vector<8x128xf32>
    %cst_1349 = arith.constant 0.36787945 : f32
    %1497 = vector.broadcast %cst_1349 : f32 to vector<8x128xf32>
    %1498 = arith.mulf %1497, %1496 : vector<8x128xf32>
    %1499 = arith.addf %1489, %1498 : vector<8x128xf32>
    %c8_1350 = arith.constant 8 : index
    %c19_1351 = arith.constant 19 : index
    %c0_1352 = arith.constant 0 : index
    %c0_1353 = arith.constant 0 : index
    %1500 = vector.load %arg2[%c8_1350, %c19_1351, %c0_1352, %c0_1353] : memref<10x20x8x128xf32, #tpu.memory_space<vmem>>, vector<1x1x8x128xf32>
    %1501 = vector.shape_cast %1500 : vector<1x1x8x128xf32> to vector<8x128xf32>
    %cst_1354 = arith.constant 1.000000e+00 : f32
    %1502 = vector.broadcast %cst_1354 : f32 to vector<8x128xf32>
    %1503 = arith.mulf %1502, %1501 : vector<8x128xf32>
    %1504 = arith.addf %1494, %1503 : vector<8x128xf32>
    %c0_1355 = arith.constant 0 : index
    %c0_1356 = arith.constant 0 : index
    %c0_1357 = arith.constant 0 : index
    %1505 = vector.load %arg12[%c0_1355, %c0_1356, %c0_1357] : memref<10x8x128xf32, #tpu.memory_space<vmem>>, vector<1x8x128xf32>
    %1506 = vector.shape_cast %1505 : vector<1x8x128xf32> to vector<8x128xf32>
    %cst_1358 = arith.constant -4.559410e-02 : f32
    %1507 = vector.broadcast %cst_1358 : f32 to vector<8x128xf32>
    %1508 = arith.mulf %1507, %1506 : vector<8x128xf32>
    %1509 = arith.addf %1499, %1508 : vector<8x128xf32>
    %c1_1359 = arith.constant 1 : index
    %c0_1360 = arith.constant 0 : index
    %c0_1361 = arith.constant 0 : index
    %1510 = vector.load %arg12[%c1_1359, %c0_1360, %c0_1361] : memref<10x8x128xf32, #tpu.memory_space<vmem>>, vector<1x8x128xf32>
    %1511 = vector.shape_cast %1510 : vector<1x8x128xf32> to vector<8x128xf32>
    %cst_1362 = arith.constant -0.123937607 : f32
    %1512 = vector.broadcast %cst_1362 : f32 to vector<8x128xf32>
    %1513 = arith.mulf %1512, %1511 : vector<8x128xf32>
    %1514 = arith.addf %1504, %1513 : vector<8x128xf32>
    %c2_1363 = arith.constant 2 : index
    %c0_1364 = arith.constant 0 : index
    %c0_1365 = arith.constant 0 : index
    %1515 = vector.load %arg12[%c2_1363, %c0_1364, %c0_1365] : memref<10x8x128xf32, #tpu.memory_space<vmem>>, vector<1x8x128xf32>
    %1516 = vector.shape_cast %1515 : vector<1x8x128xf32> to vector<8x128xf32>
    %cst_1366 = arith.constant -0.336897343 : f32
    %1517 = vector.broadcast %cst_1366 : f32 to vector<8x128xf32>
    %1518 = arith.mulf %1517, %1516 : vector<8x128xf32>
    %1519 = arith.addf %1509, %1518 : vector<8x128xf32>
    %c3_1367 = arith.constant 3 : index
    %c0_1368 = arith.constant 0 : index
    %c0_1369 = arith.constant 0 : index
    %1520 = vector.load %arg12[%c3_1367, %c0_1368, %c0_1369] : memref<10x8x128xf32, #tpu.memory_space<vmem>>, vector<1x8x128xf32>
    %1521 = vector.shape_cast %1520 : vector<1x8x128xf32> to vector<8x128xf32>
    %cst_1370 = arith.constant -0.915781915 : f32
    %1522 = vector.broadcast %cst_1370 : f32 to vector<8x128xf32>
    %1523 = arith.mulf %1522, %1521 : vector<8x128xf32>
    %1524 = arith.addf %1514, %1523 : vector<8x128xf32>
    %c4_1371 = arith.constant 4 : index
    %c0_1372 = arith.constant 0 : index
    %c0_1373 = arith.constant 0 : index
    %1525 = vector.load %arg12[%c4_1371, %c0_1372, %c0_1373] : memref<10x8x128xf32, #tpu.memory_space<vmem>>, vector<1x8x128xf32>
    %1526 = vector.shape_cast %1525 : vector<1x8x128xf32> to vector<8x128xf32>
    %cst_1374 = arith.constant -2.48935342 : f32
    %1527 = vector.broadcast %cst_1374 : f32 to vector<8x128xf32>
    %1528 = arith.mulf %1527, %1526 : vector<8x128xf32>
    %1529 = arith.addf %1519, %1528 : vector<8x128xf32>
    %c5_1375 = arith.constant 5 : index
    %c0_1376 = arith.constant 0 : index
    %c0_1377 = arith.constant 0 : index
    %1530 = vector.load %arg12[%c5_1375, %c0_1376, %c0_1377] : memref<10x8x128xf32, #tpu.memory_space<vmem>>, vector<1x8x128xf32>
    %1531 = vector.shape_cast %1530 : vector<1x8x128xf32> to vector<8x128xf32>
    %cst_1378 = arith.constant -6.76676416 : f32
    %1532 = vector.broadcast %cst_1378 : f32 to vector<8x128xf32>
    %1533 = arith.mulf %1532, %1531 : vector<8x128xf32>
    %1534 = arith.addf %1524, %1533 : vector<8x128xf32>
    %c6_1379 = arith.constant 6 : index
    %c0_1380 = arith.constant 0 : index
    %c0_1381 = arith.constant 0 : index
    %1535 = vector.load %arg12[%c6_1379, %c0_1380, %c0_1381] : memref<10x8x128xf32, #tpu.memory_space<vmem>>, vector<1x8x128xf32>
    %1536 = vector.shape_cast %1535 : vector<1x8x128xf32> to vector<8x128xf32>
    %cst_1382 = arith.constant -18.3939724 : f32
    %1537 = vector.broadcast %cst_1382 : f32 to vector<8x128xf32>
    %1538 = arith.mulf %1537, %1536 : vector<8x128xf32>
    %1539 = arith.addf %1529, %1538 : vector<8x128xf32>
    %c7_1383 = arith.constant 7 : index
    %c0_1384 = arith.constant 0 : index
    %c0_1385 = arith.constant 0 : index
    %1540 = vector.load %arg12[%c7_1383, %c0_1384, %c0_1385] : memref<10x8x128xf32, #tpu.memory_space<vmem>>, vector<1x8x128xf32>
    %1541 = vector.shape_cast %1540 : vector<1x8x128xf32> to vector<8x128xf32>
    %cst_1386 = arith.constant -5.000000e+01 : f32
    %1542 = vector.broadcast %cst_1386 : f32 to vector<8x128xf32>
    %1543 = arith.mulf %1542, %1541 : vector<8x128xf32>
    %1544 = arith.addf %1534, %1543 : vector<8x128xf32>
    %c8_1387 = arith.constant 8 : index
    %c0_1388 = arith.constant 0 : index
    %c0_1389 = arith.constant 0 : index
    %1545 = vector.load %arg12[%c8_1387, %c0_1388, %c0_1389] : memref<10x8x128xf32, #tpu.memory_space<vmem>>, vector<1x8x128xf32>
    %1546 = vector.shape_cast %1545 : vector<1x8x128xf32> to vector<8x128xf32>
    %cst_1390 = arith.constant -0.00617049029 : f32
    %1547 = vector.broadcast %cst_1390 : f32 to vector<8x128xf32>
    %1548 = arith.mulf %1547, %1546 : vector<8x128xf32>
    %1549 = arith.addf %1539, %1548 : vector<8x128xf32>
    %c9_1391 = arith.constant 9 : index
    %c0_1392 = arith.constant 0 : index
    %c0_1393 = arith.constant 0 : index
    %1550 = vector.load %arg12[%c9_1391, %c0_1392, %c0_1393] : memref<10x8x128xf32, #tpu.memory_space<vmem>>, vector<1x8x128xf32>
    %1551 = vector.shape_cast %1550 : vector<1x8x128xf32> to vector<8x128xf32>
    %cst_1394 = arith.constant -0.0167731307 : f32
    %1552 = vector.broadcast %cst_1394 : f32 to vector<8x128xf32>
    %1553 = arith.mulf %1552, %1551 : vector<8x128xf32>
    %1554 = arith.addf %1544, %1553 : vector<8x128xf32>
    %1555 = arith.addf %1549, %1554 : vector<8x128xf32>
    %c0_1395 = arith.constant 0 : index
    %c0_1396 = arith.constant 0 : index
    %1556 = vector.load %arg11[%c0_1395, %c0_1396] : memref<1x128xf32, #tpu.memory_space<vmem>>, vector<1x128xf32>
    %cst_1397 = arith.constant 0.99999988 : f32
    %1557 = vector.broadcast %cst_1397 : f32 to vector<1x128xf32>
    %1558 = arith.mulf %1556, %1557 : vector<1x128xf32>
    %cst_1398 = arith.constant -5.200000e+01 : f32
    %1559 = vector.broadcast %cst_1398 : f32 to vector<1x128xf32>
    %1560 = arith.addf %1559, %1558 : vector<1x128xf32>
    %1561 = vector.broadcast %1560 : vector<1x128xf32> to vector<8x128xf32>
    %1562 = arith.cmpf oge, %1555, %1561 : vector<8x128xf32>
    %1563 = arith.extui %1562 : vector<8x128xi1> to vector<8x128xi32>
    %1564 = arith.sitofp %1563 : vector<8x128xi32> to vector<8x128xf32>
    %cst_1399 = arith.constant dense<0.000000e+00> : vector<128xf32>
    %1565 = vector.multi_reduction <add>, %1564, %cst_1399 [0] : vector<8x128xf32> to vector<128xf32>
    %1566 = vector.shape_cast %1565 : vector<128xf32> to vector<1x128xf32>
    %cst_1400 = arith.constant 5.000000e-02 : f32
    %1567 = vector.broadcast %cst_1400 : f32 to vector<1x128xf32>
    %1568 = arith.mulf %1567, %1566 : vector<1x128xf32>
    %1569 = arith.addf %1558, %1568 : vector<1x128xf32>
    %c0_1401 = arith.constant 0 : index
    %c0_1402 = arith.constant 0 : index
    %1570 = vector.load %arg10[%c0_1401, %c0_1402] : memref<8x128xf32, #tpu.memory_space<vmem>>, vector<8x128xf32>
    tpu.vector_store %arg10[%c0_1401, %c0_1402], %1555 {strides = array<i32>} : memref<8x128xf32, #tpu.memory_space<vmem>>, vector<8x128xf32>,
    %c0_1403 = arith.constant 0 : index
    %c0_1404 = arith.constant 0 : index
    %1571 = vector.load %arg11[%c0_1403, %c0_1404] : memref<1x128xf32, #tpu.memory_space<vmem>>, vector<1x128xf32>
    tpu.vector_store %arg11[%c0_1403, %c0_1404], %1569 {strides = array<i32>} : memref<1x128xf32, #tpu.memory_space<vmem>>, vector<1x128xf32>,
    %c8_1405 = arith.constant 8 : index
    %c0_1406 = arith.constant 0 : index
    %c0_1407 = arith.constant 0 : index
    %1572 = vector.load %arg12[%c8_1405, %c0_1406, %c0_1407] : memref<10x8x128xf32, #tpu.memory_space<vmem>>, vector<1x8x128xf32>
    %1573 = vector.shape_cast %1572 : vector<1x8x128xf32> to vector<8x128xf32>
    %1574 = vector.shape_cast %1564 : vector<8x128xf32> to vector<1x8x128xf32>
    tpu.vector_store %arg12[%c8_1405, %c0_1406, %c0_1407], %1574 {strides = array<i32>} : memref<10x8x128xf32, #tpu.memory_space<vmem>>, vector<1x8x128xf32>,
    %c8_1408 = arith.constant 8 : index
    %c0_1409 = arith.constant 0 : index
    %c0_1410 = arith.constant 0 : index
    %1575 = vector.load %arg7[%c8_1408, %c0_1409, %c0_1410] : memref<10x8x128xf32, #tpu.memory_space<vmem>>, vector<1x8x128xf32>
    %1576 = vector.shape_cast %1575 : vector<1x8x128xf32> to vector<8x128xf32>
    %1577 = vector.shape_cast %1564 : vector<8x128xf32> to vector<1x8x128xf32>
    tpu.vector_store %arg7[%c8_1408, %c0_1409, %c0_1410], %1577 {strides = array<i32>} : memref<10x8x128xf32, #tpu.memory_space<vmem>>, vector<1x8x128xf32>,
    %c0_1411 = arith.constant 0 : index
    %c0_1412 = arith.constant 0 : index
    %1578 = vector.load %arg10[%c0_1411, %c0_1412] : memref<8x128xf32, #tpu.memory_space<vmem>>, vector<8x128xf32>
    %cst_1413 = arith.constant 0.990049839 : f32
    %1579 = vector.broadcast %cst_1413 : f32 to vector<8x128xf32>
    %1580 = arith.mulf %1578, %1579 : vector<8x128xf32>
    %c9_1414 = arith.constant 9 : index
    %c0_1415 = arith.constant 0 : index
    %c0_1416 = arith.constant 0 : index
    %c0_1417 = arith.constant 0 : index
    %1581 = vector.load %arg2[%c9_1414, %c0_1415, %c0_1416, %c0_1417] : memref<10x20x8x128xf32, #tpu.memory_space<vmem>>, vector<1x1x8x128xf32>
    %1582 = vector.shape_cast %1581 : vector<1x1x8x128xf32> to vector<8x128xf32>
    %cst_1418 = arith.constant 5.60279644E-9 : f32
    %1583 = vector.broadcast %cst_1418 : f32 to vector<8x128xf32>
    %1584 = arith.mulf %1583, %1582 : vector<8x128xf32>
    %c9_1419 = arith.constant 9 : index
    %c1_1420 = arith.constant 1 : index
    %c0_1421 = arith.constant 0 : index
    %c0_1422 = arith.constant 0 : index
    %1585 = vector.load %arg2[%c9_1419, %c1_1420, %c0_1421, %c0_1422] : memref<10x20x8x128xf32, #tpu.memory_space<vmem>>, vector<1x1x8x128xf32>
    %1586 = vector.shape_cast %1585 : vector<1x1x8x128xf32> to vector<8x128xf32>
    %cst_1423 = arith.constant 1.52299791E-8 : f32
    %1587 = vector.broadcast %cst_1423 : f32 to vector<8x128xf32>
    %1588 = arith.mulf %1587, %1586 : vector<8x128xf32>
    %1589 = arith.addf %1584, %1588 : vector<8x128xf32>
    %c9_1424 = arith.constant 9 : index
    %c2_1425 = arith.constant 2 : index
    %c0_1426 = arith.constant 0 : index
    %c0_1427 = arith.constant 0 : index
    %1590 = vector.load %arg2[%c9_1424, %c2_1425, %c0_1426, %c0_1427] : memref<10x20x8x128xf32, #tpu.memory_space<vmem>>, vector<1x1x8x128xf32>
    %1591 = vector.shape_cast %1590 : vector<1x1x8x128xf32> to vector<8x128xf32>
    %cst_1428 = arith.constant 4.13993781E-8 : f32
    %1592 = vector.broadcast %cst_1428 : f32 to vector<8x128xf32>
    %1593 = arith.mulf %1592, %1591 : vector<8x128xf32>
    %1594 = arith.addf %1580, %1593 : vector<8x128xf32>
    %c9_1429 = arith.constant 9 : index
    %c3_1430 = arith.constant 3 : index
    %c0_1431 = arith.constant 0 : index
    %c0_1432 = arith.constant 0 : index
    %1595 = vector.load %arg2[%c9_1429, %c3_1430, %c0_1431, %c0_1432] : memref<10x20x8x128xf32, #tpu.memory_space<vmem>>, vector<1x1x8x128xf32>
    %1596 = vector.shape_cast %1595 : vector<1x1x8x128xf32> to vector<8x128xf32>
    %cst_1433 = arith.constant 1.12535176E-7 : f32
    %1597 = vector.broadcast %cst_1433 : f32 to vector<8x128xf32>
    %1598 = arith.mulf %1597, %1596 : vector<8x128xf32>
    %1599 = arith.addf %1589, %1598 : vector<8x128xf32>
    %c9_1434 = arith.constant 9 : index
    %c4_1435 = arith.constant 4 : index
    %c0_1436 = arith.constant 0 : index
    %c0_1437 = arith.constant 0 : index
    %1600 = vector.load %arg2[%c9_1434, %c4_1435, %c0_1436, %c0_1437] : memref<10x20x8x128xf32, #tpu.memory_space<vmem>>, vector<1x1x8x128xf32>
    %1601 = vector.shape_cast %1600 : vector<1x1x8x128xf32> to vector<8x128xf32>
    %cst_1438 = arith.constant 3.05902319E-7 : f32
    %1602 = vector.broadcast %cst_1438 : f32 to vector<8x128xf32>
    %1603 = arith.mulf %1602, %1601 : vector<8x128xf32>
    %1604 = arith.addf %1594, %1603 : vector<8x128xf32>
    %c9_1439 = arith.constant 9 : index
    %c5_1440 = arith.constant 5 : index
    %c0_1441 = arith.constant 0 : index
    %c0_1442 = arith.constant 0 : index
    %1605 = vector.load %arg2[%c9_1439, %c5_1440, %c0_1441, %c0_1442] : memref<10x20x8x128xf32, #tpu.memory_space<vmem>>, vector<1x1x8x128xf32>
    %1606 = vector.shape_cast %1605 : vector<1x1x8x128xf32> to vector<8x128xf32>
    %cst_1443 = arith.constant 8.31528723E-7 : f32
    %1607 = vector.broadcast %cst_1443 : f32 to vector<8x128xf32>
    %1608 = arith.mulf %1607, %1606 : vector<8x128xf32>
    %1609 = arith.addf %1599, %1608 : vector<8x128xf32>
    %c9_1444 = arith.constant 9 : index
    %c6_1445 = arith.constant 6 : index
    %c0_1446 = arith.constant 0 : index
    %c0_1447 = arith.constant 0 : index
    %1610 = vector.load %arg2[%c9_1444, %c6_1445, %c0_1446, %c0_1447] : memref<10x20x8x128xf32, #tpu.memory_space<vmem>>, vector<1x1x8x128xf32>
    %1611 = vector.shape_cast %1610 : vector<1x1x8x128xf32> to vector<8x128xf32>
    %cst_1448 = arith.constant 2.26032944E-6 : f32
    %1612 = vector.broadcast %cst_1448 : f32 to vector<8x128xf32>
    %1613 = arith.mulf %1612, %1611 : vector<8x128xf32>
    %1614 = arith.addf %1604, %1613 : vector<8x128xf32>
    %c9_1449 = arith.constant 9 : index
    %c7_1450 = arith.constant 7 : index
    %c0_1451 = arith.constant 0 : index
    %c0_1452 = arith.constant 0 : index
    %1615 = vector.load %arg2[%c9_1449, %c7_1450, %c0_1451, %c0_1452] : memref<10x20x8x128xf32, #tpu.memory_space<vmem>>, vector<1x1x8x128xf32>
    %1616 = vector.shape_cast %1615 : vector<1x1x8x128xf32> to vector<8x128xf32>
    %cst_1453 = arith.constant 6.14421242E-6 : f32
    %1617 = vector.broadcast %cst_1453 : f32 to vector<8x128xf32>
    %1618 = arith.mulf %1617, %1616 : vector<8x128xf32>
    %1619 = arith.addf %1609, %1618 : vector<8x128xf32>
    %c9_1454 = arith.constant 9 : index
    %c8_1455 = arith.constant 8 : index
    %c0_1456 = arith.constant 0 : index
    %c0_1457 = arith.constant 0 : index
    %1620 = vector.load %arg2[%c9_1454, %c8_1455, %c0_1456, %c0_1457] : memref<10x20x8x128xf32, #tpu.memory_space<vmem>>, vector<1x1x8x128xf32>
    %1621 = vector.shape_cast %1620 : vector<1x1x8x128xf32> to vector<8x128xf32>
    %cst_1458 = arith.constant 1.670170e-05 : f32
    %1622 = vector.broadcast %cst_1458 : f32 to vector<8x128xf32>
    %1623 = arith.mulf %1622, %1621 : vector<8x128xf32>
    %1624 = arith.addf %1614, %1623 : vector<8x128xf32>
    %c9_1459 = arith.constant 9 : index
    %c9_1460 = arith.constant 9 : index
    %c0_1461 = arith.constant 0 : index
    %c0_1462 = arith.constant 0 : index
    %1625 = vector.load %arg2[%c9_1459, %c9_1460, %c0_1461, %c0_1462] : memref<10x20x8x128xf32, #tpu.memory_space<vmem>>, vector<1x1x8x128xf32>
    %1626 = vector.shape_cast %1625 : vector<1x1x8x128xf32> to vector<8x128xf32>
    %cst_1463 = arith.constant 4.5399931E-5 : f32
    %1627 = vector.broadcast %cst_1463 : f32 to vector<8x128xf32>
    %1628 = arith.mulf %1627, %1626 : vector<8x128xf32>
    %1629 = arith.addf %1619, %1628 : vector<8x128xf32>
    %c9_1464 = arith.constant 9 : index
    %c10_1465 = arith.constant 10 : index
    %c0_1466 = arith.constant 0 : index
    %c0_1467 = arith.constant 0 : index
    %1630 = vector.load %arg2[%c9_1464, %c10_1465, %c0_1466, %c0_1467] : memref<10x20x8x128xf32, #tpu.memory_space<vmem>>, vector<1x1x8x128xf32>
    %1631 = vector.shape_cast %1630 : vector<1x1x8x128xf32> to vector<8x128xf32>
    %cst_1468 = arith.constant 1.23409802E-4 : f32
    %1632 = vector.broadcast %cst_1468 : f32 to vector<8x128xf32>
    %1633 = arith.mulf %1632, %1631 : vector<8x128xf32>
    %1634 = arith.addf %1624, %1633 : vector<8x128xf32>
    %c9_1469 = arith.constant 9 : index
    %c11_1470 = arith.constant 11 : index
    %c0_1471 = arith.constant 0 : index
    %c0_1472 = arith.constant 0 : index
    %1635 = vector.load %arg2[%c9_1469, %c11_1470, %c0_1471, %c0_1472] : memref<10x20x8x128xf32, #tpu.memory_space<vmem>>, vector<1x1x8x128xf32>
    %1636 = vector.shape_cast %1635 : vector<1x1x8x128xf32> to vector<8x128xf32>
    %cst_1473 = arith.constant 3.35462624E-4 : f32
    %1637 = vector.broadcast %cst_1473 : f32 to vector<8x128xf32>
    %1638 = arith.mulf %1637, %1636 : vector<8x128xf32>
    %1639 = arith.addf %1629, %1638 : vector<8x128xf32>
    %c9_1474 = arith.constant 9 : index
    %c12_1475 = arith.constant 12 : index
    %c0_1476 = arith.constant 0 : index
    %c0_1477 = arith.constant 0 : index
    %1640 = vector.load %arg2[%c9_1474, %c12_1475, %c0_1476, %c0_1477] : memref<10x20x8x128xf32, #tpu.memory_space<vmem>>, vector<1x1x8x128xf32>
    %1641 = vector.shape_cast %1640 : vector<1x1x8x128xf32> to vector<8x128xf32>
    %cst_1478 = arith.constant 9.118820e-04 : f32
    %1642 = vector.broadcast %cst_1478 : f32 to vector<8x128xf32>
    %1643 = arith.mulf %1642, %1641 : vector<8x128xf32>
    %1644 = arith.addf %1634, %1643 : vector<8x128xf32>
    %c9_1479 = arith.constant 9 : index
    %c13_1480 = arith.constant 13 : index
    %c0_1481 = arith.constant 0 : index
    %c0_1482 = arith.constant 0 : index
    %1645 = vector.load %arg2[%c9_1479, %c13_1480, %c0_1481, %c0_1482] : memref<10x20x8x128xf32, #tpu.memory_space<vmem>>, vector<1x1x8x128xf32>
    %1646 = vector.shape_cast %1645 : vector<1x1x8x128xf32> to vector<8x128xf32>
    %cst_1483 = arith.constant 0.00247875229 : f32
    %1647 = vector.broadcast %cst_1483 : f32 to vector<8x128xf32>
    %1648 = arith.mulf %1647, %1646 : vector<8x128xf32>
    %1649 = arith.addf %1639, %1648 : vector<8x128xf32>
    %c9_1484 = arith.constant 9 : index
    %c14_1485 = arith.constant 14 : index
    %c0_1486 = arith.constant 0 : index
    %c0_1487 = arith.constant 0 : index
    %1650 = vector.load %arg2[%c9_1484, %c14_1485, %c0_1486, %c0_1487] : memref<10x20x8x128xf32, #tpu.memory_space<vmem>>, vector<1x1x8x128xf32>
    %1651 = vector.shape_cast %1650 : vector<1x1x8x128xf32> to vector<8x128xf32>
    %cst_1488 = arith.constant 0.006737947 : f32
    %1652 = vector.broadcast %cst_1488 : f32 to vector<8x128xf32>
    %1653 = arith.mulf %1652, %1651 : vector<8x128xf32>
    %1654 = arith.addf %1644, %1653 : vector<8x128xf32>
    %c9_1489 = arith.constant 9 : index
    %c15_1490 = arith.constant 15 : index
    %c0_1491 = arith.constant 0 : index
    %c0_1492 = arith.constant 0 : index
    %1655 = vector.load %arg2[%c9_1489, %c15_1490, %c0_1491, %c0_1492] : memref<10x20x8x128xf32, #tpu.memory_space<vmem>>, vector<1x1x8x128xf32>
    %1656 = vector.shape_cast %1655 : vector<1x1x8x128xf32> to vector<8x128xf32>
    %cst_1493 = arith.constant 0.0183156393 : f32
    %1657 = vector.broadcast %cst_1493 : f32 to vector<8x128xf32>
    %1658 = arith.mulf %1657, %1656 : vector<8x128xf32>
    %1659 = arith.addf %1649, %1658 : vector<8x128xf32>
    %c9_1494 = arith.constant 9 : index
    %c16_1495 = arith.constant 16 : index
    %c0_1496 = arith.constant 0 : index
    %c0_1497 = arith.constant 0 : index
    %1660 = vector.load %arg2[%c9_1494, %c16_1495, %c0_1496, %c0_1497] : memref<10x20x8x128xf32, #tpu.memory_space<vmem>>, vector<1x1x8x128xf32>
    %1661 = vector.shape_cast %1660 : vector<1x1x8x128xf32> to vector<8x128xf32>
    %cst_1498 = arith.constant 0.0497870669 : f32
    %1662 = vector.broadcast %cst_1498 : f32 to vector<8x128xf32>
    %1663 = arith.mulf %1662, %1661 : vector<8x128xf32>
    %1664 = arith.addf %1654, %1663 : vector<8x128xf32>
    %c9_1499 = arith.constant 9 : index
    %c17_1500 = arith.constant 17 : index
    %c0_1501 = arith.constant 0 : index
    %c0_1502 = arith.constant 0 : index
    %1665 = vector.load %arg2[%c9_1499, %c17_1500, %c0_1501, %c0_1502] : memref<10x20x8x128xf32, #tpu.memory_space<vmem>>, vector<1x1x8x128xf32>
    %1666 = vector.shape_cast %1665 : vector<1x1x8x128xf32> to vector<8x128xf32>
    %cst_1503 = arith.constant 0.135335281 : f32
    %1667 = vector.broadcast %cst_1503 : f32 to vector<8x128xf32>
    %1668 = arith.mulf %1667, %1666 : vector<8x128xf32>
    %1669 = arith.addf %1659, %1668 : vector<8x128xf32>
    %c9_1504 = arith.constant 9 : index
    %c18_1505 = arith.constant 18 : index
    %c0_1506 = arith.constant 0 : index
    %c0_1507 = arith.constant 0 : index
    %1670 = vector.load %arg2[%c9_1504, %c18_1505, %c0_1506, %c0_1507] : memref<10x20x8x128xf32, #tpu.memory_space<vmem>>, vector<1x1x8x128xf32>
    %1671 = vector.shape_cast %1670 : vector<1x1x8x128xf32> to vector<8x128xf32>
    %cst_1508 = arith.constant 0.36787945 : f32
    %1672 = vector.broadcast %cst_1508 : f32 to vector<8x128xf32>
    %1673 = arith.mulf %1672, %1671 : vector<8x128xf32>
    %1674 = arith.addf %1664, %1673 : vector<8x128xf32>
    %c9_1509 = arith.constant 9 : index
    %c19_1510 = arith.constant 19 : index
    %c0_1511 = arith.constant 0 : index
    %c0_1512 = arith.constant 0 : index
    %1675 = vector.load %arg2[%c9_1509, %c19_1510, %c0_1511, %c0_1512] : memref<10x20x8x128xf32, #tpu.memory_space<vmem>>, vector<1x1x8x128xf32>
    %1676 = vector.shape_cast %1675 : vector<1x1x8x128xf32> to vector<8x128xf32>
    %cst_1513 = arith.constant 1.000000e+00 : f32
    %1677 = vector.broadcast %cst_1513 : f32 to vector<8x128xf32>
    %1678 = arith.mulf %1677, %1676 : vector<8x128xf32>
    %1679 = arith.addf %1669, %1678 : vector<8x128xf32>
    %c0_1514 = arith.constant 0 : index
    %c0_1515 = arith.constant 0 : index
    %c0_1516 = arith.constant 0 : index
    %1680 = vector.load %arg12[%c0_1514, %c0_1515, %c0_1516] : memref<10x8x128xf32, #tpu.memory_space<vmem>>, vector<1x8x128xf32>
    %1681 = vector.shape_cast %1680 : vector<1x8x128xf32> to vector<8x128xf32>
    %cst_1517 = arith.constant -0.0167731307 : f32
    %1682 = vector.broadcast %cst_1517 : f32 to vector<8x128xf32>
    %1683 = arith.mulf %1682, %1681 : vector<8x128xf32>
    %1684 = arith.addf %1674, %1683 : vector<8x128xf32>
    %c1_1518 = arith.constant 1 : index
    %c0_1519 = arith.constant 0 : index
    %c0_1520 = arith.constant 0 : index
    %1685 = vector.load %arg12[%c1_1518, %c0_1519, %c0_1520] : memref<10x8x128xf32, #tpu.memory_space<vmem>>, vector<1x8x128xf32>
    %1686 = vector.shape_cast %1685 : vector<1x8x128xf32> to vector<8x128xf32>
    %cst_1521 = arith.constant -4.559410e-02 : f32
    %1687 = vector.broadcast %cst_1521 : f32 to vector<8x128xf32>
    %1688 = arith.mulf %1687, %1686 : vector<8x128xf32>
    %1689 = arith.addf %1679, %1688 : vector<8x128xf32>
    %c2_1522 = arith.constant 2 : index
    %c0_1523 = arith.constant 0 : index
    %c0_1524 = arith.constant 0 : index
    %1690 = vector.load %arg12[%c2_1522, %c0_1523, %c0_1524] : memref<10x8x128xf32, #tpu.memory_space<vmem>>, vector<1x8x128xf32>
    %1691 = vector.shape_cast %1690 : vector<1x8x128xf32> to vector<8x128xf32>
    %cst_1525 = arith.constant -0.123937607 : f32
    %1692 = vector.broadcast %cst_1525 : f32 to vector<8x128xf32>
    %1693 = arith.mulf %1692, %1691 : vector<8x128xf32>
    %1694 = arith.addf %1684, %1693 : vector<8x128xf32>
    %c3_1526 = arith.constant 3 : index
    %c0_1527 = arith.constant 0 : index
    %c0_1528 = arith.constant 0 : index
    %1695 = vector.load %arg12[%c3_1526, %c0_1527, %c0_1528] : memref<10x8x128xf32, #tpu.memory_space<vmem>>, vector<1x8x128xf32>
    %1696 = vector.shape_cast %1695 : vector<1x8x128xf32> to vector<8x128xf32>
    %cst_1529 = arith.constant -0.336897343 : f32
    %1697 = vector.broadcast %cst_1529 : f32 to vector<8x128xf32>
    %1698 = arith.mulf %1697, %1696 : vector<8x128xf32>
    %1699 = arith.addf %1689, %1698 : vector<8x128xf32>
    %c4_1530 = arith.constant 4 : index
    %c0_1531 = arith.constant 0 : index
    %c0_1532 = arith.constant 0 : index
    %1700 = vector.load %arg12[%c4_1530, %c0_1531, %c0_1532] : memref<10x8x128xf32, #tpu.memory_space<vmem>>, vector<1x8x128xf32>
    %1701 = vector.shape_cast %1700 : vector<1x8x128xf32> to vector<8x128xf32>
    %cst_1533 = arith.constant -0.915781915 : f32
    %1702 = vector.broadcast %cst_1533 : f32 to vector<8x128xf32>
    %1703 = arith.mulf %1702, %1701 : vector<8x128xf32>
    %1704 = arith.addf %1694, %1703 : vector<8x128xf32>
    %c5_1534 = arith.constant 5 : index
    %c0_1535 = arith.constant 0 : index
    %c0_1536 = arith.constant 0 : index
    %1705 = vector.load %arg12[%c5_1534, %c0_1535, %c0_1536] : memref<10x8x128xf32, #tpu.memory_space<vmem>>, vector<1x8x128xf32>
    %1706 = vector.shape_cast %1705 : vector<1x8x128xf32> to vector<8x128xf32>
    %cst_1537 = arith.constant -2.48935342 : f32
    %1707 = vector.broadcast %cst_1537 : f32 to vector<8x128xf32>
    %1708 = arith.mulf %1707, %1706 : vector<8x128xf32>
    %1709 = arith.addf %1699, %1708 : vector<8x128xf32>
    %c6_1538 = arith.constant 6 : index
    %c0_1539 = arith.constant 0 : index
    %c0_1540 = arith.constant 0 : index
    %1710 = vector.load %arg12[%c6_1538, %c0_1539, %c0_1540] : memref<10x8x128xf32, #tpu.memory_space<vmem>>, vector<1x8x128xf32>
    %1711 = vector.shape_cast %1710 : vector<1x8x128xf32> to vector<8x128xf32>
    %cst_1541 = arith.constant -6.76676416 : f32
    %1712 = vector.broadcast %cst_1541 : f32 to vector<8x128xf32>
    %1713 = arith.mulf %1712, %1711 : vector<8x128xf32>
    %1714 = arith.addf %1704, %1713 : vector<8x128xf32>
    %c7_1542 = arith.constant 7 : index
    %c0_1543 = arith.constant 0 : index
    %c0_1544 = arith.constant 0 : index
    %1715 = vector.load %arg12[%c7_1542, %c0_1543, %c0_1544] : memref<10x8x128xf32, #tpu.memory_space<vmem>>, vector<1x8x128xf32>
    %1716 = vector.shape_cast %1715 : vector<1x8x128xf32> to vector<8x128xf32>
    %cst_1545 = arith.constant -18.3939724 : f32
    %1717 = vector.broadcast %cst_1545 : f32 to vector<8x128xf32>
    %1718 = arith.mulf %1717, %1716 : vector<8x128xf32>
    %1719 = arith.addf %1709, %1718 : vector<8x128xf32>
    %c8_1546 = arith.constant 8 : index
    %c0_1547 = arith.constant 0 : index
    %c0_1548 = arith.constant 0 : index
    %1720 = vector.load %arg12[%c8_1546, %c0_1547, %c0_1548] : memref<10x8x128xf32, #tpu.memory_space<vmem>>, vector<1x8x128xf32>
    %1721 = vector.shape_cast %1720 : vector<1x8x128xf32> to vector<8x128xf32>
    %cst_1549 = arith.constant -5.000000e+01 : f32
    %1722 = vector.broadcast %cst_1549 : f32 to vector<8x128xf32>
    %1723 = arith.mulf %1722, %1721 : vector<8x128xf32>
    %1724 = arith.addf %1714, %1723 : vector<8x128xf32>
    %c9_1550 = arith.constant 9 : index
    %c0_1551 = arith.constant 0 : index
    %c0_1552 = arith.constant 0 : index
    %1725 = vector.load %arg12[%c9_1550, %c0_1551, %c0_1552] : memref<10x8x128xf32, #tpu.memory_space<vmem>>, vector<1x8x128xf32>
    %1726 = vector.shape_cast %1725 : vector<1x8x128xf32> to vector<8x128xf32>
    %cst_1553 = arith.constant -0.00617049029 : f32
    %1727 = vector.broadcast %cst_1553 : f32 to vector<8x128xf32>
    %1728 = arith.mulf %1727, %1726 : vector<8x128xf32>
    %1729 = arith.addf %1719, %1728 : vector<8x128xf32>
    %1730 = arith.addf %1724, %1729 : vector<8x128xf32>
    %c0_1554 = arith.constant 0 : index
    %c0_1555 = arith.constant 0 : index
    %1731 = vector.load %arg11[%c0_1554, %c0_1555] : memref<1x128xf32, #tpu.memory_space<vmem>>, vector<1x128xf32>
    %cst_1556 = arith.constant 0.99999988 : f32
    %1732 = vector.broadcast %cst_1556 : f32 to vector<1x128xf32>
    %1733 = arith.mulf %1731, %1732 : vector<1x128xf32>
    %cst_1557 = arith.constant -5.200000e+01 : f32
    %1734 = vector.broadcast %cst_1557 : f32 to vector<1x128xf32>
    %1735 = arith.addf %1734, %1733 : vector<1x128xf32>
    %1736 = vector.broadcast %1735 : vector<1x128xf32> to vector<8x128xf32>
    %1737 = arith.cmpf oge, %1730, %1736 : vector<8x128xf32>
    %1738 = arith.extui %1737 : vector<8x128xi1> to vector<8x128xi32>
    %1739 = arith.sitofp %1738 : vector<8x128xi32> to vector<8x128xf32>
    %cst_1558 = arith.constant dense<0.000000e+00> : vector<128xf32>
    %1740 = vector.multi_reduction <add>, %1739, %cst_1558 [0] : vector<8x128xf32> to vector<128xf32>
    %1741 = vector.shape_cast %1740 : vector<128xf32> to vector<1x128xf32>
    %cst_1559 = arith.constant 5.000000e-02 : f32
    %1742 = vector.broadcast %cst_1559 : f32 to vector<1x128xf32>
    %1743 = arith.mulf %1742, %1741 : vector<1x128xf32>
    %1744 = arith.addf %1733, %1743 : vector<1x128xf32>
    %c0_1560 = arith.constant 0 : index
    %c0_1561 = arith.constant 0 : index
    %1745 = vector.load %arg10[%c0_1560, %c0_1561] : memref<8x128xf32, #tpu.memory_space<vmem>>, vector<8x128xf32>
    tpu.vector_store %arg10[%c0_1560, %c0_1561], %1730 {strides = array<i32>} : memref<8x128xf32, #tpu.memory_space<vmem>>, vector<8x128xf32>,
    %c0_1562 = arith.constant 0 : index
    %c0_1563 = arith.constant 0 : index
    %1746 = vector.load %arg11[%c0_1562, %c0_1563] : memref<1x128xf32, #tpu.memory_space<vmem>>, vector<1x128xf32>
    tpu.vector_store %arg11[%c0_1562, %c0_1563], %1744 {strides = array<i32>} : memref<1x128xf32, #tpu.memory_space<vmem>>, vector<1x128xf32>,
    %c9_1564 = arith.constant 9 : index
    %c0_1565 = arith.constant 0 : index
    %c0_1566 = arith.constant 0 : index
    %1747 = vector.load %arg12[%c9_1564, %c0_1565, %c0_1566] : memref<10x8x128xf32, #tpu.memory_space<vmem>>, vector<1x8x128xf32>
    %1748 = vector.shape_cast %1747 : vector<1x8x128xf32> to vector<8x128xf32>
    %1749 = vector.shape_cast %1739 : vector<8x128xf32> to vector<1x8x128xf32>
    tpu.vector_store %arg12[%c9_1564, %c0_1565, %c0_1566], %1749 {strides = array<i32>} : memref<10x8x128xf32, #tpu.memory_space<vmem>>, vector<1x8x128xf32>,
    %c9_1567 = arith.constant 9 : index
    %c0_1568 = arith.constant 0 : index
    %c0_1569 = arith.constant 0 : index
    %1750 = vector.load %arg7[%c9_1567, %c0_1568, %c0_1569] : memref<10x8x128xf32, #tpu.memory_space<vmem>>, vector<1x8x128xf32>
    %1751 = vector.shape_cast %1750 : vector<1x8x128xf32> to vector<8x128xf32>
    %1752 = vector.shape_cast %1739 : vector<8x128xf32> to vector<1x8x128xf32>
    tpu.vector_store %arg7[%c9_1567, %c0_1568, %c0_1569], %1752 {strides = array<i32>} : memref<10x8x128xf32, #tpu.memory_space<vmem>>, vector<1x8x128xf32>,
    %c1_i32 = arith.constant 1 : i32
    %1753 = arith.cmpi eq, %arg1, %c1_i32 : i32
    %1754 = arith.extui %1753 : i1 to i32
    %c0_i32_1570 = arith.constant 0 : i32
    %1755 = arith.cmpi ne, %1754, %c0_i32_1570 : i32
    scf.if %1755 {
      %c0_1571 = arith.constant 0 : index
      %c0_1572 = arith.constant 0 : index
      %1756 = vector.load %arg10[%c0_1571, %c0_1572] : memref<8x128xf32, #tpu.memory_space<vmem>>, vector<8x128xf32>
      %c0_1573 = arith.constant 0 : index
      %c0_1574 = arith.constant 0 : index
      %1757 = vector.load %arg6[%c0_1573, %c0_1574] : memref<8x128xf32, #tpu.memory_space<vmem>>, vector<8x128xf32>
      tpu.vector_store %arg6[%c0_1573, %c0_1574], %1756 {strides = array<i32>} : memref<8x128xf32, #tpu.memory_space<vmem>>, vector<8x128xf32>,
      %c0_1575 = arith.constant 0 : index
      %c0_1576 = arith.constant 0 : index
      %1758 = vector.load %arg11[%c0_1575, %c0_1576] : memref<1x128xf32, #tpu.memory_space<vmem>>, vector<1x128xf32>
      %c0_1577 = arith.constant 0 : index
      %c0_1578 = arith.constant 0 : index
      %1759 = vector.load %arg8[%c0_1577, %c0_1578] : memref<1x128xf32, #tpu.memory_space<vmem>>, vector<1x128xf32>
      tpu.vector_store %arg8[%c0_1577, %c0_1578], %1758 {strides = array<i32>} : memref<1x128xf32, #tpu.memory_space<vmem>>, vector<1x128xf32>,
      %c0_1579 = arith.constant 0 : index
      %c0_1580 = arith.constant 0 : index
      %c0_1581 = arith.constant 0 : index
      %1760 = vector.load %arg12[%c0_1579, %c0_1580, %c0_1581] : memref<10x8x128xf32, #tpu.memory_space<vmem>>, vector<1x8x128xf32>
      %1761 = vector.shape_cast %1760 : vector<1x8x128xf32> to vector<8x128xf32>
      %c0_1582 = arith.constant 0 : index
      %c0_1583 = arith.constant 0 : index
      %c0_1584 = arith.constant 0 : index
      %1762 = vector.load %arg9[%c0_1582, %c0_1583, %c0_1584] : memref<10x8x128xf32, #tpu.memory_space<vmem>>, vector<1x8x128xf32>
      %1763 = vector.shape_cast %1762 : vector<1x8x128xf32> to vector<8x128xf32>
      %1764 = vector.shape_cast %1761 : vector<8x128xf32> to vector<1x8x128xf32>
      tpu.vector_store %arg9[%c0_1582, %c0_1583, %c0_1584], %1764 {strides = array<i32>} : memref<10x8x128xf32, #tpu.memory_space<vmem>>, vector<1x8x128xf32>,
      %c1_1585 = arith.constant 1 : index
      %c0_1586 = arith.constant 0 : index
      %c0_1587 = arith.constant 0 : index
      %1765 = vector.load %arg12[%c1_1585, %c0_1586, %c0_1587] : memref<10x8x128xf32, #tpu.memory_space<vmem>>, vector<1x8x128xf32>
      %1766 = vector.shape_cast %1765 : vector<1x8x128xf32> to vector<8x128xf32>
      %c1_1588 = arith.constant 1 : index
      %c0_1589 = arith.constant 0 : index
      %c0_1590 = arith.constant 0 : index
      %1767 = vector.load %arg9[%c1_1588, %c0_1589, %c0_1590] : memref<10x8x128xf32, #tpu.memory_space<vmem>>, vector<1x8x128xf32>
      %1768 = vector.shape_cast %1767 : vector<1x8x128xf32> to vector<8x128xf32>
      %1769 = vector.shape_cast %1766 : vector<8x128xf32> to vector<1x8x128xf32>
      tpu.vector_store %arg9[%c1_1588, %c0_1589, %c0_1590], %1769 {strides = array<i32>} : memref<10x8x128xf32, #tpu.memory_space<vmem>>, vector<1x8x128xf32>,
      %c2_1591 = arith.constant 2 : index
      %c0_1592 = arith.constant 0 : index
      %c0_1593 = arith.constant 0 : index
      %1770 = vector.load %arg12[%c2_1591, %c0_1592, %c0_1593] : memref<10x8x128xf32, #tpu.memory_space<vmem>>, vector<1x8x128xf32>
      %1771 = vector.shape_cast %1770 : vector<1x8x128xf32> to vector<8x128xf32>
      %c2_1594 = arith.constant 2 : index
      %c0_1595 = arith.constant 0 : index
      %c0_1596 = arith.constant 0 : index
      %1772 = vector.load %arg9[%c2_1594, %c0_1595, %c0_1596] : memref<10x8x128xf32, #tpu.memory_space<vmem>>, vector<1x8x128xf32>
      %1773 = vector.shape_cast %1772 : vector<1x8x128xf32> to vector<8x128xf32>
      %1774 = vector.shape_cast %1771 : vector<8x128xf32> to vector<1x8x128xf32>
      tpu.vector_store %arg9[%c2_1594, %c0_1595, %c0_1596], %1774 {strides = array<i32>} : memref<10x8x128xf32, #tpu.memory_space<vmem>>, vector<1x8x128xf32>,
      %c3_1597 = arith.constant 3 : index
      %c0_1598 = arith.constant 0 : index
      %c0_1599 = arith.constant 0 : index
      %1775 = vector.load %arg12[%c3_1597, %c0_1598, %c0_1599] : memref<10x8x128xf32, #tpu.memory_space<vmem>>, vector<1x8x128xf32>
      %1776 = vector.shape_cast %1775 : vector<1x8x128xf32> to vector<8x128xf32>
      %c3_1600 = arith.constant 3 : index
      %c0_1601 = arith.constant 0 : index
      %c0_1602 = arith.constant 0 : index
      %1777 = vector.load %arg9[%c3_1600, %c0_1601, %c0_1602] : memref<10x8x128xf32, #tpu.memory_space<vmem>>, vector<1x8x128xf32>
      %1778 = vector.shape_cast %1777 : vector<1x8x128xf32> to vector<8x128xf32>
      %1779 = vector.shape_cast %1776 : vector<8x128xf32> to vector<1x8x128xf32>
      tpu.vector_store %arg9[%c3_1600, %c0_1601, %c0_1602], %1779 {strides = array<i32>} : memref<10x8x128xf32, #tpu.memory_space<vmem>>, vector<1x8x128xf32>,
      %c4_1603 = arith.constant 4 : index
      %c0_1604 = arith.constant 0 : index
      %c0_1605 = arith.constant 0 : index
      %1780 = vector.load %arg12[%c4_1603, %c0_1604, %c0_1605] : memref<10x8x128xf32, #tpu.memory_space<vmem>>, vector<1x8x128xf32>
      %1781 = vector.shape_cast %1780 : vector<1x8x128xf32> to vector<8x128xf32>
      %c4_1606 = arith.constant 4 : index
      %c0_1607 = arith.constant 0 : index
      %c0_1608 = arith.constant 0 : index
      %1782 = vector.load %arg9[%c4_1606, %c0_1607, %c0_1608] : memref<10x8x128xf32, #tpu.memory_space<vmem>>, vector<1x8x128xf32>
      %1783 = vector.shape_cast %1782 : vector<1x8x128xf32> to vector<8x128xf32>
      %1784 = vector.shape_cast %1781 : vector<8x128xf32> to vector<1x8x128xf32>
      tpu.vector_store %arg9[%c4_1606, %c0_1607, %c0_1608], %1784 {strides = array<i32>} : memref<10x8x128xf32, #tpu.memory_space<vmem>>, vector<1x8x128xf32>,
      %c5_1609 = arith.constant 5 : index
      %c0_1610 = arith.constant 0 : index
      %c0_1611 = arith.constant 0 : index
      %1785 = vector.load %arg12[%c5_1609, %c0_1610, %c0_1611] : memref<10x8x128xf32, #tpu.memory_space<vmem>>, vector<1x8x128xf32>
      %1786 = vector.shape_cast %1785 : vector<1x8x128xf32> to vector<8x128xf32>
      %c5_1612 = arith.constant 5 : index
      %c0_1613 = arith.constant 0 : index
      %c0_1614 = arith.constant 0 : index
      %1787 = vector.load %arg9[%c5_1612, %c0_1613, %c0_1614] : memref<10x8x128xf32, #tpu.memory_space<vmem>>, vector<1x8x128xf32>
      %1788 = vector.shape_cast %1787 : vector<1x8x128xf32> to vector<8x128xf32>
      %1789 = vector.shape_cast %1786 : vector<8x128xf32> to vector<1x8x128xf32>
      tpu.vector_store %arg9[%c5_1612, %c0_1613, %c0_1614], %1789 {strides = array<i32>} : memref<10x8x128xf32, #tpu.memory_space<vmem>>, vector<1x8x128xf32>,
      %c6_1615 = arith.constant 6 : index
      %c0_1616 = arith.constant 0 : index
      %c0_1617 = arith.constant 0 : index
      %1790 = vector.load %arg12[%c6_1615, %c0_1616, %c0_1617] : memref<10x8x128xf32, #tpu.memory_space<vmem>>, vector<1x8x128xf32>
      %1791 = vector.shape_cast %1790 : vector<1x8x128xf32> to vector<8x128xf32>
      %c6_1618 = arith.constant 6 : index
      %c0_1619 = arith.constant 0 : index
      %c0_1620 = arith.constant 0 : index
      %1792 = vector.load %arg9[%c6_1618, %c0_1619, %c0_1620] : memref<10x8x128xf32, #tpu.memory_space<vmem>>, vector<1x8x128xf32>
      %1793 = vector.shape_cast %1792 : vector<1x8x128xf32> to vector<8x128xf32>
      %1794 = vector.shape_cast %1791 : vector<8x128xf32> to vector<1x8x128xf32>
      tpu.vector_store %arg9[%c6_1618, %c0_1619, %c0_1620], %1794 {strides = array<i32>} : memref<10x8x128xf32, #tpu.memory_space<vmem>>, vector<1x8x128xf32>,
      %c7_1621 = arith.constant 7 : index
      %c0_1622 = arith.constant 0 : index
      %c0_1623 = arith.constant 0 : index
      %1795 = vector.load %arg12[%c7_1621, %c0_1622, %c0_1623] : memref<10x8x128xf32, #tpu.memory_space<vmem>>, vector<1x8x128xf32>
      %1796 = vector.shape_cast %1795 : vector<1x8x128xf32> to vector<8x128xf32>
      %c7_1624 = arith.constant 7 : index
      %c0_1625 = arith.constant 0 : index
      %c0_1626 = arith.constant 0 : index
      %1797 = vector.load %arg9[%c7_1624, %c0_1625, %c0_1626] : memref<10x8x128xf32, #tpu.memory_space<vmem>>, vector<1x8x128xf32>
      %1798 = vector.shape_cast %1797 : vector<1x8x128xf32> to vector<8x128xf32>
      %1799 = vector.shape_cast %1796 : vector<8x128xf32> to vector<1x8x128xf32>
      tpu.vector_store %arg9[%c7_1624, %c0_1625, %c0_1626], %1799 {strides = array<i32>} : memref<10x8x128xf32, #tpu.memory_space<vmem>>, vector<1x8x128xf32>,
      %c8_1627 = arith.constant 8 : index
      %c0_1628 = arith.constant 0 : index
      %c0_1629 = arith.constant 0 : index
      %1800 = vector.load %arg12[%c8_1627, %c0_1628, %c0_1629] : memref<10x8x128xf32, #tpu.memory_space<vmem>>, vector<1x8x128xf32>
      %1801 = vector.shape_cast %1800 : vector<1x8x128xf32> to vector<8x128xf32>
      %c8_1630 = arith.constant 8 : index
      %c0_1631 = arith.constant 0 : index
      %c0_1632 = arith.constant 0 : index
      %1802 = vector.load %arg9[%c8_1630, %c0_1631, %c0_1632] : memref<10x8x128xf32, #tpu.memory_space<vmem>>, vector<1x8x128xf32>
      %1803 = vector.shape_cast %1802 : vector<1x8x128xf32> to vector<8x128xf32>
      %1804 = vector.shape_cast %1801 : vector<8x128xf32> to vector<1x8x128xf32>
      tpu.vector_store %arg9[%c8_1630, %c0_1631, %c0_1632], %1804 {strides = array<i32>} : memref<10x8x128xf32, #tpu.memory_space<vmem>>, vector<1x8x128xf32>,
      %c9_1633 = arith.constant 9 : index
      %c0_1634 = arith.constant 0 : index
      %c0_1635 = arith.constant 0 : index
      %1805 = vector.load %arg12[%c9_1633, %c0_1634, %c0_1635] : memref<10x8x128xf32, #tpu.memory_space<vmem>>, vector<1x8x128xf32>
      %1806 = vector.shape_cast %1805 : vector<1x8x128xf32> to vector<8x128xf32>
      %c9_1636 = arith.constant 9 : index
      %c0_1637 = arith.constant 0 : index
      %c0_1638 = arith.constant 0 : index
      %1807 = vector.load %arg9[%c9_1636, %c0_1637, %c0_1638] : memref<10x8x128xf32, #tpu.memory_space<vmem>>, vector<1x8x128xf32>
      %1808 = vector.shape_cast %1807 : vector<1x8x128xf32> to vector<8x128xf32>
      %1809 = vector.shape_cast %1806 : vector<8x128xf32> to vector<1x8x128xf32>
      tpu.vector_store %arg9[%c9_1636, %c0_1637, %c0_1638], %1809 {strides = array<i32>} : memref<10x8x128xf32, #tpu.memory_space<vmem>>, vector<1x8x128xf32>,
    } else {
    }
    return
  }
  func.func @transform_0(%arg0: i32, %arg1: i32) -> (i32, i32, i32, i32) {
    %c0_i32 = arith.constant 0 : i32
    %c0_i32_0 = arith.constant 0 : i32
    %c0_i32_1 = arith.constant 0 : i32
    return %arg1, %c0_i32, %c0_i32_0, %arg0 : i32, i32, i32, i32
  }
  func.func @transform_1(%arg0: i32, %arg1: i32) -> (i32, i32, i32) {
    %c0_i32 = arith.constant 0 : i32
    %c0_i32_0 = arith.constant 0 : i32
    %c0_i32_1 = arith.constant 0 : i32
    return %c0_i32, %c0_i32_0, %arg0 : i32, i32, i32
  }
  func.func @transform_2(%arg0: i32, %arg1: i32) -> (i32, i32) {
    %c0_i32 = arith.constant 0 : i32
    %c0_i32_0 = arith.constant 0 : i32
    return %c0_i32, %arg0 : i32, i32
  }
  func.func @transform_3(%arg0: i32, %arg1: i32) -> (i32, i32) {
    %c0_i32 = arith.constant 0 : i32
    %c0_i32_0 = arith.constant 0 : i32
    return %c0_i32, %arg0 : i32, i32
  }
  func.func @transform_4(%arg0: i32, %arg1: i32) -> (i32, i32) {
    %c0_i32 = arith.constant 0 : i32
    %c0_i32_0 = arith.constant 0 : i32
    return %c0_i32, %arg0 : i32, i32
  }
  func.func @transform_5(%arg0: i32, %arg1: i32) -> (i32, i32, i32) {
    %c0_i32 = arith.constant 0 : i32
    %c0_i32_0 = arith.constant 0 : i32
    return %arg1, %c0_i32, %arg0 : i32, i32, i32
  }
  func.func @transform_6(%arg0: i32, %arg1: i32) -> (i32, i32) {
    %c0_i32 = arith.constant 0 : i32
    %c0_i32_0 = arith.constant 0 : i32
    return %c0_i32, %arg0 : i32, i32
  }
  func.func @transform_7(%arg0: i32, %arg1: i32) -> (i32, i32, i32) {
    %c0_i32 = arith.constant 0 : i32
    %c0_i32_0 = arith.constant 0 : i32
    %c0_i32_1 = arith.constant 0 : i32
    return %c0_i32, %c0_i32_0, %arg0 : i32, i32, i32
  }
}

</mosaic_0001>

<llo_original>
// kernel: tpu_custom_call.1
$region0: #{tpu_custom_call.1}
  #allocation0 [shape = 'u32[]', space=smem, size = 0x4, offset = 0x4, fixed_abs, tag = 'smem constant byte address 0x4 - core index']
  #allocation1 [shape = 'u32[144,128]{1,0:T(1,128)}', space=vmem, size = 0x12000, scoped, tag = 'internal scratch']
  #allocation2 [shape = 'f32[8,128]{1,0:T(8,128)}', space=vmem, size = 0x1000, scoped, tag = 'scratch operand']
  #allocation3 [shape = 'f32[1,128]{1,0:T(1,128)}', space=vmem, size = 0x200, scoped, tag = 'scratch operand']
  #allocation4 [shape = 'f32[10,8,128]{2,1,0:T(8,128)}', space=vmem, size = 0xa000, scoped, tag = 'scratch operand']
  %s0 = inlined_call_operand.hbm [shape: f32[20,20,8,256], index: 0, kind: input, shape index: {}]
  %s1 = inlined_call_operand.hbm [shape: f32[10,8,256], index: 1, kind: input, shape index: {}, may-alias: {1,7}]
  %s2 = inlined_call_operand.hbm [shape: f32[8,256], index: 2, kind: input, shape index: {}, may-alias: {2,4}]
  %s3 = inlined_call_operand.hbm [shape: f32[1,256], index: 3, kind: input, shape index: {}, may-alias: {3,6}]
  %s4 = inlined_call_operand.hbm [shape: f32[8,256], index: 4, kind: output, shape index: {0}, may-alias: {2,4}]
  %s5 = inlined_call_operand.hbm [shape: f32[20,8,256], index: 5, kind: output, shape index: {1}]
  %s6 = inlined_call_operand.hbm [shape: f32[1,256], index: 6, kind: output, shape index: {2}, may-alias: {3,6}]
  %s7 = inlined_call_operand.hbm [shape: f32[10,8,256], index: 7, kind: output, shape index: {3}, may-alias: {1,7}]
  %8 = xla_tuple %s4, %s5, %s6, %s7
  %s9 = sld [smem:[#allocation0]]
  $region97: #{tpu_custom_call.1} parent=0
    _
  %s11 = ssub.s32 1, %s9
  %s12 = scalar_select 0, %s11, %s9
  $region1: #{tpu_custom_call.1} parent=0
    #allocation5 [shape = 'u8[1638400]{0}', space=vmem, size = 0x190000, scoped, tag = 'input window, operand 0']
    #allocation6 [shape = 's32[2]{0}', space=sflag, size = 0x8, scoped, tag = 'scoped memory for tpu_custom_call.1']
    #allocation7 [shape = 's32[2]{0}', space=sflag, size = 0x8, scoped, tag = 'scoped memory for tpu_custom_call.1']
    #allocation8 [shape = 'u8[81920]{0}', space=vmem, size = 0x14000, scoped, tag = 'input window, operand 1']
    #allocation9 [shape = 's32[2]{0}', space=sflag, size = 0x8, scoped, tag = 'scoped memory for tpu_custom_call.1']
    #allocation10 [shape = 'u8[8192]{0}', space=vmem, size = 0x2000, scoped, tag = 'input window, operand 2']
    #allocation11 [shape = 'u8[1024]{0}', space=vmem, size = 0x400, scoped, tag = 'input window, operand 3']
    #allocation12 [shape = 's32[2]{0}', space=sflag, size = 0x8, scoped, tag = 'scoped memory for tpu_custom_call.1']
    #allocation13 [shape = 'u8[8192]{0}', space=vmem, size = 0x2000, scoped, tag = 'output window, operand 0']
    #allocation14 [shape = 'u8[81920]{0}', space=vmem, size = 0x14000, scoped, tag = 'output window, operand 1']
    #allocation15 [shape = 's32[2]{0}', space=sflag, size = 0x8, scoped, tag = 'scoped memory for tpu_custom_call.1']
    #allocation16 [shape = 'u8[1024]{0}', space=vmem, size = 0x400, scoped, tag = 'output window, operand 2']
    #allocation17 [shape = 'u8[81920]{0}', space=vmem, size = 0x14000, scoped, tag = 'output window, operand 3']
    #allocation18 [shape = 's32[2]{0}', space=sflag, size = 0x8, scoped, tag = 'scoped memory for tpu_custom_call.1']
    %13 = vsyncpa [#allocation6], 0
    %s14 = scalar_lea.sflag [#allocation6], 1
    %15 = vsyncpa %s14, 0
    %16 = vsyncpa [#allocation9], 0
    %s17 = scalar_lea.sflag [#allocation9], 1
    %18 = vsyncpa %s17, 0
    %19 = vsyncpa [#allocation12], 0
    %s20 = scalar_lea.sflag [#allocation12], 1
    %21 = vsyncpa %s20, 0
    %22 = vsyncpa [#allocation7], 0
    %s23 = scalar_lea.sflag [#allocation7], 1
    %24 = vsyncpa %s23, 0
    %25 = vsyncpa [#allocation15], 0
    %s26 = scalar_lea.sflag [#allocation15], 1
    %27 = vsyncpa %s26, 0
    %28 = vsyncpa [#allocation18], 0
    %s29 = scalar_lea.sflag [#allocation18], 1
    %30 = vsyncpa %s29, 0
    loop: start=0, step=1, limit=6
    $region2: #{tpu_custom_call.1} parent=1 // loop_pre_header
      _
    $region3: #{tpu_custom_call.1} parent=1 // loop_header
      %s32 = sphi 0, %s36
      %p33 = scmp.ge.s32.totalorder %s32, 6
      %s39 = sphi 0, %s51
      %s40 = sphi 0, %s47
      %s41 = sphi 0, %s39
      %s42 = sphi 0, %s40
      %s43 = sphi 0, %s41
      %s44 = sphi 0, %s42
      %s56 = sphi 0, %s58
      %s59 = sphi 0, %s56
      %s60 = sphi 0, %s59
      %s76 = sphi 0, %s60
      %s82 = sphi 0, %s84
      %s85 = sphi 0, %s82
      %s86 = sphi 0, %s85
      %s102 = sphi 0, %s86
      %s108 = sphi 0, %s110
      %s111 = sphi 0, %s108
      %s112 = sphi 0, %s111
      %s128 = sphi 0, %s112
      %s134 = sphi 0, %s136
      %s137 = sphi 0, %s134
      %s138 = sphi 0, %s137
      %s154 = sphi 0, %s138
      %s160 = sphi 0, %s162
      %s163 = sphi 0, %s160
      %s164 = sphi 0, %s163
      %s180 = sphi 0, %s164
      %s188 = sphi 0, %s190
      %s191 = sphi 0, %s188
      %s192 = sphi 0, %s191
      %s208 = sphi 0, %s192
      %s214 = sphi 0, %s216
      %s217 = sphi 0, %s214
      %s218 = sphi 0, %s217
      %s234 = sphi 0, %s218
      %s240 = sphi 0, %s242
      %s243 = sphi 0, %s240
      %s244 = sphi 0, %s243
      %s260 = sphi 0, %s244
    $region4: #{tpu_custom_call.1} parent=1 // loop_header_branch
      %35 = sbr.rel (%p33) target = $region8
    $region5: #{tpu_custom_call.1} parent=1 // loop_body
      %s37 = ssub.s32 %s32, 1
      %s38 = ssub.s32 %s32, 2
      %s45 = sadd.s32 1, %s40
      %p46 = scmp.ge.s32.totalorder %s45, 2
      %s47 = scalar_select %p46, 0, %s45
      %s48 = sadd.s32 1, %s39
      %s49 = scalar_select %p46, %s48, %s39
      %p50 = scmp.ge.s32.totalorder %s49, 2
      %s51 = scalar_select %p50, 0, %s49
      %s52 = ssub.s32 %s40, %s47
      %s53 = ssub.s32 %s39, %s51
      %s54 = sor.u32 %s52, %s53
      %p55 = scmp.eq.s32.totalorder %s54, 0
      %s57 = sadd.s32 %s56, 1
      %s58 = scalar_select %p55, %s56, %s57
      %p61 = pneg %p55
      %p62 = scmp.eq.s32.totalorder %s32, 3
      %p63 = por %p61, %p62
      %p64 = scmp.ne.s32.totalorder %s56, %s59
      %p65 = scmp.eq.s32.totalorder %s32, 0
      %p66 = por %p64, %p65
      %p67 = scmp.ne.s32.totalorder %s56, %s59
      %p68 = scmp.eq.s32.totalorder %s37, 3
      %p69 = por %p67, %p68
      %p70 = scmp.ne.s32.totalorder %s59, %s60
      %p71 = scmp.eq.s32.totalorder %s37, 0
      %p72 = por %p70, %p71
      %p73 = scmp.ne.s32.totalorder %s59, %s60
      %p74 = scmp.eq.s32.totalorder %s38, 3
      %p75 = por %p73, %p74
      %p77 = scmp.ne.s32.totalorder %s60, %s76
      %p78 = scmp.eq.s32.totalorder %s38, 0
      %p79 = por %p77, %p78
      %s80 = ssub.s32 %s39, %s51
      %p81 = scmp.eq.s32.totalorder %s80, 0
      %s83 = sadd.s32 %s82, 1
      %s84 = scalar_select %p81, %s82, %s83
      %p87 = pneg %p81
      %p88 = scmp.eq.s32.totalorder %s32, 3
      %p89 = por %p87, %p88
      %p90 = scmp.ne.s32.totalorder %s82, %s85
      %p91 = scmp.eq.s32.totalorder %s32, 0
      %p92 = por %p90, %p91
      %p93 = scmp.ne.s32.totalorder %s82, %s85
      %p94 = scmp.eq.s32.totalorder %s37, 3
      %p95 = por %p93, %p94
      %p96 = scmp.ne.s32.totalorder %s85, %s86
      %p97 = scmp.eq.s32.totalorder %s37, 0
      %p98 = por %p96, %p97
      %p99 = scmp.ne.s32.totalorder %s85, %s86
      %p100 = scmp.eq.s32.totalorder %s38, 3
      %p101 = por %p99, %p100
      %p103 = scmp.ne.s32.totalorder %s86, %s102
      %p104 = scmp.eq.s32.totalorder %s38, 0
      %p105 = por %p103, %p104
      %s106 = ssub.s32 %s39, %s51
      %p107 = scmp.eq.s32.totalorder %s106, 0
      %s109 = sadd.s32 %s108, 1
      %s110 = scalar_select %p107, %s108, %s109
      %p113 = pneg %p107
      %p114 = scmp.eq.s32.totalorder %s32, 3
      %p115 = por %p113, %p114
      %p116 = scmp.ne.s32.totalorder %s108, %s111
      %p117 = scmp.eq.s32.totalorder %s32, 0
      %p118 = por %p116, %p117
      %p119 = scmp.ne.s32.totalorder %s108, %s111
      %p120 = scmp.eq.s32.totalorder %s37, 3
      %p121 = por %p119, %p120
      %p122 = scmp.ne.s32.totalorder %s111, %s112
      %p123 = scmp.eq.s32.totalorder %s37, 0
      %p124 = por %p122, %p123
      %p125 = scmp.ne.s32.totalorder %s111, %s112
      %p126 = scmp.eq.s32.totalorder %s38, 3
      %p127 = por %p125, %p126
      %p129 = scmp.ne.s32.totalorder %s112, %s128
      %p130 = scmp.eq.s32.totalorder %s38, 0
      %p131 = por %p129, %p130
      %s132 = ssub.s32 %s39, %s51
      %p133 = scmp.eq.s32.totalorder %s132, 0
      %s135 = sadd.s32 %s134, 1
      %s136 = scalar_select %p133, %s134, %s135
      %p139 = pneg %p133
      %p140 = scmp.eq.s32.totalorder %s32, 3
      %p141 = por %p139, %p140
      %p142 = scmp.ne.s32.totalorder %s134, %s137
      %p143 = scmp.eq.s32.totalorder %s32, 0
      %p144 = por %p142, %p143
      %p145 = scmp.ne.s32.totalorder %s134, %s137
      %p146 = scmp.eq.s32.totalorder %s37, 3
      %p147 = por %p145, %p146
      %p148 = scmp.ne.s32.totalorder %s137, %s138
      %p149 = scmp.eq.s32.totalorder %s37, 0
      %p150 = por %p148, %p149
      %p151 = scmp.ne.s32.totalorder %s137, %s138
      %p152 = scmp.eq.s32.totalorder %s38, 3
      %p153 = por %p151, %p152
      %p155 = scmp.ne.s32.totalorder %s138, %s154
      %p156 = scmp.eq.s32.totalorder %s38, 0
      %p157 = por %p155, %p156
      %s158 = ssub.s32 %s39, %s51
      %p159 = scmp.eq.s32.totalorder %s158, 0
      %s161 = sadd.s32 %s160, 1
      %s162 = scalar_select %p159, %s160, %s161
      %p165 = pneg %p159
      %p166 = scmp.eq.s32.totalorder %s32, 3
      %p167 = por %p165, %p166
      %p168 = scmp.ne.s32.totalorder %s160, %s163
      %p169 = scmp.eq.s32.totalorder %s32, 0
      %p170 = por %p168, %p169
      %p171 = scmp.ne.s32.totalorder %s160, %s163
      %p172 = scmp.eq.s32.totalorder %s37, 3
      %p173 = por %p171, %p172
      %p174 = scmp.ne.s32.totalorder %s163, %s164
      %p175 = scmp.eq.s32.totalorder %s37, 0
      %p176 = por %p174, %p175
      %p177 = scmp.ne.s32.totalorder %s163, %s164
      %p178 = scmp.eq.s32.totalorder %s38, 3
      %p179 = por %p177, %p178
      %p181 = scmp.ne.s32.totalorder %s164, %s180
      %p182 = scmp.eq.s32.totalorder %s38, 0
      %p183 = por %p181, %p182
      %s184 = ssub.s32 %s40, %s47
      %s185 = ssub.s32 %s39, %s51
      %s186 = sor.u32 %s184, %s185
      %p187 = scmp.eq.s32.totalorder %s186, 0
      %s189 = sadd.s32 %s188, 1
      %s190 = scalar_select %p187, %s188, %s189
      %p193 = pneg %p187
      %p194 = scmp.eq.s32.totalorder %s32, 3
      %p195 = por %p193, %p194
      %p196 = scmp.ne.s32.totalorder %s188, %s191
      %p197 = scmp.eq.s32.totalorder %s32, 0
      %p198 = por %p196, %p197
      %p199 = scmp.ne.s32.totalorder %s188, %s191
      %p200 = scmp.eq.s32.totalorder %s37, 3
      %p201 = por %p199, %p200
      %p202 = scmp.ne.s32.totalorder %s191, %s192
      %p203 = scmp.eq.s32.totalorder %s37, 0
      %p204 = por %p202, %p203
      %p205 = scmp.ne.s32.totalorder %s191, %s192
      %p206 = scmp.eq.s32.totalorder %s38, 3
      %p207 = por %p205, %p206
      %p209 = scmp.ne.s32.totalorder %s192, %s208
      %p210 = scmp.eq.s32.totalorder %s38, 0
      %p211 = por %p209, %p210
      %s212 = ssub.s32 %s39, %s51
      %p213 = scmp.eq.s32.totalorder %s212, 0
      %s215 = sadd.s32 %s214, 1
      %s216 = scalar_select %p213, %s214, %s215
      %p219 = pneg %p213
      %p220 = scmp.eq.s32.totalorder %s32, 3
      %p221 = por %p219, %p220
      %p222 = scmp.ne.s32.totalorder %s214, %s217
      %p223 = scmp.eq.s32.totalorder %s32, 0
      %p224 = por %p222, %p223
      %p225 = scmp.ne.s32.totalorder %s214, %s217
      %p226 = scmp.eq.s32.totalorder %s37, 3
      %p227 = por %p225, %p226
      %p228 = scmp.ne.s32.totalorder %s217, %s218
      %p229 = scmp.eq.s32.totalorder %s37, 0
      %p230 = por %p228, %p229
      %p231 = scmp.ne.s32.totalorder %s217, %s218
      %p232 = scmp.eq.s32.totalorder %s38, 3
      %p233 = por %p231, %p232
      %p235 = scmp.ne.s32.totalorder %s218, %s234
      %p236 = scmp.eq.s32.totalorder %s38, 0
      %p237 = por %p235, %p236
      %s238 = ssub.s32 %s39, %s51
      %p239 = scmp.eq.s32.totalorder %s238, 0
      %s241 = sadd.s32 %s240, 1
      %s242 = scalar_select %p239, %s240, %s241
      %p245 = pneg %p239
      %p246 = scmp.eq.s32.totalorder %s32, 3
      %p247 = por %p245, %p246
      %p248 = scmp.ne.s32.totalorder %s240, %s243
      %p249 = scmp.eq.s32.totalorder %s32, 0
      %p250 = por %p248, %p249
      %p251 = scmp.ne.s32.totalorder %s240, %s243
      %p252 = scmp.eq.s32.totalorder %s37, 3
      %p253 = por %p251, %p252
      %p254 = scmp.ne.s32.totalorder %s243, %s244
      %p255 = scmp.eq.s32.totalorder %s37, 0
      %p256 = por %p254, %p255
      %p257 = scmp.ne.s32.totalorder %s243, %s244
      %p258 = scmp.eq.s32.totalorder %s38, 3
      %p259 = por %p257, %p258
      %p261 = scmp.ne.s32.totalorder %s244, %s260
      %p262 = scmp.eq.s32.totalorder %s38, 0
      %p263 = por %p261, %p262
      %p264 = scmp.le.s32.totalorder 1, %s32
      %p265 = scmp.lt.s32.totalorder %s32, 5
      %p266 = pnand %p264, %p265
      %p267 = pneg %p266
      // Predicated region
      $region9: #{tpu_custom_call.1} parent=5 // pred_check
        _
      $region10: #{tpu_custom_call.1} parent=5 // pred_check_branch
        %269 = sbr.rel (%p266) target = $region12
      $region11: #{tpu_custom_call.1} parent=5 // pred_region
        %s270 = ssub.s32 %s32, 1
      $region12: #{tpu_custom_call.1} parent=5 // pred_fallthru
        _
      %p271 = scmp.lt.s32.totalorder %s32, 4
      // Predicated region
      $region13: #{tpu_custom_call.1} parent=5 // pred_check
        %p272 = pneg %p271
      $region14: #{tpu_custom_call.1} parent=5 // pred_check_branch
        %274 = sbr.rel (%p272) target = $region16
      $region15: #{tpu_custom_call.1} parent=5 // pred_region
        // Predicated region
        $region17: #{tpu_custom_call.1} parent=15 // pred_check
          %p275 = pneg %p66
        $region18: #{tpu_custom_call.1} parent=15 // pred_check_branch
          %277 = sbr.rel (%p275) target = $region20
        $region19: #{tpu_custom_call.1} parent=15 // pred_region
          %s278 = sand.u32 %s56, 1
          %s279 = scalar_lea.sflag [#allocation6], %s278
          %s280 = sand.u32 %s56, 1
          %s281 = smul.addr %s280, 1600
          %s282 = scalar_lea.vmem [#allocation5], %s281
          %s283 = smul.u32 10, %s40
          %s285 = ssub.s32 25600, 25600
          %286 = vsyncadd %s279, %s285
          %s287 = smul.addr %s283, 40
          %s288 = sadd.s32 %s39, %s287
          %s289 = smul.addr %s288, 128
          %s290 = scalar_lea.hbm %s0, %s289
          %s291 = sshll.u32 %s282, 4
          %s292 = int_to_ptr.vmem [resolvable:$true] %s291
          %297 = dma.hbm_to_vmem [thread:$0]  %s290, 25600, %s292, %s279, 256, 128, 8
        $region20: #{tpu_custom_call.1} parent=15 // pred_fallthru
          _
        // Predicated region
        $region21: #{tpu_custom_call.1} parent=15 // pred_check
          %p298 = pneg %p92
        $region22: #{tpu_custom_call.1} parent=15 // pred_check_branch
          %300 = sbr.rel (%p298) target = $region24
        $region23: #{tpu_custom_call.1} parent=15 // pred_region
          %s301 = sand.u32 %s32, 1
          %s302 = scalar_lea.sflag [#allocation9], %s301
          %s303 = sand.u32 %s82, 1
          %s304 = smul.addr %s303, 80
          %s305 = scalar_lea.vmem [#allocation8], %s304
          %s307 = ssub.s32 1280, 1280
          %308 = vsyncadd %s302, %s307
          %s309 = smul.addr %s39, 128
          %s310 = scalar_lea.hbm %s1, %s309
          %s311 = sshll.u32 %s305, 4
          %s312 = int_to_ptr.vmem [resolvable:$true] %s311
          %317 = dma.hbm_to_vmem [thread:$0]  %s310, 1280, %s312, %s302, 256, 128, 8
        $region24: #{tpu_custom_call.1} parent=15 // pred_fallthru
          _
        // Predicated region
        $region25: #{tpu_custom_call.1} parent=15 // pred_check
          %p318 = pneg %p118
        $region26: #{tpu_custom_call.1} parent=15 // pred_check_branch
          %320 = sbr.rel (%p318) target = $region28
        $region27: #{tpu_custom_call.1} parent=15 // pred_region
          %s321 = sand.u32 %s32, 1
          %s322 = scalar_lea.sflag [#allocation9], %s321
          %s323 = sand.u32 %s108, 1
          %s324 = smul.addr %s323, 8
          %s325 = scalar_lea.vmem [#allocation10], %s324
          %s327 = ssub.s32 128, 128
          %328 = vsyncadd %s322, %s327
          %s329 = smul.addr %s39, 128
          %s330 = scalar_lea.hbm %s2, %s329
          %s332 = sshll.u32 %s325, 4
          %s333 = int_to_ptr.vmem [resolvable:$true] %s332
          %335 = dma.hbm_to_vmem [thread:$0]  %s330, 128, %s333, %s322
        $region28: #{tpu_custom_call.1} parent=15 // pred_fallthru
          _
        // Predicated region
        $region29: #{tpu_custom_call.1} parent=15 // pred_check
          %p336 = pneg %p144
        $region30: #{tpu_custom_call.1} parent=15 // pred_check_branch
          %338 = sbr.rel (%p336) target = $region32
        $region31: #{tpu_custom_call.1} parent=15 // pred_region
          %s339 = sand.u32 %s134, 1
          %s340 = scalar_lea.sflag [#allocation12], %s339
          %s341 = sand.u32 %s134, 1
          %s342 = scalar_lea.vmem [#allocation11], %s341
          %s344 = ssub.s32 16, 16
          %345 = vsyncadd %s340, %s344
          %s346 = smul.addr %s39, 16
          %s347 = scalar_lea.hbm %s3, %s346
          %s349 = sshll.u32 %s342, 4
          %s350 = int_to_ptr.vmem [resolvable:$true] %s349
          %352 = dma.hbm_to_vmem [thread:$0]  %s347, 16, %s350, %s340
        $region32: #{tpu_custom_call.1} parent=15 // pred_fallthru
          _
      $region16: #{tpu_custom_call.1} parent=5 // pred_fallthru
        _
      %p353 = scmp.le.s32.totalorder 1, %s32
      %p354 = scmp.lt.s32.totalorder %s32, 5
      %p355 = pnand %p353, %p354
      %p356 = pneg %p355
      // Predicated region
      $region33: #{tpu_custom_call.1} parent=5 // pred_check
        _
      $region34: #{tpu_custom_call.1} parent=5 // pred_check_branch
        %358 = sbr.rel (%p355) target = $region36
      $region35: #{tpu_custom_call.1} parent=5 // pred_region
        %s359 = ssub.s32 %s32, 1
        %s360 = sand.u32 %s59, 1
        %s361 = scalar_lea.sflag [#allocation6], %s360
        %s362 = sand.u32 %s59, 1
        %s363 = smul.addr %s362, 1600
        %s364 = scalar_lea.vmem [#allocation5], %s363
        // Predicated region
        $region37: #{tpu_custom_call.1} parent=35 // pred_check
          %p365 = pneg %p72
        $region38: #{tpu_custom_call.1} parent=35 // pred_check_branch
          %367 = sbr.rel (%p365) target = $region40
        $region39: #{tpu_custom_call.1} parent=35 // pred_region
          %368 = dma.done %s361, 25600
        $region40: #{tpu_custom_call.1} parent=35 // pred_fallthru
          _
        %s369 = sand.u32 %s37, 1
        %s370 = scalar_lea.sflag [#allocation9], %s369
        %s371 = sand.u32 %s85, 1
        %s372 = smul.addr %s371, 80
        %s373 = scalar_lea.vmem [#allocation8], %s372
        // Predicated region
        $region41: #{tpu_custom_call.1} parent=35 // pred_check
          %p374 = pneg %p98
        $region42: #{tpu_custom_call.1} parent=35 // pred_check_branch
          %376 = sbr.rel (%p374) target = $region44
        $region43: #{tpu_custom_call.1} parent=35 // pred_region
          %377 = dma.done %s370, 1280
        $region44: #{tpu_custom_call.1} parent=35 // pred_fallthru
          _
        %s378 = sand.u32 %s37, 1
        %s379 = scalar_lea.sflag [#allocation9], %s378
        %s380 = sand.u32 %s111, 1
        %s381 = smul.addr %s380, 8
        %s382 = scalar_lea.vmem [#allocation10], %s381
        // Predicated region
        $region45: #{tpu_custom_call.1} parent=35 // pred_check
          %p383 = pneg %p124
        $region46: #{tpu_custom_call.1} parent=35 // pred_check_branch
          %385 = sbr.rel (%p383) target = $region48
        $region47: #{tpu_custom_call.1} parent=35 // pred_region
          %386 = dma.done %s379, 128
        $region48: #{tpu_custom_call.1} parent=35 // pred_fallthru
          _
        %s387 = sand.u32 %s137, 1
        %s388 = scalar_lea.sflag [#allocation12], %s387
        %s389 = sand.u32 %s137, 1
        %s390 = scalar_lea.vmem [#allocation11], %s389
        // Predicated region
        $region49: #{tpu_custom_call.1} parent=35 // pred_check
          %p391 = pneg %p150
        $region50: #{tpu_custom_call.1} parent=35 // pred_check_branch
          %393 = sbr.rel (%p391) target = $region52
        $region51: #{tpu_custom_call.1} parent=35 // pred_region
          %394 = dma.done %s388, 16
        $region52: #{tpu_custom_call.1} parent=35 // pred_fallthru
          _
        %s395 = sand.u32 %s59, 1
        %s396 = scalar_lea.sflag [#allocation6], %s395
        %s397 = sand.u32 %s59, 1
        %s398 = smul.addr %s397, 1600
        %s399 = scalar_lea.vmem [#allocation5], %s398
        %p400 = pneg %p72
        %p401 = pneg %p69
        %s402 = sand.u32 %s37, 1
        %s403 = scalar_lea.sflag [#allocation9], %s402
        %s404 = sand.u32 %s85, 1
        %s405 = smul.addr %s404, 80
        %s406 = scalar_lea.vmem [#allocation8], %s405
        %p407 = pneg %p98
        %p408 = pneg %p95
        %s409 = sand.u32 %s37, 1
        %s410 = scalar_lea.sflag [#allocation9], %s409
        %s411 = sand.u32 %s111, 1
        %s412 = smul.addr %s411, 8
        %s413 = scalar_lea.vmem [#allocation10], %s412
        %p414 = pneg %p124
        %p415 = pneg %p121
        %s416 = sand.u32 %s137, 1
        %s417 = scalar_lea.sflag [#allocation12], %s416
        %s418 = sand.u32 %s137, 1
        %s419 = scalar_lea.vmem [#allocation11], %s418
        %p420 = pneg %p150
        %p421 = pneg %p147
        %p422 = pneg %p176
        %p423 = pneg %p173
        %s424 = sand.u32 %s163, 1
        %s425 = scalar_lea.sflag [#allocation7], %s424
        %s426 = sand.u32 %s163, 1
        %s427 = smul.addr %s426, 8
        %s428 = scalar_lea.vmem [#allocation13], %s427
        %p429 = pneg %p204
        %p430 = pneg %p201
        %s431 = sand.u32 %s37, 1
        %s432 = scalar_lea.sflag [#allocation15], %s431
        %s433 = sand.u32 %s191, 1
        %s434 = smul.addr %s433, 80
        %s435 = scalar_lea.vmem [#allocation14], %s434
        %p436 = pneg %p230
        %p437 = pneg %p227
        %s438 = sand.u32 %s37, 1
        %s439 = scalar_lea.sflag [#allocation15], %s438
        %s440 = sand.u32 %s217, 1
        %s441 = scalar_lea.vmem [#allocation16], %s440
        %p442 = pneg %p256
        %p443 = pneg %p253
        %s444 = sand.u32 %s243, 1
        %s445 = scalar_lea.sflag [#allocation18], %s444
        %s446 = sand.u32 %s243, 1
        %s447 = smul.addr %s446, 80
        %s448 = scalar_lea.vmem [#allocation17], %s447
        %s449 = smul.u32 10, %s42
        %s450 = smul.u32 10, %s42
        %p451 = scmp.eq.s32.totalorder %s42, 0
        // Predicated region
        $region53: #{tpu_custom_call.1} parent=35 // pred_check
          %p452 = pneg %p451
        $region54: #{tpu_custom_call.1} parent=35 // pred_check_branch
          %454 = sbr.rel (%p452) target = $region56
        $region55: #{tpu_custom_call.1} parent=35 // pred_region
          %v455 = vld [vmem:[%s382] sm:$0xff]
          %456 = vst [vmem:[#allocation2] sm:$0xff] %v455
          %v457 = vld [vmem:[%s390] sm:$0x1]
          %458 = vst [vmem:[#allocation3] sm:$0x1] %v457
          %v459 = vld [vmem:[%s373] sm:$0xff]
          %460 = vst [vmem:[#allocation4] sm:$0xff] %v459
          %s461 = scalar_lea.vmem %s373, 8 [#allocation8]
          %v462 = vld [vmem:[%s461] sm:$0xff]
          %s463 = scalar_lea.vmem [#allocation4], 8
          %464 = vst [vmem:[%s463] sm:$0xff] %v462
          %s465 = scalar_lea.vmem %s373, 16 [#allocation8]
          %v466 = vld [vmem:[%s465] sm:$0xff]
          %s467 = scalar_lea.vmem [#allocation4], 16
          %468 = vst [vmem:[%s467] sm:$0xff] %v466
          %s469 = scalar_lea.vmem %s373, 24 [#allocation8]
          %v470 = vld [vmem:[%s469] sm:$0xff]
          %s471 = scalar_lea.vmem [#allocation4], 24
          %472 = vst [vmem:[%s471] sm:$0xff] %v470
          %s473 = scalar_lea.vmem %s373, 32 [#allocation8]
          %v474 = vld [vmem:[%s473] sm:$0xff]
          %s475 = scalar_lea.vmem [#allocation4], 32
          %476 = vst [vmem:[%s475] sm:$0xff] %v474
          %s477 = scalar_lea.vmem %s373, 40 [#allocation8]
          %v478 = vld [vmem:[%s477] sm:$0xff]
          %s479 = scalar_lea.vmem [#allocation4], 40
          %480 = vst [vmem:[%s479] sm:$0xff] %v478
          %s481 = scalar_lea.vmem %s373, 48 [#allocation8]
          %v482 = vld [vmem:[%s481] sm:$0xff]
          %s483 = scalar_lea.vmem [#allocation4], 48
          %484 = vst [vmem:[%s483] sm:$0xff] %v482
          %s485 = scalar_lea.vmem %s373, 56 [#allocation8]
          %v486 = vld [vmem:[%s485] sm:$0xff]
          %s487 = scalar_lea.vmem [#allocation4], 56
          %488 = vst [vmem:[%s487] sm:$0xff] %v486
          %s489 = scalar_lea.vmem %s373, 64 [#allocation8]
          %v490 = vld [vmem:[%s489] sm:$0xff]
          %s491 = scalar_lea.vmem [#allocation4], 64
          %492 = vst [vmem:[%s491] sm:$0xff] %v490
          %s493 = scalar_lea.vmem %s373, 72 [#allocation8]
          %v494 = vld [vmem:[%s493] sm:$0xff]
          %s495 = scalar_lea.vmem [#allocation4], 72
          %496 = vst [vmem:[%s495] sm:$0xff] %v494
        $region56: #{tpu_custom_call.1} parent=35 // pred_fallthru
          _
        %v497 = vld [vmem:[#allocation2] sm:$0xff]
        %v498 = vmul.f32 %v497, 0.99004984
        %v499 = vld [vmem:[%s364] sm:$0xff]
        %v500 = vmul.f32 %v499, 5.6027964e-09
        %s501 = scalar_lea.vmem %s364, 8 [#allocation5]
        %v502 = vld [vmem:[%s501] sm:$0xff]
        %v503 = vmul.f32 %v502, 1.5229979e-08
        %v504 = vadd.f32 %v500, %v503
        %s505 = scalar_lea.vmem %s364, 16 [#allocation5]
        %v506 = vld [vmem:[%s505] sm:$0xff]
        %v507 = vmul.f32 %v506, 4.1399378e-08
        %v508 = vadd.f32 %v498, %v507
        %s509 = scalar_lea.vmem %s364, 24 [#allocation5]
        %v510 = vld [vmem:[%s509] sm:$0xff]
        %v511 = vmul.f32 %v510, 1.12535176e-07
        %v512 = vadd.f32 %v504, %v511
        %s513 = scalar_lea.vmem %s364, 32 [#allocation5]
        %v514 = vld [vmem:[%s513] sm:$0xff]
        %v515 = vmul.f32 %v514, 3.0590232e-07
        %v516 = vadd.f32 %v508, %v515
        %s517 = scalar_lea.vmem %s364, 40 [#allocation5]
        %v518 = vld [vmem:[%s517] sm:$0xff]
        %v519 = vmul.f32 %v518, 8.315287e-07
        %v520 = vadd.f32 %v512, %v519
        %s521 = scalar_lea.vmem %s364, 48 [#allocation5]
        %v522 = vld [vmem:[%s521] sm:$0xff]
        %v523 = vmul.f32 %v522, 2.2603294e-06
        %v524 = vadd.f32 %v516, %v523
        %s525 = scalar_lea.vmem %s364, 56 [#allocation5]
        %v526 = vld [vmem:[%s525] sm:$0xff]
        %v527 = vmul.f32 %v526, 6.1442124e-06
        %v528 = vadd.f32 %v520, %v527
        %s529 = scalar_lea.vmem %s364, 64 [#allocation5]
        %v530 = vld [vmem:[%s529] sm:$0xff]
        %v531 = vmul.f32 %v530, 1.67017e-05
        %v532 = vadd.f32 %v524, %v531
        %s533 = scalar_lea.vmem %s364, 72 [#allocation5]
        %v534 = vld [vmem:[%s533] sm:$0xff]
        %v535 = vmul.f32 %v534, 4.539993e-05
        %v536 = vadd.f32 %v528, %v535
        %s537 = scalar_lea.vmem %s364, 80 [#allocation5]
        %v538 = vld [vmem:[%s537] sm:$0xff]
        %v539 = vmul.f32 %v538, 0.0001234098
        %v540 = vadd.f32 %v532, %v539
        %s541 = scalar_lea.vmem %s364, 88 [#allocation5]
        %v542 = vld [vmem:[%s541] sm:$0xff]
        %v543 = vmul.f32 %v542, 0.00033546262
        %v544 = vadd.f32 %v536, %v543
        %s545 = scalar_lea.vmem %s364, 96 [#allocation5]
        %v546 = vld [vmem:[%s545] sm:$0xff]
        %v547 = vmul.f32 %v546, 0.000911882
        %v548 = vadd.f32 %v540, %v547
        %s549 = scalar_lea.vmem %s364, 104 [#allocation5]
        %v550 = vld [vmem:[%s549] sm:$0xff]
        %v551 = vmul.f32 %v550, 0.0024787523
        %v552 = vadd.f32 %v544, %v551
        %s553 = scalar_lea.vmem %s364, 112 [#allocation5]
        %v554 = vld [vmem:[%s553] sm:$0xff]
        %v555 = vmul.f32 %v554, 0.006737947
        %v556 = vadd.f32 %v548, %v555
        %s557 = scalar_lea.vmem %s364, 120 [#allocation5]
        %v558 = vld [vmem:[%s557] sm:$0xff]
        %v559 = vmul.f32 %v558, 0.01831564
        %v560 = vadd.f32 %v552, %v559
        %s561 = scalar_lea.vmem %s364, 128 [#allocation5]
        %v562 = vld [vmem:[%s561] sm:$0xff]
        %v563 = vmul.f32 %v562, 0.049787067
        %v564 = vadd.f32 %v556, %v563
        %s565 = scalar_lea.vmem %s364, 136 [#allocation5]
        %v566 = vld [vmem:[%s565] sm:$0xff]
        %v567 = vmul.f32 %v566, 0.13533528
        %v568 = vadd.f32 %v560, %v567
        %s569 = scalar_lea.vmem %s364, 144 [#allocation5]
        %v570 = vld [vmem:[%s569] sm:$0xff]
        %v571 = vmul.f32 %v570, 0.36787945
        %v572 = vadd.f32 %v564, %v571
        %s573 = scalar_lea.vmem %s364, 152 [#allocation5]
        %v574 = vld [vmem:[%s573] sm:$0xff]
        %v575 = vadd.f32 %v568, %v574
        %v576 = vld [vmem:[#allocation4] sm:$0xff]
        %v577 = vmul.f32 %v576, -0.0061704903
        %v578 = vadd.f32 %v572, %v577
        %s579 = scalar_lea.vmem [#allocation4], 8
        %v580 = vld [vmem:[%s579] sm:$0xff]
        %v581 = vmul.f32 %v580, -0.01677313
        %v582 = vadd.f32 %v575, %v581
        %s583 = scalar_lea.vmem [#allocation4], 16
        %v584 = vld [vmem:[%s583] sm:$0xff]
        %v585 = vmul.f32 %v584, -0.0455941
        %v586 = vadd.f32 %v578, %v585
        %s587 = scalar_lea.vmem [#allocation4], 24
        %v588 = vld [vmem:[%s587] sm:$0xff]
        %v589 = vmul.f32 %v588, -0.12393761
        %v590 = vadd.f32 %v582, %v589
        %s591 = scalar_lea.vmem [#allocation4], 32
        %v592 = vld [vmem:[%s591] sm:$0xff]
        %v593 = vmul.f32 %v592, -0.33689734
        %v594 = vadd.f32 %v586, %v593
        %s595 = scalar_lea.vmem [#allocation4], 40
        %v596 = vld [vmem:[%s595] sm:$0xff]
        %v597 = vmul.f32 %v596, -0.9157819
        %v598 = vadd.f32 %v590, %v597
        %s599 = scalar_lea.vmem [#allocation4], 48
        %v600 = vld [vmem:[%s599] sm:$0xff]
        %v601 = vmul.f32 %v600, -2.4893534
        %v602 = vadd.f32 %v594, %v601
        %s603 = scalar_lea.vmem [#allocation4], 56
        %v604 = vld [vmem:[%s603] sm:$0xff]
        %v605 = vmul.f32 %v604, -6.766764
        %v606 = vadd.f32 %v598, %v605
        %s607 = scalar_lea.vmem [#allocation4], 64
        %v608 = vld [vmem:[%s607] sm:$0xff]
        %v609 = vmul.f32 %v608, -18.393972
        %v610 = vadd.f32 %v602, %v609
        %s611 = scalar_lea.vmem [#allocation4], 72
        %v612 = vld [vmem:[%s611] sm:$0xff]
        %v613 = vmul.f32 %v612, -50.0
        %v614 = vadd.f32 %v606, %v613
        %v615 = vadd.f32 %v610, %v614
        %v616 = vld [vmem:[#allocation3] sm:$0x1]
        %v617 = vmul.f32 %v616, 0.9999999
        %v618 = vadd.f32 %v617, -52.0
        %v620 = vlaneseq
        %v621 = vshrl.u32 %v620, 7
        %v622 = vsub.s32 0, %v621
        %v623 = vrot.slane %v618, %v622
        %vm625 = vcmp.ge.f32.partialorder %v615, %v623
        %v626 = vsel %vm625, 1, 0
        %v627 = vcvt.s32.f32 %v626
        %v628 = vrot.slane %v627, 4
        %v629 = vadd.f32 %v627, %v628
        %v630 = vrot.slane %v629, 2
        %v631 = vadd.f32 %v629, %v630
        %v632 = vrot.slane %v631, 1
        %v633 = vadd.f32 %v631, %v632
        %v634 = vmul.f32 %v633, 0.05
        %v635 = vadd.f32 %v617, %v634
        %636 = vst [vmem:[#allocation2] sm:$0xff] %v615
        %637 = vst [vmem:[#allocation3] sm:$0x1] %v635
        %638 = vst [vmem:[#allocation4] sm:$0xff] %v627
        %639 = vst [vmem:[%s435] sm:$0xff] %v627
        %v640 = vld [vmem:[#allocation2] sm:$0xff]
        %v641 = vmul.f32 %v640, 0.99004984
        %s642 = scalar_lea.vmem %s364, 160 [#allocation5]
        %v643 = vld [vmem:[%s642] sm:$0xff]
        %v644 = vmul.f32 %v643, 5.6027964e-09
        %s645 = scalar_lea.vmem %s364, 168 [#allocation5]
        %v646 = vld [vmem:[%s645] sm:$0xff]
        %v647 = vmul.f32 %v646, 1.5229979e-08
        %v648 = vadd.f32 %v644, %v647
        %s649 = scalar_lea.vmem %s364, 176 [#allocation5]
        %v650 = vld [vmem:[%s649] sm:$0xff]
        %v651 = vmul.f32 %v650, 4.1399378e-08
        %v652 = vadd.f32 %v641, %v651
        %s653 = scalar_lea.vmem %s364, 184 [#allocation5]
        %v654 = vld [vmem:[%s653] sm:$0xff]
        %v655 = vmul.f32 %v654, 1.12535176e-07
        %v656 = vadd.f32 %v648, %v655
        %s657 = scalar_lea.vmem %s364, 192 [#allocation5]
        %v658 = vld [vmem:[%s657] sm:$0xff]
        %v659 = vmul.f32 %v658, 3.0590232e-07
        %v660 = vadd.f32 %v652, %v659
        %s661 = scalar_lea.vmem %s364, 200 [#allocation5]
        %v662 = vld [vmem:[%s661] sm:$0xff]
        %v663 = vmul.f32 %v662, 8.315287e-07
        %v664 = vadd.f32 %v656, %v663
        %s665 = scalar_lea.vmem %s364, 208 [#allocation5]
        %v666 = vld [vmem:[%s665] sm:$0xff]
        %v667 = vmul.f32 %v666, 2.2603294e-06
        %v668 = vadd.f32 %v660, %v667
        %s669 = scalar_lea.vmem %s364, 216 [#allocation5]
        %v670 = vld [vmem:[%s669] sm:$0xff]
        %v671 = vmul.f32 %v670, 6.1442124e-06
        %v672 = vadd.f32 %v664, %v671
        %s673 = scalar_lea.vmem %s364, 224 [#allocation5]
        %v674 = vld [vmem:[%s673] sm:$0xff]
        %v675 = vmul.f32 %v674, 1.67017e-05
        %v676 = vadd.f32 %v668, %v675
        %s677 = scalar_lea.vmem %s364, 232 [#allocation5]
        %v678 = vld [vmem:[%s677] sm:$0xff]
        %v679 = vmul.f32 %v678, 4.539993e-05
        %v680 = vadd.f32 %v672, %v679
        %s681 = scalar_lea.vmem %s364, 240 [#allocation5]
        %v682 = vld [vmem:[%s681] sm:$0xff]
        %v683 = vmul.f32 %v682, 0.0001234098
        %v684 = vadd.f32 %v676, %v683
        %s685 = scalar_lea.vmem %s364, 248 [#allocation5]
        %v686 = vld [vmem:[%s685] sm:$0xff]
        %v687 = vmul.f32 %v686, 0.00033546262
        %v688 = vadd.f32 %v680, %v687
        %s689 = scalar_lea.vmem %s364, 256 [#allocation5]
        %v690 = vld [vmem:[%s689] sm:$0xff]
        %v691 = vmul.f32 %v690, 0.000911882
        %v692 = vadd.f32 %v684, %v691
        %s693 = scalar_lea.vmem %s364, 264 [#allocation5]
        %v694 = vld [vmem:[%s693] sm:$0xff]
        %v695 = vmul.f32 %v694, 0.0024787523
        %v696 = vadd.f32 %v688, %v695
        %s697 = scalar_lea.vmem %s364, 272 [#allocation5]
        %v698 = vld [vmem:[%s697] sm:$0xff]
        %v699 = vmul.f32 %v698, 0.006737947
        %v700 = vadd.f32 %v692, %v699
        %s701 = scalar_lea.vmem %s364, 280 [#allocation5]
        %v702 = vld [vmem:[%s701] sm:$0xff]
        %v703 = vmul.f32 %v702, 0.01831564
        %v704 = vadd.f32 %v696, %v703
        %s705 = scalar_lea.vmem %s364, 288 [#allocation5]
        %v706 = vld [vmem:[%s705] sm:$0xff]
        %v707 = vmul.f32 %v706, 0.049787067
        %v708 = vadd.f32 %v700, %v707
        %s709 = scalar_lea.vmem %s364, 296 [#allocation5]
        %v710 = vld [vmem:[%s709] sm:$0xff]
        %v711 = vmul.f32 %v710, 0.13533528
        %v712 = vadd.f32 %v704, %v711
        %s713 = scalar_lea.vmem %s364, 304 [#allocation5]
        %v714 = vld [vmem:[%s713] sm:$0xff]
        %v715 = vmul.f32 %v714, 0.36787945
        %v716 = vadd.f32 %v708, %v715
        %s717 = scalar_lea.vmem %s364, 312 [#allocation5]
        %v718 = vld [vmem:[%s717] sm:$0xff]
        %v719 = vadd.f32 %v712, %v718
        %v720 = vld [vmem:[#allocation4] sm:$0xff]
        %v721 = vmul.f32 %v720, -50.0
        %v722 = vadd.f32 %v716, %v721
        %v723 = vld [vmem:[%s579] sm:$0xff]
        %v724 = vmul.f32 %v723, -0.0061704903
        %v725 = vadd.f32 %v719, %v724
        %v726 = vld [vmem:[%s583] sm:$0xff]
        %v727 = vmul.f32 %v726, -0.01677313
        %v728 = vadd.f32 %v722, %v727
        %v729 = vld [vmem:[%s587] sm:$0xff]
        %v730 = vmul.f32 %v729, -0.0455941
        %v731 = vadd.f32 %v725, %v730
        %v732 = vld [vmem:[%s591] sm:$0xff]
        %v733 = vmul.f32 %v732, -0.12393761
        %v734 = vadd.f32 %v728, %v733
        %v735 = vld [vmem:[%s595] sm:$0xff]
        %v736 = vmul.f32 %v735, -0.33689734
        %v737 = vadd.f32 %v731, %v736
        %v738 = vld [vmem:[%s599] sm:$0xff]
        %v739 = vmul.f32 %v738, -0.9157819
        %v740 = vadd.f32 %v734, %v739
        %v741 = vld [vmem:[%s603] sm:$0xff]
        %v742 = vmul.f32 %v741, -2.4893534
        %v743 = vadd.f32 %v737, %v742
        %v744 = vld [vmem:[%s607] sm:$0xff]
        %v745 = vmul.f32 %v744, -6.766764
        %v746 = vadd.f32 %v740, %v745
        %v747 = vld [vmem:[%s611] sm:$0xff]
        %v748 = vmul.f32 %v747, -18.393972
        %v749 = vadd.f32 %v743, %v748
        %v750 = vadd.f32 %v746, %v749
        %v751 = vld [vmem:[#allocation3] sm:$0x1]
        %v752 = vmul.f32 %v751, 0.9999999
        %v753 = vadd.f32 %v752, -52.0
        %v755 = vlaneseq
        %v756 = vshrl.u32 %v755, 7
        %v757 = vsub.s32 0, %v756
        %v758 = vrot.slane %v753, %v757
        %vm760 = vcmp.ge.f32.partialorder %v750, %v758
        %v761 = vsel %vm760, 1, 0
        %v762 = vcvt.s32.f32 %v761
        %v763 = vrot.slane %v762, 4
        %v764 = vadd.f32 %v762, %v763
        %v765 = vrot.slane %v764, 2
        %v766 = vadd.f32 %v764, %v765
        %v767 = vrot.slane %v766, 1
        %v768 = vadd.f32 %v766, %v767
        %v769 = vmul.f32 %v768, 0.05
        %v770 = vadd.f32 %v752, %v769
        %771 = vst [vmem:[#allocation2] sm:$0xff] %v750
        %772 = vst [vmem:[#allocation3] sm:$0x1] %v770
        %773 = vst [vmem:[%s579] sm:$0xff] %v762
        %s774 = scalar_lea.vmem %s435, 8 [#allocation14]
        %775 = vst [vmem:[%s774] sm:$0xff] %v762
        %v776 = vld [vmem:[#allocation2] sm:$0xff]
        %v777 = vmul.f32 %v776, 0.99004984
        %s778 = scalar_lea.vmem %s364, 320 [#allocation5]
        %v779 = vld [vmem:[%s778] sm:$0xff]
        %v780 = vmul.f32 %v779, 5.6027964e-09
        %s781 = scalar_lea.vmem %s364, 328 [#allocation5]
        %v782 = vld [vmem:[%s781] sm:$0xff]
        %v783 = vmul.f32 %v782, 1.5229979e-08
        %v784 = vadd.f32 %v780, %v783
        %s785 = scalar_lea.vmem %s364, 336 [#allocation5]
        %v786 = vld [vmem:[%s785] sm:$0xff]
        %v787 = vmul.f32 %v786, 4.1399378e-08
        %v788 = vadd.f32 %v777, %v787
        %s789 = scalar_lea.vmem %s364, 344 [#allocation5]
        %v790 = vld [vmem:[%s789] sm:$0xff]
        %v791 = vmul.f32 %v790, 1.12535176e-07
        %v792 = vadd.f32 %v784, %v791
        %s793 = scalar_lea.vmem %s364, 352 [#allocation5]
        %v794 = vld [vmem:[%s793] sm:$0xff]
        %v795 = vmul.f32 %v794, 3.0590232e-07
        %v796 = vadd.f32 %v788, %v795
        %s797 = scalar_lea.vmem %s364, 360 [#allocation5]
        %v798 = vld [vmem:[%s797] sm:$0xff]
        %v799 = vmul.f32 %v798, 8.315287e-07
        %v800 = vadd.f32 %v792, %v799
        %s801 = scalar_lea.vmem %s364, 368 [#allocation5]
        %v802 = vld [vmem:[%s801] sm:$0xff]
        %v803 = vmul.f32 %v802, 2.2603294e-06
        %v804 = vadd.f32 %v796, %v803
        %s805 = scalar_lea.vmem %s364, 376 [#allocation5]
        %v806 = vld [vmem:[%s805] sm:$0xff]
        %v807 = vmul.f32 %v806, 6.1442124e-06
        %v808 = vadd.f32 %v800, %v807
        %s809 = scalar_lea.vmem %s364, 384 [#allocation5]
        %v810 = vld [vmem:[%s809] sm:$0xff]
        %v811 = vmul.f32 %v810, 1.67017e-05
        %v812 = vadd.f32 %v804, %v811
        %s813 = scalar_lea.vmem %s364, 392 [#allocation5]
        %v814 = vld [vmem:[%s813] sm:$0xff]
        %v815 = vmul.f32 %v814, 4.539993e-05
        %v816 = vadd.f32 %v808, %v815
        %s817 = scalar_lea.vmem %s364, 400 [#allocation5]
        %v818 = vld [vmem:[%s817] sm:$0xff]
        %v819 = vmul.f32 %v818, 0.0001234098
        %v820 = vadd.f32 %v812, %v819
        %s821 = scalar_lea.vmem %s364, 408 [#allocation5]
        %v822 = vld [vmem:[%s821] sm:$0xff]
        %v823 = vmul.f32 %v822, 0.00033546262
        %v824 = vadd.f32 %v816, %v823
        %s825 = scalar_lea.vmem %s364, 416 [#allocation5]
        %v826 = vld [vmem:[%s825] sm:$0xff]
        %v827 = vmul.f32 %v826, 0.000911882
        %v828 = vadd.f32 %v820, %v827
        %s829 = scalar_lea.vmem %s364, 424 [#allocation5]
        %v830 = vld [vmem:[%s829] sm:$0xff]
        %v831 = vmul.f32 %v830, 0.0024787523
        %v832 = vadd.f32 %v824, %v831
        %s833 = scalar_lea.vmem %s364, 432 [#allocation5]
        %v834 = vld [vmem:[%s833] sm:$0xff]
        %v835 = vmul.f32 %v834, 0.006737947
        %v836 = vadd.f32 %v828, %v835
        %s837 = scalar_lea.vmem %s364, 440 [#allocation5]
        %v838 = vld [vmem:[%s837] sm:$0xff]
        %v839 = vmul.f32 %v838, 0.01831564
        %v840 = vadd.f32 %v832, %v839
        %s841 = scalar_lea.vmem %s364, 448 [#allocation5]
        %v842 = vld [vmem:[%s841] sm:$0xff]
        %v843 = vmul.f32 %v842, 0.049787067
        %v844 = vadd.f32 %v836, %v843
        %s845 = scalar_lea.vmem %s364, 456 [#allocation5]
        %v846 = vld [vmem:[%s845] sm:$0xff]
        %v847 = vmul.f32 %v846, 0.13533528
        %v848 = vadd.f32 %v840, %v847
        %s849 = scalar_lea.vmem %s364, 464 [#allocation5]
        %v850 = vld [vmem:[%s849] sm:$0xff]
        %v851 = vmul.f32 %v850, 0.36787945
        %v852 = vadd.f32 %v844, %v851
        %s853 = scalar_lea.vmem %s364, 472 [#allocation5]
        %v854 = vld [vmem:[%s853] sm:$0xff]
        %v855 = vadd.f32 %v848, %v854
        %v856 = vld [vmem:[#allocation4] sm:$0xff]
        %v857 = vmul.f32 %v856, -18.393972
        %v858 = vadd.f32 %v852, %v857
        %v859 = vld [vmem:[%s579] sm:$0xff]
        %v860 = vmul.f32 %v859, -50.0
        %v861 = vadd.f32 %v855, %v860
        %v862 = vld [vmem:[%s583] sm:$0xff]
        %v863 = vmul.f32 %v862, -0.0061704903
        %v864 = vadd.f32 %v858, %v863
        %v865 = vld [vmem:[%s587] sm:$0xff]
        %v866 = vmul.f32 %v865, -0.01677313
        %v867 = vadd.f32 %v861, %v866
        %v868 = vld [vmem:[%s591] sm:$0xff]
        %v869 = vmul.f32 %v868, -0.0455941
        %v870 = vadd.f32 %v864, %v869
        %v871 = vld [vmem:[%s595] sm:$0xff]
        %v872 = vmul.f32 %v871, -0.12393761
        %v873 = vadd.f32 %v867, %v872
        %v874 = vld [vmem:[%s599] sm:$0xff]
        %v875 = vmul.f32 %v874, -0.33689734
        %v876 = vadd.f32 %v870, %v875
        %v877 = vld [vmem:[%s603] sm:$0xff]
        %v878 = vmul.f32 %v877, -0.9157819
        %v879 = vadd.f32 %v873, %v878
        %v880 = vld [vmem:[%s607] sm:$0xff]
        %v881 = vmul.f32 %v880, -2.4893534
        %v882 = vadd.f32 %v876, %v881
        %v883 = vld [vmem:[%s611] sm:$0xff]
        %v884 = vmul.f32 %v883, -6.766764
        %v885 = vadd.f32 %v879, %v884
        %v886 = vadd.f32 %v882, %v885
        %v887 = vld [vmem:[#allocation3] sm:$0x1]
        %v888 = vmul.f32 %v887, 0.9999999
        %v889 = vadd.f32 %v888, -52.0
        %v891 = vlaneseq
        %v892 = vshrl.u32 %v891, 7
        %v893 = vsub.s32 0, %v892
        %v894 = vrot.slane %v889, %v893
        %vm896 = vcmp.ge.f32.partialorder %v886, %v894
        %v897 = vsel %vm896, 1, 0
        %v898 = vcvt.s32.f32 %v897
        %v899 = vrot.slane %v898, 4
        %v900 = vadd.f32 %v898, %v899
        %v901 = vrot.slane %v900, 2
        %v902 = vadd.f32 %v900, %v901
        %v903 = vrot.slane %v902, 1
        %v904 = vadd.f32 %v902, %v903
        %v905 = vmul.f32 %v904, 0.05
        %v906 = vadd.f32 %v888, %v905
        %907 = vst [vmem:[#allocation2] sm:$0xff] %v886
        %908 = vst [vmem:[#allocation3] sm:$0x1] %v906
        %909 = vst [vmem:[%s583] sm:$0xff] %v898
        %s910 = scalar_lea.vmem %s435, 16 [#allocation14]
        %911 = vst [vmem:[%s910] sm:$0xff] %v898
        %v912 = vld [vmem:[#allocation2] sm:$0xff]
        %v913 = vmul.f32 %v912, 0.99004984
        %s914 = scalar_lea.vmem %s364, 480 [#allocation5]
        %v915 = vld [vmem:[%s914] sm:$0xff]
        %v916 = vmul.f32 %v915, 5.6027964e-09
        %s917 = scalar_lea.vmem %s364, 488 [#allocation5]
        %v918 = vld [vmem:[%s917] sm:$0xff]
        %v919 = vmul.f32 %v918, 1.5229979e-08
        %v920 = vadd.f32 %v916, %v919
        %s921 = scalar_lea.vmem %s364, 496 [#allocation5]
        %v922 = vld [vmem:[%s921] sm:$0xff]
        %v923 = vmul.f32 %v922, 4.1399378e-08
        %v924 = vadd.f32 %v913, %v923
        %s925 = scalar_lea.vmem %s364, 504 [#allocation5]
        %v926 = vld [vmem:[%s925] sm:$0xff]
        %v927 = vmul.f32 %v926, 1.12535176e-07
        %v928 = vadd.f32 %v920, %v927
        %s929 = scalar_lea.vmem %s364, 512 [#allocation5]
        %v930 = vld [vmem:[%s929] sm:$0xff]
        %v931 = vmul.f32 %v930, 3.0590232e-07
        %v932 = vadd.f32 %v924, %v931
        %s933 = scalar_lea.vmem %s364, 520 [#allocation5]
        %v934 = vld [vmem:[%s933] sm:$0xff]
        %v935 = vmul.f32 %v934, 8.315287e-07
        %v936 = vadd.f32 %v928, %v935
        %s937 = scalar_lea.vmem %s364, 528 [#allocation5]
        %v938 = vld [vmem:[%s937] sm:$0xff]
        %v939 = vmul.f32 %v938, 2.2603294e-06
        %v940 = vadd.f32 %v932, %v939
        %s941 = scalar_lea.vmem %s364, 536 [#allocation5]
        %v942 = vld [vmem:[%s941] sm:$0xff]
        %v943 = vmul.f32 %v942, 6.1442124e-06
        %v944 = vadd.f32 %v936, %v943
        %s945 = scalar_lea.vmem %s364, 544 [#allocation5]
        %v946 = vld [vmem:[%s945] sm:$0xff]
        %v947 = vmul.f32 %v946, 1.67017e-05
        %v948 = vadd.f32 %v940, %v947
        %s949 = scalar_lea.vmem %s364, 552 [#allocation5]
        %v950 = vld [vmem:[%s949] sm:$0xff]
        %v951 = vmul.f32 %v950, 4.539993e-05
        %v952 = vadd.f32 %v944, %v951
        %s953 = scalar_lea.vmem %s364, 560 [#allocation5]
        %v954 = vld [vmem:[%s953] sm:$0xff]
        %v955 = vmul.f32 %v954, 0.0001234098
        %v956 = vadd.f32 %v948, %v955
        %s957 = scalar_lea.vmem %s364, 568 [#allocation5]
        %v958 = vld [vmem:[%s957] sm:$0xff]
        %v959 = vmul.f32 %v958, 0.00033546262
        %v960 = vadd.f32 %v952, %v959
        %s961 = scalar_lea.vmem %s364, 576 [#allocation5]
        %v962 = vld [vmem:[%s961] sm:$0xff]
        %v963 = vmul.f32 %v962, 0.000911882
        %v964 = vadd.f32 %v956, %v963
        %s965 = scalar_lea.vmem %s364, 584 [#allocation5]
        %v966 = vld [vmem:[%s965] sm:$0xff]
        %v967 = vmul.f32 %v966, 0.0024787523
        %v968 = vadd.f32 %v960, %v967
        %s969 = scalar_lea.vmem %s364, 592 [#allocation5]
        %v970 = vld [vmem:[%s969] sm:$0xff]
        %v971 = vmul.f32 %v970, 0.006737947
        %v972 = vadd.f32 %v964, %v971
        %s973 = scalar_lea.vmem %s364, 600 [#allocation5]
        %v974 = vld [vmem:[%s973] sm:$0xff]
        %v975 = vmul.f32 %v974, 0.01831564
        %v976 = vadd.f32 %v968, %v975
        %s977 = scalar_lea.vmem %s364, 608 [#allocation5]
        %v978 = vld [vmem:[%s977] sm:$0xff]
        %v979 = vmul.f32 %v978, 0.049787067
        %v980 = vadd.f32 %v972, %v979
        %s981 = scalar_lea.vmem %s364, 616 [#allocation5]
        %v982 = vld [vmem:[%s981] sm:$0xff]
        %v983 = vmul.f32 %v982, 0.13533528
        %v984 = vadd.f32 %v976, %v983
        %s985 = scalar_lea.vmem %s364, 624 [#allocation5]
        %v986 = vld [vmem:[%s985] sm:$0xff]
        %v987 = vmul.f32 %v986, 0.36787945
        %v988 = vadd.f32 %v980, %v987
        %s989 = scalar_lea.vmem %s364, 632 [#allocation5]
        %v990 = vld [vmem:[%s989] sm:$0xff]
        %v991 = vadd.f32 %v984, %v990
        %v992 = vld [vmem:[#allocation4] sm:$0xff]
        %v993 = vmul.f32 %v992, -6.766764
        %v994 = vadd.f32 %v988, %v993
        %v995 = vld [vmem:[%s579] sm:$0xff]
        %v996 = vmul.f32 %v995, -18.393972
        %v997 = vadd.f32 %v991, %v996
        %v998 = vld [vmem:[%s583] sm:$0xff]
        %v999 = vmul.f32 %v998, -50.0
        %v1000 = vadd.f32 %v994, %v999
        %v1001 = vld [vmem:[%s587] sm:$0xff]
        %v1002 = vmul.f32 %v1001, -0.0061704903
        %v1003 = vadd.f32 %v997, %v1002
        %v1004 = vld [vmem:[%s591] sm:$0xff]
        %v1005 = vmul.f32 %v1004, -0.01677313
        %v1006 = vadd.f32 %v1000, %v1005
        %v1007 = vld [vmem:[%s595] sm:$0xff]
        %v1008 = vmul.f32 %v1007, -0.0455941
        %v1009 = vadd.f32 %v1003, %v1008
        %v1010 = vld [vmem:[%s599] sm:$0xff]
        %v1011 = vmul.f32 %v1010, -0.12393761
        %v1012 = vadd.f32 %v1006, %v1011
        %v1013 = vld [vmem:[%s603] sm:$0xff]
        %v1014 = vmul.f32 %v1013, -0.33689734
        %v1015 = vadd.f32 %v1009, %v1014
        %v1016 = vld [vmem:[%s607] sm:$0xff]
        %v1017 = vmul.f32 %v1016, -0.9157819
        %v1018 = vadd.f32 %v1012, %v1017
        %v1019 = vld [vmem:[%s611] sm:$0xff]
        %v1020 = vmul.f32 %v1019, -2.4893534
        %v1021 = vadd.f32 %v1015, %v1020
        %v1022 = vadd.f32 %v1018, %v1021
        %v1023 = vld [vmem:[#allocation3] sm:$0x1]
        %v1024 = vmul.f32 %v1023, 0.9999999
        %v1025 = vadd.f32 %v1024, -52.0
        %v1027 = vlaneseq
        %v1028 = vshrl.u32 %v1027, 7
        %v1029 = vsub.s32 0, %v1028
        %v1030 = vrot.slane %v1025, %v1029
        %vm1032 = vcmp.ge.f32.partialorder %v1022, %v1030
        %v1033 = vsel %vm1032, 1, 0
        %v1034 = vcvt.s32.f32 %v1033
        %v1035 = vrot.slane %v1034, 4
        %v1036 = vadd.f32 %v1034, %v1035
        %v1037 = vrot.slane %v1036, 2
        %v1038 = vadd.f32 %v1036, %v1037
        %v1039 = vrot.slane %v1038, 1
        %v1040 = vadd.f32 %v1038, %v1039
        %v1041 = vmul.f32 %v1040, 0.05
        %v1042 = vadd.f32 %v1024, %v1041
        %1043 = vst [vmem:[#allocation2] sm:$0xff] %v1022
        %1044 = vst [vmem:[#allocation3] sm:$0x1] %v1042
        %1045 = vst [vmem:[%s587] sm:$0xff] %v1034
        %s1046 = scalar_lea.vmem %s435, 24 [#allocation14]
        %1047 = vst [vmem:[%s1046] sm:$0xff] %v1034
        %v1048 = vld [vmem:[#allocation2] sm:$0xff]
        %v1049 = vmul.f32 %v1048, 0.99004984
        %s1050 = scalar_lea.vmem %s364, 640 [#allocation5]
        %v1051 = vld [vmem:[%s1050] sm:$0xff]
        %v1052 = vmul.f32 %v1051, 5.6027964e-09
        %s1053 = scalar_lea.vmem %s364, 648 [#allocation5]
        %v1054 = vld [vmem:[%s1053] sm:$0xff]
        %v1055 = vmul.f32 %v1054, 1.5229979e-08
        %v1056 = vadd.f32 %v1052, %v1055
        %s1057 = scalar_lea.vmem %s364, 656 [#allocation5]
        %v1058 = vld [vmem:[%s1057] sm:$0xff]
        %v1059 = vmul.f32 %v1058, 4.1399378e-08
        %v1060 = vadd.f32 %v1049, %v1059
        %s1061 = scalar_lea.vmem %s364, 664 [#allocation5]
        %v1062 = vld [vmem:[%s1061] sm:$0xff]
        %v1063 = vmul.f32 %v1062, 1.12535176e-07
        %v1064 = vadd.f32 %v1056, %v1063
        %s1065 = scalar_lea.vmem %s364, 672 [#allocation5]
        %v1066 = vld [vmem:[%s1065] sm:$0xff]
        %v1067 = vmul.f32 %v1066, 3.0590232e-07
        %v1068 = vadd.f32 %v1060, %v1067
        %s1069 = scalar_lea.vmem %s364, 680 [#allocation5]
        %v1070 = vld [vmem:[%s1069] sm:$0xff]
        %v1071 = vmul.f32 %v1070, 8.315287e-07
        %v1072 = vadd.f32 %v1064, %v1071
        %s1073 = scalar_lea.vmem %s364, 688 [#allocation5]
        %v1074 = vld [vmem:[%s1073] sm:$0xff]
        %v1075 = vmul.f32 %v1074, 2.2603294e-06
        %v1076 = vadd.f32 %v1068, %v1075
        %s1077 = scalar_lea.vmem %s364, 696 [#allocation5]
        %v1078 = vld [vmem:[%s1077] sm:$0xff]
        %v1079 = vmul.f32 %v1078, 6.1442124e-06
        %v1080 = vadd.f32 %v1072, %v1079
        %s1081 = scalar_lea.vmem %s364, 704 [#allocation5]
        %v1082 = vld [vmem:[%s1081] sm:$0xff]
        %v1083 = vmul.f32 %v1082, 1.67017e-05
        %v1084 = vadd.f32 %v1076, %v1083
        %s1085 = scalar_lea.vmem %s364, 712 [#allocation5]
        %v1086 = vld [vmem:[%s1085] sm:$0xff]
        %v1087 = vmul.f32 %v1086, 4.539993e-05
        %v1088 = vadd.f32 %v1080, %v1087
        %s1089 = scalar_lea.vmem %s364, 720 [#allocation5]
        %v1090 = vld [vmem:[%s1089] sm:$0xff]
        %v1091 = vmul.f32 %v1090, 0.0001234098
        %v1092 = vadd.f32 %v1084, %v1091
        %s1093 = scalar_lea.vmem %s364, 728 [#allocation5]
        %v1094 = vld [vmem:[%s1093] sm:$0xff]
        %v1095 = vmul.f32 %v1094, 0.00033546262
        %v1096 = vadd.f32 %v1088, %v1095
        %s1097 = scalar_lea.vmem %s364, 736 [#allocation5]
        %v1098 = vld [vmem:[%s1097] sm:$0xff]
        %v1099 = vmul.f32 %v1098, 0.000911882
        %v1100 = vadd.f32 %v1092, %v1099
        %s1101 = scalar_lea.vmem %s364, 744 [#allocation5]
        %v1102 = vld [vmem:[%s1101] sm:$0xff]
        %v1103 = vmul.f32 %v1102, 0.0024787523
        %v1104 = vadd.f32 %v1096, %v1103
        %s1105 = scalar_lea.vmem %s364, 752 [#allocation5]
        %v1106 = vld [vmem:[%s1105] sm:$0xff]
        %v1107 = vmul.f32 %v1106, 0.006737947
        %v1108 = vadd.f32 %v1100, %v1107
        %s1109 = scalar_lea.vmem %s364, 760 [#allocation5]
        %v1110 = vld [vmem:[%s1109] sm:$0xff]
        %v1111 = vmul.f32 %v1110, 0.01831564
        %v1112 = vadd.f32 %v1104, %v1111
        %s1113 = scalar_lea.vmem %s364, 768 [#allocation5]
        %v1114 = vld [vmem:[%s1113] sm:$0xff]
        %v1115 = vmul.f32 %v1114, 0.049787067
        %v1116 = vadd.f32 %v1108, %v1115
        %s1117 = scalar_lea.vmem %s364, 776 [#allocation5]
        %v1118 = vld [vmem:[%s1117] sm:$0xff]
        %v1119 = vmul.f32 %v1118, 0.13533528
        %v1120 = vadd.f32 %v1112, %v1119
        %s1121 = scalar_lea.vmem %s364, 784 [#allocation5]
        %v1122 = vld [vmem:[%s1121] sm:$0xff]
        %v1123 = vmul.f32 %v1122, 0.36787945
        %v1124 = vadd.f32 %v1116, %v1123
        %s1125 = scalar_lea.vmem %s364, 792 [#allocation5]
        %v1126 = vld [vmem:[%s1125] sm:$0xff]
        %v1127 = vadd.f32 %v1120, %v1126
        %v1128 = vld [vmem:[#allocation4] sm:$0xff]
        %v1129 = vmul.f32 %v1128, -2.4893534
        %v1130 = vadd.f32 %v1124, %v1129
        %v1131 = vld [vmem:[%s579] sm:$0xff]
        %v1132 = vmul.f32 %v1131, -6.766764
        %v1133 = vadd.f32 %v1127, %v1132
        %v1134 = vld [vmem:[%s583] sm:$0xff]
        %v1135 = vmul.f32 %v1134, -18.393972
        %v1136 = vadd.f32 %v1130, %v1135
        %v1137 = vld [vmem:[%s587] sm:$0xff]
        %v1138 = vmul.f32 %v1137, -50.0
        %v1139 = vadd.f32 %v1133, %v1138
        %v1140 = vld [vmem:[%s591] sm:$0xff]
        %v1141 = vmul.f32 %v1140, -0.0061704903
        %v1142 = vadd.f32 %v1136, %v1141
        %v1143 = vld [vmem:[%s595] sm:$0xff]
        %v1144 = vmul.f32 %v1143, -0.01677313
        %v1145 = vadd.f32 %v1139, %v1144
        %v1146 = vld [vmem:[%s599] sm:$0xff]
        %v1147 = vmul.f32 %v1146, -0.0455941
        %v1148 = vadd.f32 %v1142, %v1147
        %v1149 = vld [vmem:[%s603] sm:$0xff]
        %v1150 = vmul.f32 %v1149, -0.12393761
        %v1151 = vadd.f32 %v1145, %v1150
        %v1152 = vld [vmem:[%s607] sm:$0xff]
        %v1153 = vmul.f32 %v1152, -0.33689734
        %v1154 = vadd.f32 %v1148, %v1153
        %v1155 = vld [vmem:[%s611] sm:$0xff]
        %v1156 = vmul.f32 %v1155, -0.9157819
        %v1157 = vadd.f32 %v1151, %v1156
        %v1158 = vadd.f32 %v1154, %v1157
        %v1159 = vld [vmem:[#allocation3] sm:$0x1]
        %v1160 = vmul.f32 %v1159, 0.9999999
        %v1161 = vadd.f32 %v1160, -52.0
        %v1163 = vlaneseq
        %v1164 = vshrl.u32 %v1163, 7
        %v1165 = vsub.s32 0, %v1164
        %v1166 = vrot.slane %v1161, %v1165
        %vm1168 = vcmp.ge.f32.partialorder %v1158, %v1166
        %v1169 = vsel %vm1168, 1, 0
        %v1170 = vcvt.s32.f32 %v1169
        %v1171 = vrot.slane %v1170, 4
        %v1172 = vadd.f32 %v1170, %v1171
        %v1173 = vrot.slane %v1172, 2
        %v1174 = vadd.f32 %v1172, %v1173
        %v1175 = vrot.slane %v1174, 1
        %v1176 = vadd.f32 %v1174, %v1175
        %v1177 = vmul.f32 %v1176, 0.05
        %v1178 = vadd.f32 %v1160, %v1177
        %1179 = vst [vmem:[#allocation2] sm:$0xff] %v1158
        %1180 = vst [vmem:[#allocation3] sm:$0x1] %v1178
        %1181 = vst [vmem:[%s591] sm:$0xff] %v1170
        %s1182 = scalar_lea.vmem %s435, 32 [#allocation14]
        %1183 = vst [vmem:[%s1182] sm:$0xff] %v1170
        %v1184 = vld [vmem:[#allocation2] sm:$0xff]
        %v1185 = vmul.f32 %v1184, 0.99004984
        %s1186 = scalar_lea.vmem %s364, 800 [#allocation5]
        %v1187 = vld [vmem:[%s1186] sm:$0xff]
        %v1188 = vmul.f32 %v1187, 5.6027964e-09
        %s1189 = scalar_lea.vmem %s364, 808 [#allocation5]
        %v1190 = vld [vmem:[%s1189] sm:$0xff]
        %v1191 = vmul.f32 %v1190, 1.5229979e-08
        %v1192 = vadd.f32 %v1188, %v1191
        %s1193 = scalar_lea.vmem %s364, 816 [#allocation5]
        %v1194 = vld [vmem:[%s1193] sm:$0xff]
        %v1195 = vmul.f32 %v1194, 4.1399378e-08
        %v1196 = vadd.f32 %v1185, %v1195
        %s1197 = scalar_lea.vmem %s364, 824 [#allocation5]
        %v1198 = vld [vmem:[%s1197] sm:$0xff]
        %v1199 = vmul.f32 %v1198, 1.12535176e-07
        %v1200 = vadd.f32 %v1192, %v1199
        %s1201 = scalar_lea.vmem %s364, 832 [#allocation5]
        %v1202 = vld [vmem:[%s1201] sm:$0xff]
        %v1203 = vmul.f32 %v1202, 3.0590232e-07
        %v1204 = vadd.f32 %v1196, %v1203
        %s1205 = scalar_lea.vmem %s364, 840 [#allocation5]
        %v1206 = vld [vmem:[%s1205] sm:$0xff]
        %v1207 = vmul.f32 %v1206, 8.315287e-07
        %v1208 = vadd.f32 %v1200, %v1207
        %s1209 = scalar_lea.vmem %s364, 848 [#allocation5]
        %v1210 = vld [vmem:[%s1209] sm:$0xff]
        %v1211 = vmul.f32 %v1210, 2.2603294e-06
        %v1212 = vadd.f32 %v1204, %v1211
        %s1213 = scalar_lea.vmem %s364, 856 [#allocation5]
        %v1214 = vld [vmem:[%s1213] sm:$0xff]
        %v1215 = vmul.f32 %v1214, 6.1442124e-06
        %v1216 = vadd.f32 %v1208, %v1215
        %s1217 = scalar_lea.vmem %s364, 864 [#allocation5]
        %v1218 = vld [vmem:[%s1217] sm:$0xff]
        %v1219 = vmul.f32 %v1218, 1.67017e-05
        %v1220 = vadd.f32 %v1212, %v1219
        %s1221 = scalar_lea.vmem %s364, 872 [#allocation5]
        %v1222 = vld [vmem:[%s1221] sm:$0xff]
        %v1223 = vmul.f32 %v1222, 4.539993e-05
        %v1224 = vadd.f32 %v1216, %v1223
        %s1225 = scalar_lea.vmem %s364, 880 [#allocation5]
        %v1226 = vld [vmem:[%s1225] sm:$0xff]
        %v1227 = vmul.f32 %v1226, 0.0001234098
        %v1228 = vadd.f32 %v1220, %v1227
        %s1229 = scalar_lea.vmem %s364, 888 [#allocation5]
        %v1230 = vld [vmem:[%s1229] sm:$0xff]
        %v1231 = vmul.f32 %v1230, 0.00033546262
        %v1232 = vadd.f32 %v1224, %v1231
        %s1233 = scalar_lea.vmem %s364, 896 [#allocation5]
        %v1234 = vld [vmem:[%s1233] sm:$0xff]
        %v1235 = vmul.f32 %v1234, 0.000911882
        %v1236 = vadd.f32 %v1228, %v1235
        %s1237 = scalar_lea.vmem %s364, 904 [#allocation5]
        %v1238 = vld [vmem:[%s1237] sm:$0xff]
        %v1239 = vmul.f32 %v1238, 0.0024787523
        %v1240 = vadd.f32 %v1232, %v1239
        %s1241 = scalar_lea.vmem %s364, 912 [#allocation5]
        %v1242 = vld [vmem:[%s1241] sm:$0xff]
        %v1243 = vmul.f32 %v1242, 0.006737947
        %v1244 = vadd.f32 %v1236, %v1243
        %s1245 = scalar_lea.vmem %s364, 920 [#allocation5]
        %v1246 = vld [vmem:[%s1245] sm:$0xff]
        %v1247 = vmul.f32 %v1246, 0.01831564
        %v1248 = vadd.f32 %v1240, %v1247
        %s1249 = scalar_lea.vmem %s364, 928 [#allocation5]
        %v1250 = vld [vmem:[%s1249] sm:$0xff]
        %v1251 = vmul.f32 %v1250, 0.049787067
        %v1252 = vadd.f32 %v1244, %v1251
        %s1253 = scalar_lea.vmem %s364, 936 [#allocation5]
        %v1254 = vld [vmem:[%s1253] sm:$0xff]
        %v1255 = vmul.f32 %v1254, 0.13533528
        %v1256 = vadd.f32 %v1248, %v1255
        %s1257 = scalar_lea.vmem %s364, 944 [#allocation5]
        %v1258 = vld [vmem:[%s1257] sm:$0xff]
        %v1259 = vmul.f32 %v1258, 0.36787945
        %v1260 = vadd.f32 %v1252, %v1259
        %s1261 = scalar_lea.vmem %s364, 952 [#allocation5]
        %v1262 = vld [vmem:[%s1261] sm:$0xff]
        %v1263 = vadd.f32 %v1256, %v1262
        %v1264 = vld [vmem:[#allocation4] sm:$0xff]
        %v1265 = vmul.f32 %v1264, -0.9157819
        %v1266 = vadd.f32 %v1260, %v1265
        %v1267 = vld [vmem:[%s579] sm:$0xff]
        %v1268 = vmul.f32 %v1267, -2.4893534
        %v1269 = vadd.f32 %v1263, %v1268
        %v1270 = vld [vmem:[%s583] sm:$0xff]
        %v1271 = vmul.f32 %v1270, -6.766764
        %v1272 = vadd.f32 %v1266, %v1271
        %v1273 = vld [vmem:[%s587] sm:$0xff]
        %v1274 = vmul.f32 %v1273, -18.393972
        %v1275 = vadd.f32 %v1269, %v1274
        %v1276 = vld [vmem:[%s591] sm:$0xff]
        %v1277 = vmul.f32 %v1276, -50.0
        %v1278 = vadd.f32 %v1272, %v1277
        %v1279 = vld [vmem:[%s595] sm:$0xff]
        %v1280 = vmul.f32 %v1279, -0.0061704903
        %v1281 = vadd.f32 %v1275, %v1280
        %v1282 = vld [vmem:[%s599] sm:$0xff]
        %v1283 = vmul.f32 %v1282, -0.01677313
        %v1284 = vadd.f32 %v1278, %v1283
        %v1285 = vld [vmem:[%s603] sm:$0xff]
        %v1286 = vmul.f32 %v1285, -0.0455941
        %v1287 = vadd.f32 %v1281, %v1286
        %v1288 = vld [vmem:[%s607] sm:$0xff]
        %v1289 = vmul.f32 %v1288, -0.12393761
        %v1290 = vadd.f32 %v1284, %v1289
        %v1291 = vld [vmem:[%s611] sm:$0xff]
        %v1292 = vmul.f32 %v1291, -0.33689734
        %v1293 = vadd.f32 %v1287, %v1292
        %v1294 = vadd.f32 %v1290, %v1293
        %v1295 = vld [vmem:[#allocation3] sm:$0x1]
        %v1296 = vmul.f32 %v1295, 0.9999999
        %v1297 = vadd.f32 %v1296, -52.0
        %v1299 = vlaneseq
        %v1300 = vshrl.u32 %v1299, 7
        %v1301 = vsub.s32 0, %v1300
        %v1302 = vrot.slane %v1297, %v1301
        %vm1304 = vcmp.ge.f32.partialorder %v1294, %v1302
        %v1305 = vsel %vm1304, 1, 0
        %v1306 = vcvt.s32.f32 %v1305
        %v1307 = vrot.slane %v1306, 4
        %v1308 = vadd.f32 %v1306, %v1307
        %v1309 = vrot.slane %v1308, 2
        %v1310 = vadd.f32 %v1308, %v1309
        %v1311 = vrot.slane %v1310, 1
        %v1312 = vadd.f32 %v1310, %v1311
        %v1313 = vmul.f32 %v1312, 0.05
        %v1314 = vadd.f32 %v1296, %v1313
        %1315 = vst [vmem:[#allocation2] sm:$0xff] %v1294
        %1316 = vst [vmem:[#allocation3] sm:$0x1] %v1314
        %1317 = vst [vmem:[%s595] sm:$0xff] %v1306
        %s1318 = scalar_lea.vmem %s435, 40 [#allocation14]
        %1319 = vst [vmem:[%s1318] sm:$0xff] %v1306
        %v1320 = vld [vmem:[#allocation2] sm:$0xff]
        %v1321 = vmul.f32 %v1320, 0.99004984
        %s1322 = scalar_lea.vmem %s364, 960 [#allocation5]
        %v1323 = vld [vmem:[%s1322] sm:$0xff]
        %v1324 = vmul.f32 %v1323, 5.6027964e-09
        %s1325 = scalar_lea.vmem %s364, 968 [#allocation5]
        %v1326 = vld [vmem:[%s1325] sm:$0xff]
        %v1327 = vmul.f32 %v1326, 1.5229979e-08
        %v1328 = vadd.f32 %v1324, %v1327
        %s1329 = scalar_lea.vmem %s364, 976 [#allocation5]
        %v1330 = vld [vmem:[%s1329] sm:$0xff]
        %v1331 = vmul.f32 %v1330, 4.1399378e-08
        %v1332 = vadd.f32 %v1321, %v1331
        %s1333 = scalar_lea.vmem %s364, 984 [#allocation5]
        %v1334 = vld [vmem:[%s1333] sm:$0xff]
        %v1335 = vmul.f32 %v1334, 1.12535176e-07
        %v1336 = vadd.f32 %v1328, %v1335
        %s1337 = scalar_lea.vmem %s364, 992 [#allocation5]
        %v1338 = vld [vmem:[%s1337] sm:$0xff]
        %v1339 = vmul.f32 %v1338, 3.0590232e-07
        %v1340 = vadd.f32 %v1332, %v1339
        %s1341 = scalar_lea.vmem %s364, 1000 [#allocation5]
        %v1342 = vld [vmem:[%s1341] sm:$0xff]
        %v1343 = vmul.f32 %v1342, 8.315287e-07
        %v1344 = vadd.f32 %v1336, %v1343
        %s1345 = scalar_lea.vmem %s364, 1008 [#allocation5]
        %v1346 = vld [vmem:[%s1345] sm:$0xff]
        %v1347 = vmul.f32 %v1346, 2.2603294e-06
        %v1348 = vadd.f32 %v1340, %v1347
        %s1349 = scalar_lea.vmem %s364, 1016 [#allocation5]
        %v1350 = vld [vmem:[%s1349] sm:$0xff]
        %v1351 = vmul.f32 %v1350, 6.1442124e-06
        %v1352 = vadd.f32 %v1344, %v1351
        %s1353 = scalar_lea.vmem %s364, 1024 [#allocation5]
        %v1354 = vld [vmem:[%s1353] sm:$0xff]
        %v1355 = vmul.f32 %v1354, 1.67017e-05
        %v1356 = vadd.f32 %v1348, %v1355
        %s1357 = scalar_lea.vmem %s364, 1032 [#allocation5]
        %v1358 = vld [vmem:[%s1357] sm:$0xff]
        %v1359 = vmul.f32 %v1358, 4.539993e-05
        %v1360 = vadd.f32 %v1352, %v1359
        %s1361 = scalar_lea.vmem %s364, 1040 [#allocation5]
        %v1362 = vld [vmem:[%s1361] sm:$0xff]
        %v1363 = vmul.f32 %v1362, 0.0001234098
        %v1364 = vadd.f32 %v1356, %v1363
        %s1365 = scalar_lea.vmem %s364, 1048 [#allocation5]
        %v1366 = vld [vmem:[%s1365] sm:$0xff]
        %v1367 = vmul.f32 %v1366, 0.00033546262
        %v1368 = vadd.f32 %v1360, %v1367
        %s1369 = scalar_lea.vmem %s364, 1056 [#allocation5]
        %v1370 = vld [vmem:[%s1369] sm:$0xff]
        %v1371 = vmul.f32 %v1370, 0.000911882
        %v1372 = vadd.f32 %v1364, %v1371
        %s1373 = scalar_lea.vmem %s364, 1064 [#allocation5]
        %v1374 = vld [vmem:[%s1373] sm:$0xff]
        %v1375 = vmul.f32 %v1374, 0.0024787523
        %v1376 = vadd.f32 %v1368, %v1375
        %s1377 = scalar_lea.vmem %s364, 1072 [#allocation5]
        %v1378 = vld [vmem:[%s1377] sm:$0xff]
        %v1379 = vmul.f32 %v1378, 0.006737947
        %v1380 = vadd.f32 %v1372, %v1379
        %s1381 = scalar_lea.vmem %s364, 1080 [#allocation5]
        %v1382 = vld [vmem:[%s1381] sm:$0xff]
        %v1383 = vmul.f32 %v1382, 0.01831564
        %v1384 = vadd.f32 %v1376, %v1383
        %s1385 = scalar_lea.vmem %s364, 1088 [#allocation5]
        %v1386 = vld [vmem:[%s1385] sm:$0xff]
        %v1387 = vmul.f32 %v1386, 0.049787067
        %v1388 = vadd.f32 %v1380, %v1387
        %s1389 = scalar_lea.vmem %s364, 1096 [#allocation5]
        %v1390 = vld [vmem:[%s1389] sm:$0xff]
        %v1391 = vmul.f32 %v1390, 0.13533528
        %v1392 = vadd.f32 %v1384, %v1391
        %s1393 = scalar_lea.vmem %s364, 1104 [#allocation5]
        %v1394 = vld [vmem:[%s1393] sm:$0xff]
        %v1395 = vmul.f32 %v1394, 0.36787945
        %v1396 = vadd.f32 %v1388, %v1395
        %s1397 = scalar_lea.vmem %s364, 1112 [#allocation5]
        %v1398 = vld [vmem:[%s1397] sm:$0xff]
        %v1399 = vadd.f32 %v1392, %v1398
        %v1400 = vld [vmem:[#allocation4] sm:$0xff]
        %v1401 = vmul.f32 %v1400, -0.33689734
        %v1402 = vadd.f32 %v1396, %v1401
        %v1403 = vld [vmem:[%s579] sm:$0xff]
        %v1404 = vmul.f32 %v1403, -0.9157819
        %v1405 = vadd.f32 %v1399, %v1404
        %v1406 = vld [vmem:[%s583] sm:$0xff]
        %v1407 = vmul.f32 %v1406, -2.4893534
        %v1408 = vadd.f32 %v1402, %v1407
        %v1409 = vld [vmem:[%s587] sm:$0xff]
        %v1410 = vmul.f32 %v1409, -6.766764
        %v1411 = vadd.f32 %v1405, %v1410
        %v1412 = vld [vmem:[%s591] sm:$0xff]
        %v1413 = vmul.f32 %v1412, -18.393972
        %v1414 = vadd.f32 %v1408, %v1413
        %v1415 = vld [vmem:[%s595] sm:$0xff]
        %v1416 = vmul.f32 %v1415, -50.0
        %v1417 = vadd.f32 %v1411, %v1416
        %v1418 = vld [vmem:[%s599] sm:$0xff]
        %v1419 = vmul.f32 %v1418, -0.0061704903
        %v1420 = vadd.f32 %v1414, %v1419
        %v1421 = vld [vmem:[%s603] sm:$0xff]
        %v1422 = vmul.f32 %v1421, -0.01677313
        %v1423 = vadd.f32 %v1417, %v1422
        %v1424 = vld [vmem:[%s607] sm:$0xff]
        %v1425 = vmul.f32 %v1424, -0.0455941
        %v1426 = vadd.f32 %v1420, %v1425
        %v1427 = vld [vmem:[%s611] sm:$0xff]
        %v1428 = vmul.f32 %v1427, -0.12393761
        %v1429 = vadd.f32 %v1423, %v1428
        %v1430 = vadd.f32 %v1426, %v1429
        %v1431 = vld [vmem:[#allocation3] sm:$0x1]
        %v1432 = vmul.f32 %v1431, 0.9999999
        %v1433 = vadd.f32 %v1432, -52.0
        %v1435 = vlaneseq
        %v1436 = vshrl.u32 %v1435, 7
        %v1437 = vsub.s32 0, %v1436
        %v1438 = vrot.slane %v1433, %v1437
        %vm1440 = vcmp.ge.f32.partialorder %v1430, %v1438
        %v1441 = vsel %vm1440, 1, 0
        %v1442 = vcvt.s32.f32 %v1441
        %v1443 = vrot.slane %v1442, 4
        %v1444 = vadd.f32 %v1442, %v1443
        %v1445 = vrot.slane %v1444, 2
        %v1446 = vadd.f32 %v1444, %v1445
        %v1447 = vrot.slane %v1446, 1
        %v1448 = vadd.f32 %v1446, %v1447
        %v1449 = vmul.f32 %v1448, 0.05
        %v1450 = vadd.f32 %v1432, %v1449
        %1451 = vst [vmem:[#allocation2] sm:$0xff] %v1430
        %1452 = vst [vmem:[#allocation3] sm:$0x1] %v1450
        %1453 = vst [vmem:[%s599] sm:$0xff] %v1442
        %s1454 = scalar_lea.vmem %s435, 48 [#allocation14]
        %1455 = vst [vmem:[%s1454] sm:$0xff] %v1442
        %v1456 = vld [vmem:[#allocation2] sm:$0xff]
        %v1457 = vmul.f32 %v1456, 0.99004984
        %s1458 = scalar_lea.vmem %s364, 1120 [#allocation5]
        %v1459 = vld [vmem:[%s1458] sm:$0xff]
        %v1460 = vmul.f32 %v1459, 5.6027964e-09
        %s1461 = scalar_lea.vmem %s364, 1128 [#allocation5]
        %v1462 = vld [vmem:[%s1461] sm:$0xff]
        %v1463 = vmul.f32 %v1462, 1.5229979e-08
        %v1464 = vadd.f32 %v1460, %v1463
        %s1465 = scalar_lea.vmem %s364, 1136 [#allocation5]
        %v1466 = vld [vmem:[%s1465] sm:$0xff]
        %v1467 = vmul.f32 %v1466, 4.1399378e-08
        %v1468 = vadd.f32 %v1457, %v1467
        %s1469 = scalar_lea.vmem %s364, 1144 [#allocation5]
        %v1470 = vld [vmem:[%s1469] sm:$0xff]
        %v1471 = vmul.f32 %v1470, 1.12535176e-07
        %v1472 = vadd.f32 %v1464, %v1471
        %s1473 = scalar_lea.vmem %s364, 1152 [#allocation5]
        %v1474 = vld [vmem:[%s1473] sm:$0xff]
        %v1475 = vmul.f32 %v1474, 3.0590232e-07
        %v1476 = vadd.f32 %v1468, %v1475
        %s1477 = scalar_lea.vmem %s364, 1160 [#allocation5]
        %v1478 = vld [vmem:[%s1477] sm:$0xff]
        %v1479 = vmul.f32 %v1478, 8.315287e-07
        %v1480 = vadd.f32 %v1472, %v1479
        %s1481 = scalar_lea.vmem %s364, 1168 [#allocation5]
        %v1482 = vld [vmem:[%s1481] sm:$0xff]
        %v1483 = vmul.f32 %v1482, 2.2603294e-06
        %v1484 = vadd.f32 %v1476, %v1483
        %s1485 = scalar_lea.vmem %s364, 1176 [#allocation5]
        %v1486 = vld [vmem:[%s1485] sm:$0xff]
        %v1487 = vmul.f32 %v1486, 6.1442124e-06
        %v1488 = vadd.f32 %v1480, %v1487
        %s1489 = scalar_lea.vmem %s364, 1184 [#allocation5]
        %v1490 = vld [vmem:[%s1489] sm:$0xff]
        %v1491 = vmul.f32 %v1490, 1.67017e-05
        %v1492 = vadd.f32 %v1484, %v1491
        %s1493 = scalar_lea.vmem %s364, 1192 [#allocation5]
        %v1494 = vld [vmem:[%s1493] sm:$0xff]
        %v1495 = vmul.f32 %v1494, 4.539993e-05
        %v1496 = vadd.f32 %v1488, %v1495
        %s1497 = scalar_lea.vmem %s364, 1200 [#allocation5]
        %v1498 = vld [vmem:[%s1497] sm:$0xff]
        %v1499 = vmul.f32 %v1498, 0.0001234098
        %v1500 = vadd.f32 %v1492, %v1499
        %s1501 = scalar_lea.vmem %s364, 1208 [#allocation5]
        %v1502 = vld [vmem:[%s1501] sm:$0xff]
        %v1503 = vmul.f32 %v1502, 0.00033546262
        %v1504 = vadd.f32 %v1496, %v1503
        %s1505 = scalar_lea.vmem %s364, 1216 [#allocation5]
        %v1506 = vld [vmem:[%s1505] sm:$0xff]
        %v1507 = vmul.f32 %v1506, 0.000911882
        %v1508 = vadd.f32 %v1500, %v1507
        %s1509 = scalar_lea.vmem %s364, 1224 [#allocation5]
        %v1510 = vld [vmem:[%s1509] sm:$0xff]
        %v1511 = vmul.f32 %v1510, 0.0024787523
        %v1512 = vadd.f32 %v1504, %v1511
        %s1513 = scalar_lea.vmem %s364, 1232 [#allocation5]
        %v1514 = vld [vmem:[%s1513] sm:$0xff]
        %v1515 = vmul.f32 %v1514, 0.006737947
        %v1516 = vadd.f32 %v1508, %v1515
        %s1517 = scalar_lea.vmem %s364, 1240 [#allocation5]
        %v1518 = vld [vmem:[%s1517] sm:$0xff]
        %v1519 = vmul.f32 %v1518, 0.01831564
        %v1520 = vadd.f32 %v1512, %v1519
        %s1521 = scalar_lea.vmem %s364, 1248 [#allocation5]
        %v1522 = vld [vmem:[%s1521] sm:$0xff]
        %v1523 = vmul.f32 %v1522, 0.049787067
        %v1524 = vadd.f32 %v1516, %v1523
        %s1525 = scalar_lea.vmem %s364, 1256 [#allocation5]
        %v1526 = vld [vmem:[%s1525] sm:$0xff]
        %v1527 = vmul.f32 %v1526, 0.13533528
        %v1528 = vadd.f32 %v1520, %v1527
        %s1529 = scalar_lea.vmem %s364, 1264 [#allocation5]
        %v1530 = vld [vmem:[%s1529] sm:$0xff]
        %v1531 = vmul.f32 %v1530, 0.36787945
        %v1532 = vadd.f32 %v1524, %v1531
        %s1533 = scalar_lea.vmem %s364, 1272 [#allocation5]
        %v1534 = vld [vmem:[%s1533] sm:$0xff]
        %v1535 = vadd.f32 %v1528, %v1534
        %v1536 = vld [vmem:[#allocation4] sm:$0xff]
        %v1537 = vmul.f32 %v1536, -0.12393761
        %v1538 = vadd.f32 %v1532, %v1537
        %v1539 = vld [vmem:[%s579] sm:$0xff]
        %v1540 = vmul.f32 %v1539, -0.33689734
        %v1541 = vadd.f32 %v1535, %v1540
        %v1542 = vld [vmem:[%s583] sm:$0xff]
        %v1543 = vmul.f32 %v1542, -0.9157819
        %v1544 = vadd.f32 %v1538, %v1543
        %v1545 = vld [vmem:[%s587] sm:$0xff]
        %v1546 = vmul.f32 %v1545, -2.4893534
        %v1547 = vadd.f32 %v1541, %v1546
        %v1548 = vld [vmem:[%s591] sm:$0xff]
        %v1549 = vmul.f32 %v1548, -6.766764
        %v1550 = vadd.f32 %v1544, %v1549
        %v1551 = vld [vmem:[%s595] sm:$0xff]
        %v1552 = vmul.f32 %v1551, -18.393972
        %v1553 = vadd.f32 %v1547, %v1552
        %v1554 = vld [vmem:[%s599] sm:$0xff]
        %v1555 = vmul.f32 %v1554, -50.0
        %v1556 = vadd.f32 %v1550, %v1555
        %v1557 = vld [vmem:[%s603] sm:$0xff]
        %v1558 = vmul.f32 %v1557, -0.0061704903
        %v1559 = vadd.f32 %v1553, %v1558
        %v1560 = vld [vmem:[%s607] sm:$0xff]
        %v1561 = vmul.f32 %v1560, -0.01677313
        %v1562 = vadd.f32 %v1556, %v1561
        %v1563 = vld [vmem:[%s611] sm:$0xff]
        %v1564 = vmul.f32 %v1563, -0.0455941
        %v1565 = vadd.f32 %v1559, %v1564
        %v1566 = vadd.f32 %v1562, %v1565
        %v1567 = vld [vmem:[#allocation3] sm:$0x1]
        %v1568 = vmul.f32 %v1567, 0.9999999
        %v1569 = vadd.f32 %v1568, -52.0
        %v1571 = vlaneseq
        %v1572 = vshrl.u32 %v1571, 7
        %v1573 = vsub.s32 0, %v1572
        %v1574 = vrot.slane %v1569, %v1573
        %vm1576 = vcmp.ge.f32.partialorder %v1566, %v1574
        %v1577 = vsel %vm1576, 1, 0
        %v1578 = vcvt.s32.f32 %v1577
        %v1579 = vrot.slane %v1578, 4
        %v1580 = vadd.f32 %v1578, %v1579
        %v1581 = vrot.slane %v1580, 2
        %v1582 = vadd.f32 %v1580, %v1581
        %v1583 = vrot.slane %v1582, 1
        %v1584 = vadd.f32 %v1582, %v1583
        %v1585 = vmul.f32 %v1584, 0.05
        %v1586 = vadd.f32 %v1568, %v1585
        %1587 = vst [vmem:[#allocation2] sm:$0xff] %v1566
        %1588 = vst [vmem:[#allocation3] sm:$0x1] %v1586
        %1589 = vst [vmem:[%s603] sm:$0xff] %v1578
        %s1590 = scalar_lea.vmem %s435, 56 [#allocation14]
        %1591 = vst [vmem:[%s1590] sm:$0xff] %v1578
        %v1592 = vld [vmem:[#allocation2] sm:$0xff]
        %v1593 = vmul.f32 %v1592, 0.99004984
        %s1594 = scalar_lea.vmem %s364, 1280 [#allocation5]
        %v1595 = vld [vmem:[%s1594] sm:$0xff]
        %v1596 = vmul.f32 %v1595, 5.6027964e-09
        %s1597 = scalar_lea.vmem %s364, 1288 [#allocation5]
        %v1598 = vld [vmem:[%s1597] sm:$0xff]
        %v1599 = vmul.f32 %v1598, 1.5229979e-08
        %v1600 = vadd.f32 %v1596, %v1599
        %s1601 = scalar_lea.vmem %s364, 1296 [#allocation5]
        %v1602 = vld [vmem:[%s1601] sm:$0xff]
        %v1603 = vmul.f32 %v1602, 4.1399378e-08
        %v1604 = vadd.f32 %v1593, %v1603
        %s1605 = scalar_lea.vmem %s364, 1304 [#allocation5]
        %v1606 = vld [vmem:[%s1605] sm:$0xff]
        %v1607 = vmul.f32 %v1606, 1.12535176e-07
        %v1608 = vadd.f32 %v1600, %v1607
        %s1609 = scalar_lea.vmem %s364, 1312 [#allocation5]
        %v1610 = vld [vmem:[%s1609] sm:$0xff]
        %v1611 = vmul.f32 %v1610, 3.0590232e-07
        %v1612 = vadd.f32 %v1604, %v1611
        %s1613 = scalar_lea.vmem %s364, 1320 [#allocation5]
        %v1614 = vld [vmem:[%s1613] sm:$0xff]
        %v1615 = vmul.f32 %v1614, 8.315287e-07
        %v1616 = vadd.f32 %v1608, %v1615
        %s1617 = scalar_lea.vmem %s364, 1328 [#allocation5]
        %v1618 = vld [vmem:[%s1617] sm:$0xff]
        %v1619 = vmul.f32 %v1618, 2.2603294e-06
        %v1620 = vadd.f32 %v1612, %v1619
        %s1621 = scalar_lea.vmem %s364, 1336 [#allocation5]
        %v1622 = vld [vmem:[%s1621] sm:$0xff]
        %v1623 = vmul.f32 %v1622, 6.1442124e-06
        %v1624 = vadd.f32 %v1616, %v1623
        %s1625 = scalar_lea.vmem %s364, 1344 [#allocation5]
        %v1626 = vld [vmem:[%s1625] sm:$0xff]
        %v1627 = vmul.f32 %v1626, 1.67017e-05
        %v1628 = vadd.f32 %v1620, %v1627
        %s1629 = scalar_lea.vmem %s364, 1352 [#allocation5]
        %v1630 = vld [vmem:[%s1629] sm:$0xff]
        %v1631 = vmul.f32 %v1630, 4.539993e-05
        %v1632 = vadd.f32 %v1624, %v1631
        %s1633 = scalar_lea.vmem %s364, 1360 [#allocation5]
        %v1634 = vld [vmem:[%s1633] sm:$0xff]
        %v1635 = vmul.f32 %v1634, 0.0001234098
        %v1636 = vadd.f32 %v1628, %v1635
        %s1637 = scalar_lea.vmem %s364, 1368 [#allocation5]
        %v1638 = vld [vmem:[%s1637] sm:$0xff]
        %v1639 = vmul.f32 %v1638, 0.00033546262
        %v1640 = vadd.f32 %v1632, %v1639
        %s1641 = scalar_lea.vmem %s364, 1376 [#allocation5]
        %v1642 = vld [vmem:[%s1641] sm:$0xff]
        %v1643 = vmul.f32 %v1642, 0.000911882
        %v1644 = vadd.f32 %v1636, %v1643
        %s1645 = scalar_lea.vmem %s364, 1384 [#allocation5]
        %v1646 = vld [vmem:[%s1645] sm:$0xff]
        %v1647 = vmul.f32 %v1646, 0.0024787523
        %v1648 = vadd.f32 %v1640, %v1647
        %s1649 = scalar_lea.vmem %s364, 1392 [#allocation5]
        %v1650 = vld [vmem:[%s1649] sm:$0xff]
        %v1651 = vmul.f32 %v1650, 0.006737947
        %v1652 = vadd.f32 %v1644, %v1651
        %s1653 = scalar_lea.vmem %s364, 1400 [#allocation5]
        %v1654 = vld [vmem:[%s1653] sm:$0xff]
        %v1655 = vmul.f32 %v1654, 0.01831564
        %v1656 = vadd.f32 %v1648, %v1655
        %s1657 = scalar_lea.vmem %s364, 1408 [#allocation5]
        %v1658 = vld [vmem:[%s1657] sm:$0xff]
        %v1659 = vmul.f32 %v1658, 0.049787067
        %v1660 = vadd.f32 %v1652, %v1659
        %s1661 = scalar_lea.vmem %s364, 1416 [#allocation5]
        %v1662 = vld [vmem:[%s1661] sm:$0xff]
        %v1663 = vmul.f32 %v1662, 0.13533528
        %v1664 = vadd.f32 %v1656, %v1663
        %s1665 = scalar_lea.vmem %s364, 1424 [#allocation5]
        %v1666 = vld [vmem:[%s1665] sm:$0xff]
        %v1667 = vmul.f32 %v1666, 0.36787945
        %v1668 = vadd.f32 %v1660, %v1667
        %s1669 = scalar_lea.vmem %s364, 1432 [#allocation5]
        %v1670 = vld [vmem:[%s1669] sm:$0xff]
        %v1671 = vadd.f32 %v1664, %v1670
        %v1672 = vld [vmem:[#allocation4] sm:$0xff]
        %v1673 = vmul.f32 %v1672, -0.0455941
        %v1674 = vadd.f32 %v1668, %v1673
        %v1675 = vld [vmem:[%s579] sm:$0xff]
        %v1676 = vmul.f32 %v1675, -0.12393761
        %v1677 = vadd.f32 %v1671, %v1676
        %v1678 = vld [vmem:[%s583] sm:$0xff]
        %v1679 = vmul.f32 %v1678, -0.33689734
        %v1680 = vadd.f32 %v1674, %v1679
        %v1681 = vld [vmem:[%s587] sm:$0xff]
        %v1682 = vmul.f32 %v1681, -0.9157819
        %v1683 = vadd.f32 %v1677, %v1682
        %v1684 = vld [vmem:[%s591] sm:$0xff]
        %v1685 = vmul.f32 %v1684, -2.4893534
        %v1686 = vadd.f32 %v1680, %v1685
        %v1687 = vld [vmem:[%s595] sm:$0xff]
        %v1688 = vmul.f32 %v1687, -6.766764
        %v1689 = vadd.f32 %v1683, %v1688
        %v1690 = vld [vmem:[%s599] sm:$0xff]
        %v1691 = vmul.f32 %v1690, -18.393972
        %v1692 = vadd.f32 %v1686, %v1691
        %v1693 = vld [vmem:[%s603] sm:$0xff]
        %v1694 = vmul.f32 %v1693, -50.0
        %v1695 = vadd.f32 %v1689, %v1694
        %v1696 = vld [vmem:[%s607] sm:$0xff]
        %v1697 = vmul.f32 %v1696, -0.0061704903
        %v1698 = vadd.f32 %v1692, %v1697
        %v1699 = vld [vmem:[%s611] sm:$0xff]
        %v1700 = vmul.f32 %v1699, -0.01677313
        %v1701 = vadd.f32 %v1695, %v1700
        %v1702 = vadd.f32 %v1698, %v1701
        %v1703 = vld [vmem:[#allocation3] sm:$0x1]
        %v1704 = vmul.f32 %v1703, 0.9999999
        %v1705 = vadd.f32 %v1704, -52.0
        %v1707 = vlaneseq
        %v1708 = vshrl.u32 %v1707, 7
        %v1709 = vsub.s32 0, %v1708
        %v1710 = vrot.slane %v1705, %v1709
        %vm1712 = vcmp.ge.f32.partialorder %v1702, %v1710
        %v1713 = vsel %vm1712, 1, 0
        %v1714 = vcvt.s32.f32 %v1713
        %v1715 = vrot.slane %v1714, 4
        %v1716 = vadd.f32 %v1714, %v1715
        %v1717 = vrot.slane %v1716, 2
        %v1718 = vadd.f32 %v1716, %v1717
        %v1719 = vrot.slane %v1718, 1
        %v1720 = vadd.f32 %v1718, %v1719
        %v1721 = vmul.f32 %v1720, 0.05
        %v1722 = vadd.f32 %v1704, %v1721
        %1723 = vst [vmem:[#allocation2] sm:$0xff] %v1702
        %1724 = vst [vmem:[#allocation3] sm:$0x1] %v1722
        %1725 = vst [vmem:[%s607] sm:$0xff] %v1714
        %s1726 = scalar_lea.vmem %s435, 64 [#allocation14]
        %1727 = vst [vmem:[%s1726] sm:$0xff] %v1714
        %v1728 = vld [vmem:[#allocation2] sm:$0xff]
        %v1729 = vmul.f32 %v1728, 0.99004984
        %s1730 = scalar_lea.vmem %s364, 1440 [#allocation5]
        %v1731 = vld [vmem:[%s1730] sm:$0xff]
        %v1732 = vmul.f32 %v1731, 5.6027964e-09
        %s1733 = scalar_lea.vmem %s364, 1448 [#allocation5]
        %v1734 = vld [vmem:[%s1733] sm:$0xff]
        %v1735 = vmul.f32 %v1734, 1.5229979e-08
        %v1736 = vadd.f32 %v1732, %v1735
        %s1737 = scalar_lea.vmem %s364, 1456 [#allocation5]
        %v1738 = vld [vmem:[%s1737] sm:$0xff]
        %v1739 = vmul.f32 %v1738, 4.1399378e-08
        %v1740 = vadd.f32 %v1729, %v1739
        %s1741 = scalar_lea.vmem %s364, 1464 [#allocation5]
        %v1742 = vld [vmem:[%s1741] sm:$0xff]
        %v1743 = vmul.f32 %v1742, 1.12535176e-07
        %v1744 = vadd.f32 %v1736, %v1743
        %s1745 = scalar_lea.vmem %s364, 1472 [#allocation5]
        %v1746 = vld [vmem:[%s1745] sm:$0xff]
        %v1747 = vmul.f32 %v1746, 3.0590232e-07
        %v1748 = vadd.f32 %v1740, %v1747
        %s1749 = scalar_lea.vmem %s364, 1480 [#allocation5]
        %v1750 = vld [vmem:[%s1749] sm:$0xff]
        %v1751 = vmul.f32 %v1750, 8.315287e-07
        %v1752 = vadd.f32 %v1744, %v1751
        %s1753 = scalar_lea.vmem %s364, 1488 [#allocation5]
        %v1754 = vld [vmem:[%s1753] sm:$0xff]
        %v1755 = vmul.f32 %v1754, 2.2603294e-06
        %v1756 = vadd.f32 %v1748, %v1755
        %s1757 = scalar_lea.vmem %s364, 1496 [#allocation5]
        %v1758 = vld [vmem:[%s1757] sm:$0xff]
        %v1759 = vmul.f32 %v1758, 6.1442124e-06
        %v1760 = vadd.f32 %v1752, %v1759
        %s1761 = scalar_lea.vmem %s364, 1504 [#allocation5]
        %v1762 = vld [vmem:[%s1761] sm:$0xff]
        %v1763 = vmul.f32 %v1762, 1.67017e-05
        %v1764 = vadd.f32 %v1756, %v1763
        %s1765 = scalar_lea.vmem %s364, 1512 [#allocation5]
        %v1766 = vld [vmem:[%s1765] sm:$0xff]
        %v1767 = vmul.f32 %v1766, 4.539993e-05
        %v1768 = vadd.f32 %v1760, %v1767
        %s1769 = scalar_lea.vmem %s364, 1520 [#allocation5]
        %v1770 = vld [vmem:[%s1769] sm:$0xff]
        %v1771 = vmul.f32 %v1770, 0.0001234098
        %v1772 = vadd.f32 %v1764, %v1771
        %s1773 = scalar_lea.vmem %s364, 1528 [#allocation5]
        %v1774 = vld [vmem:[%s1773] sm:$0xff]
        %v1775 = vmul.f32 %v1774, 0.00033546262
        %v1776 = vadd.f32 %v1768, %v1775
        %s1777 = scalar_lea.vmem %s364, 1536 [#allocation5]
        %v1778 = vld [vmem:[%s1777] sm:$0xff]
        %v1779 = vmul.f32 %v1778, 0.000911882
        %v1780 = vadd.f32 %v1772, %v1779
        %s1781 = scalar_lea.vmem %s364, 1544 [#allocation5]
        %v1782 = vld [vmem:[%s1781] sm:$0xff]
        %v1783 = vmul.f32 %v1782, 0.0024787523
        %v1784 = vadd.f32 %v1776, %v1783
        %s1785 = scalar_lea.vmem %s364, 1552 [#allocation5]
        %v1786 = vld [vmem:[%s1785] sm:$0xff]
        %v1787 = vmul.f32 %v1786, 0.006737947
        %v1788 = vadd.f32 %v1780, %v1787
        %s1789 = scalar_lea.vmem %s364, 1560 [#allocation5]
        %v1790 = vld [vmem:[%s1789] sm:$0xff]
        %v1791 = vmul.f32 %v1790, 0.01831564
        %v1792 = vadd.f32 %v1784, %v1791
        %s1793 = scalar_lea.vmem %s364, 1568 [#allocation5]
        %v1794 = vld [vmem:[%s1793] sm:$0xff]
        %v1795 = vmul.f32 %v1794, 0.049787067
        %v1796 = vadd.f32 %v1788, %v1795
        %s1797 = scalar_lea.vmem %s364, 1576 [#allocation5]
        %v1798 = vld [vmem:[%s1797] sm:$0xff]
        %v1799 = vmul.f32 %v1798, 0.13533528
        %v1800 = vadd.f32 %v1792, %v1799
        %s1801 = scalar_lea.vmem %s364, 1584 [#allocation5]
        %v1802 = vld [vmem:[%s1801] sm:$0xff]
        %v1803 = vmul.f32 %v1802, 0.36787945
        %v1804 = vadd.f32 %v1796, %v1803
        %s1805 = scalar_lea.vmem %s364, 1592 [#allocation5]
        %v1806 = vld [vmem:[%s1805] sm:$0xff]
        %v1807 = vadd.f32 %v1800, %v1806
        %v1808 = vld [vmem:[#allocation4] sm:$0xff]
        %v1809 = vmul.f32 %v1808, -0.01677313
        %v1810 = vadd.f32 %v1804, %v1809
        %v1811 = vld [vmem:[%s579] sm:$0xff]
        %v1812 = vmul.f32 %v1811, -0.0455941
        %v1813 = vadd.f32 %v1807, %v1812
        %v1814 = vld [vmem:[%s583] sm:$0xff]
        %v1815 = vmul.f32 %v1814, -0.12393761
        %v1816 = vadd.f32 %v1810, %v1815
        %v1817 = vld [vmem:[%s587] sm:$0xff]
        %v1818 = vmul.f32 %v1817, -0.33689734
        %v1819 = vadd.f32 %v1813, %v1818
        %v1820 = vld [vmem:[%s591] sm:$0xff]
        %v1821 = vmul.f32 %v1820, -0.9157819
        %v1822 = vadd.f32 %v1816, %v1821
        %v1823 = vld [vmem:[%s595] sm:$0xff]
        %v1824 = vmul.f32 %v1823, -2.4893534
        %v1825 = vadd.f32 %v1819, %v1824
        %v1826 = vld [vmem:[%s599] sm:$0xff]
        %v1827 = vmul.f32 %v1826, -6.766764
        %v1828 = vadd.f32 %v1822, %v1827
        %v1829 = vld [vmem:[%s603] sm:$0xff]
        %v1830 = vmul.f32 %v1829, -18.393972
        %v1831 = vadd.f32 %v1825, %v1830
        %v1832 = vld [vmem:[%s607] sm:$0xff]
        %v1833 = vmul.f32 %v1832, -50.0
        %v1834 = vadd.f32 %v1828, %v1833
        %v1835 = vld [vmem:[%s611] sm:$0xff]
        %v1836 = vmul.f32 %v1835, -0.0061704903
        %v1837 = vadd.f32 %v1831, %v1836
        %v1838 = vadd.f32 %v1834, %v1837
        %v1839 = vld [vmem:[#allocation3] sm:$0x1]
        %v1840 = vmul.f32 %v1839, 0.9999999
        %v1841 = vadd.f32 %v1840, -52.0
        %v1843 = vlaneseq
        %v1844 = vshrl.u32 %v1843, 7
        %v1845 = vsub.s32 0, %v1844
        %v1846 = vrot.slane %v1841, %v1845
        %vm1848 = vcmp.ge.f32.partialorder %v1838, %v1846
        %v1849 = vsel %vm1848, 1, 0
        %v1850 = vcvt.s32.f32 %v1849
        %v1851 = vrot.slane %v1850, 4
        %v1852 = vadd.f32 %v1850, %v1851
        %v1853 = vrot.slane %v1852, 2
        %v1854 = vadd.f32 %v1852, %v1853
        %v1855 = vrot.slane %v1854, 1
        %v1856 = vadd.f32 %v1854, %v1855
        %v1857 = vmul.f32 %v1856, 0.05
        %v1858 = vadd.f32 %v1840, %v1857
        %1859 = vst [vmem:[#allocation2] sm:$0xff] %v1838
        %1860 = vst [vmem:[#allocation3] sm:$0x1] %v1858
        %1861 = vst [vmem:[%s611] sm:$0xff] %v1850
        %s1862 = scalar_lea.vmem %s435, 72 [#allocation14]
        %1863 = vst [vmem:[%s1862] sm:$0xff] %v1850
        %p1864 = scmp.eq.s32.totalorder %s42, 1
        // Predicated region
        $region57: #{tpu_custom_call.1} parent=35 // pred_check
          %p1865 = pneg %p1864
        $region58: #{tpu_custom_call.1} parent=35 // pred_check_branch
          %1867 = sbr.rel (%p1865) target = $region60
        $region59: #{tpu_custom_call.1} parent=35 // pred_region
          %v1868 = vld [vmem:[#allocation2] sm:$0xff]
          %1869 = vst [vmem:[%s428] sm:$0xff] %v1868
          %v1870 = vld [vmem:[#allocation3] sm:$0x1]
          %1871 = vst [vmem:[%s441] sm:$0x1] %v1870
          %v1872 = vld [vmem:[#allocation4] sm:$0xff]
          %1873 = vst [vmem:[%s448] sm:$0xff] %v1872
          %v1874 = vld [vmem:[%s579] sm:$0xff]
          %s1875 = scalar_lea.vmem %s448, 8 [#allocation17]
          %1876 = vst [vmem:[%s1875] sm:$0xff] %v1874
          %v1877 = vld [vmem:[%s583] sm:$0xff]
          %s1878 = scalar_lea.vmem %s448, 16 [#allocation17]
          %1879 = vst [vmem:[%s1878] sm:$0xff] %v1877
          %v1880 = vld [vmem:[%s587] sm:$0xff]
          %s1881 = scalar_lea.vmem %s448, 24 [#allocation17]
          %1882 = vst [vmem:[%s1881] sm:$0xff] %v1880
          %v1883 = vld [vmem:[%s591] sm:$0xff]
          %s1884 = scalar_lea.vmem %s448, 32 [#allocation17]
          %1885 = vst [vmem:[%s1884] sm:$0xff] %v1883
          %v1886 = vld [vmem:[%s595] sm:$0xff]
          %s1887 = scalar_lea.vmem %s448, 40 [#allocation17]
          %1888 = vst [vmem:[%s1887] sm:$0xff] %v1886
          %v1889 = vld [vmem:[%s599] sm:$0xff]
          %s1890 = scalar_lea.vmem %s448, 48 [#allocation17]
          %1891 = vst [vmem:[%s1890] sm:$0xff] %v1889
          %v1892 = vld [vmem:[%s603] sm:$0xff]
          %s1893 = scalar_lea.vmem %s448, 56 [#allocation17]
          %1894 = vst [vmem:[%s1893] sm:$0xff] %v1892
          %v1895 = vld [vmem:[%s607] sm:$0xff]
          %s1896 = scalar_lea.vmem %s448, 64 [#allocation17]
          %1897 = vst [vmem:[%s1896] sm:$0xff] %v1895
          %v1898 = vld [vmem:[%s611] sm:$0xff]
          %s1899 = scalar_lea.vmem %s448, 72 [#allocation17]
          %1900 = vst [vmem:[%s1899] sm:$0xff] %v1898
        $region60: #{tpu_custom_call.1} parent=35 // pred_fallthru
          _
        %s1901 = sand.u32 %s163, 1
        %s1902 = scalar_lea.sflag [#allocation7], %s1901
        %s1903 = sand.u32 %s163, 1
        %s1904 = smul.addr %s1903, 8
        %s1905 = scalar_lea.vmem [#allocation13], %s1904
        %s1906 = sand.u32 %s37, 1
        %s1907 = scalar_lea.sflag [#allocation15], %s1906
        %s1908 = sand.u32 %s191, 1
        %s1909 = smul.addr %s1908, 80
        %s1910 = scalar_lea.vmem [#allocation14], %s1909
        %s1911 = sand.u32 %s37, 1
        %s1912 = scalar_lea.sflag [#allocation15], %s1911
        %s1913 = sand.u32 %s217, 1
        %s1914 = scalar_lea.vmem [#allocation16], %s1913
        %s1915 = sand.u32 %s243, 1
        %s1916 = scalar_lea.sflag [#allocation18], %s1915
        %s1917 = sand.u32 %s243, 1
        %s1918 = smul.addr %s1917, 80
        %s1919 = scalar_lea.vmem [#allocation17], %s1918
        // Predicated region
        $region61: #{tpu_custom_call.1} parent=35 // pred_check
          %p1920 = pneg %p173
        $region62: #{tpu_custom_call.1} parent=35 // pred_check_branch
          %1922 = sbr.rel (%p1920) target = $region64
        $region63: #{tpu_custom_call.1} parent=35 // pred_region
          %s1924 = ssub.s32 128, 128
          %1925 = vsyncadd %s1902, %s1924
          %s1926 = smul.addr %s41, 128
          %s1927 = scalar_lea.hbm %s4, %s1926
          %s1929 = sshll.u32 %s1905, 4
          %s1930 = int_to_ptr.vmem [resolvable:$true] %s1929
          %1932 = dma.vmem_to_hbm [thread:$0]  %s1930, 128, %s1927, %s1902
        $region64: #{tpu_custom_call.1} parent=35 // pred_fallthru
          _
        // Predicated region
        $region65: #{tpu_custom_call.1} parent=35 // pred_check
          %p1933 = pneg %p201
        $region66: #{tpu_custom_call.1} parent=35 // pred_check_branch
          %1935 = sbr.rel (%p1933) target = $region68
        $region67: #{tpu_custom_call.1} parent=35 // pred_region
          %s1936 = smul.u32 10, %s42
          %s1938 = ssub.s32 1280, 1280
          %1939 = vsyncadd %s1907, %s1938
          %s1940 = smul.addr %s1936, 2
          %s1941 = sadd.s32 %s41, %s1940
          %s1942 = smul.addr %s1941, 128
          %s1943 = scalar_lea.hbm %s5, %s1942
          %s1944 = sshll.u32 %s1910, 4
          %s1945 = int_to_ptr.vmem [resolvable:$true] %s1944
          %1950 = dma.vmem_to_hbm [thread:$0]  %s1945, 1280, %s1943, %s1907, 128, 256, 8
        $region68: #{tpu_custom_call.1} parent=35 // pred_fallthru
          _
        // Predicated region
        $region69: #{tpu_custom_call.1} parent=35 // pred_check
          %p1951 = pneg %p227
        $region70: #{tpu_custom_call.1} parent=35 // pred_check_branch
          %1953 = sbr.rel (%p1951) target = $region72
        $region71: #{tpu_custom_call.1} parent=35 // pred_region
          %s1955 = ssub.s32 16, 16
          %1956 = vsyncadd %s1912, %s1955
          %s1957 = smul.addr %s41, 16
          %s1958 = scalar_lea.hbm %s6, %s1957
          %s1960 = sshll.u32 %s1914, 4
          %s1961 = int_to_ptr.vmem [resolvable:$true] %s1960
          %1963 = dma.vmem_to_hbm [thread:$0]  %s1961, 16, %s1958, %s1912
        $region72: #{tpu_custom_call.1} parent=35 // pred_fallthru
          _
        // Predicated region
        $region73: #{tpu_custom_call.1} parent=35 // pred_check
          %p1964 = pneg %p253
        $region74: #{tpu_custom_call.1} parent=35 // pred_check_branch
          %1966 = sbr.rel (%p1964) target = $region76
        $region75: #{tpu_custom_call.1} parent=35 // pred_region
          %s1968 = ssub.s32 1280, 1280
          %1969 = vsyncadd %s1916, %s1968
          %s1970 = smul.addr %s41, 128
          %s1971 = scalar_lea.hbm %s7, %s1970
          %s1972 = sshll.u32 %s1919, 4
          %s1973 = int_to_ptr.vmem [resolvable:$true] %s1972
          %1978 = dma.vmem_to_hbm [thread:$0]  %s1973, 1280, %s1971, %s1916, 128, 256, 8
        $region76: #{tpu_custom_call.1} parent=35 // pred_fallthru
          _
      $region36: #{tpu_custom_call.1} parent=5 // pred_fallthru
        _
      %p1979 = scmp.le.s32.totalorder 2, %s32
      // Predicated region
      $region77: #{tpu_custom_call.1} parent=5 // pred_check
        %p1980 = pneg %p1979
      $region78: #{tpu_custom_call.1} parent=5 // pred_check_branch
        %1982 = sbr.rel (%p1980) target = $region80
      $region79: #{tpu_custom_call.1} parent=5 // pred_region
        %s1983 = ssub.s32 %s32, 2
        // Predicated region
        $region81: #{tpu_custom_call.1} parent=79 // pred_check
          %p1984 = pneg %p179
        $region82: #{tpu_custom_call.1} parent=79 // pred_check_branch
          %1986 = sbr.rel (%p1984) target = $region84
        $region83: #{tpu_custom_call.1} parent=79 // pred_region
          %s1987 = sand.u32 %s164, 1
          %s1988 = scalar_lea.sflag [#allocation7], %s1987
          %s1989 = sand.u32 %s164, 1
          %s1990 = smul.addr %s1989, 8
          %s1991 = scalar_lea.vmem [#allocation13], %s1990
          %1992 = dma.done %s1988, 128
        $region84: #{tpu_custom_call.1} parent=79 // pred_fallthru
          _
        // Predicated region
        $region85: #{tpu_custom_call.1} parent=79 // pred_check
          %p1993 = pneg %p207
        $region86: #{tpu_custom_call.1} parent=79 // pred_check_branch
          %1995 = sbr.rel (%p1993) target = $region88
        $region87: #{tpu_custom_call.1} parent=79 // pred_region
          %s1996 = sand.u32 %s38, 1
          %s1997 = scalar_lea.sflag [#allocation15], %s1996
          %s1998 = sand.u32 %s192, 1
          %s1999 = smul.addr %s1998, 80
          %s2000 = scalar_lea.vmem [#allocation14], %s1999
          %2001 = dma.done %s1997, 1280
        $region88: #{tpu_custom_call.1} parent=79 // pred_fallthru
          _
        // Predicated region
        $region89: #{tpu_custom_call.1} parent=79 // pred_check
          %p2002 = pneg %p233
        $region90: #{tpu_custom_call.1} parent=79 // pred_check_branch
          %2004 = sbr.rel (%p2002) target = $region92
        $region91: #{tpu_custom_call.1} parent=79 // pred_region
          %s2005 = sand.u32 %s38, 1
          %s2006 = scalar_lea.sflag [#allocation15], %s2005
          %s2007 = sand.u32 %s218, 1
          %s2008 = scalar_lea.vmem [#allocation16], %s2007
          %2009 = dma.done %s2006, 16
        $region92: #{tpu_custom_call.1} parent=79 // pred_fallthru
          _
        // Predicated region
        $region93: #{tpu_custom_call.1} parent=79 // pred_check
          %p2010 = pneg %p259
        $region94: #{tpu_custom_call.1} parent=79 // pred_check_branch
          %2012 = sbr.rel (%p2010) target = $region96
        $region95: #{tpu_custom_call.1} parent=79 // pred_region
          %s2013 = sand.u32 %s244, 1
          %s2014 = scalar_lea.sflag [#allocation18], %s2013
          %s2015 = sand.u32 %s244, 1
          %s2016 = smul.addr %s2015, 80
          %s2017 = scalar_lea.vmem [#allocation17], %s2016
          %2018 = dma.done %s2014, 1280
        $region96: #{tpu_custom_call.1} parent=79 // pred_fallthru
          _
      $region80: #{tpu_custom_call.1} parent=5 // pred_fallthru
        _
    $region6: #{tpu_custom_call.1} parent=1 // loop_footer
      %s36 = sadd.s32 1, %s32
    $region7: #{tpu_custom_call.1} parent=1 // loop_footer_branch
      %31 = sbr.rel target = $region3
    $region8: #{tpu_custom_call.1} parent=1 // loop_exit
      _
    %2019 = vsyncpa [#allocation6], 1
    %s2020 = scalar_lea.sflag [#allocation6], 1
    %2021 = vsyncpa %s2020, 1
    %2022 = vsyncpa [#allocation9], 1
    %s2023 = scalar_lea.sflag [#allocation9], 1
    %2024 = vsyncpa %s2023, 1
    %2025 = vsyncpa [#allocation12], 1
    %s2026 = scalar_lea.sflag [#allocation12], 1
    %2027 = vsyncpa %s2026, 1
    %2028 = vsyncpa [#allocation7], 1
    %s2029 = scalar_lea.sflag [#allocation7], 1
    %2030 = vsyncpa %s2029, 1
    %2031 = vsyncpa [#allocation15], 1
    %s2032 = scalar_lea.sflag [#allocation15], 1
    %2033 = vsyncpa %s2032, 1
    %2034 = vsyncpa [#allocation18], 1
    %s2035 = scalar_lea.sflag [#allocation18], 1
    %2036 = vsyncpa %s2035, 1

</llo_original>
